<compile_context>
chip_gen: v7x
topology: tpu7x:2x2x1
jax: 0.10.0
libtpu: 0.0.40
codegen_flags: <defaults>
</compile_context>

<pallas_src>
import functools

import jax
import jax.numpy as jnp
from jax import lax
from jax.experimental import pallas as pl
from jax.experimental.pallas import tpu as pltpu

NUM_NODES = 129          # required so that (N - 8) == 121 matches fc1
NUM_FEATURES = 4
NUM_EDGE_CHANNELS = 2
NUM_EDGES = 512
GCN_LEVELS = 5
LANE = 128
NODES_PAD = ((NUM_NODES + LANE - 1) // LANE) * LANE       # 256

# ---- packed SMEM scalar slab layout (per channel) ----
OFF_W1 = 0                          # GCN level-1 weight (NUM_FEATURES scalars)
OFF_WL = OFF_W1 + NUM_FEATURES      # GCN level 2..5 weights (4)
OFF_BL = OFF_WL + 4                 # GCN biases b1..b5 (5)
OFF_C1W = OFF_BL + 5                # Conv1d(5,3,3) weights (45: o*15 + i*3 + k)
OFF_C1B = OFF_C1W + 45              # Conv1d(5,3,3) bias (3)
OFF_C2W = OFF_C1B + 3               # Conv1d(3,1,3) weights (9: i*3 + k)
OFF_C2B = OFF_C2W + 9               # Conv1d(3,1,3) bias (1)
N_SCAL = OFF_C2B + 1                # 71


def _elu(v):
    return jnp.where(v > 0, v, jnp.exp(jnp.minimum(v, 0.0)) - 1.0)


# ------------------------------ fused kernel ------------------------------
def _fused_dgcnn_kernel(scal_ref, xT_ref, src_ref, edge_ref, fc1w_ref, fcs_ref,
                        o_ref, *, num_nodes):
    f32 = jnp.float32
    npad = xT_ref.shape[1]
    n_feat = xT_ref.shape[0]
    n_edges = src_ref.shape[1]
    n_chan = fc1w_ref.shape[0]

    # ---- shared (channel-independent) one-hot / iota machinery ----
    iota_je = lax.broadcasted_iota(jnp.int32, (npad, n_edges), 0)
    oh_srcT = (iota_je == src_ref[...]).astype(f32)               # [j,e]=1 iff src[e]==j
    iota_ei = lax.broadcasted_iota(jnp.int32, (n_edges, npad), 1)
    dst_eq = iota_ei == edge_ref[:, 0:1].astype(jnp.int32)        # [e,i]=1 iff dst[e]==i

    iota_s = lax.broadcasted_iota(jnp.int32, (npad, npad), 0)
    iota_l = lax.broadcasted_iota(jnp.int32, (npad, npad), 1)
    eye_full = (iota_s == iota_l).astype(f32)
    eye_n = jnp.where(jnp.logical_and(iota_s == iota_l, iota_s < num_nodes), 1.0, 0.0)
    iota_l_f = iota_l.astype(f32)
    lane_valid = lax.broadcasted_iota(jnp.int32, (1, npad), 1) < num_nodes

    # pltpu.roll(x, npad-k, axis=1) == jnp.roll(x, -k): out[t] = in[t+k]
    sh1, sh2 = npad - 1, npad - 2

    h1_acc = fcs_ref[0:1, :]                                      # fc1 bias (1, 32)

    for c in range(n_chan):
        # --- normalized adjacency (transposed) via a one-hot MXU matmul ---
        oh_dst_w = jnp.where(dst_eq, edge_ref[:, 1 + c:2 + c], 0.0)          # (E, Npad)
        at = jnp.dot(oh_srcT, oh_dst_w, preferred_element_type=f32)          # A^T[j,i]
        at = at + eye_n                                                       # self loops (real nodes only)
        deg = jnp.sum(at, axis=0, keepdims=True)                              # (1, Npad)
        dinv = jnp.where(deg > 0, lax.rsqrt(deg), 0.0)                        # pads -> 0

        # --- 5-level GCN chain: h_new = ((h*dinv) @ A^T) * dinv + b  (row matvecs) ---
        xw = scal_ref[c, OFF_W1] * xT_ref[0:1, :]                             # level-1 proj on VPU
        for f in range(1, n_feat):
            xw = xw + scal_ref[c, OFF_W1 + f] * xT_ref[f:f + 1, :]
        h = (jnp.dot(xw * dinv, at, preferred_element_type=f32) * dinv
             + scal_ref[c, OFF_BL])
        levels = [h]
        for l in range(GCN_LEVELS - 1):
            h = (jnp.dot((h * scal_ref[c, OFF_WL + l]) * dinv, at,
                         preferred_element_type=f32) * dinv
                 + scal_ref[c, OFF_BL + 1 + l])
            levels.append(h)

        # --- global_sort_pool(k = num_nodes): descending by level-5 value ---
        # TODO(synk): tie-break is stable by node index; torch.sort(descending=True)
        # is not stable, so outputs may differ when level-5 values tie exactly.
        vals = jnp.where(lane_valid, levels[-1], -1e30)                       # pads sort last
        vals_b = jnp.broadcast_to(vals, (npad, npad))                         # vals[k] on lanes
        vals_col = jnp.sum(vals_b * eye_full, axis=1, keepdims=True)          # vals[j] column
        before = jnp.logical_or(vals_b > vals_col,
                                jnp.logical_and(vals_b == vals_col, iota_l < iota_s))
        rank = jnp.sum(before.astype(f32), axis=1, keepdims=True)             # (Npad, 1)
        perm = (rank == iota_l_f).astype(f32)                                 # perm[j, r]
        xs = [jnp.dot(levels[l], perm, preferred_element_type=f32)
              for l in range(GCN_LEVELS)]                                     # sorted rows

        # --- Conv1d(5,3,3) -> MaxPool(3,1) -> Conv1d(3,1,3) -> MaxPool(3,1), on VPU ---
        xs_sh = [(r, pltpu.roll(r, sh1, 1), pltpu.roll(r, sh2, 1)) for r in xs]
        p1 = []
        for o in range(3):
            acc = None
            for i in range(GCN_LEVELS):
                for k in range(3):
                    t = scal_ref[c, OFF_C1W + o * 15 + i * 3 + k] * xs_sh[i][k]
                    acc = t if acc is None else acc + t
            co = acc + scal_ref[c, OFF_C1B + o]
            p1.append(jnp.maximum(jnp.maximum(co, pltpu.roll(co, sh1, 1)),
                                  pltpu.roll(co, sh2, 1)))
        p1_sh = [(r, pltpu.roll(r, sh1, 1), pltpu.roll(r, sh2, 1)) for r in p1]
        acc = None
        for i in range(3):
            for k in range(3):
                t = scal_ref[c, OFF_C2W + i * 3 + k] * p1_sh[i][k]
                acc = t if acc is None else acc + t
        c2 = acc + scal_ref[c, OFF_C2B]
        pooled = jnp.maximum(jnp.maximum(c2, pltpu.roll(c2, sh1, 1)),
                             pltpu.roll(c2, sh2, 1))                          # valid lanes 0..120

        # fc1 partial product; fc1 weight rows >= 121 are zero, so junk lanes vanish
        h1_acc = h1_acc + jnp.dot(pooled, fc1w_ref[c], preferred_element_type=f32)

    # --- fc1 -> ELU -> fc2 -> ELU -> fc3 (dropout p = 0 is identity) ---
    h1 = _elu(h1_acc)
    h2 = _elu(jnp.dot(h1, fcs_ref[8:40, 0:6], preferred_element_type=f32)
              + fcs_ref[1:2, 0:6])
    o_ref[...] = (jnp.dot(h2, fcs_ref[40:46, 0:2], preferred_element_type=f32)
                  + fcs_ref[2:3, 0:2])


def _fused_forward(scal, xT, src_row, edge_cols, fc1_w, fcs, *, num_nodes):
    kernel = functools.partial(_fused_dgcnn_kernel, num_nodes=num_nodes)
    vspec = pl.BlockSpec(memory_space=pltpu.MemorySpace.VMEM)
    return pl.pallas_call(
        kernel,
        out_shape=jax.ShapeDtypeStruct((1, 2), jnp.float32),
        in_specs=[
            pl.BlockSpec(memory_space=pltpu.MemorySpace.SMEM),   # packed scalar slab
            vspec,                                               # xT (F, Npad)
            vspec,                                               # src row (1, E)
            vspec,                                               # [dst | edge_attr] (E, 1+C)
            vspec,                                               # fc1 weight slab (C, Npad, 32)
            vspec,                                               # small fc slab (48, 32)
        ],
        out_specs=pl.BlockSpec(memory_space=pltpu.MemorySpace.VMEM),
    )(scal, xT, src_row, edge_cols, fc1_w, fcs)


# ----------------------------------- wrapper ---------------------------------------
@jax.jit
def forward(params, x, edge_index, edge_attr):
    n, f = x.shape
    e = edge_attr.shape[0]
    # only trivial layout plumbing stays in XLA: transpose/pad x, reshape the edge list
    xT = jnp.zeros((f, NODES_PAD), jnp.float32).at[:, :n].set(x.T.astype(jnp.float32))
    src_row = edge_index[0].reshape(1, e).astype(jnp.int32)
    edge_cols = jnp.concatenate(
        [edge_index[1].reshape(e, 1).astype(jnp.float32),
         edge_attr.astype(jnp.float32)], axis=1)                 # (E, 1+C)
    return _fused_forward(params["scal"], xT, src_row, edge_cols,
                          params["fc1_w"], params["fcs"], num_nodes=n)


def init_params(key):
    C, F, N, Npad = NUM_EDGE_CHANNELS, NUM_FEATURES, NUM_NODES, NODES_PAD
    d_blk = N - 8                                                # 121 features / channel
    ks = jax.random.split(key, 13)
    gcn_w1 = 0.1 * jax.random.normal(ks[0], (C, F), jnp.float32)             # level-1 W
    gcn_wl = 0.1 * jax.random.normal(ks[1], (C, 4), jnp.float32)             # w2..w5
    gcn_bl = 0.1 * jax.random.normal(ks[2], (C, 5), jnp.float32)             # b1..b5
    conv1_w = 0.1 * jax.random.normal(ks[3], (C, 3, 5, 3), jnp.float32)      # torch (out,in,k)
    conv1_b = 0.1 * jax.random.normal(ks[4], (C, 3), jnp.float32)
    conv2_w = 0.1 * jax.random.normal(ks[5], (C, 1, 3, 3), jnp.float32)
    conv2_b = 0.1 * jax.random.normal(ks[6], (C, 1), jnp.float32)
    scal = jnp.concatenate(
        [gcn_w1, gcn_wl, gcn_bl,
         conv1_w.reshape(C, 45), conv1_b,
         conv2_w.reshape(C, 9), conv2_b], axis=1)
    assert scal.shape == (C, N_SCAL)

    # fc1.weight is torch (32, C*121); store each channel's transposed row block,
    # zero-padded to Npad rows so the kernel uses an aligned K=Npad matmul.
    fc1_w = 0.1 * jax.random.normal(ks[7], (C, d_blk, 32), jnp.float32)
    fc1_w_pad = jnp.zeros((C, Npad, 32), jnp.float32).at[:, :d_blk, :].set(fc1_w)

    fc1_b = 0.1 * jax.random.normal(ks[8], (32,), jnp.float32)
    fc2_w = 0.1 * jax.random.normal(ks[9], (32, 6), jnp.float32)
    fc2_b = 0.1 * jax.random.normal(ks[10], (6,), jnp.float32)
    fc3_w = 0.1 * jax.random.normal(ks[11], (6, 2), jnp.float32)
    fc3_b = 0.1 * jax.random.normal(ks[12], (2,), jnp.float32)
    fcs = jnp.zeros((48, 32), jnp.float32)
    fcs = fcs.at[0, :].set(fc1_b)            # row 0      : fc1 bias
    fcs = fcs.at[1, 0:6].set(fc2_b)          # row 1      : fc2 bias
    fcs = fcs.at[2, 0:2].set(fc3_b)          # row 2      : fc3 bias
    fcs = fcs.at[8:40, 0:6].set(fc2_w)       # rows 8..39 : fc2 weight (32,6)
    fcs = fcs.at[40:46, 0:2].set(fc3_w)      # rows 40..45: fc3 weight (6,2)
    return dict(scal=scal, fc1_w=fc1_w_pad, fcs=fcs)


if __name__ == "__main__":
    key = jax.random.PRNGKey(0)
    k_data, k_param = jax.random.split(key)
    k_x, k_src, k_off, k_attr = jax.random.split(k_data, 4)
    x = jax.random.normal(k_x, (NUM_NODES, NUM_FEATURES), jnp.float32)
    # random edges with no self loops (so A + I matches PyG add_remaining_self_loops)
    src = jax.random.randint(k_src, (NUM_EDGES,), 0, NUM_NODES)
    off = jax.random.randint(k_off, (NUM_EDGES,), 1, NUM_NODES)
    dst = (src + off) % NUM_NODES
    edge_index = jnp.stack([src, dst]).astype(jnp.int32)                     # (2, E)
    edge_attr = jax.random.uniform(k_attr, (NUM_EDGES, NUM_EDGE_CHANNELS),
                                   minval=0.1, maxval=1.0, dtype=jnp.float32)

    params = init_params(k_param)
    out = forward(params, x, edge_index, edge_attr)
    jax.block_until_ready(out)
    assert out.shape == (1, 2) and out.dtype == jnp.float32
    print("KERNEL_OK")
</pallas_src>

<mosaic_0001>
module attributes {stable_mosaic.version = 11 : i64} {
  func.func @_fused_dgcnn_kernel(%arg0: memref<2x71xf32, #tpu.memory_space<smem>>, %arg1: memref<4x256xf32, #tpu.memory_space<vmem>>, %arg2: memref<1x512xi32, #tpu.memory_space<vmem>>, %arg3: memref<512x3xf32, #tpu.memory_space<vmem>>, %arg4: memref<2x256x32xf32, #tpu.memory_space<vmem>>, %arg5: memref<48x32xf32, #tpu.memory_space<vmem>>, %arg6: memref<1x2xf32, #tpu.memory_space<vmem>>) attributes {dimension_semantics = [], scalar_prefetch = 0 : i64, scratch_operands = 0 : i64, tpu.core_type = #tpu.core_type<tc>} {
    %0 = tpu.iota {dimensions = array<i32: 0>} : vector<256x512xi32>
    %c0 = arith.constant 0 : index
    %c0_0 = arith.constant 0 : index
    %1 = vector.load %arg2[%c0, %c0_0] : memref<1x512xi32, #tpu.memory_space<vmem>>, vector<1x512xi32>
    %2 = vector.broadcast %1 : vector<1x512xi32> to vector<256x512xi32>
    %3 = arith.cmpi eq, %0, %2 : vector<256x512xi32>
    %4 = arith.extui %3 : vector<256x512xi1> to vector<256x512xi32>
    %5 = arith.sitofp %4 : vector<256x512xi32> to vector<256x512xf32>
    %6 = tpu.iota {dimensions = array<i32: 1>} : vector<512x256xi32>
    %c0_1 = arith.constant 0 : index
    %c0_2 = arith.constant 0 : index
    %7 = vector.load %arg3[%c0_1, %c0_2] : memref<512x3xf32, #tpu.memory_space<vmem>>, vector<512x1xf32>
    %8 = arith.fptosi %7 : vector<512x1xf32> to vector<512x1xi32>
    %9 = vector.broadcast %8 : vector<512x1xi32> to vector<512x256xi32>
    %10 = arith.cmpi eq, %6, %9 : vector<512x256xi32>
    %11 = tpu.iota {dimensions = array<i32: 0>} : vector<256x256xi32>
    %12 = tpu.iota {dimensions = array<i32: 1>} : vector<256x256xi32>
    %13 = arith.cmpi eq, %11, %12 : vector<256x256xi32>
    %14 = arith.extui %13 : vector<256x256xi1> to vector<256x256xi32>
    %15 = arith.sitofp %14 : vector<256x256xi32> to vector<256x256xf32>
    %16 = arith.cmpi eq, %11, %12 : vector<256x256xi32>
    %c129_i32 = arith.constant 129 : i32
    %17 = vector.broadcast %c129_i32 : i32 to vector<256x256xi32>
    %18 = arith.cmpi slt, %11, %17 : vector<256x256xi32>
    %19 = arith.andi %16, %18 : vector<256x256xi1>
    %cst = arith.constant 1.000000e+00 : f32
    %cst_3 = arith.constant 0.000000e+00 : f32
    %20 = vector.broadcast %cst : f32 to vector<256x256xf32>
    %21 = vector.broadcast %cst_3 : f32 to vector<256x256xf32>
    %22 = arith.select %19, %20, %21 : vector<256x256xi1>, vector<256x256xf32>
    %23 = arith.sitofp %12 : vector<256x256xi32> to vector<256x256xf32>
    %24 = tpu.iota {dimensions = array<i32: 1>} : vector<1x256xi32>
    %c129_i32_4 = arith.constant 129 : i32
    %25 = vector.broadcast %c129_i32_4 : i32 to vector<1x256xi32>
    %26 = arith.cmpi slt, %24, %25 : vector<1x256xi32>
    %c0_5 = arith.constant 0 : index
    %c0_6 = arith.constant 0 : index
    %27 = vector.load %arg5[%c0_5, %c0_6] : memref<48x32xf32, #tpu.memory_space<vmem>>, vector<1x32xf32>
    %c0_7 = arith.constant 0 : index
    %c1 = arith.constant 1 : index
    %28 = vector.load %arg3[%c0_7, %c1] : memref<512x3xf32, #tpu.memory_space<vmem>>, vector<512x1xf32>
    %cst_8 = arith.constant 0.000000e+00 : f32
    %29 = vector.shape_cast %28 : vector<512x1xf32> to vector<512x1xf32>
    %30 = vector.broadcast %29 : vector<512x1xf32> to vector<512x256xf32>
    %31 = vector.broadcast %cst_8 : f32 to vector<512x256xf32>
    %32 = arith.select %10, %30, %31 : vector<512x256xi1>, vector<512x256xf32>
    %cst_9 = arith.constant dense<0.000000e+00> : vector<256x256xf32>
    %33 = tpu.matmul %5, %32, %cst_9 {dimension_numbers = #tpu.dot_dimension_numbers<[1], [0], [0], [1], [0, 0, 1, 1], [], []>} : vector<256x512xf32>, vector<512x256xf32>, vector<256x256xf32> -> vector<256x256xf32>
    %34 = arith.addf %33, %22 : vector<256x256xf32>
    %cst_10 = arith.constant dense<0.000000e+00> : vector<256xf32>
    %35 = vector.multi_reduction <add>, %34, %cst_10 [0] : vector<256x256xf32> to vector<256xf32>
    %36 = vector.shape_cast %35 : vector<256xf32> to vector<1x256xf32>
    %cst_11 = arith.constant 0.000000e+00 : f32
    %37 = vector.broadcast %cst_11 : f32 to vector<1x256xf32>
    %38 = arith.cmpf ogt, %36, %37 : vector<1x256xf32>
    %39 = math.rsqrt %36 : vector<1x256xf32>
    %cst_12 = arith.constant 0.000000e+00 : f32
    %40 = vector.broadcast %cst_12 : f32 to vector<1x256xf32>
    %41 = arith.select %38, %39, %40 : vector<1x256xi1>, vector<1x256xf32>
    %c0_13 = arith.constant 0 : index
    %c0_14 = arith.constant 0 : index
    %42 = memref.load %arg0[%c0_13, %c0_14] : memref<2x71xf32, #tpu.memory_space<smem>>
    %c0_15 = arith.constant 0 : index
    %c0_16 = arith.constant 0 : index
    %43 = vector.load %arg1[%c0_15, %c0_16] : memref<4x256xf32, #tpu.memory_space<vmem>>, vector<1x256xf32>
    %44 = vector.broadcast %42 : f32 to vector<1x256xf32>
    %45 = arith.mulf %44, %43 : vector<1x256xf32>
    %c0_17 = arith.constant 0 : index
    %c1_18 = arith.constant 1 : index
    %46 = memref.load %arg0[%c0_17, %c1_18] : memref<2x71xf32, #tpu.memory_space<smem>>
    %c1_19 = arith.constant 1 : index
    %c0_20 = arith.constant 0 : index
    %47 = vector.load %arg1[%c1_19, %c0_20] : memref<4x256xf32, #tpu.memory_space<vmem>>, vector<1x256xf32>
    %48 = vector.broadcast %46 : f32 to vector<1x256xf32>
    %49 = arith.mulf %48, %47 : vector<1x256xf32>
    %50 = arith.addf %45, %49 : vector<1x256xf32>
    %c0_21 = arith.constant 0 : index
    %c2 = arith.constant 2 : index
    %51 = memref.load %arg0[%c0_21, %c2] : memref<2x71xf32, #tpu.memory_space<smem>>
    %c2_22 = arith.constant 2 : index
    %c0_23 = arith.constant 0 : index
    %52 = vector.load %arg1[%c2_22, %c0_23] : memref<4x256xf32, #tpu.memory_space<vmem>>, vector<1x256xf32>
    %53 = vector.broadcast %51 : f32 to vector<1x256xf32>
    %54 = arith.mulf %53, %52 : vector<1x256xf32>
    %55 = arith.addf %50, %54 : vector<1x256xf32>
    %c0_24 = arith.constant 0 : index
    %c3 = arith.constant 3 : index
    %56 = memref.load %arg0[%c0_24, %c3] : memref<2x71xf32, #tpu.memory_space<smem>>
    %c3_25 = arith.constant 3 : index
    %c0_26 = arith.constant 0 : index
    %57 = vector.load %arg1[%c3_25, %c0_26] : memref<4x256xf32, #tpu.memory_space<vmem>>, vector<1x256xf32>
    %58 = vector.broadcast %56 : f32 to vector<1x256xf32>
    %59 = arith.mulf %58, %57 : vector<1x256xf32>
    %60 = arith.addf %55, %59 : vector<1x256xf32>
    %61 = arith.mulf %60, %41 : vector<1x256xf32>
    %cst_27 = arith.constant dense<0.000000e+00> : vector<1x256xf32>
    %62 = tpu.matmul %61, %34, %cst_27 {dimension_numbers = #tpu.dot_dimension_numbers<[1], [0], [0], [1], [0, 0, 1, 1], [], []>} : vector<1x256xf32>, vector<256x256xf32>, vector<1x256xf32> -> vector<1x256xf32>
    %63 = arith.mulf %62, %41 : vector<1x256xf32>
    %c0_28 = arith.constant 0 : index
    %c8 = arith.constant 8 : index
    %64 = memref.load %arg0[%c0_28, %c8] : memref<2x71xf32, #tpu.memory_space<smem>>
    %65 = vector.broadcast %64 : f32 to vector<1x256xf32>
    %66 = arith.addf %63, %65 : vector<1x256xf32>
    %c0_29 = arith.constant 0 : index
    %c4 = arith.constant 4 : index
    %67 = memref.load %arg0[%c0_29, %c4] : memref<2x71xf32, #tpu.memory_space<smem>>
    %68 = vector.broadcast %67 : f32 to vector<1x256xf32>
    %69 = arith.mulf %66, %68 : vector<1x256xf32>
    %70 = arith.mulf %69, %41 : vector<1x256xf32>
    %cst_30 = arith.constant dense<0.000000e+00> : vector<1x256xf32>
    %71 = tpu.matmul %70, %34, %cst_30 {dimension_numbers = #tpu.dot_dimension_numbers<[1], [0], [0], [1], [0, 0, 1, 1], [], []>} : vector<1x256xf32>, vector<256x256xf32>, vector<1x256xf32> -> vector<1x256xf32>
    %72 = arith.mulf %71, %41 : vector<1x256xf32>
    %c0_31 = arith.constant 0 : index
    %c9 = arith.constant 9 : index
    %73 = memref.load %arg0[%c0_31, %c9] : memref<2x71xf32, #tpu.memory_space<smem>>
    %74 = vector.broadcast %73 : f32 to vector<1x256xf32>
    %75 = arith.addf %72, %74 : vector<1x256xf32>
    %c0_32 = arith.constant 0 : index
    %c5 = arith.constant 5 : index
    %76 = memref.load %arg0[%c0_32, %c5] : memref<2x71xf32, #tpu.memory_space<smem>>
    %77 = vector.broadcast %76 : f32 to vector<1x256xf32>
    %78 = arith.mulf %75, %77 : vector<1x256xf32>
    %79 = arith.mulf %78, %41 : vector<1x256xf32>
    %cst_33 = arith.constant dense<0.000000e+00> : vector<1x256xf32>
    %80 = tpu.matmul %79, %34, %cst_33 {dimension_numbers = #tpu.dot_dimension_numbers<[1], [0], [0], [1], [0, 0, 1, 1], [], []>} : vector<1x256xf32>, vector<256x256xf32>, vector<1x256xf32> -> vector<1x256xf32>
    %81 = arith.mulf %80, %41 : vector<1x256xf32>
    %c0_34 = arith.constant 0 : index
    %c10 = arith.constant 10 : index
    %82 = memref.load %arg0[%c0_34, %c10] : memref<2x71xf32, #tpu.memory_space<smem>>
    %83 = vector.broadcast %82 : f32 to vector<1x256xf32>
    %84 = arith.addf %81, %83 : vector<1x256xf32>
    %c0_35 = arith.constant 0 : index
    %c6 = arith.constant 6 : index
    %85 = memref.load %arg0[%c0_35, %c6] : memref<2x71xf32, #tpu.memory_space<smem>>
    %86 = vector.broadcast %85 : f32 to vector<1x256xf32>
    %87 = arith.mulf %84, %86 : vector<1x256xf32>
    %88 = arith.mulf %87, %41 : vector<1x256xf32>
    %cst_36 = arith.constant dense<0.000000e+00> : vector<1x256xf32>
    %89 = tpu.matmul %88, %34, %cst_36 {dimension_numbers = #tpu.dot_dimension_numbers<[1], [0], [0], [1], [0, 0, 1, 1], [], []>} : vector<1x256xf32>, vector<256x256xf32>, vector<1x256xf32> -> vector<1x256xf32>
    %90 = arith.mulf %89, %41 : vector<1x256xf32>
    %c0_37 = arith.constant 0 : index
    %c11 = arith.constant 11 : index
    %91 = memref.load %arg0[%c0_37, %c11] : memref<2x71xf32, #tpu.memory_space<smem>>
    %92 = vector.broadcast %91 : f32 to vector<1x256xf32>
    %93 = arith.addf %90, %92 : vector<1x256xf32>
    %c0_38 = arith.constant 0 : index
    %c7 = arith.constant 7 : index
    %94 = memref.load %arg0[%c0_38, %c7] : memref<2x71xf32, #tpu.memory_space<smem>>
    %95 = vector.broadcast %94 : f32 to vector<1x256xf32>
    %96 = arith.mulf %93, %95 : vector<1x256xf32>
    %97 = arith.mulf %96, %41 : vector<1x256xf32>
    %cst_39 = arith.constant dense<0.000000e+00> : vector<1x256xf32>
    %98 = tpu.matmul %97, %34, %cst_39 {dimension_numbers = #tpu.dot_dimension_numbers<[1], [0], [0], [1], [0, 0, 1, 1], [], []>} : vector<1x256xf32>, vector<256x256xf32>, vector<1x256xf32> -> vector<1x256xf32>
    %99 = arith.mulf %98, %41 : vector<1x256xf32>
    %c0_40 = arith.constant 0 : index
    %c12 = arith.constant 12 : index
    %100 = memref.load %arg0[%c0_40, %c12] : memref<2x71xf32, #tpu.memory_space<smem>>
    %101 = vector.broadcast %100 : f32 to vector<1x256xf32>
    %102 = arith.addf %99, %101 : vector<1x256xf32>
    %cst_41 = arith.constant -1.000000e+30 : f32
    %103 = vector.broadcast %cst_41 : f32 to vector<1x256xf32>
    %104 = arith.select %26, %102, %103 : vector<1x256xi1>, vector<1x256xf32>
    %105 = vector.shape_cast %104 : vector<1x256xf32> to vector<1x256xf32>
    %106 = vector.broadcast %105 : vector<1x256xf32> to vector<256x256xf32>
    %107 = arith.mulf %106, %15 : vector<256x256xf32>
    %cst_42 = arith.constant dense<0.000000e+00> : vector<256xf32>
    %108 = vector.multi_reduction <add>, %107, %cst_42 [1] : vector<256x256xf32> to vector<256xf32>
    %109 = vector.shape_cast %108 : vector<256xf32> to vector<256x1xf32>
    %110 = vector.broadcast %109 : vector<256x1xf32> to vector<256x256xf32>
    %111 = arith.cmpf ogt, %106, %110 : vector<256x256xf32>
    %112 = vector.broadcast %109 : vector<256x1xf32> to vector<256x256xf32>
    %113 = arith.cmpf oeq, %106, %112 : vector<256x256xf32>
    %114 = arith.cmpi slt, %12, %11 : vector<256x256xi32>
    %115 = arith.andi %113, %114 : vector<256x256xi1>
    %116 = arith.ori %111, %115 : vector<256x256xi1>
    %117 = arith.extui %116 : vector<256x256xi1> to vector<256x256xi32>
    %118 = arith.sitofp %117 : vector<256x256xi32> to vector<256x256xf32>
    %cst_43 = arith.constant dense<0.000000e+00> : vector<256xf32>
    %119 = vector.multi_reduction <add>, %118, %cst_43 [1] : vector<256x256xf32> to vector<256xf32>
    %120 = vector.shape_cast %119 : vector<256xf32> to vector<256x1xf32>
    %121 = vector.broadcast %120 : vector<256x1xf32> to vector<256x256xf32>
    %122 = arith.cmpf oeq, %121, %23 : vector<256x256xf32>
    %123 = arith.extui %122 : vector<256x256xi1> to vector<256x256xi32>
    %124 = arith.sitofp %123 : vector<256x256xi32> to vector<256x256xf32>
    %cst_44 = arith.constant dense<0.000000e+00> : vector<1x256xf32>
    %125 = tpu.matmul %66, %124, %cst_44 {dimension_numbers = #tpu.dot_dimension_numbers<[1], [0], [0], [1], [0, 0, 1, 1], [], []>} : vector<1x256xf32>, vector<256x256xf32>, vector<1x256xf32> -> vector<1x256xf32>
    %cst_45 = arith.constant dense<0.000000e+00> : vector<1x256xf32>
    %126 = tpu.matmul %75, %124, %cst_45 {dimension_numbers = #tpu.dot_dimension_numbers<[1], [0], [0], [1], [0, 0, 1, 1], [], []>} : vector<1x256xf32>, vector<256x256xf32>, vector<1x256xf32> -> vector<1x256xf32>
    %cst_46 = arith.constant dense<0.000000e+00> : vector<1x256xf32>
    %127 = tpu.matmul %84, %124, %cst_46 {dimension_numbers = #tpu.dot_dimension_numbers<[1], [0], [0], [1], [0, 0, 1, 1], [], []>} : vector<1x256xf32>, vector<256x256xf32>, vector<1x256xf32> -> vector<1x256xf32>
    %cst_47 = arith.constant dense<0.000000e+00> : vector<1x256xf32>
    %128 = tpu.matmul %93, %124, %cst_47 {dimension_numbers = #tpu.dot_dimension_numbers<[1], [0], [0], [1], [0, 0, 1, 1], [], []>} : vector<1x256xf32>, vector<256x256xf32>, vector<1x256xf32> -> vector<1x256xf32>
    %cst_48 = arith.constant dense<0.000000e+00> : vector<1x256xf32>
    %129 = tpu.matmul %102, %124, %cst_48 {dimension_numbers = #tpu.dot_dimension_numbers<[1], [0], [0], [1], [0, 0, 1, 1], [], []>} : vector<1x256xf32>, vector<256x256xf32>, vector<1x256xf32> -> vector<1x256xf32>
    %c255_i32 = arith.constant 255 : i32
    %130 = tpu.dynamic_rotate %125 by %c255_i32 dim 1 : vector<1x256xf32>, i32 -> vector<1x256xf32>
    %c254_i32 = arith.constant 254 : i32
    %131 = tpu.dynamic_rotate %125 by %c254_i32 dim 1 : vector<1x256xf32>, i32 -> vector<1x256xf32>
    %c255_i32_49 = arith.constant 255 : i32
    %132 = tpu.dynamic_rotate %126 by %c255_i32_49 dim 1 : vector<1x256xf32>, i32 -> vector<1x256xf32>
    %c254_i32_50 = arith.constant 254 : i32
    %133 = tpu.dynamic_rotate %126 by %c254_i32_50 dim 1 : vector<1x256xf32>, i32 -> vector<1x256xf32>
    %c255_i32_51 = arith.constant 255 : i32
    %134 = tpu.dynamic_rotate %127 by %c255_i32_51 dim 1 : vector<1x256xf32>, i32 -> vector<1x256xf32>
    %c254_i32_52 = arith.constant 254 : i32
    %135 = tpu.dynamic_rotate %127 by %c254_i32_52 dim 1 : vector<1x256xf32>, i32 -> vector<1x256xf32>
    %c255_i32_53 = arith.constant 255 : i32
    %136 = tpu.dynamic_rotate %128 by %c255_i32_53 dim 1 : vector<1x256xf32>, i32 -> vector<1x256xf32>
    %c254_i32_54 = arith.constant 254 : i32
    %137 = tpu.dynamic_rotate %128 by %c254_i32_54 dim 1 : vector<1x256xf32>, i32 -> vector<1x256xf32>
    %c255_i32_55 = arith.constant 255 : i32
    %138 = tpu.dynamic_rotate %129 by %c255_i32_55 dim 1 : vector<1x256xf32>, i32 -> vector<1x256xf32>
    %c254_i32_56 = arith.constant 254 : i32
    %139 = tpu.dynamic_rotate %129 by %c254_i32_56 dim 1 : vector<1x256xf32>, i32 -> vector<1x256xf32>
    %c0_57 = arith.constant 0 : index
    %c13 = arith.constant 13 : index
    %140 = memref.load %arg0[%c0_57, %c13] : memref<2x71xf32, #tpu.memory_space<smem>>
    %141 = vector.broadcast %140 : f32 to vector<1x256xf32>
    %142 = arith.mulf %141, %125 : vector<1x256xf32>
    %c0_58 = arith.constant 0 : index
    %c14 = arith.constant 14 : index
    %143 = memref.load %arg0[%c0_58, %c14] : memref<2x71xf32, #tpu.memory_space<smem>>
    %144 = vector.broadcast %143 : f32 to vector<1x256xf32>
    %145 = arith.mulf %144, %130 : vector<1x256xf32>
    %146 = arith.addf %142, %145 : vector<1x256xf32>
    %c0_59 = arith.constant 0 : index
    %c15 = arith.constant 15 : index
    %147 = memref.load %arg0[%c0_59, %c15] : memref<2x71xf32, #tpu.memory_space<smem>>
    %148 = vector.broadcast %147 : f32 to vector<1x256xf32>
    %149 = arith.mulf %148, %131 : vector<1x256xf32>
    %150 = arith.addf %146, %149 : vector<1x256xf32>
    %c0_60 = arith.constant 0 : index
    %c16 = arith.constant 16 : index
    %151 = memref.load %arg0[%c0_60, %c16] : memref<2x71xf32, #tpu.memory_space<smem>>
    %152 = vector.broadcast %151 : f32 to vector<1x256xf32>
    %153 = arith.mulf %152, %126 : vector<1x256xf32>
    %154 = arith.addf %150, %153 : vector<1x256xf32>
    %c0_61 = arith.constant 0 : index
    %c17 = arith.constant 17 : index
    %155 = memref.load %arg0[%c0_61, %c17] : memref<2x71xf32, #tpu.memory_space<smem>>
    %156 = vector.broadcast %155 : f32 to vector<1x256xf32>
    %157 = arith.mulf %156, %132 : vector<1x256xf32>
    %158 = arith.addf %154, %157 : vector<1x256xf32>
    %c0_62 = arith.constant 0 : index
    %c18 = arith.constant 18 : index
    %159 = memref.load %arg0[%c0_62, %c18] : memref<2x71xf32, #tpu.memory_space<smem>>
    %160 = vector.broadcast %159 : f32 to vector<1x256xf32>
    %161 = arith.mulf %160, %133 : vector<1x256xf32>
    %162 = arith.addf %158, %161 : vector<1x256xf32>
    %c0_63 = arith.constant 0 : index
    %c19 = arith.constant 19 : index
    %163 = memref.load %arg0[%c0_63, %c19] : memref<2x71xf32, #tpu.memory_space<smem>>
    %164 = vector.broadcast %163 : f32 to vector<1x256xf32>
    %165 = arith.mulf %164, %127 : vector<1x256xf32>
    %166 = arith.addf %162, %165 : vector<1x256xf32>
    %c0_64 = arith.constant 0 : index
    %c20 = arith.constant 20 : index
    %167 = memref.load %arg0[%c0_64, %c20] : memref<2x71xf32, #tpu.memory_space<smem>>
    %168 = vector.broadcast %167 : f32 to vector<1x256xf32>
    %169 = arith.mulf %168, %134 : vector<1x256xf32>
    %170 = arith.addf %166, %169 : vector<1x256xf32>
    %c0_65 = arith.constant 0 : index
    %c21 = arith.constant 21 : index
    %171 = memref.load %arg0[%c0_65, %c21] : memref<2x71xf32, #tpu.memory_space<smem>>
    %172 = vector.broadcast %171 : f32 to vector<1x256xf32>
    %173 = arith.mulf %172, %135 : vector<1x256xf32>
    %174 = arith.addf %170, %173 : vector<1x256xf32>
    %c0_66 = arith.constant 0 : index
    %c22 = arith.constant 22 : index
    %175 = memref.load %arg0[%c0_66, %c22] : memref<2x71xf32, #tpu.memory_space<smem>>
    %176 = vector.broadcast %175 : f32 to vector<1x256xf32>
    %177 = arith.mulf %176, %128 : vector<1x256xf32>
    %178 = arith.addf %174, %177 : vector<1x256xf32>
    %c0_67 = arith.constant 0 : index
    %c23 = arith.constant 23 : index
    %179 = memref.load %arg0[%c0_67, %c23] : memref<2x71xf32, #tpu.memory_space<smem>>
    %180 = vector.broadcast %179 : f32 to vector<1x256xf32>
    %181 = arith.mulf %180, %136 : vector<1x256xf32>
    %182 = arith.addf %178, %181 : vector<1x256xf32>
    %c0_68 = arith.constant 0 : index
    %c24 = arith.constant 24 : index
    %183 = memref.load %arg0[%c0_68, %c24] : memref<2x71xf32, #tpu.memory_space<smem>>
    %184 = vector.broadcast %183 : f32 to vector<1x256xf32>
    %185 = arith.mulf %184, %137 : vector<1x256xf32>
    %186 = arith.addf %182, %185 : vector<1x256xf32>
    %c0_69 = arith.constant 0 : index
    %c25 = arith.constant 25 : index
    %187 = memref.load %arg0[%c0_69, %c25] : memref<2x71xf32, #tpu.memory_space<smem>>
    %188 = vector.broadcast %187 : f32 to vector<1x256xf32>
    %189 = arith.mulf %188, %129 : vector<1x256xf32>
    %190 = arith.addf %186, %189 : vector<1x256xf32>
    %c0_70 = arith.constant 0 : index
    %c26 = arith.constant 26 : index
    %191 = memref.load %arg0[%c0_70, %c26] : memref<2x71xf32, #tpu.memory_space<smem>>
    %192 = vector.broadcast %191 : f32 to vector<1x256xf32>
    %193 = arith.mulf %192, %138 : vector<1x256xf32>
    %194 = arith.addf %190, %193 : vector<1x256xf32>
    %c0_71 = arith.constant 0 : index
    %c27 = arith.constant 27 : index
    %195 = memref.load %arg0[%c0_71, %c27] : memref<2x71xf32, #tpu.memory_space<smem>>
    %196 = vector.broadcast %195 : f32 to vector<1x256xf32>
    %197 = arith.mulf %196, %139 : vector<1x256xf32>
    %198 = arith.addf %194, %197 : vector<1x256xf32>
    %c0_72 = arith.constant 0 : index
    %c58 = arith.constant 58 : index
    %199 = memref.load %arg0[%c0_72, %c58] : memref<2x71xf32, #tpu.memory_space<smem>>
    %200 = vector.broadcast %199 : f32 to vector<1x256xf32>
    %201 = arith.addf %198, %200 : vector<1x256xf32>
    %c255_i32_73 = arith.constant 255 : i32
    %202 = tpu.dynamic_rotate %201 by %c255_i32_73 dim 1 : vector<1x256xf32>, i32 -> vector<1x256xf32>
    %203 = arith.maximumf %201, %202 : vector<1x256xf32>
    %c254_i32_74 = arith.constant 254 : i32
    %204 = tpu.dynamic_rotate %201 by %c254_i32_74 dim 1 : vector<1x256xf32>, i32 -> vector<1x256xf32>
    %205 = arith.maximumf %203, %204 : vector<1x256xf32>
    %c0_75 = arith.constant 0 : index
    %c28 = arith.constant 28 : index
    %206 = memref.load %arg0[%c0_75, %c28] : memref<2x71xf32, #tpu.memory_space<smem>>
    %207 = vector.broadcast %206 : f32 to vector<1x256xf32>
    %208 = arith.mulf %207, %125 : vector<1x256xf32>
    %c0_76 = arith.constant 0 : index
    %c29 = arith.constant 29 : index
    %209 = memref.load %arg0[%c0_76, %c29] : memref<2x71xf32, #tpu.memory_space<smem>>
    %210 = vector.broadcast %209 : f32 to vector<1x256xf32>
    %211 = arith.mulf %210, %130 : vector<1x256xf32>
    %212 = arith.addf %208, %211 : vector<1x256xf32>
    %c0_77 = arith.constant 0 : index
    %c30 = arith.constant 30 : index
    %213 = memref.load %arg0[%c0_77, %c30] : memref<2x71xf32, #tpu.memory_space<smem>>
    %214 = vector.broadcast %213 : f32 to vector<1x256xf32>
    %215 = arith.mulf %214, %131 : vector<1x256xf32>
    %216 = arith.addf %212, %215 : vector<1x256xf32>
    %c0_78 = arith.constant 0 : index
    %c31 = arith.constant 31 : index
    %217 = memref.load %arg0[%c0_78, %c31] : memref<2x71xf32, #tpu.memory_space<smem>>
    %218 = vector.broadcast %217 : f32 to vector<1x256xf32>
    %219 = arith.mulf %218, %126 : vector<1x256xf32>
    %220 = arith.addf %216, %219 : vector<1x256xf32>
    %c0_79 = arith.constant 0 : index
    %c32 = arith.constant 32 : index
    %221 = memref.load %arg0[%c0_79, %c32] : memref<2x71xf32, #tpu.memory_space<smem>>
    %222 = vector.broadcast %221 : f32 to vector<1x256xf32>
    %223 = arith.mulf %222, %132 : vector<1x256xf32>
    %224 = arith.addf %220, %223 : vector<1x256xf32>
    %c0_80 = arith.constant 0 : index
    %c33 = arith.constant 33 : index
    %225 = memref.load %arg0[%c0_80, %c33] : memref<2x71xf32, #tpu.memory_space<smem>>
    %226 = vector.broadcast %225 : f32 to vector<1x256xf32>
    %227 = arith.mulf %226, %133 : vector<1x256xf32>
    %228 = arith.addf %224, %227 : vector<1x256xf32>
    %c0_81 = arith.constant 0 : index
    %c34 = arith.constant 34 : index
    %229 = memref.load %arg0[%c0_81, %c34] : memref<2x71xf32, #tpu.memory_space<smem>>
    %230 = vector.broadcast %229 : f32 to vector<1x256xf32>
    %231 = arith.mulf %230, %127 : vector<1x256xf32>
    %232 = arith.addf %228, %231 : vector<1x256xf32>
    %c0_82 = arith.constant 0 : index
    %c35 = arith.constant 35 : index
    %233 = memref.load %arg0[%c0_82, %c35] : memref<2x71xf32, #tpu.memory_space<smem>>
    %234 = vector.broadcast %233 : f32 to vector<1x256xf32>
    %235 = arith.mulf %234, %134 : vector<1x256xf32>
    %236 = arith.addf %232, %235 : vector<1x256xf32>
    %c0_83 = arith.constant 0 : index
    %c36 = arith.constant 36 : index
    %237 = memref.load %arg0[%c0_83, %c36] : memref<2x71xf32, #tpu.memory_space<smem>>
    %238 = vector.broadcast %237 : f32 to vector<1x256xf32>
    %239 = arith.mulf %238, %135 : vector<1x256xf32>
    %240 = arith.addf %236, %239 : vector<1x256xf32>
    %c0_84 = arith.constant 0 : index
    %c37 = arith.constant 37 : index
    %241 = memref.load %arg0[%c0_84, %c37] : memref<2x71xf32, #tpu.memory_space<smem>>
    %242 = vector.broadcast %241 : f32 to vector<1x256xf32>
    %243 = arith.mulf %242, %128 : vector<1x256xf32>
    %244 = arith.addf %240, %243 : vector<1x256xf32>
    %c0_85 = arith.constant 0 : index
    %c38 = arith.constant 38 : index
    %245 = memref.load %arg0[%c0_85, %c38] : memref<2x71xf32, #tpu.memory_space<smem>>
    %246 = vector.broadcast %245 : f32 to vector<1x256xf32>
    %247 = arith.mulf %246, %136 : vector<1x256xf32>
    %248 = arith.addf %244, %247 : vector<1x256xf32>
    %c0_86 = arith.constant 0 : index
    %c39 = arith.constant 39 : index
    %249 = memref.load %arg0[%c0_86, %c39] : memref<2x71xf32, #tpu.memory_space<smem>>
    %250 = vector.broadcast %249 : f32 to vector<1x256xf32>
    %251 = arith.mulf %250, %137 : vector<1x256xf32>
    %252 = arith.addf %248, %251 : vector<1x256xf32>
    %c0_87 = arith.constant 0 : index
    %c40 = arith.constant 40 : index
    %253 = memref.load %arg0[%c0_87, %c40] : memref<2x71xf32, #tpu.memory_space<smem>>
    %254 = vector.broadcast %253 : f32 to vector<1x256xf32>
    %255 = arith.mulf %254, %129 : vector<1x256xf32>
    %256 = arith.addf %252, %255 : vector<1x256xf32>
    %c0_88 = arith.constant 0 : index
    %c41 = arith.constant 41 : index
    %257 = memref.load %arg0[%c0_88, %c41] : memref<2x71xf32, #tpu.memory_space<smem>>
    %258 = vector.broadcast %257 : f32 to vector<1x256xf32>
    %259 = arith.mulf %258, %138 : vector<1x256xf32>
    %260 = arith.addf %256, %259 : vector<1x256xf32>
    %c0_89 = arith.constant 0 : index
    %c42 = arith.constant 42 : index
    %261 = memref.load %arg0[%c0_89, %c42] : memref<2x71xf32, #tpu.memory_space<smem>>
    %262 = vector.broadcast %261 : f32 to vector<1x256xf32>
    %263 = arith.mulf %262, %139 : vector<1x256xf32>
    %264 = arith.addf %260, %263 : vector<1x256xf32>
    %c0_90 = arith.constant 0 : index
    %c59 = arith.constant 59 : index
    %265 = memref.load %arg0[%c0_90, %c59] : memref<2x71xf32, #tpu.memory_space<smem>>
    %266 = vector.broadcast %265 : f32 to vector<1x256xf32>
    %267 = arith.addf %264, %266 : vector<1x256xf32>
    %c255_i32_91 = arith.constant 255 : i32
    %268 = tpu.dynamic_rotate %267 by %c255_i32_91 dim 1 : vector<1x256xf32>, i32 -> vector<1x256xf32>
    %269 = arith.maximumf %267, %268 : vector<1x256xf32>
    %c254_i32_92 = arith.constant 254 : i32
    %270 = tpu.dynamic_rotate %267 by %c254_i32_92 dim 1 : vector<1x256xf32>, i32 -> vector<1x256xf32>
    %271 = arith.maximumf %269, %270 : vector<1x256xf32>
    %c0_93 = arith.constant 0 : index
    %c43 = arith.constant 43 : index
    %272 = memref.load %arg0[%c0_93, %c43] : memref<2x71xf32, #tpu.memory_space<smem>>
    %273 = vector.broadcast %272 : f32 to vector<1x256xf32>
    %274 = arith.mulf %273, %125 : vector<1x256xf32>
    %c0_94 = arith.constant 0 : index
    %c44 = arith.constant 44 : index
    %275 = memref.load %arg0[%c0_94, %c44] : memref<2x71xf32, #tpu.memory_space<smem>>
    %276 = vector.broadcast %275 : f32 to vector<1x256xf32>
    %277 = arith.mulf %276, %130 : vector<1x256xf32>
    %278 = arith.addf %274, %277 : vector<1x256xf32>
    %c0_95 = arith.constant 0 : index
    %c45 = arith.constant 45 : index
    %279 = memref.load %arg0[%c0_95, %c45] : memref<2x71xf32, #tpu.memory_space<smem>>
    %280 = vector.broadcast %279 : f32 to vector<1x256xf32>
    %281 = arith.mulf %280, %131 : vector<1x256xf32>
    %282 = arith.addf %278, %281 : vector<1x256xf32>
    %c0_96 = arith.constant 0 : index
    %c46 = arith.constant 46 : index
    %283 = memref.load %arg0[%c0_96, %c46] : memref<2x71xf32, #tpu.memory_space<smem>>
    %284 = vector.broadcast %283 : f32 to vector<1x256xf32>
    %285 = arith.mulf %284, %126 : vector<1x256xf32>
    %286 = arith.addf %282, %285 : vector<1x256xf32>
    %c0_97 = arith.constant 0 : index
    %c47 = arith.constant 47 : index
    %287 = memref.load %arg0[%c0_97, %c47] : memref<2x71xf32, #tpu.memory_space<smem>>
    %288 = vector.broadcast %287 : f32 to vector<1x256xf32>
    %289 = arith.mulf %288, %132 : vector<1x256xf32>
    %290 = arith.addf %286, %289 : vector<1x256xf32>
    %c0_98 = arith.constant 0 : index
    %c48 = arith.constant 48 : index
    %291 = memref.load %arg0[%c0_98, %c48] : memref<2x71xf32, #tpu.memory_space<smem>>
    %292 = vector.broadcast %291 : f32 to vector<1x256xf32>
    %293 = arith.mulf %292, %133 : vector<1x256xf32>
    %294 = arith.addf %290, %293 : vector<1x256xf32>
    %c0_99 = arith.constant 0 : index
    %c49 = arith.constant 49 : index
    %295 = memref.load %arg0[%c0_99, %c49] : memref<2x71xf32, #tpu.memory_space<smem>>
    %296 = vector.broadcast %295 : f32 to vector<1x256xf32>
    %297 = arith.mulf %296, %127 : vector<1x256xf32>
    %298 = arith.addf %294, %297 : vector<1x256xf32>
    %c0_100 = arith.constant 0 : index
    %c50 = arith.constant 50 : index
    %299 = memref.load %arg0[%c0_100, %c50] : memref<2x71xf32, #tpu.memory_space<smem>>
    %300 = vector.broadcast %299 : f32 to vector<1x256xf32>
    %301 = arith.mulf %300, %134 : vector<1x256xf32>
    %302 = arith.addf %298, %301 : vector<1x256xf32>
    %c0_101 = arith.constant 0 : index
    %c51 = arith.constant 51 : index
    %303 = memref.load %arg0[%c0_101, %c51] : memref<2x71xf32, #tpu.memory_space<smem>>
    %304 = vector.broadcast %303 : f32 to vector<1x256xf32>
    %305 = arith.mulf %304, %135 : vector<1x256xf32>
    %306 = arith.addf %302, %305 : vector<1x256xf32>
    %c0_102 = arith.constant 0 : index
    %c52 = arith.constant 52 : index
    %307 = memref.load %arg0[%c0_102, %c52] : memref<2x71xf32, #tpu.memory_space<smem>>
    %308 = vector.broadcast %307 : f32 to vector<1x256xf32>
    %309 = arith.mulf %308, %128 : vector<1x256xf32>
    %310 = arith.addf %306, %309 : vector<1x256xf32>
    %c0_103 = arith.constant 0 : index
    %c53 = arith.constant 53 : index
    %311 = memref.load %arg0[%c0_103, %c53] : memref<2x71xf32, #tpu.memory_space<smem>>
    %312 = vector.broadcast %311 : f32 to vector<1x256xf32>
    %313 = arith.mulf %312, %136 : vector<1x256xf32>
    %314 = arith.addf %310, %313 : vector<1x256xf32>
    %c0_104 = arith.constant 0 : index
    %c54 = arith.constant 54 : index
    %315 = memref.load %arg0[%c0_104, %c54] : memref<2x71xf32, #tpu.memory_space<smem>>
    %316 = vector.broadcast %315 : f32 to vector<1x256xf32>
    %317 = arith.mulf %316, %137 : vector<1x256xf32>
    %318 = arith.addf %314, %317 : vector<1x256xf32>
    %c0_105 = arith.constant 0 : index
    %c55 = arith.constant 55 : index
    %319 = memref.load %arg0[%c0_105, %c55] : memref<2x71xf32, #tpu.memory_space<smem>>
    %320 = vector.broadcast %319 : f32 to vector<1x256xf32>
    %321 = arith.mulf %320, %129 : vector<1x256xf32>
    %322 = arith.addf %318, %321 : vector<1x256xf32>
    %c0_106 = arith.constant 0 : index
    %c56 = arith.constant 56 : index
    %323 = memref.load %arg0[%c0_106, %c56] : memref<2x71xf32, #tpu.memory_space<smem>>
    %324 = vector.broadcast %323 : f32 to vector<1x256xf32>
    %325 = arith.mulf %324, %138 : vector<1x256xf32>
    %326 = arith.addf %322, %325 : vector<1x256xf32>
    %c0_107 = arith.constant 0 : index
    %c57 = arith.constant 57 : index
    %327 = memref.load %arg0[%c0_107, %c57] : memref<2x71xf32, #tpu.memory_space<smem>>
    %328 = vector.broadcast %327 : f32 to vector<1x256xf32>
    %329 = arith.mulf %328, %139 : vector<1x256xf32>
    %330 = arith.addf %326, %329 : vector<1x256xf32>
    %c0_108 = arith.constant 0 : index
    %c60 = arith.constant 60 : index
    %331 = memref.load %arg0[%c0_108, %c60] : memref<2x71xf32, #tpu.memory_space<smem>>
    %332 = vector.broadcast %331 : f32 to vector<1x256xf32>
    %333 = arith.addf %330, %332 : vector<1x256xf32>
    %c255_i32_109 = arith.constant 255 : i32
    %334 = tpu.dynamic_rotate %333 by %c255_i32_109 dim 1 : vector<1x256xf32>, i32 -> vector<1x256xf32>
    %335 = arith.maximumf %333, %334 : vector<1x256xf32>
    %c254_i32_110 = arith.constant 254 : i32
    %336 = tpu.dynamic_rotate %333 by %c254_i32_110 dim 1 : vector<1x256xf32>, i32 -> vector<1x256xf32>
    %337 = arith.maximumf %335, %336 : vector<1x256xf32>
    %c255_i32_111 = arith.constant 255 : i32
    %338 = tpu.dynamic_rotate %205 by %c255_i32_111 dim 1 : vector<1x256xf32>, i32 -> vector<1x256xf32>
    %c254_i32_112 = arith.constant 254 : i32
    %339 = tpu.dynamic_rotate %205 by %c254_i32_112 dim 1 : vector<1x256xf32>, i32 -> vector<1x256xf32>
    %c255_i32_113 = arith.constant 255 : i32
    %340 = tpu.dynamic_rotate %271 by %c255_i32_113 dim 1 : vector<1x256xf32>, i32 -> vector<1x256xf32>
    %c254_i32_114 = arith.constant 254 : i32
    %341 = tpu.dynamic_rotate %271 by %c254_i32_114 dim 1 : vector<1x256xf32>, i32 -> vector<1x256xf32>
    %c255_i32_115 = arith.constant 255 : i32
    %342 = tpu.dynamic_rotate %337 by %c255_i32_115 dim 1 : vector<1x256xf32>, i32 -> vector<1x256xf32>
    %c254_i32_116 = arith.constant 254 : i32
    %343 = tpu.dynamic_rotate %337 by %c254_i32_116 dim 1 : vector<1x256xf32>, i32 -> vector<1x256xf32>
    %c0_117 = arith.constant 0 : index
    %c61 = arith.constant 61 : index
    %344 = memref.load %arg0[%c0_117, %c61] : memref<2x71xf32, #tpu.memory_space<smem>>
    %345 = vector.broadcast %344 : f32 to vector<1x256xf32>
    %346 = arith.mulf %345, %205 : vector<1x256xf32>
    %c0_118 = arith.constant 0 : index
    %c62 = arith.constant 62 : index
    %347 = memref.load %arg0[%c0_118, %c62] : memref<2x71xf32, #tpu.memory_space<smem>>
    %348 = vector.broadcast %347 : f32 to vector<1x256xf32>
    %349 = arith.mulf %348, %338 : vector<1x256xf32>
    %350 = arith.addf %346, %349 : vector<1x256xf32>
    %c0_119 = arith.constant 0 : index
    %c63 = arith.constant 63 : index
    %351 = memref.load %arg0[%c0_119, %c63] : memref<2x71xf32, #tpu.memory_space<smem>>
    %352 = vector.broadcast %351 : f32 to vector<1x256xf32>
    %353 = arith.mulf %352, %339 : vector<1x256xf32>
    %354 = arith.addf %350, %353 : vector<1x256xf32>
    %c0_120 = arith.constant 0 : index
    %c64 = arith.constant 64 : index
    %355 = memref.load %arg0[%c0_120, %c64] : memref<2x71xf32, #tpu.memory_space<smem>>
    %356 = vector.broadcast %355 : f32 to vector<1x256xf32>
    %357 = arith.mulf %356, %271 : vector<1x256xf32>
    %358 = arith.addf %354, %357 : vector<1x256xf32>
    %c0_121 = arith.constant 0 : index
    %c65 = arith.constant 65 : index
    %359 = memref.load %arg0[%c0_121, %c65] : memref<2x71xf32, #tpu.memory_space<smem>>
    %360 = vector.broadcast %359 : f32 to vector<1x256xf32>
    %361 = arith.mulf %360, %340 : vector<1x256xf32>
    %362 = arith.addf %358, %361 : vector<1x256xf32>
    %c0_122 = arith.constant 0 : index
    %c66 = arith.constant 66 : index
    %363 = memref.load %arg0[%c0_122, %c66] : memref<2x71xf32, #tpu.memory_space<smem>>
    %364 = vector.broadcast %363 : f32 to vector<1x256xf32>
    %365 = arith.mulf %364, %341 : vector<1x256xf32>
    %366 = arith.addf %362, %365 : vector<1x256xf32>
    %c0_123 = arith.constant 0 : index
    %c67 = arith.constant 67 : index
    %367 = memref.load %arg0[%c0_123, %c67] : memref<2x71xf32, #tpu.memory_space<smem>>
    %368 = vector.broadcast %367 : f32 to vector<1x256xf32>
    %369 = arith.mulf %368, %337 : vector<1x256xf32>
    %370 = arith.addf %366, %369 : vector<1x256xf32>
    %c0_124 = arith.constant 0 : index
    %c68 = arith.constant 68 : index
    %371 = memref.load %arg0[%c0_124, %c68] : memref<2x71xf32, #tpu.memory_space<smem>>
    %372 = vector.broadcast %371 : f32 to vector<1x256xf32>
    %373 = arith.mulf %372, %342 : vector<1x256xf32>
    %374 = arith.addf %370, %373 : vector<1x256xf32>
    %c0_125 = arith.constant 0 : index
    %c69 = arith.constant 69 : index
    %375 = memref.load %arg0[%c0_125, %c69] : memref<2x71xf32, #tpu.memory_space<smem>>
    %376 = vector.broadcast %375 : f32 to vector<1x256xf32>
    %377 = arith.mulf %376, %343 : vector<1x256xf32>
    %378 = arith.addf %374, %377 : vector<1x256xf32>
    %c0_126 = arith.constant 0 : index
    %c70 = arith.constant 70 : index
    %379 = memref.load %arg0[%c0_126, %c70] : memref<2x71xf32, #tpu.memory_space<smem>>
    %380 = vector.broadcast %379 : f32 to vector<1x256xf32>
    %381 = arith.addf %378, %380 : vector<1x256xf32>
    %c255_i32_127 = arith.constant 255 : i32
    %382 = tpu.dynamic_rotate %381 by %c255_i32_127 dim 1 : vector<1x256xf32>, i32 -> vector<1x256xf32>
    %383 = arith.maximumf %381, %382 : vector<1x256xf32>
    %c254_i32_128 = arith.constant 254 : i32
    %384 = tpu.dynamic_rotate %381 by %c254_i32_128 dim 1 : vector<1x256xf32>, i32 -> vector<1x256xf32>
    %385 = arith.maximumf %383, %384 : vector<1x256xf32>
    %c0_129 = arith.constant 0 : index
    %c0_130 = arith.constant 0 : index
    %c0_131 = arith.constant 0 : index
    %386 = vector.load %arg4[%c0_129, %c0_130, %c0_131] : memref<2x256x32xf32, #tpu.memory_space<vmem>>, vector<1x256x32xf32>
    %387 = vector.shape_cast %386 : vector<1x256x32xf32> to vector<256x32xf32>
    %cst_132 = arith.constant dense<0.000000e+00> : vector<1x32xf32>
    %388 = tpu.matmul %385, %387, %cst_132 {dimension_numbers = #tpu.dot_dimension_numbers<[1], [0], [0], [1], [0, 0, 1, 1], [], []>} : vector<1x256xf32>, vector<256x32xf32>, vector<1x32xf32> -> vector<1x32xf32>
    %389 = arith.addf %27, %388 : vector<1x32xf32>
    %c0_133 = arith.constant 0 : index
    %c2_134 = arith.constant 2 : index
    %390 = vector.load %arg3[%c0_133, %c2_134] : memref<512x3xf32, #tpu.memory_space<vmem>>, vector<512x1xf32>
    %cst_135 = arith.constant 0.000000e+00 : f32
    %391 = vector.shape_cast %390 : vector<512x1xf32> to vector<512x1xf32>
    %392 = vector.broadcast %391 : vector<512x1xf32> to vector<512x256xf32>
    %393 = vector.broadcast %cst_135 : f32 to vector<512x256xf32>
    %394 = arith.select %10, %392, %393 : vector<512x256xi1>, vector<512x256xf32>
    %cst_136 = arith.constant dense<0.000000e+00> : vector<256x256xf32>
    %395 = tpu.matmul %5, %394, %cst_136 {dimension_numbers = #tpu.dot_dimension_numbers<[1], [0], [0], [1], [0, 0, 1, 1], [], []>} : vector<256x512xf32>, vector<512x256xf32>, vector<256x256xf32> -> vector<256x256xf32>
    %396 = arith.addf %395, %22 : vector<256x256xf32>
    %cst_137 = arith.constant dense<0.000000e+00> : vector<256xf32>
    %397 = vector.multi_reduction <add>, %396, %cst_137 [0] : vector<256x256xf32> to vector<256xf32>
    %398 = vector.shape_cast %397 : vector<256xf32> to vector<1x256xf32>
    %cst_138 = arith.constant 0.000000e+00 : f32
    %399 = vector.broadcast %cst_138 : f32 to vector<1x256xf32>
    %400 = arith.cmpf ogt, %398, %399 : vector<1x256xf32>
    %401 = math.rsqrt %398 : vector<1x256xf32>
    %cst_139 = arith.constant 0.000000e+00 : f32
    %402 = vector.broadcast %cst_139 : f32 to vector<1x256xf32>
    %403 = arith.select %400, %401, %402 : vector<1x256xi1>, vector<1x256xf32>
    %c1_140 = arith.constant 1 : index
    %c0_141 = arith.constant 0 : index
    %404 = memref.load %arg0[%c1_140, %c0_141] : memref<2x71xf32, #tpu.memory_space<smem>>
    %c0_142 = arith.constant 0 : index
    %c0_143 = arith.constant 0 : index
    %405 = vector.load %arg1[%c0_142, %c0_143] : memref<4x256xf32, #tpu.memory_space<vmem>>, vector<1x256xf32>
    %406 = vector.broadcast %404 : f32 to vector<1x256xf32>
    %407 = arith.mulf %406, %405 : vector<1x256xf32>
    %c1_144 = arith.constant 1 : index
    %c1_145 = arith.constant 1 : index
    %408 = memref.load %arg0[%c1_144, %c1_145] : memref<2x71xf32, #tpu.memory_space<smem>>
    %c1_146 = arith.constant 1 : index
    %c0_147 = arith.constant 0 : index
    %409 = vector.load %arg1[%c1_146, %c0_147] : memref<4x256xf32, #tpu.memory_space<vmem>>, vector<1x256xf32>
    %410 = vector.broadcast %408 : f32 to vector<1x256xf32>
    %411 = arith.mulf %410, %409 : vector<1x256xf32>
    %412 = arith.addf %407, %411 : vector<1x256xf32>
    %c1_148 = arith.constant 1 : index
    %c2_149 = arith.constant 2 : index
    %413 = memref.load %arg0[%c1_148, %c2_149] : memref<2x71xf32, #tpu.memory_space<smem>>
    %c2_150 = arith.constant 2 : index
    %c0_151 = arith.constant 0 : index
    %414 = vector.load %arg1[%c2_150, %c0_151] : memref<4x256xf32, #tpu.memory_space<vmem>>, vector<1x256xf32>
    %415 = vector.broadcast %413 : f32 to vector<1x256xf32>
    %416 = arith.mulf %415, %414 : vector<1x256xf32>
    %417 = arith.addf %412, %416 : vector<1x256xf32>
    %c1_152 = arith.constant 1 : index
    %c3_153 = arith.constant 3 : index
    %418 = memref.load %arg0[%c1_152, %c3_153] : memref<2x71xf32, #tpu.memory_space<smem>>
    %c3_154 = arith.constant 3 : index
    %c0_155 = arith.constant 0 : index
    %419 = vector.load %arg1[%c3_154, %c0_155] : memref<4x256xf32, #tpu.memory_space<vmem>>, vector<1x256xf32>
    %420 = vector.broadcast %418 : f32 to vector<1x256xf32>
    %421 = arith.mulf %420, %419 : vector<1x256xf32>
    %422 = arith.addf %417, %421 : vector<1x256xf32>
    %423 = arith.mulf %422, %403 : vector<1x256xf32>
    %cst_156 = arith.constant dense<0.000000e+00> : vector<1x256xf32>
    %424 = tpu.matmul %423, %396, %cst_156 {dimension_numbers = #tpu.dot_dimension_numbers<[1], [0], [0], [1], [0, 0, 1, 1], [], []>} : vector<1x256xf32>, vector<256x256xf32>, vector<1x256xf32> -> vector<1x256xf32>
    %425 = arith.mulf %424, %403 : vector<1x256xf32>
    %c1_157 = arith.constant 1 : index
    %c8_158 = arith.constant 8 : index
    %426 = memref.load %arg0[%c1_157, %c8_158] : memref<2x71xf32, #tpu.memory_space<smem>>
    %427 = vector.broadcast %426 : f32 to vector<1x256xf32>
    %428 = arith.addf %425, %427 : vector<1x256xf32>
    %c1_159 = arith.constant 1 : index
    %c4_160 = arith.constant 4 : index
    %429 = memref.load %arg0[%c1_159, %c4_160] : memref<2x71xf32, #tpu.memory_space<smem>>
    %430 = vector.broadcast %429 : f32 to vector<1x256xf32>
    %431 = arith.mulf %428, %430 : vector<1x256xf32>
    %432 = arith.mulf %431, %403 : vector<1x256xf32>
    %cst_161 = arith.constant dense<0.000000e+00> : vector<1x256xf32>
    %433 = tpu.matmul %432, %396, %cst_161 {dimension_numbers = #tpu.dot_dimension_numbers<[1], [0], [0], [1], [0, 0, 1, 1], [], []>} : vector<1x256xf32>, vector<256x256xf32>, vector<1x256xf32> -> vector<1x256xf32>
    %434 = arith.mulf %433, %403 : vector<1x256xf32>
    %c1_162 = arith.constant 1 : index
    %c9_163 = arith.constant 9 : index
    %435 = memref.load %arg0[%c1_162, %c9_163] : memref<2x71xf32, #tpu.memory_space<smem>>
    %436 = vector.broadcast %435 : f32 to vector<1x256xf32>
    %437 = arith.addf %434, %436 : vector<1x256xf32>
    %c1_164 = arith.constant 1 : index
    %c5_165 = arith.constant 5 : index
    %438 = memref.load %arg0[%c1_164, %c5_165] : memref<2x71xf32, #tpu.memory_space<smem>>
    %439 = vector.broadcast %438 : f32 to vector<1x256xf32>
    %440 = arith.mulf %437, %439 : vector<1x256xf32>
    %441 = arith.mulf %440, %403 : vector<1x256xf32>
    %cst_166 = arith.constant dense<0.000000e+00> : vector<1x256xf32>
    %442 = tpu.matmul %441, %396, %cst_166 {dimension_numbers = #tpu.dot_dimension_numbers<[1], [0], [0], [1], [0, 0, 1, 1], [], []>} : vector<1x256xf32>, vector<256x256xf32>, vector<1x256xf32> -> vector<1x256xf32>
    %443 = arith.mulf %442, %403 : vector<1x256xf32>
    %c1_167 = arith.constant 1 : index
    %c10_168 = arith.constant 10 : index
    %444 = memref.load %arg0[%c1_167, %c10_168] : memref<2x71xf32, #tpu.memory_space<smem>>
    %445 = vector.broadcast %444 : f32 to vector<1x256xf32>
    %446 = arith.addf %443, %445 : vector<1x256xf32>
    %c1_169 = arith.constant 1 : index
    %c6_170 = arith.constant 6 : index
    %447 = memref.load %arg0[%c1_169, %c6_170] : memref<2x71xf32, #tpu.memory_space<smem>>
    %448 = vector.broadcast %447 : f32 to vector<1x256xf32>
    %449 = arith.mulf %446, %448 : vector<1x256xf32>
    %450 = arith.mulf %449, %403 : vector<1x256xf32>
    %cst_171 = arith.constant dense<0.000000e+00> : vector<1x256xf32>
    %451 = tpu.matmul %450, %396, %cst_171 {dimension_numbers = #tpu.dot_dimension_numbers<[1], [0], [0], [1], [0, 0, 1, 1], [], []>} : vector<1x256xf32>, vector<256x256xf32>, vector<1x256xf32> -> vector<1x256xf32>
    %452 = arith.mulf %451, %403 : vector<1x256xf32>
    %c1_172 = arith.constant 1 : index
    %c11_173 = arith.constant 11 : index
    %453 = memref.load %arg0[%c1_172, %c11_173] : memref<2x71xf32, #tpu.memory_space<smem>>
    %454 = vector.broadcast %453 : f32 to vector<1x256xf32>
    %455 = arith.addf %452, %454 : vector<1x256xf32>
    %c1_174 = arith.constant 1 : index
    %c7_175 = arith.constant 7 : index
    %456 = memref.load %arg0[%c1_174, %c7_175] : memref<2x71xf32, #tpu.memory_space<smem>>
    %457 = vector.broadcast %456 : f32 to vector<1x256xf32>
    %458 = arith.mulf %455, %457 : vector<1x256xf32>
    %459 = arith.mulf %458, %403 : vector<1x256xf32>
    %cst_176 = arith.constant dense<0.000000e+00> : vector<1x256xf32>
    %460 = tpu.matmul %459, %396, %cst_176 {dimension_numbers = #tpu.dot_dimension_numbers<[1], [0], [0], [1], [0, 0, 1, 1], [], []>} : vector<1x256xf32>, vector<256x256xf32>, vector<1x256xf32> -> vector<1x256xf32>
    %461 = arith.mulf %460, %403 : vector<1x256xf32>
    %c1_177 = arith.constant 1 : index
    %c12_178 = arith.constant 12 : index
    %462 = memref.load %arg0[%c1_177, %c12_178] : memref<2x71xf32, #tpu.memory_space<smem>>
    %463 = vector.broadcast %462 : f32 to vector<1x256xf32>
    %464 = arith.addf %461, %463 : vector<1x256xf32>
    %cst_179 = arith.constant -1.000000e+30 : f32
    %465 = vector.broadcast %cst_179 : f32 to vector<1x256xf32>
    %466 = arith.select %26, %464, %465 : vector<1x256xi1>, vector<1x256xf32>
    %467 = vector.shape_cast %466 : vector<1x256xf32> to vector<1x256xf32>
    %468 = vector.broadcast %467 : vector<1x256xf32> to vector<256x256xf32>
    %469 = arith.mulf %468, %15 : vector<256x256xf32>
    %cst_180 = arith.constant dense<0.000000e+00> : vector<256xf32>
    %470 = vector.multi_reduction <add>, %469, %cst_180 [1] : vector<256x256xf32> to vector<256xf32>
    %471 = vector.shape_cast %470 : vector<256xf32> to vector<256x1xf32>
    %472 = vector.broadcast %471 : vector<256x1xf32> to vector<256x256xf32>
    %473 = arith.cmpf ogt, %468, %472 : vector<256x256xf32>
    %474 = vector.broadcast %471 : vector<256x1xf32> to vector<256x256xf32>
    %475 = arith.cmpf oeq, %468, %474 : vector<256x256xf32>
    %476 = arith.cmpi slt, %12, %11 : vector<256x256xi32>
    %477 = arith.andi %475, %476 : vector<256x256xi1>
    %478 = arith.ori %473, %477 : vector<256x256xi1>
    %479 = arith.extui %478 : vector<256x256xi1> to vector<256x256xi32>
    %480 = arith.sitofp %479 : vector<256x256xi32> to vector<256x256xf32>
    %cst_181 = arith.constant dense<0.000000e+00> : vector<256xf32>
    %481 = vector.multi_reduction <add>, %480, %cst_181 [1] : vector<256x256xf32> to vector<256xf32>
    %482 = vector.shape_cast %481 : vector<256xf32> to vector<256x1xf32>
    %483 = vector.broadcast %482 : vector<256x1xf32> to vector<256x256xf32>
    %484 = arith.cmpf oeq, %483, %23 : vector<256x256xf32>
    %485 = arith.extui %484 : vector<256x256xi1> to vector<256x256xi32>
    %486 = arith.sitofp %485 : vector<256x256xi32> to vector<256x256xf32>
    %cst_182 = arith.constant dense<0.000000e+00> : vector<1x256xf32>
    %487 = tpu.matmul %428, %486, %cst_182 {dimension_numbers = #tpu.dot_dimension_numbers<[1], [0], [0], [1], [0, 0, 1, 1], [], []>} : vector<1x256xf32>, vector<256x256xf32>, vector<1x256xf32> -> vector<1x256xf32>
    %cst_183 = arith.constant dense<0.000000e+00> : vector<1x256xf32>
    %488 = tpu.matmul %437, %486, %cst_183 {dimension_numbers = #tpu.dot_dimension_numbers<[1], [0], [0], [1], [0, 0, 1, 1], [], []>} : vector<1x256xf32>, vector<256x256xf32>, vector<1x256xf32> -> vector<1x256xf32>
    %cst_184 = arith.constant dense<0.000000e+00> : vector<1x256xf32>
    %489 = tpu.matmul %446, %486, %cst_184 {dimension_numbers = #tpu.dot_dimension_numbers<[1], [0], [0], [1], [0, 0, 1, 1], [], []>} : vector<1x256xf32>, vector<256x256xf32>, vector<1x256xf32> -> vector<1x256xf32>
    %cst_185 = arith.constant dense<0.000000e+00> : vector<1x256xf32>
    %490 = tpu.matmul %455, %486, %cst_185 {dimension_numbers = #tpu.dot_dimension_numbers<[1], [0], [0], [1], [0, 0, 1, 1], [], []>} : vector<1x256xf32>, vector<256x256xf32>, vector<1x256xf32> -> vector<1x256xf32>
    %cst_186 = arith.constant dense<0.000000e+00> : vector<1x256xf32>
    %491 = tpu.matmul %464, %486, %cst_186 {dimension_numbers = #tpu.dot_dimension_numbers<[1], [0], [0], [1], [0, 0, 1, 1], [], []>} : vector<1x256xf32>, vector<256x256xf32>, vector<1x256xf32> -> vector<1x256xf32>
    %c255_i32_187 = arith.constant 255 : i32
    %492 = tpu.dynamic_rotate %487 by %c255_i32_187 dim 1 : vector<1x256xf32>, i32 -> vector<1x256xf32>
    %c254_i32_188 = arith.constant 254 : i32
    %493 = tpu.dynamic_rotate %487 by %c254_i32_188 dim 1 : vector<1x256xf32>, i32 -> vector<1x256xf32>
    %c255_i32_189 = arith.constant 255 : i32
    %494 = tpu.dynamic_rotate %488 by %c255_i32_189 dim 1 : vector<1x256xf32>, i32 -> vector<1x256xf32>
    %c254_i32_190 = arith.constant 254 : i32
    %495 = tpu.dynamic_rotate %488 by %c254_i32_190 dim 1 : vector<1x256xf32>, i32 -> vector<1x256xf32>
    %c255_i32_191 = arith.constant 255 : i32
    %496 = tpu.dynamic_rotate %489 by %c255_i32_191 dim 1 : vector<1x256xf32>, i32 -> vector<1x256xf32>
    %c254_i32_192 = arith.constant 254 : i32
    %497 = tpu.dynamic_rotate %489 by %c254_i32_192 dim 1 : vector<1x256xf32>, i32 -> vector<1x256xf32>
    %c255_i32_193 = arith.constant 255 : i32
    %498 = tpu.dynamic_rotate %490 by %c255_i32_193 dim 1 : vector<1x256xf32>, i32 -> vector<1x256xf32>
    %c254_i32_194 = arith.constant 254 : i32
    %499 = tpu.dynamic_rotate %490 by %c254_i32_194 dim 1 : vector<1x256xf32>, i32 -> vector<1x256xf32>
    %c255_i32_195 = arith.constant 255 : i32
    %500 = tpu.dynamic_rotate %491 by %c255_i32_195 dim 1 : vector<1x256xf32>, i32 -> vector<1x256xf32>
    %c254_i32_196 = arith.constant 254 : i32
    %501 = tpu.dynamic_rotate %491 by %c254_i32_196 dim 1 : vector<1x256xf32>, i32 -> vector<1x256xf32>
    %c1_197 = arith.constant 1 : index
    %c13_198 = arith.constant 13 : index
    %502 = memref.load %arg0[%c1_197, %c13_198] : memref<2x71xf32, #tpu.memory_space<smem>>
    %503 = vector.broadcast %502 : f32 to vector<1x256xf32>
    %504 = arith.mulf %503, %487 : vector<1x256xf32>
    %c1_199 = arith.constant 1 : index
    %c14_200 = arith.constant 14 : index
    %505 = memref.load %arg0[%c1_199, %c14_200] : memref<2x71xf32, #tpu.memory_space<smem>>
    %506 = vector.broadcast %505 : f32 to vector<1x256xf32>
    %507 = arith.mulf %506, %492 : vector<1x256xf32>
    %508 = arith.addf %504, %507 : vector<1x256xf32>
    %c1_201 = arith.constant 1 : index
    %c15_202 = arith.constant 15 : index
    %509 = memref.load %arg0[%c1_201, %c15_202] : memref<2x71xf32, #tpu.memory_space<smem>>
    %510 = vector.broadcast %509 : f32 to vector<1x256xf32>
    %511 = arith.mulf %510, %493 : vector<1x256xf32>
    %512 = arith.addf %508, %511 : vector<1x256xf32>
    %c1_203 = arith.constant 1 : index
    %c16_204 = arith.constant 16 : index
    %513 = memref.load %arg0[%c1_203, %c16_204] : memref<2x71xf32, #tpu.memory_space<smem>>
    %514 = vector.broadcast %513 : f32 to vector<1x256xf32>
    %515 = arith.mulf %514, %488 : vector<1x256xf32>
    %516 = arith.addf %512, %515 : vector<1x256xf32>
    %c1_205 = arith.constant 1 : index
    %c17_206 = arith.constant 17 : index
    %517 = memref.load %arg0[%c1_205, %c17_206] : memref<2x71xf32, #tpu.memory_space<smem>>
    %518 = vector.broadcast %517 : f32 to vector<1x256xf32>
    %519 = arith.mulf %518, %494 : vector<1x256xf32>
    %520 = arith.addf %516, %519 : vector<1x256xf32>
    %c1_207 = arith.constant 1 : index
    %c18_208 = arith.constant 18 : index
    %521 = memref.load %arg0[%c1_207, %c18_208] : memref<2x71xf32, #tpu.memory_space<smem>>
    %522 = vector.broadcast %521 : f32 to vector<1x256xf32>
    %523 = arith.mulf %522, %495 : vector<1x256xf32>
    %524 = arith.addf %520, %523 : vector<1x256xf32>
    %c1_209 = arith.constant 1 : index
    %c19_210 = arith.constant 19 : index
    %525 = memref.load %arg0[%c1_209, %c19_210] : memref<2x71xf32, #tpu.memory_space<smem>>
    %526 = vector.broadcast %525 : f32 to vector<1x256xf32>
    %527 = arith.mulf %526, %489 : vector<1x256xf32>
    %528 = arith.addf %524, %527 : vector<1x256xf32>
    %c1_211 = arith.constant 1 : index
    %c20_212 = arith.constant 20 : index
    %529 = memref.load %arg0[%c1_211, %c20_212] : memref<2x71xf32, #tpu.memory_space<smem>>
    %530 = vector.broadcast %529 : f32 to vector<1x256xf32>
    %531 = arith.mulf %530, %496 : vector<1x256xf32>
    %532 = arith.addf %528, %531 : vector<1x256xf32>
    %c1_213 = arith.constant 1 : index
    %c21_214 = arith.constant 21 : index
    %533 = memref.load %arg0[%c1_213, %c21_214] : memref<2x71xf32, #tpu.memory_space<smem>>
    %534 = vector.broadcast %533 : f32 to vector<1x256xf32>
    %535 = arith.mulf %534, %497 : vector<1x256xf32>
    %536 = arith.addf %532, %535 : vector<1x256xf32>
    %c1_215 = arith.constant 1 : index
    %c22_216 = arith.constant 22 : index
    %537 = memref.load %arg0[%c1_215, %c22_216] : memref<2x71xf32, #tpu.memory_space<smem>>
    %538 = vector.broadcast %537 : f32 to vector<1x256xf32>
    %539 = arith.mulf %538, %490 : vector<1x256xf32>
    %540 = arith.addf %536, %539 : vector<1x256xf32>
    %c1_217 = arith.constant 1 : index
    %c23_218 = arith.constant 23 : index
    %541 = memref.load %arg0[%c1_217, %c23_218] : memref<2x71xf32, #tpu.memory_space<smem>>
    %542 = vector.broadcast %541 : f32 to vector<1x256xf32>
    %543 = arith.mulf %542, %498 : vector<1x256xf32>
    %544 = arith.addf %540, %543 : vector<1x256xf32>
    %c1_219 = arith.constant 1 : index
    %c24_220 = arith.constant 24 : index
    %545 = memref.load %arg0[%c1_219, %c24_220] : memref<2x71xf32, #tpu.memory_space<smem>>
    %546 = vector.broadcast %545 : f32 to vector<1x256xf32>
    %547 = arith.mulf %546, %499 : vector<1x256xf32>
    %548 = arith.addf %544, %547 : vector<1x256xf32>
    %c1_221 = arith.constant 1 : index
    %c25_222 = arith.constant 25 : index
    %549 = memref.load %arg0[%c1_221, %c25_222] : memref<2x71xf32, #tpu.memory_space<smem>>
    %550 = vector.broadcast %549 : f32 to vector<1x256xf32>
    %551 = arith.mulf %550, %491 : vector<1x256xf32>
    %552 = arith.addf %548, %551 : vector<1x256xf32>
    %c1_223 = arith.constant 1 : index
    %c26_224 = arith.constant 26 : index
    %553 = memref.load %arg0[%c1_223, %c26_224] : memref<2x71xf32, #tpu.memory_space<smem>>
    %554 = vector.broadcast %553 : f32 to vector<1x256xf32>
    %555 = arith.mulf %554, %500 : vector<1x256xf32>
    %556 = arith.addf %552, %555 : vector<1x256xf32>
    %c1_225 = arith.constant 1 : index
    %c27_226 = arith.constant 27 : index
    %557 = memref.load %arg0[%c1_225, %c27_226] : memref<2x71xf32, #tpu.memory_space<smem>>
    %558 = vector.broadcast %557 : f32 to vector<1x256xf32>
    %559 = arith.mulf %558, %501 : vector<1x256xf32>
    %560 = arith.addf %556, %559 : vector<1x256xf32>
    %c1_227 = arith.constant 1 : index
    %c58_228 = arith.constant 58 : index
    %561 = memref.load %arg0[%c1_227, %c58_228] : memref<2x71xf32, #tpu.memory_space<smem>>
    %562 = vector.broadcast %561 : f32 to vector<1x256xf32>
    %563 = arith.addf %560, %562 : vector<1x256xf32>
    %c255_i32_229 = arith.constant 255 : i32
    %564 = tpu.dynamic_rotate %563 by %c255_i32_229 dim 1 : vector<1x256xf32>, i32 -> vector<1x256xf32>
    %565 = arith.maximumf %563, %564 : vector<1x256xf32>
    %c254_i32_230 = arith.constant 254 : i32
    %566 = tpu.dynamic_rotate %563 by %c254_i32_230 dim 1 : vector<1x256xf32>, i32 -> vector<1x256xf32>
    %567 = arith.maximumf %565, %566 : vector<1x256xf32>
    %c1_231 = arith.constant 1 : index
    %c28_232 = arith.constant 28 : index
    %568 = memref.load %arg0[%c1_231, %c28_232] : memref<2x71xf32, #tpu.memory_space<smem>>
    %569 = vector.broadcast %568 : f32 to vector<1x256xf32>
    %570 = arith.mulf %569, %487 : vector<1x256xf32>
    %c1_233 = arith.constant 1 : index
    %c29_234 = arith.constant 29 : index
    %571 = memref.load %arg0[%c1_233, %c29_234] : memref<2x71xf32, #tpu.memory_space<smem>>
    %572 = vector.broadcast %571 : f32 to vector<1x256xf32>
    %573 = arith.mulf %572, %492 : vector<1x256xf32>
    %574 = arith.addf %570, %573 : vector<1x256xf32>
    %c1_235 = arith.constant 1 : index
    %c30_236 = arith.constant 30 : index
    %575 = memref.load %arg0[%c1_235, %c30_236] : memref<2x71xf32, #tpu.memory_space<smem>>
    %576 = vector.broadcast %575 : f32 to vector<1x256xf32>
    %577 = arith.mulf %576, %493 : vector<1x256xf32>
    %578 = arith.addf %574, %577 : vector<1x256xf32>
    %c1_237 = arith.constant 1 : index
    %c31_238 = arith.constant 31 : index
    %579 = memref.load %arg0[%c1_237, %c31_238] : memref<2x71xf32, #tpu.memory_space<smem>>
    %580 = vector.broadcast %579 : f32 to vector<1x256xf32>
    %581 = arith.mulf %580, %488 : vector<1x256xf32>
    %582 = arith.addf %578, %581 : vector<1x256xf32>
    %c1_239 = arith.constant 1 : index
    %c32_240 = arith.constant 32 : index
    %583 = memref.load %arg0[%c1_239, %c32_240] : memref<2x71xf32, #tpu.memory_space<smem>>
    %584 = vector.broadcast %583 : f32 to vector<1x256xf32>
    %585 = arith.mulf %584, %494 : vector<1x256xf32>
    %586 = arith.addf %582, %585 : vector<1x256xf32>
    %c1_241 = arith.constant 1 : index
    %c33_242 = arith.constant 33 : index
    %587 = memref.load %arg0[%c1_241, %c33_242] : memref<2x71xf32, #tpu.memory_space<smem>>
    %588 = vector.broadcast %587 : f32 to vector<1x256xf32>
    %589 = arith.mulf %588, %495 : vector<1x256xf32>
    %590 = arith.addf %586, %589 : vector<1x256xf32>
    %c1_243 = arith.constant 1 : index
    %c34_244 = arith.constant 34 : index
    %591 = memref.load %arg0[%c1_243, %c34_244] : memref<2x71xf32, #tpu.memory_space<smem>>
    %592 = vector.broadcast %591 : f32 to vector<1x256xf32>
    %593 = arith.mulf %592, %489 : vector<1x256xf32>
    %594 = arith.addf %590, %593 : vector<1x256xf32>
    %c1_245 = arith.constant 1 : index
    %c35_246 = arith.constant 35 : index
    %595 = memref.load %arg0[%c1_245, %c35_246] : memref<2x71xf32, #tpu.memory_space<smem>>
    %596 = vector.broadcast %595 : f32 to vector<1x256xf32>
    %597 = arith.mulf %596, %496 : vector<1x256xf32>
    %598 = arith.addf %594, %597 : vector<1x256xf32>
    %c1_247 = arith.constant 1 : index
    %c36_248 = arith.constant 36 : index
    %599 = memref.load %arg0[%c1_247, %c36_248] : memref<2x71xf32, #tpu.memory_space<smem>>
    %600 = vector.broadcast %599 : f32 to vector<1x256xf32>
    %601 = arith.mulf %600, %497 : vector<1x256xf32>
    %602 = arith.addf %598, %601 : vector<1x256xf32>
    %c1_249 = arith.constant 1 : index
    %c37_250 = arith.constant 37 : index
    %603 = memref.load %arg0[%c1_249, %c37_250] : memref<2x71xf32, #tpu.memory_space<smem>>
    %604 = vector.broadcast %603 : f32 to vector<1x256xf32>
    %605 = arith.mulf %604, %490 : vector<1x256xf32>
    %606 = arith.addf %602, %605 : vector<1x256xf32>
    %c1_251 = arith.constant 1 : index
    %c38_252 = arith.constant 38 : index
    %607 = memref.load %arg0[%c1_251, %c38_252] : memref<2x71xf32, #tpu.memory_space<smem>>
    %608 = vector.broadcast %607 : f32 to vector<1x256xf32>
    %609 = arith.mulf %608, %498 : vector<1x256xf32>
    %610 = arith.addf %606, %609 : vector<1x256xf32>
    %c1_253 = arith.constant 1 : index
    %c39_254 = arith.constant 39 : index
    %611 = memref.load %arg0[%c1_253, %c39_254] : memref<2x71xf32, #tpu.memory_space<smem>>
    %612 = vector.broadcast %611 : f32 to vector<1x256xf32>
    %613 = arith.mulf %612, %499 : vector<1x256xf32>
    %614 = arith.addf %610, %613 : vector<1x256xf32>
    %c1_255 = arith.constant 1 : index
    %c40_256 = arith.constant 40 : index
    %615 = memref.load %arg0[%c1_255, %c40_256] : memref<2x71xf32, #tpu.memory_space<smem>>
    %616 = vector.broadcast %615 : f32 to vector<1x256xf32>
    %617 = arith.mulf %616, %491 : vector<1x256xf32>
    %618 = arith.addf %614, %617 : vector<1x256xf32>
    %c1_257 = arith.constant 1 : index
    %c41_258 = arith.constant 41 : index
    %619 = memref.load %arg0[%c1_257, %c41_258] : memref<2x71xf32, #tpu.memory_space<smem>>
    %620 = vector.broadcast %619 : f32 to vector<1x256xf32>
    %621 = arith.mulf %620, %500 : vector<1x256xf32>
    %622 = arith.addf %618, %621 : vector<1x256xf32>
    %c1_259 = arith.constant 1 : index
    %c42_260 = arith.constant 42 : index
    %623 = memref.load %arg0[%c1_259, %c42_260] : memref<2x71xf32, #tpu.memory_space<smem>>
    %624 = vector.broadcast %623 : f32 to vector<1x256xf32>
    %625 = arith.mulf %624, %501 : vector<1x256xf32>
    %626 = arith.addf %622, %625 : vector<1x256xf32>
    %c1_261 = arith.constant 1 : index
    %c59_262 = arith.constant 59 : index
    %627 = memref.load %arg0[%c1_261, %c59_262] : memref<2x71xf32, #tpu.memory_space<smem>>
    %628 = vector.broadcast %627 : f32 to vector<1x256xf32>
    %629 = arith.addf %626, %628 : vector<1x256xf32>
    %c255_i32_263 = arith.constant 255 : i32
    %630 = tpu.dynamic_rotate %629 by %c255_i32_263 dim 1 : vector<1x256xf32>, i32 -> vector<1x256xf32>
    %631 = arith.maximumf %629, %630 : vector<1x256xf32>
    %c254_i32_264 = arith.constant 254 : i32
    %632 = tpu.dynamic_rotate %629 by %c254_i32_264 dim 1 : vector<1x256xf32>, i32 -> vector<1x256xf32>
    %633 = arith.maximumf %631, %632 : vector<1x256xf32>
    %c1_265 = arith.constant 1 : index
    %c43_266 = arith.constant 43 : index
    %634 = memref.load %arg0[%c1_265, %c43_266] : memref<2x71xf32, #tpu.memory_space<smem>>
    %635 = vector.broadcast %634 : f32 to vector<1x256xf32>
    %636 = arith.mulf %635, %487 : vector<1x256xf32>
    %c1_267 = arith.constant 1 : index
    %c44_268 = arith.constant 44 : index
    %637 = memref.load %arg0[%c1_267, %c44_268] : memref<2x71xf32, #tpu.memory_space<smem>>
    %638 = vector.broadcast %637 : f32 to vector<1x256xf32>
    %639 = arith.mulf %638, %492 : vector<1x256xf32>
    %640 = arith.addf %636, %639 : vector<1x256xf32>
    %c1_269 = arith.constant 1 : index
    %c45_270 = arith.constant 45 : index
    %641 = memref.load %arg0[%c1_269, %c45_270] : memref<2x71xf32, #tpu.memory_space<smem>>
    %642 = vector.broadcast %641 : f32 to vector<1x256xf32>
    %643 = arith.mulf %642, %493 : vector<1x256xf32>
    %644 = arith.addf %640, %643 : vector<1x256xf32>
    %c1_271 = arith.constant 1 : index
    %c46_272 = arith.constant 46 : index
    %645 = memref.load %arg0[%c1_271, %c46_272] : memref<2x71xf32, #tpu.memory_space<smem>>
    %646 = vector.broadcast %645 : f32 to vector<1x256xf32>
    %647 = arith.mulf %646, %488 : vector<1x256xf32>
    %648 = arith.addf %644, %647 : vector<1x256xf32>
    %c1_273 = arith.constant 1 : index
    %c47_274 = arith.constant 47 : index
    %649 = memref.load %arg0[%c1_273, %c47_274] : memref<2x71xf32, #tpu.memory_space<smem>>
    %650 = vector.broadcast %649 : f32 to vector<1x256xf32>
    %651 = arith.mulf %650, %494 : vector<1x256xf32>
    %652 = arith.addf %648, %651 : vector<1x256xf32>
    %c1_275 = arith.constant 1 : index
    %c48_276 = arith.constant 48 : index
    %653 = memref.load %arg0[%c1_275, %c48_276] : memref<2x71xf32, #tpu.memory_space<smem>>
    %654 = vector.broadcast %653 : f32 to vector<1x256xf32>
    %655 = arith.mulf %654, %495 : vector<1x256xf32>
    %656 = arith.addf %652, %655 : vector<1x256xf32>
    %c1_277 = arith.constant 1 : index
    %c49_278 = arith.constant 49 : index
    %657 = memref.load %arg0[%c1_277, %c49_278] : memref<2x71xf32, #tpu.memory_space<smem>>
    %658 = vector.broadcast %657 : f32 to vector<1x256xf32>
    %659 = arith.mulf %658, %489 : vector<1x256xf32>
    %660 = arith.addf %656, %659 : vector<1x256xf32>
    %c1_279 = arith.constant 1 : index
    %c50_280 = arith.constant 50 : index
    %661 = memref.load %arg0[%c1_279, %c50_280] : memref<2x71xf32, #tpu.memory_space<smem>>
    %662 = vector.broadcast %661 : f32 to vector<1x256xf32>
    %663 = arith.mulf %662, %496 : vector<1x256xf32>
    %664 = arith.addf %660, %663 : vector<1x256xf32>
    %c1_281 = arith.constant 1 : index
    %c51_282 = arith.constant 51 : index
    %665 = memref.load %arg0[%c1_281, %c51_282] : memref<2x71xf32, #tpu.memory_space<smem>>
    %666 = vector.broadcast %665 : f32 to vector<1x256xf32>
    %667 = arith.mulf %666, %497 : vector<1x256xf32>
    %668 = arith.addf %664, %667 : vector<1x256xf32>
    %c1_283 = arith.constant 1 : index
    %c52_284 = arith.constant 52 : index
    %669 = memref.load %arg0[%c1_283, %c52_284] : memref<2x71xf32, #tpu.memory_space<smem>>
    %670 = vector.broadcast %669 : f32 to vector<1x256xf32>
    %671 = arith.mulf %670, %490 : vector<1x256xf32>
    %672 = arith.addf %668, %671 : vector<1x256xf32>
    %c1_285 = arith.constant 1 : index
    %c53_286 = arith.constant 53 : index
    %673 = memref.load %arg0[%c1_285, %c53_286] : memref<2x71xf32, #tpu.memory_space<smem>>
    %674 = vector.broadcast %673 : f32 to vector<1x256xf32>
    %675 = arith.mulf %674, %498 : vector<1x256xf32>
    %676 = arith.addf %672, %675 : vector<1x256xf32>
    %c1_287 = arith.constant 1 : index
    %c54_288 = arith.constant 54 : index
    %677 = memref.load %arg0[%c1_287, %c54_288] : memref<2x71xf32, #tpu.memory_space<smem>>
    %678 = vector.broadcast %677 : f32 to vector<1x256xf32>
    %679 = arith.mulf %678, %499 : vector<1x256xf32>
    %680 = arith.addf %676, %679 : vector<1x256xf32>
    %c1_289 = arith.constant 1 : index
    %c55_290 = arith.constant 55 : index
    %681 = memref.load %arg0[%c1_289, %c55_290] : memref<2x71xf32, #tpu.memory_space<smem>>
    %682 = vector.broadcast %681 : f32 to vector<1x256xf32>
    %683 = arith.mulf %682, %491 : vector<1x256xf32>
    %684 = arith.addf %680, %683 : vector<1x256xf32>
    %c1_291 = arith.constant 1 : index
    %c56_292 = arith.constant 56 : index
    %685 = memref.load %arg0[%c1_291, %c56_292] : memref<2x71xf32, #tpu.memory_space<smem>>
    %686 = vector.broadcast %685 : f32 to vector<1x256xf32>
    %687 = arith.mulf %686, %500 : vector<1x256xf32>
    %688 = arith.addf %684, %687 : vector<1x256xf32>
    %c1_293 = arith.constant 1 : index
    %c57_294 = arith.constant 57 : index
    %689 = memref.load %arg0[%c1_293, %c57_294] : memref<2x71xf32, #tpu.memory_space<smem>>
    %690 = vector.broadcast %689 : f32 to vector<1x256xf32>
    %691 = arith.mulf %690, %501 : vector<1x256xf32>
    %692 = arith.addf %688, %691 : vector<1x256xf32>
    %c1_295 = arith.constant 1 : index
    %c60_296 = arith.constant 60 : index
    %693 = memref.load %arg0[%c1_295, %c60_296] : memref<2x71xf32, #tpu.memory_space<smem>>
    %694 = vector.broadcast %693 : f32 to vector<1x256xf32>
    %695 = arith.addf %692, %694 : vector<1x256xf32>
    %c255_i32_297 = arith.constant 255 : i32
    %696 = tpu.dynamic_rotate %695 by %c255_i32_297 dim 1 : vector<1x256xf32>, i32 -> vector<1x256xf32>
    %697 = arith.maximumf %695, %696 : vector<1x256xf32>
    %c254_i32_298 = arith.constant 254 : i32
    %698 = tpu.dynamic_rotate %695 by %c254_i32_298 dim 1 : vector<1x256xf32>, i32 -> vector<1x256xf32>
    %699 = arith.maximumf %697, %698 : vector<1x256xf32>
    %c255_i32_299 = arith.constant 255 : i32
    %700 = tpu.dynamic_rotate %567 by %c255_i32_299 dim 1 : vector<1x256xf32>, i32 -> vector<1x256xf32>
    %c254_i32_300 = arith.constant 254 : i32
    %701 = tpu.dynamic_rotate %567 by %c254_i32_300 dim 1 : vector<1x256xf32>, i32 -> vector<1x256xf32>
    %c255_i32_301 = arith.constant 255 : i32
    %702 = tpu.dynamic_rotate %633 by %c255_i32_301 dim 1 : vector<1x256xf32>, i32 -> vector<1x256xf32>
    %c254_i32_302 = arith.constant 254 : i32
    %703 = tpu.dynamic_rotate %633 by %c254_i32_302 dim 1 : vector<1x256xf32>, i32 -> vector<1x256xf32>
    %c255_i32_303 = arith.constant 255 : i32
    %704 = tpu.dynamic_rotate %699 by %c255_i32_303 dim 1 : vector<1x256xf32>, i32 -> vector<1x256xf32>
    %c254_i32_304 = arith.constant 254 : i32
    %705 = tpu.dynamic_rotate %699 by %c254_i32_304 dim 1 : vector<1x256xf32>, i32 -> vector<1x256xf32>
    %c1_305 = arith.constant 1 : index
    %c61_306 = arith.constant 61 : index
    %706 = memref.load %arg0[%c1_305, %c61_306] : memref<2x71xf32, #tpu.memory_space<smem>>
    %707 = vector.broadcast %706 : f32 to vector<1x256xf32>
    %708 = arith.mulf %707, %567 : vector<1x256xf32>
    %c1_307 = arith.constant 1 : index
    %c62_308 = arith.constant 62 : index
    %709 = memref.load %arg0[%c1_307, %c62_308] : memref<2x71xf32, #tpu.memory_space<smem>>
    %710 = vector.broadcast %709 : f32 to vector<1x256xf32>
    %711 = arith.mulf %710, %700 : vector<1x256xf32>
    %712 = arith.addf %708, %711 : vector<1x256xf32>
    %c1_309 = arith.constant 1 : index
    %c63_310 = arith.constant 63 : index
    %713 = memref.load %arg0[%c1_309, %c63_310] : memref<2x71xf32, #tpu.memory_space<smem>>
    %714 = vector.broadcast %713 : f32 to vector<1x256xf32>
    %715 = arith.mulf %714, %701 : vector<1x256xf32>
    %716 = arith.addf %712, %715 : vector<1x256xf32>
    %c1_311 = arith.constant 1 : index
    %c64_312 = arith.constant 64 : index
    %717 = memref.load %arg0[%c1_311, %c64_312] : memref<2x71xf32, #tpu.memory_space<smem>>
    %718 = vector.broadcast %717 : f32 to vector<1x256xf32>
    %719 = arith.mulf %718, %633 : vector<1x256xf32>
    %720 = arith.addf %716, %719 : vector<1x256xf32>
    %c1_313 = arith.constant 1 : index
    %c65_314 = arith.constant 65 : index
    %721 = memref.load %arg0[%c1_313, %c65_314] : memref<2x71xf32, #tpu.memory_space<smem>>
    %722 = vector.broadcast %721 : f32 to vector<1x256xf32>
    %723 = arith.mulf %722, %702 : vector<1x256xf32>
    %724 = arith.addf %720, %723 : vector<1x256xf32>
    %c1_315 = arith.constant 1 : index
    %c66_316 = arith.constant 66 : index
    %725 = memref.load %arg0[%c1_315, %c66_316] : memref<2x71xf32, #tpu.memory_space<smem>>
    %726 = vector.broadcast %725 : f32 to vector<1x256xf32>
    %727 = arith.mulf %726, %703 : vector<1x256xf32>
    %728 = arith.addf %724, %727 : vector<1x256xf32>
    %c1_317 = arith.constant 1 : index
    %c67_318 = arith.constant 67 : index
    %729 = memref.load %arg0[%c1_317, %c67_318] : memref<2x71xf32, #tpu.memory_space<smem>>
    %730 = vector.broadcast %729 : f32 to vector<1x256xf32>
    %731 = arith.mulf %730, %699 : vector<1x256xf32>
    %732 = arith.addf %728, %731 : vector<1x256xf32>
    %c1_319 = arith.constant 1 : index
    %c68_320 = arith.constant 68 : index
    %733 = memref.load %arg0[%c1_319, %c68_320] : memref<2x71xf32, #tpu.memory_space<smem>>
    %734 = vector.broadcast %733 : f32 to vector<1x256xf32>
    %735 = arith.mulf %734, %704 : vector<1x256xf32>
    %736 = arith.addf %732, %735 : vector<1x256xf32>
    %c1_321 = arith.constant 1 : index
    %c69_322 = arith.constant 69 : index
    %737 = memref.load %arg0[%c1_321, %c69_322] : memref<2x71xf32, #tpu.memory_space<smem>>
    %738 = vector.broadcast %737 : f32 to vector<1x256xf32>
    %739 = arith.mulf %738, %705 : vector<1x256xf32>
    %740 = arith.addf %736, %739 : vector<1x256xf32>
    %c1_323 = arith.constant 1 : index
    %c70_324 = arith.constant 70 : index
    %741 = memref.load %arg0[%c1_323, %c70_324] : memref<2x71xf32, #tpu.memory_space<smem>>
    %742 = vector.broadcast %741 : f32 to vector<1x256xf32>
    %743 = arith.addf %740, %742 : vector<1x256xf32>
    %c255_i32_325 = arith.constant 255 : i32
    %744 = tpu.dynamic_rotate %743 by %c255_i32_325 dim 1 : vector<1x256xf32>, i32 -> vector<1x256xf32>
    %745 = arith.maximumf %743, %744 : vector<1x256xf32>
    %c254_i32_326 = arith.constant 254 : i32
    %746 = tpu.dynamic_rotate %743 by %c254_i32_326 dim 1 : vector<1x256xf32>, i32 -> vector<1x256xf32>
    %747 = arith.maximumf %745, %746 : vector<1x256xf32>
    %c1_327 = arith.constant 1 : index
    %c0_328 = arith.constant 0 : index
    %c0_329 = arith.constant 0 : index
    %748 = vector.load %arg4[%c1_327, %c0_328, %c0_329] : memref<2x256x32xf32, #tpu.memory_space<vmem>>, vector<1x256x32xf32>
    %749 = vector.shape_cast %748 : vector<1x256x32xf32> to vector<256x32xf32>
    %cst_330 = arith.constant dense<0.000000e+00> : vector<1x32xf32>
    %750 = tpu.matmul %747, %749, %cst_330 {dimension_numbers = #tpu.dot_dimension_numbers<[1], [0], [0], [1], [0, 0, 1, 1], [], []>} : vector<1x256xf32>, vector<256x32xf32>, vector<1x32xf32> -> vector<1x32xf32>
    %751 = arith.addf %389, %750 : vector<1x32xf32>
    %cst_331 = arith.constant 0.000000e+00 : f32
    %752 = vector.broadcast %cst_331 : f32 to vector<1x32xf32>
    %753 = arith.cmpf ogt, %751, %752 : vector<1x32xf32>
    %cst_332 = arith.constant 0.000000e+00 : f32
    %754 = vector.broadcast %cst_332 : f32 to vector<1x32xf32>
    %755 = arith.minimumf %751, %754 : vector<1x32xf32>
    %756 = math.exp %755 : vector<1x32xf32>
    %cst_333 = arith.constant 1.000000e+00 : f32
    %757 = vector.broadcast %cst_333 : f32 to vector<1x32xf32>
    %758 = arith.subf %756, %757 : vector<1x32xf32>
    %759 = arith.select %753, %751, %758 : vector<1x32xi1>, vector<1x32xf32>
    %c8_334 = arith.constant 8 : index
    %c0_335 = arith.constant 0 : index
    %760 = vector.load %arg5[%c8_334, %c0_335] : memref<48x32xf32, #tpu.memory_space<vmem>>, vector<32x6xf32>
    %cst_336 = arith.constant dense<0.000000e+00> : vector<1x6xf32>
    %761 = tpu.matmul %759, %760, %cst_336 {dimension_numbers = #tpu.dot_dimension_numbers<[1], [0], [0], [1], [0, 0, 1, 1], [], []>} : vector<1x32xf32>, vector<32x6xf32>, vector<1x6xf32> -> vector<1x6xf32>
    %c1_337 = arith.constant 1 : index
    %c0_338 = arith.constant 0 : index
    %762 = vector.load %arg5[%c1_337, %c0_338] : memref<48x32xf32, #tpu.memory_space<vmem>>, vector<1x6xf32>
    %763 = arith.addf %761, %762 : vector<1x6xf32>
    %cst_339 = arith.constant 0.000000e+00 : f32
    %764 = vector.broadcast %cst_339 : f32 to vector<1x6xf32>
    %765 = arith.cmpf ogt, %763, %764 : vector<1x6xf32>
    %cst_340 = arith.constant 0.000000e+00 : f32
    %766 = vector.broadcast %cst_340 : f32 to vector<1x6xf32>
    %767 = arith.minimumf %763, %766 : vector<1x6xf32>
    %768 = math.exp %767 : vector<1x6xf32>
    %cst_341 = arith.constant 1.000000e+00 : f32
    %769 = vector.broadcast %cst_341 : f32 to vector<1x6xf32>
    %770 = arith.subf %768, %769 : vector<1x6xf32>
    %771 = arith.select %765, %763, %770 : vector<1x6xi1>, vector<1x6xf32>
    %c40_342 = arith.constant 40 : index
    %c0_343 = arith.constant 0 : index
    %772 = vector.load %arg5[%c40_342, %c0_343] : memref<48x32xf32, #tpu.memory_space<vmem>>, vector<6x2xf32>
    %cst_344 = arith.constant dense<0.000000e+00> : vector<1x2xf32>
    %773 = tpu.matmul %771, %772, %cst_344 {dimension_numbers = #tpu.dot_dimension_numbers<[1], [0], [0], [1], [0, 0, 1, 1], [], []>} : vector<1x6xf32>, vector<6x2xf32>, vector<1x2xf32> -> vector<1x2xf32>
    %c2_345 = arith.constant 2 : index
    %c0_346 = arith.constant 0 : index
    %774 = vector.load %arg5[%c2_345, %c0_346] : memref<48x32xf32, #tpu.memory_space<vmem>>, vector<1x2xf32>
    %775 = arith.addf %773, %774 : vector<1x2xf32>
    %c0_347 = arith.constant 0 : index
    %c0_348 = arith.constant 0 : index
    %776 = vector.load %arg6[%c0_347, %c0_348] : memref<1x2xf32, #tpu.memory_space<vmem>>, vector<1x2xf32>
    tpu.vector_store %arg6[%c0_347, %c0_348], %775 {strides = array<i32>} : memref<1x2xf32, #tpu.memory_space<vmem>>, vector<1x2xf32>,
    return
  }
}

</mosaic_0001>

<llo_original>
// kernel: forward.1
$region0: #{forward.1}
  #allocation0 [shape = 'u32[]', space=smem, size = 0x4, offset = 0x4, fixed_abs, tag = 'smem constant byte address 0x4 - core index']
  #allocation1 [shape = 'u32[144,128]{1,0:T(1,128)}', space=vmem, size = 0x12000, scoped, tag = 'internal scratch']
  %s0 = inlined_call_operand.vmem [shape: f32[2,71], index: 0, kind: input, shape index: {}]
  %s1 = inlined_call_operand.vmem [shape: f32[4,256], index: 1, kind: input, shape index: {}]
  %s2 = inlined_call_operand.vmem [shape: s32[1,512], index: 2, kind: input, shape index: {}]
  %s3 = inlined_call_operand.vmem [shape: f32[512,3], index: 3, kind: input, shape index: {}]
  %s4 = inlined_call_operand.vmem [shape: f32[2,256,32], index: 4, kind: input, shape index: {}]
  %s5 = inlined_call_operand.vmem [shape: f32[48,32], index: 5, kind: input, shape index: {}]
  %s6 = inlined_call_operand.hbm [shape: f32[1,2], index: 6, kind: output, shape index: {}]
  %s7 = sld [smem:[#allocation0]]
  $region38: #{forward.1} parent=0
    _
  %s9 = ssub.s32 1, %s7
  %s10 = scalar_select 0, %s9, %s7
  $region1: #{forward.1} parent=0
    #allocation2 [shape = 'u8[1024]{0}', space=smem, size = 0x400, scoped, tag = 'input window, operand 0, single buffered']
    #allocation3 [shape = 's32[1]{0}', space=sflag, size = 0x4, scoped, tag = 'scoped memory for forward.1']
    #allocation4 [shape = 's32[1]{0}', space=sflag, size = 0x4, scoped, tag = 'scoped memory for forward.1']
    #allocation5 [shape = 'u8[512]{0}', space=vmem, size = 0x400, scoped, tag = 'output window, operand 0, single buffered']
    %11 = vsyncpa [#allocation4], 0
    %12 = vsyncpa [#allocation3], 0
    // Predicated region
    $region2: #{forward.1} parent=1 // pred_check
      _
    $region3: #{forward.1} parent=1 // pred_check_branch
      %14 = sbr.rel (0) target = $region5
    $region4: #{forward.1} parent=1 // pred_region
      %s16 = ssub.s32 32, 32
      %17 = vsyncadd [#allocation4], %s16
      %s19 = sshll.u32 %s0, 4
      %s20 = int_to_ptr.vmem [resolvable:$true] %s19
      %22 = dma.vmem_to_smem %s20, 32, [#allocation2], [#allocation4]
    $region5: #{forward.1} parent=1 // pred_fallthru
      _
    // Predicated region
    $region6: #{forward.1} parent=1 // pred_check
      _
    $region7: #{forward.1} parent=1 // pred_check_branch
      %24 = sbr.rel (0) target = $region9
    $region8: #{forward.1} parent=1 // pred_region
      _
    $region9: #{forward.1} parent=1 // pred_fallthru
      _
    // Predicated region
    $region10: #{forward.1} parent=1 // pred_check
      _
    $region11: #{forward.1} parent=1 // pred_check_branch
      %26 = sbr.rel (0) target = $region13
    $region12: #{forward.1} parent=1 // pred_region
      _
    $region13: #{forward.1} parent=1 // pred_fallthru
      _
    // Predicated region
    $region14: #{forward.1} parent=1 // pred_check
      _
    $region15: #{forward.1} parent=1 // pred_check_branch
      %28 = sbr.rel (0) target = $region17
    $region16: #{forward.1} parent=1 // pred_region
      _
    $region17: #{forward.1} parent=1 // pred_fallthru
      _
    // Predicated region
    $region18: #{forward.1} parent=1 // pred_check
      _
    $region19: #{forward.1} parent=1 // pred_check_branch
      %30 = sbr.rel (0) target = $region21
    $region20: #{forward.1} parent=1 // pred_region
      _
    $region21: #{forward.1} parent=1 // pred_fallthru
      _
    // Predicated region
    $region22: #{forward.1} parent=1 // pred_check
      _
    $region23: #{forward.1} parent=1 // pred_check_branch
      %32 = sbr.rel (0) target = $region25
    $region24: #{forward.1} parent=1 // pred_region
      _
    $region25: #{forward.1} parent=1 // pred_fallthru
      _
    // Predicated region
    $region26: #{forward.1} parent=1 // pred_check
      _
    $region27: #{forward.1} parent=1 // pred_check_branch
      %34 = sbr.rel (0) target = $region29
    $region28: #{forward.1} parent=1 // pred_region
      %35 = dma.done [#allocation4], 32
    $region29: #{forward.1} parent=1 // pred_fallthru
      _
    %36 = sfence
    %v37 = vlaneseq
    %v38 = vshrl.u32 %v37, 7
    %v39 = vadd.s32 %v38, 8
    %v40 = vadd.s32 %v38, 16
    %v41 = vadd.s32 %v38, 24
    %v42 = vadd.s32 %v38, 32
    %v43 = vadd.s32 %v38, 40
    %v44 = vadd.s32 %v38, 48
    %v45 = vadd.s32 %v38, 56
    %v46 = vadd.s32 %v38, 64
    %v47 = vadd.s32 %v38, 72
    %v48 = vadd.s32 %v38, 80
    %v49 = vadd.s32 %v38, 88
    %v50 = vadd.s32 %v38, 96
    %v51 = vadd.s32 %v38, 104
    %v52 = vadd.s32 %v38, 112
    %v53 = vadd.s32 %v38, 120
    %v54 = vadd.s32 %v38, 128
    %v55 = vadd.s32 %v38, 136
    %v56 = vadd.s32 %v38, 144
    %v57 = vadd.s32 %v38, 152
    %v58 = vadd.s32 %v38, 160
    %v59 = vadd.s32 %v38, 168
    %v60 = vadd.s32 %v38, 176
    %v61 = vadd.s32 %v38, 184
    %v62 = vadd.s32 %v38, 192
    %v63 = vadd.s32 %v38, 200
    %v64 = vadd.s32 %v38, 208
    %v65 = vadd.s32 %v38, 216
    %v66 = vadd.s32 %v38, 224
    %v67 = vadd.s32 %v38, 232
    %v68 = vadd.s32 %v38, 240
    %v69 = vadd.s32 %v38, 248
    %v70 = vld [vmem:[%s2] sm:$0xf]
    %v71 = vlaneseq
    %v72 = vshrl.u32 %v71, 7
    %v73 = vsub.s32 0, %v72
    %v74 = vrot.slane %v70, %v73
    %v75 = vlaneseq
    %v76 = vshrl.u32 %v75, 7
    %v77 = vsub.s32 1, %v76
    %v78 = vrot.slane %v70, %v77
    %v79 = vlaneseq
    %v80 = vshrl.u32 %v79, 7
    %v81 = vsub.s32 2, %v80
    %v82 = vrot.slane %v70, %v81
    %v83 = vlaneseq
    %v84 = vshrl.u32 %v83, 7
    %v85 = vsub.s32 3, %v84
    %v86 = vrot.slane %v70, %v85
    %vm87 = vcmp.eq.s32.totalorder %v38, %v74
    %vm88 = vcmp.eq.s32.totalorder %v38, %v78
    %vm89 = vcmp.eq.s32.totalorder %v38, %v82
    %vm90 = vcmp.eq.s32.totalorder %v38, %v86
    %vm91 = vcmp.eq.s32.totalorder %v39, %v74
    %vm92 = vcmp.eq.s32.totalorder %v39, %v78
    %vm93 = vcmp.eq.s32.totalorder %v39, %v82
    %vm94 = vcmp.eq.s32.totalorder %v39, %v86
    %vm95 = vcmp.eq.s32.totalorder %v40, %v74
    %vm96 = vcmp.eq.s32.totalorder %v40, %v78
    %vm97 = vcmp.eq.s32.totalorder %v40, %v82
    %vm98 = vcmp.eq.s32.totalorder %v40, %v86
    %vm99 = vcmp.eq.s32.totalorder %v41, %v74
    %vm100 = vcmp.eq.s32.totalorder %v41, %v78
    %vm101 = vcmp.eq.s32.totalorder %v41, %v82
    %vm102 = vcmp.eq.s32.totalorder %v41, %v86
    %vm103 = vcmp.eq.s32.totalorder %v42, %v74
    %vm104 = vcmp.eq.s32.totalorder %v42, %v78
    %vm105 = vcmp.eq.s32.totalorder %v42, %v82
    %vm106 = vcmp.eq.s32.totalorder %v42, %v86
    %vm107 = vcmp.eq.s32.totalorder %v43, %v74
    %vm108 = vcmp.eq.s32.totalorder %v43, %v78
    %vm109 = vcmp.eq.s32.totalorder %v43, %v82
    %vm110 = vcmp.eq.s32.totalorder %v43, %v86
    %vm111 = vcmp.eq.s32.totalorder %v44, %v74
    %vm112 = vcmp.eq.s32.totalorder %v44, %v78
    %vm113 = vcmp.eq.s32.totalorder %v44, %v82
    %vm114 = vcmp.eq.s32.totalorder %v44, %v86
    %vm115 = vcmp.eq.s32.totalorder %v45, %v74
    %vm116 = vcmp.eq.s32.totalorder %v45, %v78
    %vm117 = vcmp.eq.s32.totalorder %v45, %v82
    %vm118 = vcmp.eq.s32.totalorder %v45, %v86
    %vm119 = vcmp.eq.s32.totalorder %v46, %v74
    %vm120 = vcmp.eq.s32.totalorder %v46, %v78
    %vm121 = vcmp.eq.s32.totalorder %v46, %v82
    %vm122 = vcmp.eq.s32.totalorder %v46, %v86
    %vm123 = vcmp.eq.s32.totalorder %v47, %v74
    %vm124 = vcmp.eq.s32.totalorder %v47, %v78
    %vm125 = vcmp.eq.s32.totalorder %v47, %v82
    %vm126 = vcmp.eq.s32.totalorder %v47, %v86
    %vm127 = vcmp.eq.s32.totalorder %v48, %v74
    %vm128 = vcmp.eq.s32.totalorder %v48, %v78
    %vm129 = vcmp.eq.s32.totalorder %v48, %v82
    %vm130 = vcmp.eq.s32.totalorder %v48, %v86
    %vm131 = vcmp.eq.s32.totalorder %v49, %v74
    %vm132 = vcmp.eq.s32.totalorder %v49, %v78
    %vm133 = vcmp.eq.s32.totalorder %v49, %v82
    %vm134 = vcmp.eq.s32.totalorder %v49, %v86
    %vm135 = vcmp.eq.s32.totalorder %v50, %v74
    %vm136 = vcmp.eq.s32.totalorder %v50, %v78
    %vm137 = vcmp.eq.s32.totalorder %v50, %v82
    %vm138 = vcmp.eq.s32.totalorder %v50, %v86
    %vm139 = vcmp.eq.s32.totalorder %v51, %v74
    %vm140 = vcmp.eq.s32.totalorder %v51, %v78
    %vm141 = vcmp.eq.s32.totalorder %v51, %v82
    %vm142 = vcmp.eq.s32.totalorder %v51, %v86
    %vm143 = vcmp.eq.s32.totalorder %v52, %v74
    %vm144 = vcmp.eq.s32.totalorder %v52, %v78
    %vm145 = vcmp.eq.s32.totalorder %v52, %v82
    %vm146 = vcmp.eq.s32.totalorder %v52, %v86
    %vm147 = vcmp.eq.s32.totalorder %v53, %v74
    %vm148 = vcmp.eq.s32.totalorder %v53, %v78
    %vm149 = vcmp.eq.s32.totalorder %v53, %v82
    %vm150 = vcmp.eq.s32.totalorder %v53, %v86
    %vm151 = vcmp.eq.s32.totalorder %v54, %v74
    %vm152 = vcmp.eq.s32.totalorder %v54, %v78
    %vm153 = vcmp.eq.s32.totalorder %v54, %v82
    %vm154 = vcmp.eq.s32.totalorder %v54, %v86
    %vm155 = vcmp.eq.s32.totalorder %v55, %v74
    %vm156 = vcmp.eq.s32.totalorder %v55, %v78
    %vm157 = vcmp.eq.s32.totalorder %v55, %v82
    %vm158 = vcmp.eq.s32.totalorder %v55, %v86
    %vm159 = vcmp.eq.s32.totalorder %v56, %v74
    %vm160 = vcmp.eq.s32.totalorder %v56, %v78
    %vm161 = vcmp.eq.s32.totalorder %v56, %v82
    %vm162 = vcmp.eq.s32.totalorder %v56, %v86
    %vm163 = vcmp.eq.s32.totalorder %v57, %v74
    %vm164 = vcmp.eq.s32.totalorder %v57, %v78
    %vm165 = vcmp.eq.s32.totalorder %v57, %v82
    %vm166 = vcmp.eq.s32.totalorder %v57, %v86
    %vm167 = vcmp.eq.s32.totalorder %v58, %v74
    %vm168 = vcmp.eq.s32.totalorder %v58, %v78
    %vm169 = vcmp.eq.s32.totalorder %v58, %v82
    %vm170 = vcmp.eq.s32.totalorder %v58, %v86
    %vm171 = vcmp.eq.s32.totalorder %v59, %v74
    %vm172 = vcmp.eq.s32.totalorder %v59, %v78
    %vm173 = vcmp.eq.s32.totalorder %v59, %v82
    %vm174 = vcmp.eq.s32.totalorder %v59, %v86
    %vm175 = vcmp.eq.s32.totalorder %v60, %v74
    %vm176 = vcmp.eq.s32.totalorder %v60, %v78
    %vm177 = vcmp.eq.s32.totalorder %v60, %v82
    %vm178 = vcmp.eq.s32.totalorder %v60, %v86
    %vm179 = vcmp.eq.s32.totalorder %v61, %v74
    %vm180 = vcmp.eq.s32.totalorder %v61, %v78
    %vm181 = vcmp.eq.s32.totalorder %v61, %v82
    %vm182 = vcmp.eq.s32.totalorder %v61, %v86
    %vm183 = vcmp.eq.s32.totalorder %v62, %v74
    %vm184 = vcmp.eq.s32.totalorder %v62, %v78
    %vm185 = vcmp.eq.s32.totalorder %v62, %v82
    %vm186 = vcmp.eq.s32.totalorder %v62, %v86
    %vm187 = vcmp.eq.s32.totalorder %v63, %v74
    %vm188 = vcmp.eq.s32.totalorder %v63, %v78
    %vm189 = vcmp.eq.s32.totalorder %v63, %v82
    %vm190 = vcmp.eq.s32.totalorder %v63, %v86
    %vm191 = vcmp.eq.s32.totalorder %v64, %v74
    %vm192 = vcmp.eq.s32.totalorder %v64, %v78
    %vm193 = vcmp.eq.s32.totalorder %v64, %v82
    %vm194 = vcmp.eq.s32.totalorder %v64, %v86
    %vm195 = vcmp.eq.s32.totalorder %v65, %v74
    %vm196 = vcmp.eq.s32.totalorder %v65, %v78
    %vm197 = vcmp.eq.s32.totalorder %v65, %v82
    %vm198 = vcmp.eq.s32.totalorder %v65, %v86
    %vm199 = vcmp.eq.s32.totalorder %v66, %v74
    %vm200 = vcmp.eq.s32.totalorder %v66, %v78
    %vm201 = vcmp.eq.s32.totalorder %v66, %v82
    %vm202 = vcmp.eq.s32.totalorder %v66, %v86
    %vm203 = vcmp.eq.s32.totalorder %v67, %v74
    %vm204 = vcmp.eq.s32.totalorder %v67, %v78
    %vm205 = vcmp.eq.s32.totalorder %v67, %v82
    %vm206 = vcmp.eq.s32.totalorder %v67, %v86
    %vm207 = vcmp.eq.s32.totalorder %v68, %v74
    %vm208 = vcmp.eq.s32.totalorder %v68, %v78
    %vm209 = vcmp.eq.s32.totalorder %v68, %v82
    %vm210 = vcmp.eq.s32.totalorder %v68, %v86
    %vm211 = vcmp.eq.s32.totalorder %v69, %v74
    %vm212 = vcmp.eq.s32.totalorder %v69, %v78
    %vm213 = vcmp.eq.s32.totalorder %v69, %v82
    %vm214 = vcmp.eq.s32.totalorder %v69, %v86
    %v215 = vsel %vm87, 1, 0
    %v216 = vsel %vm88, 1, 0
    %v217 = vsel %vm89, 1, 0
    %v218 = vsel %vm90, 1, 0
    %v219 = vsel %vm91, 1, 0
    %v220 = vsel %vm92, 1, 0
    %v221 = vsel %vm93, 1, 0
    %v222 = vsel %vm94, 1, 0
    %v223 = vsel %vm95, 1, 0
    %v224 = vsel %vm96, 1, 0
    %v225 = vsel %vm97, 1, 0
    %v226 = vsel %vm98, 1, 0
    %v227 = vsel %vm99, 1, 0
    %v228 = vsel %vm100, 1, 0
    %v229 = vsel %vm101, 1, 0
    %v230 = vsel %vm102, 1, 0
    %v231 = vsel %vm103, 1, 0
    %v232 = vsel %vm104, 1, 0
    %v233 = vsel %vm105, 1, 0
    %v234 = vsel %vm106, 1, 0
    %v235 = vsel %vm107, 1, 0
    %v236 = vsel %vm108, 1, 0
    %v237 = vsel %vm109, 1, 0
    %v238 = vsel %vm110, 1, 0
    %v239 = vsel %vm111, 1, 0
    %v240 = vsel %vm112, 1, 0
    %v241 = vsel %vm113, 1, 0
    %v242 = vsel %vm114, 1, 0
    %v243 = vsel %vm115, 1, 0
    %v244 = vsel %vm116, 1, 0
    %v245 = vsel %vm117, 1, 0
    %v246 = vsel %vm118, 1, 0
    %v247 = vsel %vm119, 1, 0
    %v248 = vsel %vm120, 1, 0
    %v249 = vsel %vm121, 1, 0
    %v250 = vsel %vm122, 1, 0
    %v251 = vsel %vm123, 1, 0
    %v252 = vsel %vm124, 1, 0
    %v253 = vsel %vm125, 1, 0
    %v254 = vsel %vm126, 1, 0
    %v255 = vsel %vm127, 1, 0
    %v256 = vsel %vm128, 1, 0
    %v257 = vsel %vm129, 1, 0
    %v258 = vsel %vm130, 1, 0
    %v259 = vsel %vm131, 1, 0
    %v260 = vsel %vm132, 1, 0
    %v261 = vsel %vm133, 1, 0
    %v262 = vsel %vm134, 1, 0
    %v263 = vsel %vm135, 1, 0
    %v264 = vsel %vm136, 1, 0
    %v265 = vsel %vm137, 1, 0
    %v266 = vsel %vm138, 1, 0
    %v267 = vsel %vm139, 1, 0
    %v268 = vsel %vm140, 1, 0
    %v269 = vsel %vm141, 1, 0
    %v270 = vsel %vm142, 1, 0
    %v271 = vsel %vm143, 1, 0
    %v272 = vsel %vm144, 1, 0
    %v273 = vsel %vm145, 1, 0
    %v274 = vsel %vm146, 1, 0
    %v275 = vsel %vm147, 1, 0
    %v276 = vsel %vm148, 1, 0
    %v277 = vsel %vm149, 1, 0
    %v278 = vsel %vm150, 1, 0
    %v279 = vsel %vm151, 1, 0
    %v280 = vsel %vm152, 1, 0
    %v281 = vsel %vm153, 1, 0
    %v282 = vsel %vm154, 1, 0
    %v283 = vsel %vm155, 1, 0
    %v284 = vsel %vm156, 1, 0
    %v285 = vsel %vm157, 1, 0
    %v286 = vsel %vm158, 1, 0
    %v287 = vsel %vm159, 1, 0
    %v288 = vsel %vm160, 1, 0
    %v289 = vsel %vm161, 1, 0
    %v290 = vsel %vm162, 1, 0
    %v291 = vsel %vm163, 1, 0
    %v292 = vsel %vm164, 1, 0
    %v293 = vsel %vm165, 1, 0
    %v294 = vsel %vm166, 1, 0
    %v295 = vsel %vm167, 1, 0
    %v296 = vsel %vm168, 1, 0
    %v297 = vsel %vm169, 1, 0
    %v298 = vsel %vm170, 1, 0
    %v299 = vsel %vm171, 1, 0
    %v300 = vsel %vm172, 1, 0
    %v301 = vsel %vm173, 1, 0
    %v302 = vsel %vm174, 1, 0
    %v303 = vsel %vm175, 1, 0
    %v304 = vsel %vm176, 1, 0
    %v305 = vsel %vm177, 1, 0
    %v306 = vsel %vm178, 1, 0
    %v307 = vsel %vm179, 1, 0
    %v308 = vsel %vm180, 1, 0
    %v309 = vsel %vm181, 1, 0
    %v310 = vsel %vm182, 1, 0
    %v311 = vsel %vm183, 1, 0
    %v312 = vsel %vm184, 1, 0
    %v313 = vsel %vm185, 1, 0
    %v314 = vsel %vm186, 1, 0
    %v315 = vsel %vm187, 1, 0
    %v316 = vsel %vm188, 1, 0
    %v317 = vsel %vm189, 1, 0
    %v318 = vsel %vm190, 1, 0
    %v319 = vsel %vm191, 1, 0
    %v320 = vsel %vm192, 1, 0
    %v321 = vsel %vm193, 1, 0
    %v322 = vsel %vm194, 1, 0
    %v323 = vsel %vm195, 1, 0
    %v324 = vsel %vm196, 1, 0
    %v325 = vsel %vm197, 1, 0
    %v326 = vsel %vm198, 1, 0
    %v327 = vsel %vm199, 1, 0
    %v328 = vsel %vm200, 1, 0
    %v329 = vsel %vm201, 1, 0
    %v330 = vsel %vm202, 1, 0
    %v331 = vsel %vm203, 1, 0
    %v332 = vsel %vm204, 1, 0
    %v333 = vsel %vm205, 1, 0
    %v334 = vsel %vm206, 1, 0
    %v335 = vsel %vm207, 1, 0
    %v336 = vsel %vm208, 1, 0
    %v337 = vsel %vm209, 1, 0
    %v338 = vsel %vm210, 1, 0
    %v339 = vsel %vm211, 1, 0
    %v340 = vsel %vm212, 1, 0
    %v341 = vsel %vm213, 1, 0
    %v342 = vsel %vm214, 1, 0
    %v343 = vcvt.s32.f32 %v215
    %v344 = vcvt.s32.f32 %v216
    %v345 = vcvt.s32.f32 %v217
    %v346 = vcvt.s32.f32 %v218
    %v347 = vcvt.s32.f32 %v219
    %v348 = vcvt.s32.f32 %v220
    %v349 = vcvt.s32.f32 %v221
    %v350 = vcvt.s32.f32 %v222
    %v351 = vcvt.s32.f32 %v223
    %v352 = vcvt.s32.f32 %v224
    %v353 = vcvt.s32.f32 %v225
    %v354 = vcvt.s32.f32 %v226
    %v355 = vcvt.s32.f32 %v227
    %v356 = vcvt.s32.f32 %v228
    %v357 = vcvt.s32.f32 %v229
    %v358 = vcvt.s32.f32 %v230
    %v359 = vcvt.s32.f32 %v231
    %v360 = vcvt.s32.f32 %v232
    %v361 = vcvt.s32.f32 %v233
    %v362 = vcvt.s32.f32 %v234
    %v363 = vcvt.s32.f32 %v235
    %v364 = vcvt.s32.f32 %v236
    %v365 = vcvt.s32.f32 %v237
    %v366 = vcvt.s32.f32 %v238
    %v367 = vcvt.s32.f32 %v239
    %v368 = vcvt.s32.f32 %v240
    %v369 = vcvt.s32.f32 %v241
    %v370 = vcvt.s32.f32 %v242
    %v371 = vcvt.s32.f32 %v243
    %v372 = vcvt.s32.f32 %v244
    %v373 = vcvt.s32.f32 %v245
    %v374 = vcvt.s32.f32 %v246
    %v375 = vcvt.s32.f32 %v247
    %v376 = vcvt.s32.f32 %v248
    %v377 = vcvt.s32.f32 %v249
    %v378 = vcvt.s32.f32 %v250
    %v379 = vcvt.s32.f32 %v251
    %v380 = vcvt.s32.f32 %v252
    %v381 = vcvt.s32.f32 %v253
    %v382 = vcvt.s32.f32 %v254
    %v383 = vcvt.s32.f32 %v255
    %v384 = vcvt.s32.f32 %v256
    %v385 = vcvt.s32.f32 %v257
    %v386 = vcvt.s32.f32 %v258
    %v387 = vcvt.s32.f32 %v259
    %v388 = vcvt.s32.f32 %v260
    %v389 = vcvt.s32.f32 %v261
    %v390 = vcvt.s32.f32 %v262
    %v391 = vcvt.s32.f32 %v263
    %v392 = vcvt.s32.f32 %v264
    %v393 = vcvt.s32.f32 %v265
    %v394 = vcvt.s32.f32 %v266
    %v395 = vcvt.s32.f32 %v267
    %v396 = vcvt.s32.f32 %v268
    %v397 = vcvt.s32.f32 %v269
    %v398 = vcvt.s32.f32 %v270
    %v399 = vcvt.s32.f32 %v271
    %v400 = vcvt.s32.f32 %v272
    %v401 = vcvt.s32.f32 %v273
    %v402 = vcvt.s32.f32 %v274
    %v403 = vcvt.s32.f32 %v275
    %v404 = vcvt.s32.f32 %v276
    %v405 = vcvt.s32.f32 %v277
    %v406 = vcvt.s32.f32 %v278
    %v407 = vcvt.s32.f32 %v279
    %v408 = vcvt.s32.f32 %v280
    %v409 = vcvt.s32.f32 %v281
    %v410 = vcvt.s32.f32 %v282
    %v411 = vcvt.s32.f32 %v283
    %v412 = vcvt.s32.f32 %v284
    %v413 = vcvt.s32.f32 %v285
    %v414 = vcvt.s32.f32 %v286
    %v415 = vcvt.s32.f32 %v287
    %v416 = vcvt.s32.f32 %v288
    %v417 = vcvt.s32.f32 %v289
    %v418 = vcvt.s32.f32 %v290
    %v419 = vcvt.s32.f32 %v291
    %v420 = vcvt.s32.f32 %v292
    %v421 = vcvt.s32.f32 %v293
    %v422 = vcvt.s32.f32 %v294
    %v423 = vcvt.s32.f32 %v295
    %v424 = vcvt.s32.f32 %v296
    %v425 = vcvt.s32.f32 %v297
    %v426 = vcvt.s32.f32 %v298
    %v427 = vcvt.s32.f32 %v299
    %v428 = vcvt.s32.f32 %v300
    %v429 = vcvt.s32.f32 %v301
    %v430 = vcvt.s32.f32 %v302
    %v431 = vcvt.s32.f32 %v303
    %v432 = vcvt.s32.f32 %v304
    %v433 = vcvt.s32.f32 %v305
    %v434 = vcvt.s32.f32 %v306
    %v435 = vcvt.s32.f32 %v307
    %v436 = vcvt.s32.f32 %v308
    %v437 = vcvt.s32.f32 %v309
    %v438 = vcvt.s32.f32 %v310
    %v439 = vcvt.s32.f32 %v311
    %v440 = vcvt.s32.f32 %v312
    %v441 = vcvt.s32.f32 %v313
    %v442 = vcvt.s32.f32 %v314
    %v443 = vcvt.s32.f32 %v315
    %v444 = vcvt.s32.f32 %v316
    %v445 = vcvt.s32.f32 %v317
    %v446 = vcvt.s32.f32 %v318
    %v447 = vcvt.s32.f32 %v319
    %v448 = vcvt.s32.f32 %v320
    %v449 = vcvt.s32.f32 %v321
    %v450 = vcvt.s32.f32 %v322
    %v451 = vcvt.s32.f32 %v323
    %v452 = vcvt.s32.f32 %v324
    %v453 = vcvt.s32.f32 %v325
    %v454 = vcvt.s32.f32 %v326
    %v455 = vcvt.s32.f32 %v327
    %v456 = vcvt.s32.f32 %v328
    %v457 = vcvt.s32.f32 %v329
    %v458 = vcvt.s32.f32 %v330
    %v459 = vcvt.s32.f32 %v331
    %v460 = vcvt.s32.f32 %v332
    %v461 = vcvt.s32.f32 %v333
    %v462 = vcvt.s32.f32 %v334
    %v463 = vcvt.s32.f32 %v335
    %v464 = vcvt.s32.f32 %v336
    %v465 = vcvt.s32.f32 %v337
    %v466 = vcvt.s32.f32 %v338
    %v467 = vcvt.s32.f32 %v339
    %v468 = vcvt.s32.f32 %v340
    %v469 = vcvt.s32.f32 %v341
    %v470 = vcvt.s32.f32 %v342
    %v471 = vlaneseq
    %v472 = vand.u32 %v471, 127
    %v473 = vadd.s32 %v472, 128
    %v474 = vld [vmem:[%s3] sm:$0xff]
    %v475 = vld [vmem:[%s3 + $0x8] sm:$0xff]
    %v476 = vld [vmem:[%s3 + $0x10] sm:$0xff]
    %v477 = vld [vmem:[%s3 + $0x18] sm:$0xff]
    %v478 = vld [vmem:[%s3 + $0x20] sm:$0xff]
    %v479 = vld [vmem:[%s3 + $0x28] sm:$0xff]
    %v480 = vld [vmem:[%s3 + $0x30] sm:$0xff]
    %v481 = vld [vmem:[%s3 + $0x38] sm:$0xff]
    %v482 = vld [vmem:[%s3 + $0x40] sm:$0xff]
    %v483 = vld [vmem:[%s3 + $0x48] sm:$0xff]
    %v484 = vld [vmem:[%s3 + $0x50] sm:$0xff]
    %v485 = vld [vmem:[%s3 + $0x58] sm:$0xff]
    %v486 = vld [vmem:[%s3 + $0x60] sm:$0xff]
    %v487 = vld [vmem:[%s3 + $0x68] sm:$0xff]
    %v488 = vld [vmem:[%s3 + $0x70] sm:$0xff]
    %v489 = vld [vmem:[%s3 + $0x78] sm:$0xff]
    %v490 = vld [vmem:[%s3 + $0x80] sm:$0xff]
    %v491 = vld [vmem:[%s3 + $0x88] sm:$0xff]
    %v492 = vld [vmem:[%s3 + $0x90] sm:$0xff]
    %v493 = vld [vmem:[%s3 + $0x98] sm:$0xff]
    %v494 = vld [vmem:[%s3 + $0xa0] sm:$0xff]
    %v495 = vld [vmem:[%s3 + $0xa8] sm:$0xff]
    %v496 = vld [vmem:[%s3 + $0xb0] sm:$0xff]
    %v497 = vld [vmem:[%s3 + $0xb8] sm:$0xff]
    %v498 = vld [vmem:[%s3 + $0xc0] sm:$0xff]
    %v499 = vld [vmem:[%s3 + $0xc8] sm:$0xff]
    %v500 = vld [vmem:[%s3 + $0xd0] sm:$0xff]
    %v501 = vld [vmem:[%s3 + $0xd8] sm:$0xff]
    %v502 = vld [vmem:[%s3 + $0xe0] sm:$0xff]
    %v503 = vld [vmem:[%s3 + $0xe8] sm:$0xff]
    %v504 = vld [vmem:[%s3 + $0xf0] sm:$0xff]
    %v505 = vld [vmem:[%s3 + $0xf8] sm:$0xff]
    %v506 = vld [vmem:[%s3 + $0x100] sm:$0xff]
    %v507 = vld [vmem:[%s3 + $0x108] sm:$0xff]
    %v508 = vld [vmem:[%s3 + $0x110] sm:$0xff]
    %v509 = vld [vmem:[%s3 + $0x118] sm:$0xff]
    %v510 = vld [vmem:[%s3 + $0x120] sm:$0xff]
    %v511 = vld [vmem:[%s3 + $0x128] sm:$0xff]
    %v512 = vld [vmem:[%s3 + $0x130] sm:$0xff]
    %v513 = vld [vmem:[%s3 + $0x138] sm:$0xff]
    %v514 = vld [vmem:[%s3 + $0x140] sm:$0xff]
    %v515 = vld [vmem:[%s3 + $0x148] sm:$0xff]
    %v516 = vld [vmem:[%s3 + $0x150] sm:$0xff]
    %v517 = vld [vmem:[%s3 + $0x158] sm:$0xff]
    %v518 = vld [vmem:[%s3 + $0x160] sm:$0xff]
    %v519 = vld [vmem:[%s3 + $0x168] sm:$0xff]
    %v520 = vld [vmem:[%s3 + $0x170] sm:$0xff]
    %v521 = vld [vmem:[%s3 + $0x178] sm:$0xff]
    %v522 = vld [vmem:[%s3 + $0x180] sm:$0xff]
    %v523 = vld [vmem:[%s3 + $0x188] sm:$0xff]
    %v524 = vld [vmem:[%s3 + $0x190] sm:$0xff]
    %v525 = vld [vmem:[%s3 + $0x198] sm:$0xff]
    %v526 = vld [vmem:[%s3 + $0x1a0] sm:$0xff]
    %v527 = vld [vmem:[%s3 + $0x1a8] sm:$0xff]
    %v528 = vld [vmem:[%s3 + $0x1b0] sm:$0xff]
    %v529 = vld [vmem:[%s3 + $0x1b8] sm:$0xff]
    %v530 = vld [vmem:[%s3 + $0x1c0] sm:$0xff]
    %v531 = vld [vmem:[%s3 + $0x1c8] sm:$0xff]
    %v532 = vld [vmem:[%s3 + $0x1d0] sm:$0xff]
    %v533 = vld [vmem:[%s3 + $0x1d8] sm:$0xff]
    %v534 = vld [vmem:[%s3 + $0x1e0] sm:$0xff]
    %v535 = vld [vmem:[%s3 + $0x1e8] sm:$0xff]
    %v536 = vld [vmem:[%s3 + $0x1f0] sm:$0xff]
    %v537 = vld [vmem:[%s3 + $0x1f8] sm:$0xff]
    %v538 = vcvt.f32.s32.to.zero.pseudo %v474
    %v539 = vcvt.f32.s32.to.zero.pseudo %v475
    %v540 = vcvt.f32.s32.to.zero.pseudo %v476
    %v541 = vcvt.f32.s32.to.zero.pseudo %v477
    %v542 = vcvt.f32.s32.to.zero.pseudo %v478
    %v543 = vcvt.f32.s32.to.zero.pseudo %v479
    %v544 = vcvt.f32.s32.to.zero.pseudo %v480
    %v545 = vcvt.f32.s32.to.zero.pseudo %v481
    %v546 = vcvt.f32.s32.to.zero.pseudo %v482
    %v547 = vcvt.f32.s32.to.zero.pseudo %v483
    %v548 = vcvt.f32.s32.to.zero.pseudo %v484
    %v549 = vcvt.f32.s32.to.zero.pseudo %v485
    %v550 = vcvt.f32.s32.to.zero.pseudo %v486
    %v551 = vcvt.f32.s32.to.zero.pseudo %v487
    %v552 = vcvt.f32.s32.to.zero.pseudo %v488
    %v553 = vcvt.f32.s32.to.zero.pseudo %v489
    %v554 = vcvt.f32.s32.to.zero.pseudo %v490
    %v555 = vcvt.f32.s32.to.zero.pseudo %v491
    %v556 = vcvt.f32.s32.to.zero.pseudo %v492
    %v557 = vcvt.f32.s32.to.zero.pseudo %v493
    %v558 = vcvt.f32.s32.to.zero.pseudo %v494
    %v559 = vcvt.f32.s32.to.zero.pseudo %v495
    %v560 = vcvt.f32.s32.to.zero.pseudo %v496
    %v561 = vcvt.f32.s32.to.zero.pseudo %v497
    %v562 = vcvt.f32.s32.to.zero.pseudo %v498
    %v563 = vcvt.f32.s32.to.zero.pseudo %v499
    %v564 = vcvt.f32.s32.to.zero.pseudo %v500
    %v565 = vcvt.f32.s32.to.zero.pseudo %v501
    %v566 = vcvt.f32.s32.to.zero.pseudo %v502
    %v567 = vcvt.f32.s32.to.zero.pseudo %v503
    %v568 = vcvt.f32.s32.to.zero.pseudo %v504
    %v569 = vcvt.f32.s32.to.zero.pseudo %v505
    %v570 = vcvt.f32.s32.to.zero.pseudo %v506
    %v571 = vcvt.f32.s32.to.zero.pseudo %v507
    %v572 = vcvt.f32.s32.to.zero.pseudo %v508
    %v573 = vcvt.f32.s32.to.zero.pseudo %v509
    %v574 = vcvt.f32.s32.to.zero.pseudo %v510
    %v575 = vcvt.f32.s32.to.zero.pseudo %v511
    %v576 = vcvt.f32.s32.to.zero.pseudo %v512
    %v577 = vcvt.f32.s32.to.zero.pseudo %v513
    %v578 = vcvt.f32.s32.to.zero.pseudo %v514
    %v579 = vcvt.f32.s32.to.zero.pseudo %v515
    %v580 = vcvt.f32.s32.to.zero.pseudo %v516
    %v581 = vcvt.f32.s32.to.zero.pseudo %v517
    %v582 = vcvt.f32.s32.to.zero.pseudo %v518
    %v583 = vcvt.f32.s32.to.zero.pseudo %v519
    %v584 = vcvt.f32.s32.to.zero.pseudo %v520
    %v585 = vcvt.f32.s32.to.zero.pseudo %v521
    %v586 = vcvt.f32.s32.to.zero.pseudo %v522
    %v587 = vcvt.f32.s32.to.zero.pseudo %v523
    %v588 = vcvt.f32.s32.to.zero.pseudo %v524
    %v589 = vcvt.f32.s32.to.zero.pseudo %v525
    %v590 = vcvt.f32.s32.to.zero.pseudo %v526
    %v591 = vcvt.f32.s32.to.zero.pseudo %v527
    %v592 = vcvt.f32.s32.to.zero.pseudo %v528
    %v593 = vcvt.f32.s32.to.zero.pseudo %v529
    %v594 = vcvt.f32.s32.to.zero.pseudo %v530
    %v595 = vcvt.f32.s32.to.zero.pseudo %v531
    %v596 = vcvt.f32.s32.to.zero.pseudo %v532
    %v597 = vcvt.f32.s32.to.zero.pseudo %v533
    %v598 = vcvt.f32.s32.to.zero.pseudo %v534
    %v599 = vcvt.f32.s32.to.zero.pseudo %v535
    %v600 = vcvt.f32.s32.to.zero.pseudo %v536
    %v601 = vcvt.f32.s32.to.zero.pseudo %v537
    %602 = vset.pattern.permute.xlu0 0
    %603 = vperm.xlu0 %602, %v538
    %v604 = vpop.permute.xlu0 %603
    %605 = vset.pattern.permute.xlu0 0
    %606 = vperm.xlu0 %605, %v539
    %v607 = vpop.permute.xlu0 %606
    %608 = vset.pattern.permute.xlu0 0
    %609 = vperm.xlu0 %608, %v540
    %v610 = vpop.permute.xlu0 %609
    %611 = vset.pattern.permute.xlu0 0
    %612 = vperm.xlu0 %611, %v541
    %v613 = vpop.permute.xlu0 %612
    %614 = vset.pattern.permute.xlu0 0
    %615 = vperm.xlu0 %614, %v542
    %v616 = vpop.permute.xlu0 %615
    %617 = vset.pattern.permute.xlu0 0
    %618 = vperm.xlu0 %617, %v543
    %v619 = vpop.permute.xlu0 %618
    %620 = vset.pattern.permute.xlu0 0
    %621 = vperm.xlu0 %620, %v544
    %v622 = vpop.permute.xlu0 %621
    %623 = vset.pattern.permute.xlu0 0
    %624 = vperm.xlu0 %623, %v545
    %v625 = vpop.permute.xlu0 %624
    %626 = vset.pattern.permute.xlu0 0
    %627 = vperm.xlu0 %626, %v546
    %v628 = vpop.permute.xlu0 %627
    %629 = vset.pattern.permute.xlu0 0
    %630 = vperm.xlu0 %629, %v547
    %v631 = vpop.permute.xlu0 %630
    %632 = vset.pattern.permute.xlu0 0
    %633 = vperm.xlu0 %632, %v548
    %v634 = vpop.permute.xlu0 %633
    %635 = vset.pattern.permute.xlu0 0
    %636 = vperm.xlu0 %635, %v549
    %v637 = vpop.permute.xlu0 %636
    %638 = vset.pattern.permute.xlu0 0
    %639 = vperm.xlu0 %638, %v550
    %v640 = vpop.permute.xlu0 %639
    %641 = vset.pattern.permute.xlu0 0
    %642 = vperm.xlu0 %641, %v551
    %v643 = vpop.permute.xlu0 %642
    %644 = vset.pattern.permute.xlu0 0
    %645 = vperm.xlu0 %644, %v552
    %v646 = vpop.permute.xlu0 %645
    %647 = vset.pattern.permute.xlu0 0
    %648 = vperm.xlu0 %647, %v553
    %v649 = vpop.permute.xlu0 %648
    %650 = vset.pattern.permute.xlu0 0
    %651 = vperm.xlu0 %650, %v554
    %v652 = vpop.permute.xlu0 %651
    %653 = vset.pattern.permute.xlu0 0
    %654 = vperm.xlu0 %653, %v555
    %v655 = vpop.permute.xlu0 %654
    %656 = vset.pattern.permute.xlu0 0
    %657 = vperm.xlu0 %656, %v556
    %v658 = vpop.permute.xlu0 %657
    %659 = vset.pattern.permute.xlu0 0
    %660 = vperm.xlu0 %659, %v557
    %v661 = vpop.permute.xlu0 %660
    %662 = vset.pattern.permute.xlu0 0
    %663 = vperm.xlu0 %662, %v558
    %v664 = vpop.permute.xlu0 %663
    %665 = vset.pattern.permute.xlu0 0
    %666 = vperm.xlu0 %665, %v559
    %v667 = vpop.permute.xlu0 %666
    %668 = vset.pattern.permute.xlu0 0
    %669 = vperm.xlu0 %668, %v560
    %v670 = vpop.permute.xlu0 %669
    %671 = vset.pattern.permute.xlu0 0
    %672 = vperm.xlu0 %671, %v561
    %v673 = vpop.permute.xlu0 %672
    %674 = vset.pattern.permute.xlu0 0
    %675 = vperm.xlu0 %674, %v562
    %v676 = vpop.permute.xlu0 %675
    %677 = vset.pattern.permute.xlu0 0
    %678 = vperm.xlu0 %677, %v563
    %v679 = vpop.permute.xlu0 %678
    %680 = vset.pattern.permute.xlu0 0
    %681 = vperm.xlu0 %680, %v564
    %v682 = vpop.permute.xlu0 %681
    %683 = vset.pattern.permute.xlu0 0
    %684 = vperm.xlu0 %683, %v565
    %v685 = vpop.permute.xlu0 %684
    %686 = vset.pattern.permute.xlu0 0
    %687 = vperm.xlu0 %686, %v566
    %v688 = vpop.permute.xlu0 %687
    %689 = vset.pattern.permute.xlu0 0
    %690 = vperm.xlu0 %689, %v567
    %v691 = vpop.permute.xlu0 %690
    %692 = vset.pattern.permute.xlu0 0
    %693 = vperm.xlu0 %692, %v568
    %v694 = vpop.permute.xlu0 %693
    %695 = vset.pattern.permute.xlu0 0
    %696 = vperm.xlu0 %695, %v569
    %v697 = vpop.permute.xlu0 %696
    %698 = vset.pattern.permute.xlu0 0
    %699 = vperm.xlu0 %698, %v570
    %v700 = vpop.permute.xlu0 %699
    %701 = vset.pattern.permute.xlu0 0
    %702 = vperm.xlu0 %701, %v571
    %v703 = vpop.permute.xlu0 %702
    %704 = vset.pattern.permute.xlu0 0
    %705 = vperm.xlu0 %704, %v572
    %v706 = vpop.permute.xlu0 %705
    %707 = vset.pattern.permute.xlu0 0
    %708 = vperm.xlu0 %707, %v573
    %v709 = vpop.permute.xlu0 %708
    %710 = vset.pattern.permute.xlu0 0
    %711 = vperm.xlu0 %710, %v574
    %v712 = vpop.permute.xlu0 %711
    %713 = vset.pattern.permute.xlu0 0
    %714 = vperm.xlu0 %713, %v575
    %v715 = vpop.permute.xlu0 %714
    %716 = vset.pattern.permute.xlu0 0
    %717 = vperm.xlu0 %716, %v576
    %v718 = vpop.permute.xlu0 %717
    %719 = vset.pattern.permute.xlu0 0
    %720 = vperm.xlu0 %719, %v577
    %v721 = vpop.permute.xlu0 %720
    %722 = vset.pattern.permute.xlu0 0
    %723 = vperm.xlu0 %722, %v578
    %v724 = vpop.permute.xlu0 %723
    %725 = vset.pattern.permute.xlu0 0
    %726 = vperm.xlu0 %725, %v579
    %v727 = vpop.permute.xlu0 %726
    %728 = vset.pattern.permute.xlu0 0
    %729 = vperm.xlu0 %728, %v580
    %v730 = vpop.permute.xlu0 %729
    %731 = vset.pattern.permute.xlu0 0
    %732 = vperm.xlu0 %731, %v581
    %v733 = vpop.permute.xlu0 %732
    %734 = vset.pattern.permute.xlu0 0
    %735 = vperm.xlu0 %734, %v582
    %v736 = vpop.permute.xlu0 %735
    %737 = vset.pattern.permute.xlu0 0
    %738 = vperm.xlu0 %737, %v583
    %v739 = vpop.permute.xlu0 %738
    %740 = vset.pattern.permute.xlu0 0
    %741 = vperm.xlu0 %740, %v584
    %v742 = vpop.permute.xlu0 %741
    %743 = vset.pattern.permute.xlu0 0
    %744 = vperm.xlu0 %743, %v585
    %v745 = vpop.permute.xlu0 %744
    %746 = vset.pattern.permute.xlu0 0
    %747 = vperm.xlu0 %746, %v586
    %v748 = vpop.permute.xlu0 %747
    %749 = vset.pattern.permute.xlu0 0
    %750 = vperm.xlu0 %749, %v587
    %v751 = vpop.permute.xlu0 %750
    %752 = vset.pattern.permute.xlu0 0
    %753 = vperm.xlu0 %752, %v588
    %v754 = vpop.permute.xlu0 %753
    %755 = vset.pattern.permute.xlu0 0
    %756 = vperm.xlu0 %755, %v589
    %v757 = vpop.permute.xlu0 %756
    %758 = vset.pattern.permute.xlu0 0
    %759 = vperm.xlu0 %758, %v590
    %v760 = vpop.permute.xlu0 %759
    %761 = vset.pattern.permute.xlu0 0
    %762 = vperm.xlu0 %761, %v591
    %v763 = vpop.permute.xlu0 %762
    %764 = vset.pattern.permute.xlu0 0
    %765 = vperm.xlu0 %764, %v592
    %v766 = vpop.permute.xlu0 %765
    %767 = vset.pattern.permute.xlu0 0
    %768 = vperm.xlu0 %767, %v593
    %v769 = vpop.permute.xlu0 %768
    %770 = vset.pattern.permute.xlu0 0
    %771 = vperm.xlu0 %770, %v594
    %v772 = vpop.permute.xlu0 %771
    %773 = vset.pattern.permute.xlu0 0
    %774 = vperm.xlu0 %773, %v595
    %v775 = vpop.permute.xlu0 %774
    %776 = vset.pattern.permute.xlu0 0
    %777 = vperm.xlu0 %776, %v596
    %v778 = vpop.permute.xlu0 %777
    %779 = vset.pattern.permute.xlu0 0
    %780 = vperm.xlu0 %779, %v597
    %v781 = vpop.permute.xlu0 %780
    %782 = vset.pattern.permute.xlu0 0
    %783 = vperm.xlu0 %782, %v598
    %v784 = vpop.permute.xlu0 %783
    %785 = vset.pattern.permute.xlu0 0
    %786 = vperm.xlu0 %785, %v599
    %v787 = vpop.permute.xlu0 %786
    %788 = vset.pattern.permute.xlu0 0
    %789 = vperm.xlu0 %788, %v600
    %v790 = vpop.permute.xlu0 %789
    %791 = vset.pattern.permute.xlu0 0
    %792 = vperm.xlu0 %791, %v601
    %v793 = vpop.permute.xlu0 %792
    %vm794 = vcmp.eq.s32.totalorder %v472, %v604
    %vm795 = vcmp.eq.s32.totalorder %v473, %v604
    %vm796 = vcmp.eq.s32.totalorder %v472, %v607
    %vm797 = vcmp.eq.s32.totalorder %v473, %v607
    %vm798 = vcmp.eq.s32.totalorder %v472, %v610
    %vm799 = vcmp.eq.s32.totalorder %v473, %v610
    %vm800 = vcmp.eq.s32.totalorder %v472, %v613
    %vm801 = vcmp.eq.s32.totalorder %v473, %v613
    %vm802 = vcmp.eq.s32.totalorder %v472, %v616
    %vm803 = vcmp.eq.s32.totalorder %v473, %v616
    %vm804 = vcmp.eq.s32.totalorder %v472, %v619
    %vm805 = vcmp.eq.s32.totalorder %v473, %v619
    %vm806 = vcmp.eq.s32.totalorder %v472, %v622
    %vm807 = vcmp.eq.s32.totalorder %v473, %v622
    %vm808 = vcmp.eq.s32.totalorder %v472, %v625
    %vm809 = vcmp.eq.s32.totalorder %v473, %v625
    %vm810 = vcmp.eq.s32.totalorder %v472, %v628
    %vm811 = vcmp.eq.s32.totalorder %v473, %v628
    %vm812 = vcmp.eq.s32.totalorder %v472, %v631
    %vm813 = vcmp.eq.s32.totalorder %v473, %v631
    %vm814 = vcmp.eq.s32.totalorder %v472, %v634
    %vm815 = vcmp.eq.s32.totalorder %v473, %v634
    %vm816 = vcmp.eq.s32.totalorder %v472, %v637
    %vm817 = vcmp.eq.s32.totalorder %v473, %v637
    %vm818 = vcmp.eq.s32.totalorder %v472, %v640
    %vm819 = vcmp.eq.s32.totalorder %v473, %v640
    %vm820 = vcmp.eq.s32.totalorder %v472, %v643
    %vm821 = vcmp.eq.s32.totalorder %v473, %v643
    %vm822 = vcmp.eq.s32.totalorder %v472, %v646
    %vm823 = vcmp.eq.s32.totalorder %v473, %v646
    %vm824 = vcmp.eq.s32.totalorder %v472, %v649
    %vm825 = vcmp.eq.s32.totalorder %v473, %v649
    %vm826 = vcmp.eq.s32.totalorder %v472, %v652
    %vm827 = vcmp.eq.s32.totalorder %v473, %v652
    %vm828 = vcmp.eq.s32.totalorder %v472, %v655
    %vm829 = vcmp.eq.s32.totalorder %v473, %v655
    %vm830 = vcmp.eq.s32.totalorder %v472, %v658
    %vm831 = vcmp.eq.s32.totalorder %v473, %v658
    %vm832 = vcmp.eq.s32.totalorder %v472, %v661
    %vm833 = vcmp.eq.s32.totalorder %v473, %v661
    %vm834 = vcmp.eq.s32.totalorder %v472, %v664
    %vm835 = vcmp.eq.s32.totalorder %v473, %v664
    %vm836 = vcmp.eq.s32.totalorder %v472, %v667
    %vm837 = vcmp.eq.s32.totalorder %v473, %v667
    %vm838 = vcmp.eq.s32.totalorder %v472, %v670
    %vm839 = vcmp.eq.s32.totalorder %v473, %v670
    %vm840 = vcmp.eq.s32.totalorder %v472, %v673
    %vm841 = vcmp.eq.s32.totalorder %v473, %v673
    %vm842 = vcmp.eq.s32.totalorder %v472, %v676
    %vm843 = vcmp.eq.s32.totalorder %v473, %v676
    %vm844 = vcmp.eq.s32.totalorder %v472, %v679
    %vm845 = vcmp.eq.s32.totalorder %v473, %v679
    %vm846 = vcmp.eq.s32.totalorder %v472, %v682
    %vm847 = vcmp.eq.s32.totalorder %v473, %v682
    %vm848 = vcmp.eq.s32.totalorder %v472, %v685
    %vm849 = vcmp.eq.s32.totalorder %v473, %v685
    %vm850 = vcmp.eq.s32.totalorder %v472, %v688
    %vm851 = vcmp.eq.s32.totalorder %v473, %v688
    %vm852 = vcmp.eq.s32.totalorder %v472, %v691
    %vm853 = vcmp.eq.s32.totalorder %v473, %v691
    %vm854 = vcmp.eq.s32.totalorder %v472, %v694
    %vm855 = vcmp.eq.s32.totalorder %v473, %v694
    %vm856 = vcmp.eq.s32.totalorder %v472, %v697
    %vm857 = vcmp.eq.s32.totalorder %v473, %v697
    %vm858 = vcmp.eq.s32.totalorder %v472, %v700
    %vm859 = vcmp.eq.s32.totalorder %v473, %v700
    %vm860 = vcmp.eq.s32.totalorder %v472, %v703
    %vm861 = vcmp.eq.s32.totalorder %v473, %v703
    %vm862 = vcmp.eq.s32.totalorder %v472, %v706
    %vm863 = vcmp.eq.s32.totalorder %v473, %v706
    %vm864 = vcmp.eq.s32.totalorder %v472, %v709
    %vm865 = vcmp.eq.s32.totalorder %v473, %v709
    %vm866 = vcmp.eq.s32.totalorder %v472, %v712
    %vm867 = vcmp.eq.s32.totalorder %v473, %v712
    %vm868 = vcmp.eq.s32.totalorder %v472, %v715
    %vm869 = vcmp.eq.s32.totalorder %v473, %v715
    %vm870 = vcmp.eq.s32.totalorder %v472, %v718
    %vm871 = vcmp.eq.s32.totalorder %v473, %v718
    %vm872 = vcmp.eq.s32.totalorder %v472, %v721
    %vm873 = vcmp.eq.s32.totalorder %v473, %v721
    %vm874 = vcmp.eq.s32.totalorder %v472, %v724
    %vm875 = vcmp.eq.s32.totalorder %v473, %v724
    %vm876 = vcmp.eq.s32.totalorder %v472, %v727
    %vm877 = vcmp.eq.s32.totalorder %v473, %v727
    %vm878 = vcmp.eq.s32.totalorder %v472, %v730
    %vm879 = vcmp.eq.s32.totalorder %v473, %v730
    %vm880 = vcmp.eq.s32.totalorder %v472, %v733
    %vm881 = vcmp.eq.s32.totalorder %v473, %v733
    %vm882 = vcmp.eq.s32.totalorder %v472, %v736
    %vm883 = vcmp.eq.s32.totalorder %v473, %v736
    %vm884 = vcmp.eq.s32.totalorder %v472, %v739
    %vm885 = vcmp.eq.s32.totalorder %v473, %v739
    %vm886 = vcmp.eq.s32.totalorder %v472, %v742
    %vm887 = vcmp.eq.s32.totalorder %v473, %v742
    %vm888 = vcmp.eq.s32.totalorder %v472, %v745
    %vm889 = vcmp.eq.s32.totalorder %v473, %v745
    %vm890 = vcmp.eq.s32.totalorder %v472, %v748
    %vm891 = vcmp.eq.s32.totalorder %v473, %v748
    %vm892 = vcmp.eq.s32.totalorder %v472, %v751
    %vm893 = vcmp.eq.s32.totalorder %v473, %v751
    %vm894 = vcmp.eq.s32.totalorder %v472, %v754
    %vm895 = vcmp.eq.s32.totalorder %v473, %v754
    %vm896 = vcmp.eq.s32.totalorder %v472, %v757
    %vm897 = vcmp.eq.s32.totalorder %v473, %v757
    %vm898 = vcmp.eq.s32.totalorder %v472, %v760
    %vm899 = vcmp.eq.s32.totalorder %v473, %v760
    %vm900 = vcmp.eq.s32.totalorder %v472, %v763
    %vm901 = vcmp.eq.s32.totalorder %v473, %v763
    %vm902 = vcmp.eq.s32.totalorder %v472, %v766
    %vm903 = vcmp.eq.s32.totalorder %v473, %v766
    %vm904 = vcmp.eq.s32.totalorder %v472, %v769
    %vm905 = vcmp.eq.s32.totalorder %v473, %v769
    %vm906 = vcmp.eq.s32.totalorder %v472, %v772
    %vm907 = vcmp.eq.s32.totalorder %v473, %v772
    %vm908 = vcmp.eq.s32.totalorder %v472, %v775
    %vm909 = vcmp.eq.s32.totalorder %v473, %v775
    %vm910 = vcmp.eq.s32.totalorder %v472, %v778
    %vm911 = vcmp.eq.s32.totalorder %v473, %v778
    %vm912 = vcmp.eq.s32.totalorder %v472, %v781
    %vm913 = vcmp.eq.s32.totalorder %v473, %v781
    %vm914 = vcmp.eq.s32.totalorder %v472, %v784
    %vm915 = vcmp.eq.s32.totalorder %v473, %v784
    %vm916 = vcmp.eq.s32.totalorder %v472, %v787
    %vm917 = vcmp.eq.s32.totalorder %v473, %v787
    %vm918 = vcmp.eq.s32.totalorder %v472, %v790
    %vm919 = vcmp.eq.s32.totalorder %v473, %v790
    %vm920 = vcmp.eq.s32.totalorder %v472, %v793
    %vm921 = vcmp.eq.s32.totalorder %v473, %v793
    %vm922 = vcmp.eq.s32.totalorder %v38, %v472
    %vm923 = vcmp.eq.s32.totalorder %v38, %v473
    %vm924 = vcmp.eq.s32.totalorder %v39, %v472
    %vm925 = vcmp.eq.s32.totalorder %v39, %v473
    %vm926 = vcmp.eq.s32.totalorder %v40, %v472
    %vm927 = vcmp.eq.s32.totalorder %v40, %v473
    %vm928 = vcmp.eq.s32.totalorder %v41, %v472
    %vm929 = vcmp.eq.s32.totalorder %v41, %v473
    %vm930 = vcmp.eq.s32.totalorder %v42, %v472
    %vm931 = vcmp.eq.s32.totalorder %v42, %v473
    %vm932 = vcmp.eq.s32.totalorder %v43, %v472
    %vm933 = vcmp.eq.s32.totalorder %v43, %v473
    %vm934 = vcmp.eq.s32.totalorder %v44, %v472
    %vm935 = vcmp.eq.s32.totalorder %v44, %v473
    %vm936 = vcmp.eq.s32.totalorder %v45, %v472
    %vm937 = vcmp.eq.s32.totalorder %v45, %v473
    %vm938 = vcmp.eq.s32.totalorder %v46, %v472
    %vm939 = vcmp.eq.s32.totalorder %v46, %v473
    %vm940 = vcmp.eq.s32.totalorder %v47, %v472
    %vm941 = vcmp.eq.s32.totalorder %v47, %v473
    %vm942 = vcmp.eq.s32.totalorder %v48, %v472
    %vm943 = vcmp.eq.s32.totalorder %v48, %v473
    %vm944 = vcmp.eq.s32.totalorder %v49, %v472
    %vm945 = vcmp.eq.s32.totalorder %v49, %v473
    %vm946 = vcmp.eq.s32.totalorder %v50, %v472
    %vm947 = vcmp.eq.s32.totalorder %v50, %v473
    %vm948 = vcmp.eq.s32.totalorder %v51, %v472
    %vm949 = vcmp.eq.s32.totalorder %v51, %v473
    %vm950 = vcmp.eq.s32.totalorder %v52, %v472
    %vm951 = vcmp.eq.s32.totalorder %v52, %v473
    %vm952 = vcmp.eq.s32.totalorder %v53, %v472
    %vm953 = vcmp.eq.s32.totalorder %v53, %v473
    %vm954 = vcmp.eq.s32.totalorder %v54, %v472
    %vm955 = vcmp.eq.s32.totalorder %v54, %v473
    %vm956 = vcmp.eq.s32.totalorder %v55, %v472
    %vm957 = vcmp.eq.s32.totalorder %v55, %v473
    %vm958 = vcmp.eq.s32.totalorder %v56, %v472
    %vm959 = vcmp.eq.s32.totalorder %v56, %v473
    %vm960 = vcmp.eq.s32.totalorder %v57, %v472
    %vm961 = vcmp.eq.s32.totalorder %v57, %v473
    %vm962 = vcmp.eq.s32.totalorder %v58, %v472
    %vm963 = vcmp.eq.s32.totalorder %v58, %v473
    %vm964 = vcmp.eq.s32.totalorder %v59, %v472
    %vm965 = vcmp.eq.s32.totalorder %v59, %v473
    %vm966 = vcmp.eq.s32.totalorder %v60, %v472
    %vm967 = vcmp.eq.s32.totalorder %v60, %v473
    %vm968 = vcmp.eq.s32.totalorder %v61, %v472
    %vm969 = vcmp.eq.s32.totalorder %v61, %v473
    %vm970 = vcmp.eq.s32.totalorder %v62, %v472
    %vm971 = vcmp.eq.s32.totalorder %v62, %v473
    %vm972 = vcmp.eq.s32.totalorder %v63, %v472
    %vm973 = vcmp.eq.s32.totalorder %v63, %v473
    %vm974 = vcmp.eq.s32.totalorder %v64, %v472
    %vm975 = vcmp.eq.s32.totalorder %v64, %v473
    %vm976 = vcmp.eq.s32.totalorder %v65, %v472
    %vm977 = vcmp.eq.s32.totalorder %v65, %v473
    %vm978 = vcmp.eq.s32.totalorder %v66, %v472
    %vm979 = vcmp.eq.s32.totalorder %v66, %v473
    %vm980 = vcmp.eq.s32.totalorder %v67, %v472
    %vm981 = vcmp.eq.s32.totalorder %v67, %v473
    %vm982 = vcmp.eq.s32.totalorder %v68, %v472
    %vm983 = vcmp.eq.s32.totalorder %v68, %v473
    %vm984 = vcmp.eq.s32.totalorder %v69, %v472
    %vm985 = vcmp.eq.s32.totalorder %v69, %v473
    %v986 = vsel %vm922, 1, 0
    %v987 = vsel %vm923, 1, 0
    %v988 = vsel %vm924, 1, 0
    %v989 = vsel %vm925, 1, 0
    %v990 = vsel %vm926, 1, 0
    %v991 = vsel %vm927, 1, 0
    %v992 = vsel %vm928, 1, 0
    %v993 = vsel %vm929, 1, 0
    %v994 = vsel %vm930, 1, 0
    %v995 = vsel %vm931, 1, 0
    %v996 = vsel %vm932, 1, 0
    %v997 = vsel %vm933, 1, 0
    %v998 = vsel %vm934, 1, 0
    %v999 = vsel %vm935, 1, 0
    %v1000 = vsel %vm936, 1, 0
    %v1001 = vsel %vm937, 1, 0
    %v1002 = vsel %vm938, 1, 0
    %v1003 = vsel %vm939, 1, 0
    %v1004 = vsel %vm940, 1, 0
    %v1005 = vsel %vm941, 1, 0
    %v1006 = vsel %vm942, 1, 0
    %v1007 = vsel %vm943, 1, 0
    %v1008 = vsel %vm944, 1, 0
    %v1009 = vsel %vm945, 1, 0
    %v1010 = vsel %vm946, 1, 0
    %v1011 = vsel %vm947, 1, 0
    %v1012 = vsel %vm948, 1, 0
    %v1013 = vsel %vm949, 1, 0
    %v1014 = vsel %vm950, 1, 0
    %v1015 = vsel %vm951, 1, 0
    %v1016 = vsel %vm952, 1, 0
    %v1017 = vsel %vm953, 1, 0
    %v1018 = vsel %vm954, 1, 0
    %v1019 = vsel %vm955, 1, 0
    %v1020 = vsel %vm956, 1, 0
    %v1021 = vsel %vm957, 1, 0
    %v1022 = vsel %vm958, 1, 0
    %v1023 = vsel %vm959, 1, 0
    %v1024 = vsel %vm960, 1, 0
    %v1025 = vsel %vm961, 1, 0
    %v1026 = vsel %vm962, 1, 0
    %v1027 = vsel %vm963, 1, 0
    %v1028 = vsel %vm964, 1, 0
    %v1029 = vsel %vm965, 1, 0
    %v1030 = vsel %vm966, 1, 0
    %v1031 = vsel %vm967, 1, 0
    %v1032 = vsel %vm968, 1, 0
    %v1033 = vsel %vm969, 1, 0
    %v1034 = vsel %vm970, 1, 0
    %v1035 = vsel %vm971, 1, 0
    %v1036 = vsel %vm972, 1, 0
    %v1037 = vsel %vm973, 1, 0
    %v1038 = vsel %vm974, 1, 0
    %v1039 = vsel %vm975, 1, 0
    %v1040 = vsel %vm976, 1, 0
    %v1041 = vsel %vm977, 1, 0
    %v1042 = vsel %vm978, 1, 0
    %v1043 = vsel %vm979, 1, 0
    %v1044 = vsel %vm980, 1, 0
    %v1045 = vsel %vm981, 1, 0
    %v1046 = vsel %vm982, 1, 0
    %v1047 = vsel %vm983, 1, 0
    %v1048 = vsel %vm984, 1, 0
    %v1049 = vsel %vm985, 1, 0
    %v1050 = vcvt.s32.f32 %v986
    %v1051 = vcvt.s32.f32 %v987
    %v1052 = vcvt.s32.f32 %v988
    %v1053 = vcvt.s32.f32 %v989
    %v1054 = vcvt.s32.f32 %v990
    %v1055 = vcvt.s32.f32 %v991
    %v1056 = vcvt.s32.f32 %v992
    %v1057 = vcvt.s32.f32 %v993
    %v1058 = vcvt.s32.f32 %v994
    %v1059 = vcvt.s32.f32 %v995
    %v1060 = vcvt.s32.f32 %v996
    %v1061 = vcvt.s32.f32 %v997
    %v1062 = vcvt.s32.f32 %v998
    %v1063 = vcvt.s32.f32 %v999
    %v1064 = vcvt.s32.f32 %v1000
    %v1065 = vcvt.s32.f32 %v1001
    %v1066 = vcvt.s32.f32 %v1002
    %v1067 = vcvt.s32.f32 %v1003
    %v1068 = vcvt.s32.f32 %v1004
    %v1069 = vcvt.s32.f32 %v1005
    %v1070 = vcvt.s32.f32 %v1006
    %v1071 = vcvt.s32.f32 %v1007
    %v1072 = vcvt.s32.f32 %v1008
    %v1073 = vcvt.s32.f32 %v1009
    %v1074 = vcvt.s32.f32 %v1010
    %v1075 = vcvt.s32.f32 %v1011
    %v1076 = vcvt.s32.f32 %v1012
    %v1077 = vcvt.s32.f32 %v1013
    %v1078 = vcvt.s32.f32 %v1014
    %v1079 = vcvt.s32.f32 %v1015
    %v1080 = vcvt.s32.f32 %v1016
    %v1081 = vcvt.s32.f32 %v1017
    %v1082 = vcvt.s32.f32 %v1018
    %v1083 = vcvt.s32.f32 %v1019
    %v1084 = vcvt.s32.f32 %v1020
    %v1085 = vcvt.s32.f32 %v1021
    %v1086 = vcvt.s32.f32 %v1022
    %v1087 = vcvt.s32.f32 %v1023
    %v1088 = vcvt.s32.f32 %v1024
    %v1089 = vcvt.s32.f32 %v1025
    %v1090 = vcvt.s32.f32 %v1026
    %v1091 = vcvt.s32.f32 %v1027
    %v1092 = vcvt.s32.f32 %v1028
    %v1093 = vcvt.s32.f32 %v1029
    %v1094 = vcvt.s32.f32 %v1030
    %v1095 = vcvt.s32.f32 %v1031
    %v1096 = vcvt.s32.f32 %v1032
    %v1097 = vcvt.s32.f32 %v1033
    %v1098 = vcvt.s32.f32 %v1034
    %v1099 = vcvt.s32.f32 %v1035
    %v1100 = vcvt.s32.f32 %v1036
    %v1101 = vcvt.s32.f32 %v1037
    %v1102 = vcvt.s32.f32 %v1038
    %v1103 = vcvt.s32.f32 %v1039
    %v1104 = vcvt.s32.f32 %v1040
    %v1105 = vcvt.s32.f32 %v1041
    %v1106 = vcvt.s32.f32 %v1042
    %v1107 = vcvt.s32.f32 %v1043
    %v1108 = vcvt.s32.f32 %v1044
    %v1109 = vcvt.s32.f32 %v1045
    %v1110 = vcvt.s32.f32 %v1046
    %v1111 = vcvt.s32.f32 %v1047
    %v1112 = vcvt.s32.f32 %v1048
    %v1113 = vcvt.s32.f32 %v1049
    %vm1114 = vcmp.lt.s32.totalorder %v38, 129
    %vm1115 = vcmp.lt.s32.totalorder %v39, 129
    %vm1116 = vcmp.lt.s32.totalorder %v40, 129
    %vm1117 = vcmp.lt.s32.totalorder %v41, 129
    %vm1118 = vcmp.lt.s32.totalorder %v42, 129
    %vm1119 = vcmp.lt.s32.totalorder %v43, 129
    %vm1120 = vcmp.lt.s32.totalorder %v44, 129
    %vm1121 = vcmp.lt.s32.totalorder %v45, 129
    %vm1122 = vcmp.lt.s32.totalorder %v46, 129
    %vm1123 = vcmp.lt.s32.totalorder %v47, 129
    %vm1124 = vcmp.lt.s32.totalorder %v48, 129
    %vm1125 = vcmp.lt.s32.totalorder %v49, 129
    %vm1126 = vcmp.lt.s32.totalorder %v50, 129
    %vm1127 = vcmp.lt.s32.totalorder %v51, 129
    %vm1128 = vcmp.lt.s32.totalorder %v52, 129
    %vm1129 = vcmp.lt.s32.totalorder %v53, 129
    %vm1130 = vcmp.lt.s32.totalorder %v54, 129
    %vm1131 = vcmp.lt.s32.totalorder %v55, 129
    %vm1132 = vcmp.lt.s32.totalorder %v56, 129
    %vm1133 = vcmp.lt.s32.totalorder %v57, 129
    %vm1134 = vcmp.lt.s32.totalorder %v58, 129
    %vm1135 = vcmp.lt.s32.totalorder %v59, 129
    %vm1136 = vcmp.lt.s32.totalorder %v60, 129
    %vm1137 = vcmp.lt.s32.totalorder %v61, 129
    %vm1138 = vcmp.lt.s32.totalorder %v62, 129
    %vm1139 = vcmp.lt.s32.totalorder %v63, 129
    %vm1140 = vcmp.lt.s32.totalorder %v64, 129
    %vm1141 = vcmp.lt.s32.totalorder %v65, 129
    %vm1142 = vcmp.lt.s32.totalorder %v66, 129
    %vm1143 = vcmp.lt.s32.totalorder %v67, 129
    %vm1144 = vcmp.lt.s32.totalorder %v68, 129
    %vm1145 = vcmp.lt.s32.totalorder %v69, 129
    %vm1146 = vmand %vm922, %vm1114
    %vm1147 = vmand %vm923, %vm1114
    %vm1148 = vmand %vm924, %vm1115
    %vm1149 = vmand %vm925, %vm1115
    %vm1150 = vmand %vm926, %vm1116
    %vm1151 = vmand %vm927, %vm1116
    %vm1152 = vmand %vm928, %vm1117
    %vm1153 = vmand %vm929, %vm1117
    %vm1154 = vmand %vm930, %vm1118
    %vm1155 = vmand %vm931, %vm1118
    %vm1156 = vmand %vm932, %vm1119
    %vm1157 = vmand %vm933, %vm1119
    %vm1158 = vmand %vm934, %vm1120
    %vm1159 = vmand %vm935, %vm1120
    %vm1160 = vmand %vm936, %vm1121
    %vm1161 = vmand %vm937, %vm1121
    %vm1162 = vmand %vm938, %vm1122
    %vm1163 = vmand %vm939, %vm1122
    %vm1164 = vmand %vm940, %vm1123
    %vm1165 = vmand %vm941, %vm1123
    %vm1166 = vmand %vm942, %vm1124
    %vm1167 = vmand %vm943, %vm1124
    %vm1168 = vmand %vm944, %vm1125
    %vm1169 = vmand %vm945, %vm1125
    %vm1170 = vmand %vm946, %vm1126
    %vm1171 = vmand %vm947, %vm1126
    %vm1172 = vmand %vm948, %vm1127
    %vm1173 = vmand %vm949, %vm1127
    %vm1174 = vmand %vm950, %vm1128
    %vm1175 = vmand %vm951, %vm1128
    %vm1176 = vmand %vm952, %vm1129
    %vm1177 = vmand %vm953, %vm1129
    %vm1178 = vmand %vm954, %vm1130
    %vm1179 = vmand %vm955, %vm1130
    %vm1180 = vmand %vm956, %vm1131
    %vm1181 = vmand %vm957, %vm1131
    %vm1182 = vmand %vm958, %vm1132
    %vm1183 = vmand %vm959, %vm1132
    %vm1184 = vmand %vm960, %vm1133
    %vm1185 = vmand %vm961, %vm1133
    %vm1186 = vmand %vm962, %vm1134
    %vm1187 = vmand %vm963, %vm1134
    %vm1188 = vmand %vm964, %vm1135
    %vm1189 = vmand %vm965, %vm1135
    %vm1190 = vmand %vm966, %vm1136
    %vm1191 = vmand %vm967, %vm1136
    %vm1192 = vmand %vm968, %vm1137
    %vm1193 = vmand %vm969, %vm1137
    %vm1194 = vmand %vm970, %vm1138
    %vm1195 = vmand %vm971, %vm1138
    %vm1196 = vmand %vm972, %vm1139
    %vm1197 = vmand %vm973, %vm1139
    %vm1198 = vmand %vm974, %vm1140
    %vm1199 = vmand %vm975, %vm1140
    %vm1200 = vmand %vm976, %vm1141
    %vm1201 = vmand %vm977, %vm1141
    %vm1202 = vmand %vm978, %vm1142
    %vm1203 = vmand %vm979, %vm1142
    %vm1204 = vmand %vm980, %vm1143
    %vm1205 = vmand %vm981, %vm1143
    %vm1206 = vmand %vm982, %vm1144
    %vm1207 = vmand %vm983, %vm1144
    %vm1208 = vmand %vm984, %vm1145
    %vm1209 = vmand %vm985, %vm1145
    %v1210 = vsel %vm1146, 1.0, 0.0
    %v1211 = vsel %vm1147, 1.0, 0.0
    %v1212 = vsel %vm1148, 1.0, 0.0
    %v1213 = vsel %vm1149, 1.0, 0.0
    %v1214 = vsel %vm1150, 1.0, 0.0
    %v1215 = vsel %vm1151, 1.0, 0.0
    %v1216 = vsel %vm1152, 1.0, 0.0
    %v1217 = vsel %vm1153, 1.0, 0.0
    %v1218 = vsel %vm1154, 1.0, 0.0
    %v1219 = vsel %vm1155, 1.0, 0.0
    %v1220 = vsel %vm1156, 1.0, 0.0
    %v1221 = vsel %vm1157, 1.0, 0.0
    %v1222 = vsel %vm1158, 1.0, 0.0
    %v1223 = vsel %vm1159, 1.0, 0.0
    %v1224 = vsel %vm1160, 1.0, 0.0
    %v1225 = vsel %vm1161, 1.0, 0.0
    %v1226 = vsel %vm1162, 1.0, 0.0
    %v1227 = vsel %vm1163, 1.0, 0.0
    %v1228 = vsel %vm1164, 1.0, 0.0
    %v1229 = vsel %vm1165, 1.0, 0.0
    %v1230 = vsel %vm1166, 1.0, 0.0
    %v1231 = vsel %vm1167, 1.0, 0.0
    %v1232 = vsel %vm1168, 1.0, 0.0
    %v1233 = vsel %vm1169, 1.0, 0.0
    %v1234 = vsel %vm1170, 1.0, 0.0
    %v1235 = vsel %vm1171, 1.0, 0.0
    %v1236 = vsel %vm1172, 1.0, 0.0
    %v1237 = vsel %vm1173, 1.0, 0.0
    %v1238 = vsel %vm1174, 1.0, 0.0
    %v1239 = vsel %vm1175, 1.0, 0.0
    %v1240 = vsel %vm1176, 1.0, 0.0
    %v1241 = vsel %vm1177, 1.0, 0.0
    %v1242 = vsel %vm1178, 1.0, 0.0
    %v1243 = vsel %vm1179, 1.0, 0.0
    %v1244 = vsel %vm1180, 1.0, 0.0
    %v1245 = vsel %vm1181, 1.0, 0.0
    %v1246 = vsel %vm1182, 1.0, 0.0
    %v1247 = vsel %vm1183, 1.0, 0.0
    %v1248 = vsel %vm1184, 1.0, 0.0
    %v1249 = vsel %vm1185, 1.0, 0.0
    %v1250 = vsel %vm1186, 1.0, 0.0
    %v1251 = vsel %vm1187, 1.0, 0.0
    %v1252 = vsel %vm1188, 1.0, 0.0
    %v1253 = vsel %vm1189, 1.0, 0.0
    %v1254 = vsel %vm1190, 1.0, 0.0
    %v1255 = vsel %vm1191, 1.0, 0.0
    %v1256 = vsel %vm1192, 1.0, 0.0
    %v1257 = vsel %vm1193, 1.0, 0.0
    %v1258 = vsel %vm1194, 1.0, 0.0
    %v1259 = vsel %vm1195, 1.0, 0.0
    %v1260 = vsel %vm1196, 1.0, 0.0
    %v1261 = vsel %vm1197, 1.0, 0.0
    %v1262 = vsel %vm1198, 1.0, 0.0
    %v1263 = vsel %vm1199, 1.0, 0.0
    %v1264 = vsel %vm1200, 1.0, 0.0
    %v1265 = vsel %vm1201, 1.0, 0.0
    %v1266 = vsel %vm1202, 1.0, 0.0
    %v1267 = vsel %vm1203, 1.0, 0.0
    %v1268 = vsel %vm1204, 1.0, 0.0
    %v1269 = vsel %vm1205, 1.0, 0.0
    %v1270 = vsel %vm1206, 1.0, 0.0
    %v1271 = vsel %vm1207, 1.0, 0.0
    %v1272 = vsel %vm1208, 1.0, 0.0
    %v1273 = vsel %vm1209, 1.0, 0.0
    %v1274 = vcvt.s32.f32 %v472
    %v1275 = vcvt.s32.f32 %v473
    %vm1276 = vcmp.lt.s32.totalorder %v472, 129
    %vm1277 = vcmp.lt.s32.totalorder %v473, 129
    %v1278 = vld [vmem:[%s5] sm:$0x1]
    %1280 = vset.pattern.permute.xlu0 1
    %1281 = vperm.xlu0 %1280, %v474
    %v1282 = vpop.permute.xlu0 %1281
    %1285 = vset.pattern.permute.xlu0 1
    %1286 = vperm.xlu0 %1285, %v475
    %v1287 = vpop.permute.xlu0 %1286
    %1290 = vset.pattern.permute.xlu0 1
    %1291 = vperm.xlu0 %1290, %v476
    %v1292 = vpop.permute.xlu0 %1291
    %1295 = vset.pattern.permute.xlu0 1
    %1296 = vperm.xlu0 %1295, %v477
    %v1297 = vpop.permute.xlu0 %1296
    %1300 = vset.pattern.permute.xlu0 1
    %1301 = vperm.xlu0 %1300, %v478
    %v1302 = vpop.permute.xlu0 %1301
    %1305 = vset.pattern.permute.xlu0 1
    %1306 = vperm.xlu0 %1305, %v479
    %v1307 = vpop.permute.xlu0 %1306
    %1310 = vset.pattern.permute.xlu0 1
    %1311 = vperm.xlu0 %1310, %v480
    %v1312 = vpop.permute.xlu0 %1311
    %1315 = vset.pattern.permute.xlu0 1
    %1316 = vperm.xlu0 %1315, %v481
    %v1317 = vpop.permute.xlu0 %1316
    %1320 = vset.pattern.permute.xlu0 1
    %1321 = vperm.xlu0 %1320, %v482
    %v1322 = vpop.permute.xlu0 %1321
    %1325 = vset.pattern.permute.xlu0 1
    %1326 = vperm.xlu0 %1325, %v483
    %v1327 = vpop.permute.xlu0 %1326
    %1330 = vset.pattern.permute.xlu0 1
    %1331 = vperm.xlu0 %1330, %v484
    %v1332 = vpop.permute.xlu0 %1331
    %1335 = vset.pattern.permute.xlu0 1
    %1336 = vperm.xlu0 %1335, %v485
    %v1337 = vpop.permute.xlu0 %1336
    %1340 = vset.pattern.permute.xlu0 1
    %1341 = vperm.xlu0 %1340, %v486
    %v1342 = vpop.permute.xlu0 %1341
    %1345 = vset.pattern.permute.xlu0 1
    %1346 = vperm.xlu0 %1345, %v487
    %v1347 = vpop.permute.xlu0 %1346
    %1350 = vset.pattern.permute.xlu0 1
    %1351 = vperm.xlu0 %1350, %v488
    %v1352 = vpop.permute.xlu0 %1351
    %1355 = vset.pattern.permute.xlu0 1
    %1356 = vperm.xlu0 %1355, %v489
    %v1357 = vpop.permute.xlu0 %1356
    %1360 = vset.pattern.permute.xlu0 1
    %1361 = vperm.xlu0 %1360, %v490
    %v1362 = vpop.permute.xlu0 %1361
    %1365 = vset.pattern.permute.xlu0 1
    %1366 = vperm.xlu0 %1365, %v491
    %v1367 = vpop.permute.xlu0 %1366
    %1370 = vset.pattern.permute.xlu0 1
    %1371 = vperm.xlu0 %1370, %v492
    %v1372 = vpop.permute.xlu0 %1371
    %1375 = vset.pattern.permute.xlu0 1
    %1376 = vperm.xlu0 %1375, %v493
    %v1377 = vpop.permute.xlu0 %1376
    %1380 = vset.pattern.permute.xlu0 1
    %1381 = vperm.xlu0 %1380, %v494
    %v1382 = vpop.permute.xlu0 %1381
    %1385 = vset.pattern.permute.xlu0 1
    %1386 = vperm.xlu0 %1385, %v495
    %v1387 = vpop.permute.xlu0 %1386
    %1390 = vset.pattern.permute.xlu0 1
    %1391 = vperm.xlu0 %1390, %v496
    %v1392 = vpop.permute.xlu0 %1391
    %1395 = vset.pattern.permute.xlu0 1
    %1396 = vperm.xlu0 %1395, %v497
    %v1397 = vpop.permute.xlu0 %1396
    %1400 = vset.pattern.permute.xlu0 1
    %1401 = vperm.xlu0 %1400, %v498
    %v1402 = vpop.permute.xlu0 %1401
    %1405 = vset.pattern.permute.xlu0 1
    %1406 = vperm.xlu0 %1405, %v499
    %v1407 = vpop.permute.xlu0 %1406
    %1410 = vset.pattern.permute.xlu0 1
    %1411 = vperm.xlu0 %1410, %v500
    %v1412 = vpop.permute.xlu0 %1411
    %1415 = vset.pattern.permute.xlu0 1
    %1416 = vperm.xlu0 %1415, %v501
    %v1417 = vpop.permute.xlu0 %1416
    %1420 = vset.pattern.permute.xlu0 1
    %1421 = vperm.xlu0 %1420, %v502
    %v1422 = vpop.permute.xlu0 %1421
    %1425 = vset.pattern.permute.xlu0 1
    %1426 = vperm.xlu0 %1425, %v503
    %v1427 = vpop.permute.xlu0 %1426
    %1430 = vset.pattern.permute.xlu0 1
    %1431 = vperm.xlu0 %1430, %v504
    %v1432 = vpop.permute.xlu0 %1431
    %1435 = vset.pattern.permute.xlu0 1
    %1436 = vperm.xlu0 %1435, %v505
    %v1437 = vpop.permute.xlu0 %1436
    %1440 = vset.pattern.permute.xlu0 1
    %1441 = vperm.xlu0 %1440, %v506
    %v1442 = vpop.permute.xlu0 %1441
    %1445 = vset.pattern.permute.xlu0 1
    %1446 = vperm.xlu0 %1445, %v507
    %v1447 = vpop.permute.xlu0 %1446
    %1450 = vset.pattern.permute.xlu0 1
    %1451 = vperm.xlu0 %1450, %v508
    %v1452 = vpop.permute.xlu0 %1451
    %1455 = vset.pattern.permute.xlu0 1
    %1456 = vperm.xlu0 %1455, %v509
    %v1457 = vpop.permute.xlu0 %1456
    %1460 = vset.pattern.permute.xlu0 1
    %1461 = vperm.xlu0 %1460, %v510
    %v1462 = vpop.permute.xlu0 %1461
    %1465 = vset.pattern.permute.xlu0 1
    %1466 = vperm.xlu0 %1465, %v511
    %v1467 = vpop.permute.xlu0 %1466
    %1470 = vset.pattern.permute.xlu0 1
    %1471 = vperm.xlu0 %1470, %v512
    %v1472 = vpop.permute.xlu0 %1471
    %1475 = vset.pattern.permute.xlu0 1
    %1476 = vperm.xlu0 %1475, %v513
    %v1477 = vpop.permute.xlu0 %1476
    %1480 = vset.pattern.permute.xlu0 1
    %1481 = vperm.xlu0 %1480, %v514
    %v1482 = vpop.permute.xlu0 %1481
    %1485 = vset.pattern.permute.xlu0 1
    %1486 = vperm.xlu0 %1485, %v515
    %v1487 = vpop.permute.xlu0 %1486
    %1490 = vset.pattern.permute.xlu0 1
    %1491 = vperm.xlu0 %1490, %v516
    %v1492 = vpop.permute.xlu0 %1491
    %1495 = vset.pattern.permute.xlu0 1
    %1496 = vperm.xlu0 %1495, %v517
    %v1497 = vpop.permute.xlu0 %1496
    %1500 = vset.pattern.permute.xlu0 1
    %1501 = vperm.xlu0 %1500, %v518
    %v1502 = vpop.permute.xlu0 %1501
    %1505 = vset.pattern.permute.xlu0 1
    %1506 = vperm.xlu0 %1505, %v519
    %v1507 = vpop.permute.xlu0 %1506
    %1510 = vset.pattern.permute.xlu0 1
    %1511 = vperm.xlu0 %1510, %v520
    %v1512 = vpop.permute.xlu0 %1511
    %1515 = vset.pattern.permute.xlu0 1
    %1516 = vperm.xlu0 %1515, %v521
    %v1517 = vpop.permute.xlu0 %1516
    %1520 = vset.pattern.permute.xlu0 1
    %1521 = vperm.xlu0 %1520, %v522
    %v1522 = vpop.permute.xlu0 %1521
    %1525 = vset.pattern.permute.xlu0 1
    %1526 = vperm.xlu0 %1525, %v523
    %v1527 = vpop.permute.xlu0 %1526
    %1530 = vset.pattern.permute.xlu0 1
    %1531 = vperm.xlu0 %1530, %v524
    %v1532 = vpop.permute.xlu0 %1531
    %1535 = vset.pattern.permute.xlu0 1
    %1536 = vperm.xlu0 %1535, %v525
    %v1537 = vpop.permute.xlu0 %1536
    %1540 = vset.pattern.permute.xlu0 1
    %1541 = vperm.xlu0 %1540, %v526
    %v1542 = vpop.permute.xlu0 %1541
    %1545 = vset.pattern.permute.xlu0 1
    %1546 = vperm.xlu0 %1545, %v527
    %v1547 = vpop.permute.xlu0 %1546
    %1550 = vset.pattern.permute.xlu0 1
    %1551 = vperm.xlu0 %1550, %v528
    %v1552 = vpop.permute.xlu0 %1551
    %1555 = vset.pattern.permute.xlu0 1
    %1556 = vperm.xlu0 %1555, %v529
    %v1557 = vpop.permute.xlu0 %1556
    %1560 = vset.pattern.permute.xlu0 1
    %1561 = vperm.xlu0 %1560, %v530
    %v1562 = vpop.permute.xlu0 %1561
    %1565 = vset.pattern.permute.xlu0 1
    %1566 = vperm.xlu0 %1565, %v531
    %v1567 = vpop.permute.xlu0 %1566
    %1570 = vset.pattern.permute.xlu0 1
    %1571 = vperm.xlu0 %1570, %v532
    %v1572 = vpop.permute.xlu0 %1571
    %1575 = vset.pattern.permute.xlu0 1
    %1576 = vperm.xlu0 %1575, %v533
    %v1577 = vpop.permute.xlu0 %1576
    %1580 = vset.pattern.permute.xlu0 1
    %1581 = vperm.xlu0 %1580, %v534
    %v1582 = vpop.permute.xlu0 %1581
    %1585 = vset.pattern.permute.xlu0 1
    %1586 = vperm.xlu0 %1585, %v535
    %v1587 = vpop.permute.xlu0 %1586
    %1590 = vset.pattern.permute.xlu0 1
    %1591 = vperm.xlu0 %1590, %v536
    %v1592 = vpop.permute.xlu0 %1591
    %1595 = vset.pattern.permute.xlu0 1
    %1596 = vperm.xlu0 %1595, %v537
    %v1597 = vpop.permute.xlu0 %1596
    %v1599 = vsel %vm794, %v1282, 0.0
    %v1600 = vsel %vm795, %v1282, 0.0
    %v1601 = vsel %vm796, %v1287, 0.0
    %v1602 = vsel %vm797, %v1287, 0.0
    %v1603 = vsel %vm798, %v1292, 0.0
    %v1604 = vsel %vm799, %v1292, 0.0
    %v1605 = vsel %vm800, %v1297, 0.0
    %v1606 = vsel %vm801, %v1297, 0.0
    %v1607 = vsel %vm802, %v1302, 0.0
    %v1608 = vsel %vm803, %v1302, 0.0
    %v1609 = vsel %vm804, %v1307, 0.0
    %v1610 = vsel %vm805, %v1307, 0.0
    %v1611 = vsel %vm806, %v1312, 0.0
    %v1612 = vsel %vm807, %v1312, 0.0
    %v1613 = vsel %vm808, %v1317, 0.0
    %v1614 = vsel %vm809, %v1317, 0.0
    %v1615 = vsel %vm810, %v1322, 0.0
    %v1616 = vsel %vm811, %v1322, 0.0
    %v1617 = vsel %vm812, %v1327, 0.0
    %v1618 = vsel %vm813, %v1327, 0.0
    %v1619 = vsel %vm814, %v1332, 0.0
    %v1620 = vsel %vm815, %v1332, 0.0
    %v1621 = vsel %vm816, %v1337, 0.0
    %v1622 = vsel %vm817, %v1337, 0.0
    %v1623 = vsel %vm818, %v1342, 0.0
    %v1624 = vsel %vm819, %v1342, 0.0
    %v1625 = vsel %vm820, %v1347, 0.0
    %v1626 = vsel %vm821, %v1347, 0.0
    %v1627 = vsel %vm822, %v1352, 0.0
    %v1628 = vsel %vm823, %v1352, 0.0
    %v1629 = vsel %vm824, %v1357, 0.0
    %v1630 = vsel %vm825, %v1357, 0.0
    %v1631 = vsel %vm826, %v1362, 0.0
    %v1632 = vsel %vm827, %v1362, 0.0
    %v1633 = vsel %vm828, %v1367, 0.0
    %v1634 = vsel %vm829, %v1367, 0.0
    %v1635 = vsel %vm830, %v1372, 0.0
    %v1636 = vsel %vm831, %v1372, 0.0
    %v1637 = vsel %vm832, %v1377, 0.0
    %v1638 = vsel %vm833, %v1377, 0.0
    %v1639 = vsel %vm834, %v1382, 0.0
    %v1640 = vsel %vm835, %v1382, 0.0
    %v1641 = vsel %vm836, %v1387, 0.0
    %v1642 = vsel %vm837, %v1387, 0.0
    %v1643 = vsel %vm838, %v1392, 0.0
    %v1644 = vsel %vm839, %v1392, 0.0
    %v1645 = vsel %vm840, %v1397, 0.0
    %v1646 = vsel %vm841, %v1397, 0.0
    %v1647 = vsel %vm842, %v1402, 0.0
    %v1648 = vsel %vm843, %v1402, 0.0
    %v1649 = vsel %vm844, %v1407, 0.0
    %v1650 = vsel %vm845, %v1407, 0.0
    %v1651 = vsel %vm846, %v1412, 0.0
    %v1652 = vsel %vm847, %v1412, 0.0
    %v1653 = vsel %vm848, %v1417, 0.0
    %v1654 = vsel %vm849, %v1417, 0.0
    %v1655 = vsel %vm850, %v1422, 0.0
    %v1656 = vsel %vm851, %v1422, 0.0
    %v1657 = vsel %vm852, %v1427, 0.0
    %v1658 = vsel %vm853, %v1427, 0.0
    %v1659 = vsel %vm854, %v1432, 0.0
    %v1660 = vsel %vm855, %v1432, 0.0
    %v1661 = vsel %vm856, %v1437, 0.0
    %v1662 = vsel %vm857, %v1437, 0.0
    %v1663 = vsel %vm858, %v1442, 0.0
    %v1664 = vsel %vm859, %v1442, 0.0
    %v1665 = vsel %vm860, %v1447, 0.0
    %v1666 = vsel %vm861, %v1447, 0.0
    %v1667 = vsel %vm862, %v1452, 0.0
    %v1668 = vsel %vm863, %v1452, 0.0
    %v1669 = vsel %vm864, %v1457, 0.0
    %v1670 = vsel %vm865, %v1457, 0.0
    %v1671 = vsel %vm866, %v1462, 0.0
    %v1672 = vsel %vm867, %v1462, 0.0
    %v1673 = vsel %vm868, %v1467, 0.0
    %v1674 = vsel %vm869, %v1467, 0.0
    %v1675 = vsel %vm870, %v1472, 0.0
    %v1676 = vsel %vm871, %v1472, 0.0
    %v1677 = vsel %vm872, %v1477, 0.0
    %v1678 = vsel %vm873, %v1477, 0.0
    %v1679 = vsel %vm874, %v1482, 0.0
    %v1680 = vsel %vm875, %v1482, 0.0
    %v1681 = vsel %vm876, %v1487, 0.0
    %v1682 = vsel %vm877, %v1487, 0.0
    %v1683 = vsel %vm878, %v1492, 0.0
    %v1684 = vsel %vm879, %v1492, 0.0
    %v1685 = vsel %vm880, %v1497, 0.0
    %v1686 = vsel %vm881, %v1497, 0.0
    %v1687 = vsel %vm882, %v1502, 0.0
    %v1688 = vsel %vm883, %v1502, 0.0
    %v1689 = vsel %vm884, %v1507, 0.0
    %v1690 = vsel %vm885, %v1507, 0.0
    %v1691 = vsel %vm886, %v1512, 0.0
    %v1692 = vsel %vm887, %v1512, 0.0
    %v1693 = vsel %vm888, %v1517, 0.0
    %v1694 = vsel %vm889, %v1517, 0.0
    %v1695 = vsel %vm890, %v1522, 0.0
    %v1696 = vsel %vm891, %v1522, 0.0
    %v1697 = vsel %vm892, %v1527, 0.0
    %v1698 = vsel %vm893, %v1527, 0.0
    %v1699 = vsel %vm894, %v1532, 0.0
    %v1700 = vsel %vm895, %v1532, 0.0
    %v1701 = vsel %vm896, %v1537, 0.0
    %v1702 = vsel %vm897, %v1537, 0.0
    %v1703 = vsel %vm898, %v1542, 0.0
    %v1704 = vsel %vm899, %v1542, 0.0
    %v1705 = vsel %vm900, %v1547, 0.0
    %v1706 = vsel %vm901, %v1547, 0.0
    %v1707 = vsel %vm902, %v1552, 0.0
    %v1708 = vsel %vm903, %v1552, 0.0
    %v1709 = vsel %vm904, %v1557, 0.0
    %v1710 = vsel %vm905, %v1557, 0.0
    %v1711 = vsel %vm906, %v1562, 0.0
    %v1712 = vsel %vm907, %v1562, 0.0
    %v1713 = vsel %vm908, %v1567, 0.0
    %v1714 = vsel %vm909, %v1567, 0.0
    %v1715 = vsel %vm910, %v1572, 0.0
    %v1716 = vsel %vm911, %v1572, 0.0
    %v1717 = vsel %vm912, %v1577, 0.0
    %v1718 = vsel %vm913, %v1577, 0.0
    %v1719 = vsel %vm914, %v1582, 0.0
    %v1720 = vsel %vm915, %v1582, 0.0
    %v1721 = vsel %vm916, %v1587, 0.0
    %v1722 = vsel %vm917, %v1587, 0.0
    %v1723 = vsel %vm918, %v1592, 0.0
    %v1724 = vsel %vm919, %v1592, 0.0
    %v1725 = vsel %vm920, %v1597, 0.0
    %v1726 = vsel %vm921, %v1597, 0.0
    %1727 = vmatprep.subr.mxu0 %v1600
    %1728 = vmatpush1.msra.mxu0 %v1599
    %1729 = vmatprep.subr.mxu0 %v1602
    %1730 = vmatpush1.msra.mxu0 %v1601
    %1731 = vmatprep.subr.mxu0 %v1604
    %1732 = vmatpush1.msra.mxu0 %v1603
    %1733 = vmatprep.subr.mxu0 %v1606
    %1734 = vmatpush1.msra.mxu0 %v1605
    %1735 = vmatprep.subr.mxu0 %v1608
    %1736 = vmatpush1.msra.mxu0 %v1607
    %1737 = vmatprep.subr.mxu0 %v1610
    %1738 = vmatpush1.msra.mxu0 %v1609
    %1739 = vmatprep.subr.mxu0 %v1612
    %1740 = vmatpush1.msra.mxu0 %v1611
    %1741 = vmatprep.subr.mxu0 %v1614
    %1742 = vmatpush1.msra.mxu0 %v1613
    %1743 = vmatprep.subr.mxu0 %v1616
    %1744 = vmatpush1.msra.mxu0 %v1615
    %1745 = vmatprep.subr.mxu0 %v1618
    %1746 = vmatpush1.msra.mxu0 %v1617
    %1747 = vmatprep.subr.mxu0 %v1620
    %1748 = vmatpush1.msra.mxu0 %v1619
    %1749 = vmatprep.subr.mxu0 %v1622
    %1750 = vmatpush1.msra.mxu0 %v1621
    %1751 = vmatprep.subr.mxu0 %v1624
    %1752 = vmatpush1.msra.mxu0 %v1623
    %1753 = vmatprep.subr.mxu0 %v1626
    %1754 = vmatpush1.msra.mxu0 %v1625
    %1755 = vmatprep.subr.mxu0 %v1628
    %1756 = vmatpush1.msra.mxu0 %v1627
    %1757 = vmatprep.subr.mxu0 %v1630
    %1758 = vmatpush1.msra.mxu0 %v1629
    %1759 = vmatprep.subr.mxu0 %v1632
    %1760 = vmatpush1.msra.mxu0 %v1631
    %1761 = vmatprep.subr.mxu0 %v1634
    %1762 = vmatpush1.msra.mxu0 %v1633
    %1763 = vmatprep.subr.mxu0 %v1636
    %1764 = vmatpush1.msra.mxu0 %v1635
    %1765 = vmatprep.subr.mxu0 %v1638
    %1766 = vmatpush1.msra.mxu0 %v1637
    %1767 = vmatprep.subr.mxu0 %v1640
    %1768 = vmatpush1.msra.mxu0 %v1639
    %1769 = vmatprep.subr.mxu0 %v1642
    %1770 = vmatpush1.msra.mxu0 %v1641
    %1771 = vmatprep.subr.mxu0 %v1644
    %1772 = vmatpush1.msra.mxu0 %v1643
    %1773 = vmatprep.subr.mxu0 %v1646
    %1774 = vmatpush1.msra.mxu0 %v1645
    %1775 = vmatprep.subr.mxu0 %v1648
    %1776 = vmatpush1.msra.mxu0 %v1647
    %1777 = vmatprep.subr.mxu0 %v1650
    %1778 = vmatpush1.msra.mxu0 %v1649
    %1779 = vmatprep.subr.mxu0 %v1652
    %1780 = vmatpush1.msra.mxu0 %v1651
    %1781 = vmatprep.subr.mxu0 %v1654
    %1782 = vmatpush1.msra.mxu0 %v1653
    %1783 = vmatprep.subr.mxu0 %v1656
    %1784 = vmatpush1.msra.mxu0 %v1655
    %1785 = vmatprep.subr.mxu0 %v1658
    %1786 = vmatpush1.msra.mxu0 %v1657
    %1787 = vmatprep.subr.mxu0 %v1660
    %1788 = vmatpush1.msra.mxu0 %v1659
    %1789 = vmatprep.subr.mxu0 %v1662
    %1790 = vmatpush1.msra.mxu0 %v1661
    %1791 = vmatprep.mubr.f32.mxu0 %v344
    %1792 = vmatmul.mubr.f32.gmra.mrb[0].mxu0 %v343
    %v1793 = vpop.f32.mrb[0].mxu0
    %v1794 = vadd.f32 %v1210, %v1793
    %v1795 = vpop.f32.mrb[0].mxu0
    %v1796 = vadd.f32 %v1211, %v1795
    %1797 = vmatprep.mubr.f32.mxu0 %v348
    %1798 = vmatmul.mubr.f32.gmra.mrb[0].mxu0 %v347
    %v1799 = vpop.f32.mrb[0].mxu0
    %v1800 = vadd.f32 %v1212, %v1799
    %v1801 = vpop.f32.mrb[0].mxu0
    %v1802 = vadd.f32 %v1213, %v1801
    %1803 = vmatprep.mubr.f32.mxu0 %v352
    %1804 = vmatmul.mubr.f32.gmra.mrb[0].mxu0 %v351
    %v1805 = vpop.f32.mrb[0].mxu0
    %v1806 = vadd.f32 %v1214, %v1805
    %v1807 = vpop.f32.mrb[0].mxu0
    %v1808 = vadd.f32 %v1215, %v1807
    %1809 = vmatprep.mubr.f32.mxu0 %v356
    %1810 = vmatmul.mubr.f32.gmra.mrb[0].mxu0 %v355
    %v1811 = vpop.f32.mrb[0].mxu0
    %v1812 = vadd.f32 %v1216, %v1811
    %v1813 = vpop.f32.mrb[0].mxu0
    %v1814 = vadd.f32 %v1217, %v1813
    %1815 = vmatprep.mubr.f32.mxu0 %v360
    %1816 = vmatmul.mubr.f32.gmra.mrb[0].mxu0 %v359
    %v1817 = vpop.f32.mrb[0].mxu0
    %v1818 = vadd.f32 %v1218, %v1817
    %v1819 = vpop.f32.mrb[0].mxu0
    %v1820 = vadd.f32 %v1219, %v1819
    %1821 = vmatprep.mubr.f32.mxu0 %v364
    %1822 = vmatmul.mubr.f32.gmra.mrb[0].mxu0 %v363
    %v1823 = vpop.f32.mrb[0].mxu0
    %v1824 = vadd.f32 %v1220, %v1823
    %v1825 = vpop.f32.mrb[0].mxu0
    %v1826 = vadd.f32 %v1221, %v1825
    %1827 = vmatprep.mubr.f32.mxu0 %v368
    %1828 = vmatmul.mubr.f32.gmra.mrb[0].mxu0 %v367
    %v1829 = vpop.f32.mrb[0].mxu0
    %v1830 = vadd.f32 %v1222, %v1829
    %v1831 = vpop.f32.mrb[0].mxu0
    %v1832 = vadd.f32 %v1223, %v1831
    %1833 = vmatprep.mubr.f32.mxu0 %v372
    %1834 = vmatmul.mubr.f32.gmra.mrb[0].mxu0 %v371
    %v1835 = vpop.f32.mrb[0].mxu0
    %v1836 = vadd.f32 %v1224, %v1835
    %v1837 = vpop.f32.mrb[0].mxu0
    %v1838 = vadd.f32 %v1225, %v1837
    %1839 = vmatprep.mubr.f32.mxu0 %v376
    %1840 = vmatmul.mubr.f32.gmra.mrb[0].mxu0 %v375
    %v1841 = vpop.f32.mrb[0].mxu0
    %v1842 = vadd.f32 %v1226, %v1841
    %v1843 = vpop.f32.mrb[0].mxu0
    %v1844 = vadd.f32 %v1227, %v1843
    %1845 = vmatprep.mubr.f32.mxu0 %v380
    %1846 = vmatmul.mubr.f32.gmra.mrb[0].mxu0 %v379
    %v1847 = vpop.f32.mrb[0].mxu0
    %v1848 = vadd.f32 %v1228, %v1847
    %v1849 = vpop.f32.mrb[0].mxu0
    %v1850 = vadd.f32 %v1229, %v1849
    %1851 = vmatprep.mubr.f32.mxu0 %v384
    %1852 = vmatmul.mubr.f32.gmra.mrb[0].mxu0 %v383
    %v1853 = vpop.f32.mrb[0].mxu0
    %v1854 = vadd.f32 %v1230, %v1853
    %v1855 = vpop.f32.mrb[0].mxu0
    %v1856 = vadd.f32 %v1231, %v1855
    %1857 = vmatprep.mubr.f32.mxu0 %v388
    %1858 = vmatmul.mubr.f32.gmra.mrb[0].mxu0 %v387
    %v1859 = vpop.f32.mrb[0].mxu0
    %v1860 = vadd.f32 %v1232, %v1859
    %v1861 = vpop.f32.mrb[0].mxu0
    %v1862 = vadd.f32 %v1233, %v1861
    %1863 = vmatprep.mubr.f32.mxu0 %v392
    %1864 = vmatmul.mubr.f32.gmra.mrb[0].mxu0 %v391
    %v1865 = vpop.f32.mrb[0].mxu0
    %v1866 = vadd.f32 %v1234, %v1865
    %v1867 = vpop.f32.mrb[0].mxu0
    %v1868 = vadd.f32 %v1235, %v1867
    %1869 = vmatprep.mubr.f32.mxu0 %v396
    %1870 = vmatmul.mubr.f32.gmra.mrb[0].mxu0 %v395
    %v1871 = vpop.f32.mrb[0].mxu0
    %v1872 = vadd.f32 %v1236, %v1871
    %v1873 = vpop.f32.mrb[0].mxu0
    %v1874 = vadd.f32 %v1237, %v1873
    %1875 = vmatprep.mubr.f32.mxu0 %v400
    %1876 = vmatmul.mubr.f32.gmra.mrb[0].mxu0 %v399
    %v1877 = vpop.f32.mrb[0].mxu0
    %v1878 = vadd.f32 %v1238, %v1877
    %v1879 = vpop.f32.mrb[0].mxu0
    %v1880 = vadd.f32 %v1239, %v1879
    %1881 = vmatprep.mubr.f32.mxu0 %v404
    %1882 = vmatmul.mubr.f32.gmra.mrb[0].mxu0 %v403
    %v1883 = vpop.f32.mrb[0].mxu0
    %v1884 = vadd.f32 %v1240, %v1883
    %v1885 = vpop.f32.mrb[0].mxu0
    %v1886 = vadd.f32 %v1241, %v1885
    %1887 = vmatprep.mubr.f32.mxu0 %v408
    %1888 = vmatmul.mubr.f32.gmra.mrb[0].mxu0 %v407
    %v1889 = vpop.f32.mrb[0].mxu0
    %v1890 = vadd.f32 %v1242, %v1889
    %v1891 = vpop.f32.mrb[0].mxu0
    %v1892 = vadd.f32 %v1243, %v1891
    %1893 = vmatprep.mubr.f32.mxu0 %v412
    %1894 = vmatmul.mubr.f32.gmra.mrb[0].mxu0 %v411
    %v1895 = vpop.f32.mrb[0].mxu0
    %v1896 = vadd.f32 %v1244, %v1895
    %v1897 = vpop.f32.mrb[0].mxu0
    %v1898 = vadd.f32 %v1245, %v1897
    %1899 = vmatprep.mubr.f32.mxu0 %v416
    %1900 = vmatmul.mubr.f32.gmra.mrb[0].mxu0 %v415
    %v1901 = vpop.f32.mrb[0].mxu0
    %v1902 = vadd.f32 %v1246, %v1901
    %v1903 = vpop.f32.mrb[0].mxu0
    %v1904 = vadd.f32 %v1247, %v1903
    %1905 = vmatprep.mubr.f32.mxu0 %v420
    %1906 = vmatmul.mubr.f32.gmra.mrb[0].mxu0 %v419
    %v1907 = vpop.f32.mrb[0].mxu0
    %v1908 = vadd.f32 %v1248, %v1907
    %v1909 = vpop.f32.mrb[0].mxu0
    %v1910 = vadd.f32 %v1249, %v1909
    %1911 = vmatprep.mubr.f32.mxu0 %v424
    %1912 = vmatmul.mubr.f32.gmra.mrb[0].mxu0 %v423
    %v1913 = vpop.f32.mrb[0].mxu0
    %v1914 = vadd.f32 %v1250, %v1913
    %v1915 = vpop.f32.mrb[0].mxu0
    %v1916 = vadd.f32 %v1251, %v1915
    %1917 = vmatprep.mubr.f32.mxu0 %v428
    %1918 = vmatmul.mubr.f32.gmra.mrb[0].mxu0 %v427
    %v1919 = vpop.f32.mrb[0].mxu0
    %v1920 = vadd.f32 %v1252, %v1919
    %v1921 = vpop.f32.mrb[0].mxu0
    %v1922 = vadd.f32 %v1253, %v1921
    %1923 = vmatprep.mubr.f32.mxu0 %v432
    %1924 = vmatmul.mubr.f32.gmra.mrb[0].mxu0 %v431
    %v1925 = vpop.f32.mrb[0].mxu0
    %v1926 = vadd.f32 %v1254, %v1925
    %v1927 = vpop.f32.mrb[0].mxu0
    %v1928 = vadd.f32 %v1255, %v1927
    %1929 = vmatprep.mubr.f32.mxu0 %v436
    %1930 = vmatmul.mubr.f32.gmra.mrb[0].mxu0 %v435
    %v1931 = vpop.f32.mrb[0].mxu0
    %v1932 = vadd.f32 %v1256, %v1931
    %v1933 = vpop.f32.mrb[0].mxu0
    %v1934 = vadd.f32 %v1257, %v1933
    %1935 = vmatprep.mubr.f32.mxu0 %v440
    %1936 = vmatmul.mubr.f32.gmra.mrb[0].mxu0 %v439
    %v1937 = vpop.f32.mrb[0].mxu0
    %v1938 = vadd.f32 %v1258, %v1937
    %v1939 = vpop.f32.mrb[0].mxu0
    %v1940 = vadd.f32 %v1259, %v1939
    %1941 = vmatprep.mubr.f32.mxu0 %v444
    %1942 = vmatmul.mubr.f32.gmra.mrb[0].mxu0 %v443
    %v1943 = vpop.f32.mrb[0].mxu0
    %v1944 = vadd.f32 %v1260, %v1943
    %v1945 = vpop.f32.mrb[0].mxu0
    %v1946 = vadd.f32 %v1261, %v1945
    %1947 = vmatprep.mubr.f32.mxu0 %v448
    %1948 = vmatmul.mubr.f32.gmra.mrb[0].mxu0 %v447
    %v1949 = vpop.f32.mrb[0].mxu0
    %v1950 = vadd.f32 %v1262, %v1949
    %v1951 = vpop.f32.mrb[0].mxu0
    %v1952 = vadd.f32 %v1263, %v1951
    %1953 = vmatprep.mubr.f32.mxu0 %v452
    %1954 = vmatmul.mubr.f32.gmra.mrb[0].mxu0 %v451
    %v1955 = vpop.f32.mrb[0].mxu0
    %v1956 = vadd.f32 %v1264, %v1955
    %v1957 = vpop.f32.mrb[0].mxu0
    %v1958 = vadd.f32 %v1265, %v1957
    %1959 = vmatprep.mubr.f32.mxu0 %v456
    %1960 = vmatmul.mubr.f32.gmra.mrb[0].mxu0 %v455
    %v1961 = vpop.f32.mrb[0].mxu0
    %v1962 = vadd.f32 %v1266, %v1961
    %v1963 = vpop.f32.mrb[0].mxu0
    %v1964 = vadd.f32 %v1267, %v1963
    %1965 = vmatprep.mubr.f32.mxu0 %v460
    %1966 = vmatmul.mubr.f32.gmra.mrb[0].mxu0 %v459
    %v1967 = vpop.f32.mrb[0].mxu0
    %v1968 = vadd.f32 %v1268, %v1967
    %v1969 = vpop.f32.mrb[0].mxu0
    %v1970 = vadd.f32 %v1269, %v1969
    %1971 = vmatprep.mubr.f32.mxu0 %v464
    %1972 = vmatmul.mubr.f32.gmra.mrb[0].mxu0 %v463
    %v1973 = vpop.f32.mrb[0].mxu0
    %v1974 = vadd.f32 %v1270, %v1973
    %v1975 = vpop.f32.mrb[0].mxu0
    %v1976 = vadd.f32 %v1271, %v1975
    %1977 = vmatprep.mubr.f32.mxu0 %v468
    %1978 = vmatmul.mubr.f32.gmra.mrb[0].mxu0 %v467
    %v1979 = vpop.f32.mrb[0].mxu0
    %v1980 = vadd.f32 %v1272, %v1979
    %v1981 = vpop.f32.mrb[0].mxu0
    %v1982 = vadd.f32 %v1273, %v1981
    %1983 = vdwg.mxu0
    %1984 = vmatprep.subr.mxu0 %v1664
    %1985 = vmatpush1.msra.mxu0 %v1663
    %1986 = vmatprep.subr.mxu0 %v1666
    %1987 = vmatpush1.msra.mxu0 %v1665
    %1988 = vmatprep.subr.mxu0 %v1668
    %1989 = vmatpush1.msra.mxu0 %v1667
    %1990 = vmatprep.subr.mxu0 %v1670
    %1991 = vmatpush1.msra.mxu0 %v1669
    %1992 = vmatprep.subr.mxu0 %v1672
    %1993 = vmatpush1.msra.mxu0 %v1671
    %1994 = vmatprep.subr.mxu0 %v1674
    %1995 = vmatpush1.msra.mxu0 %v1673
    %1996 = vmatprep.subr.mxu0 %v1676
    %1997 = vmatpush1.msra.mxu0 %v1675
    %1998 = vmatprep.subr.mxu0 %v1678
    %1999 = vmatpush1.msra.mxu0 %v1677
    %2000 = vmatprep.subr.mxu0 %v1680
    %2001 = vmatpush1.msra.mxu0 %v1679
    %2002 = vmatprep.subr.mxu0 %v1682
    %2003 = vmatpush1.msra.mxu0 %v1681
    %2004 = vmatprep.subr.mxu0 %v1684
    %2005 = vmatpush1.msra.mxu0 %v1683
    %2006 = vmatprep.subr.mxu0 %v1686
    %2007 = vmatpush1.msra.mxu0 %v1685
    %2008 = vmatprep.subr.mxu0 %v1688
    %2009 = vmatpush1.msra.mxu0 %v1687
    %2010 = vmatprep.subr.mxu0 %v1690
    %2011 = vmatpush1.msra.mxu0 %v1689
    %2012 = vmatprep.subr.mxu0 %v1692
    %2013 = vmatpush1.msra.mxu0 %v1691
    %2014 = vmatprep.subr.mxu0 %v1694
    %2015 = vmatpush1.msra.mxu0 %v1693
    %2016 = vmatprep.subr.mxu0 %v1696
    %2017 = vmatpush1.msra.mxu0 %v1695
    %2018 = vmatprep.subr.mxu0 %v1698
    %2019 = vmatpush1.msra.mxu0 %v1697
    %2020 = vmatprep.subr.mxu0 %v1700
    %2021 = vmatpush1.msra.mxu0 %v1699
    %2022 = vmatprep.subr.mxu0 %v1702
    %2023 = vmatpush1.msra.mxu0 %v1701
    %2024 = vmatprep.subr.mxu0 %v1704
    %2025 = vmatpush1.msra.mxu0 %v1703
    %2026 = vmatprep.subr.mxu0 %v1706
    %2027 = vmatpush1.msra.mxu0 %v1705
    %2028 = vmatprep.subr.mxu0 %v1708
    %2029 = vmatpush1.msra.mxu0 %v1707
    %2030 = vmatprep.subr.mxu0 %v1710
    %2031 = vmatpush1.msra.mxu0 %v1709
    %2032 = vmatprep.subr.mxu0 %v1712
    %2033 = vmatpush1.msra.mxu0 %v1711
    %2034 = vmatprep.subr.mxu0 %v1714
    %2035 = vmatpush1.msra.mxu0 %v1713
    %2036 = vmatprep.subr.mxu0 %v1716
    %2037 = vmatpush1.msra.mxu0 %v1715
    %2038 = vmatprep.subr.mxu0 %v1718
    %2039 = vmatpush1.msra.mxu0 %v1717
    %2040 = vmatprep.subr.mxu0 %v1720
    %2041 = vmatpush1.msra.mxu0 %v1719
    %2042 = vmatprep.subr.mxu0 %v1722
    %2043 = vmatpush1.msra.mxu0 %v1721
    %2044 = vmatprep.subr.mxu0 %v1724
    %2045 = vmatpush1.msra.mxu0 %v1723
    %2046 = vmatprep.subr.mxu0 %v1726
    %2047 = vmatpush1.msra.mxu0 %v1725
    %2048 = vmatprep.mubr.f32.mxu0 %v346
    %2049 = vmatmul.mubr.f32.gmra.mrb[0].mxu0 %v345
    %v2050 = vpop.f32.mrb[0].mxu0
    %v2051 = vadd.f32 %v1794, %v2050
    %v2052 = vpop.f32.mrb[0].mxu0
    %v2053 = vadd.f32 %v1796, %v2052
    %2054 = vmatprep.mubr.f32.mxu0 %v350
    %2055 = vmatmul.mubr.f32.gmra.mrb[0].mxu0 %v349
    %v2056 = vpop.f32.mrb[0].mxu0
    %v2057 = vadd.f32 %v1800, %v2056
    %v2058 = vpop.f32.mrb[0].mxu0
    %v2059 = vadd.f32 %v1802, %v2058
    %2060 = vmatprep.mubr.f32.mxu0 %v354
    %2061 = vmatmul.mubr.f32.gmra.mrb[0].mxu0 %v353
    %v2062 = vpop.f32.mrb[0].mxu0
    %v2063 = vadd.f32 %v1806, %v2062
    %v2064 = vpop.f32.mrb[0].mxu0
    %v2065 = vadd.f32 %v1808, %v2064
    %2066 = vmatprep.mubr.f32.mxu0 %v358
    %2067 = vmatmul.mubr.f32.gmra.mrb[0].mxu0 %v357
    %v2068 = vpop.f32.mrb[0].mxu0
    %v2069 = vadd.f32 %v1812, %v2068
    %v2070 = vpop.f32.mrb[0].mxu0
    %v2071 = vadd.f32 %v1814, %v2070
    %2072 = vmatprep.mubr.f32.mxu0 %v362
    %2073 = vmatmul.mubr.f32.gmra.mrb[0].mxu0 %v361
    %v2074 = vpop.f32.mrb[0].mxu0
    %v2075 = vadd.f32 %v1818, %v2074
    %v2076 = vpop.f32.mrb[0].mxu0
    %v2077 = vadd.f32 %v1820, %v2076
    %2078 = vmatprep.mubr.f32.mxu0 %v366
    %2079 = vmatmul.mubr.f32.gmra.mrb[0].mxu0 %v365
    %v2080 = vpop.f32.mrb[0].mxu0
    %v2081 = vadd.f32 %v1824, %v2080
    %v2082 = vpop.f32.mrb[0].mxu0
    %v2083 = vadd.f32 %v1826, %v2082
    %2084 = vmatprep.mubr.f32.mxu0 %v370
    %2085 = vmatmul.mubr.f32.gmra.mrb[0].mxu0 %v369
    %v2086 = vpop.f32.mrb[0].mxu0
    %v2087 = vadd.f32 %v1830, %v2086
    %v2088 = vpop.f32.mrb[0].mxu0
    %v2089 = vadd.f32 %v1832, %v2088
    %2090 = vmatprep.mubr.f32.mxu0 %v374
    %2091 = vmatmul.mubr.f32.gmra.mrb[0].mxu0 %v373
    %v2092 = vpop.f32.mrb[0].mxu0
    %v2093 = vadd.f32 %v1836, %v2092
    %v2094 = vpop.f32.mrb[0].mxu0
    %v2095 = vadd.f32 %v1838, %v2094
    %2096 = vmatprep.mubr.f32.mxu0 %v378
    %2097 = vmatmul.mubr.f32.gmra.mrb[0].mxu0 %v377
    %v2098 = vpop.f32.mrb[0].mxu0
    %v2099 = vadd.f32 %v1842, %v2098
    %v2100 = vpop.f32.mrb[0].mxu0
    %v2101 = vadd.f32 %v1844, %v2100
    %2102 = vmatprep.mubr.f32.mxu0 %v382
    %2103 = vmatmul.mubr.f32.gmra.mrb[0].mxu0 %v381
    %v2104 = vpop.f32.mrb[0].mxu0
    %v2105 = vadd.f32 %v1848, %v2104
    %v2106 = vpop.f32.mrb[0].mxu0
    %v2107 = vadd.f32 %v1850, %v2106
    %2108 = vmatprep.mubr.f32.mxu0 %v386
    %2109 = vmatmul.mubr.f32.gmra.mrb[0].mxu0 %v385
    %v2110 = vpop.f32.mrb[0].mxu0
    %v2111 = vadd.f32 %v1854, %v2110
    %v2112 = vpop.f32.mrb[0].mxu0
    %v2113 = vadd.f32 %v1856, %v2112
    %2114 = vmatprep.mubr.f32.mxu0 %v390
    %2115 = vmatmul.mubr.f32.gmra.mrb[0].mxu0 %v389
    %v2116 = vpop.f32.mrb[0].mxu0
    %v2117 = vadd.f32 %v1860, %v2116
    %v2118 = vpop.f32.mrb[0].mxu0
    %v2119 = vadd.f32 %v1862, %v2118
    %2120 = vmatprep.mubr.f32.mxu0 %v394
    %2121 = vmatmul.mubr.f32.gmra.mrb[0].mxu0 %v393
    %v2122 = vpop.f32.mrb[0].mxu0
    %v2123 = vadd.f32 %v1866, %v2122
    %v2124 = vpop.f32.mrb[0].mxu0
    %v2125 = vadd.f32 %v1868, %v2124
    %2126 = vmatprep.mubr.f32.mxu0 %v398
    %2127 = vmatmul.mubr.f32.gmra.mrb[0].mxu0 %v397
    %v2128 = vpop.f32.mrb[0].mxu0
    %v2129 = vadd.f32 %v1872, %v2128
    %v2130 = vpop.f32.mrb[0].mxu0
    %v2131 = vadd.f32 %v1874, %v2130
    %2132 = vmatprep.mubr.f32.mxu0 %v402
    %2133 = vmatmul.mubr.f32.gmra.mrb[0].mxu0 %v401
    %v2134 = vpop.f32.mrb[0].mxu0
    %v2135 = vadd.f32 %v1878, %v2134
    %v2136 = vpop.f32.mrb[0].mxu0
    %v2137 = vadd.f32 %v1880, %v2136
    %2138 = vmatprep.mubr.f32.mxu0 %v406
    %2139 = vmatmul.mubr.f32.gmra.mrb[0].mxu0 %v405
    %v2140 = vpop.f32.mrb[0].mxu0
    %v2141 = vadd.f32 %v1884, %v2140
    %v2142 = vpop.f32.mrb[0].mxu0
    %v2143 = vadd.f32 %v1886, %v2142
    %2144 = vmatprep.mubr.f32.mxu0 %v410
    %2145 = vmatmul.mubr.f32.gmra.mrb[0].mxu0 %v409
    %v2146 = vpop.f32.mrb[0].mxu0
    %v2147 = vadd.f32 %v1890, %v2146
    %v2148 = vpop.f32.mrb[0].mxu0
    %v2149 = vadd.f32 %v1892, %v2148
    %2150 = vmatprep.mubr.f32.mxu0 %v414
    %2151 = vmatmul.mubr.f32.gmra.mrb[0].mxu0 %v413
    %v2152 = vpop.f32.mrb[0].mxu0
    %v2153 = vadd.f32 %v1896, %v2152
    %v2154 = vpop.f32.mrb[0].mxu0
    %v2155 = vadd.f32 %v1898, %v2154
    %2156 = vmatprep.mubr.f32.mxu0 %v418
    %2157 = vmatmul.mubr.f32.gmra.mrb[0].mxu0 %v417
    %v2158 = vpop.f32.mrb[0].mxu0
    %v2159 = vadd.f32 %v1902, %v2158
    %v2160 = vpop.f32.mrb[0].mxu0
    %v2161 = vadd.f32 %v1904, %v2160
    %2162 = vmatprep.mubr.f32.mxu0 %v422
    %2163 = vmatmul.mubr.f32.gmra.mrb[0].mxu0 %v421
    %v2164 = vpop.f32.mrb[0].mxu0
    %v2165 = vadd.f32 %v1908, %v2164
    %v2166 = vpop.f32.mrb[0].mxu0
    %v2167 = vadd.f32 %v1910, %v2166
    %2168 = vmatprep.mubr.f32.mxu0 %v426
    %2169 = vmatmul.mubr.f32.gmra.mrb[0].mxu0 %v425
    %v2170 = vpop.f32.mrb[0].mxu0
    %v2171 = vadd.f32 %v1914, %v2170
    %v2172 = vpop.f32.mrb[0].mxu0
    %v2173 = vadd.f32 %v1916, %v2172
    %2174 = vmatprep.mubr.f32.mxu0 %v430
    %2175 = vmatmul.mubr.f32.gmra.mrb[0].mxu0 %v429
    %v2176 = vpop.f32.mrb[0].mxu0
    %v2177 = vadd.f32 %v1920, %v2176
    %v2178 = vpop.f32.mrb[0].mxu0
    %v2179 = vadd.f32 %v1922, %v2178
    %2180 = vmatprep.mubr.f32.mxu0 %v434
    %2181 = vmatmul.mubr.f32.gmra.mrb[0].mxu0 %v433
    %v2182 = vpop.f32.mrb[0].mxu0
    %v2183 = vadd.f32 %v1926, %v2182
    %v2184 = vpop.f32.mrb[0].mxu0
    %v2185 = vadd.f32 %v1928, %v2184
    %2186 = vmatprep.mubr.f32.mxu0 %v438
    %2187 = vmatmul.mubr.f32.gmra.mrb[0].mxu0 %v437
    %v2188 = vpop.f32.mrb[0].mxu0
    %v2189 = vadd.f32 %v1932, %v2188
    %v2190 = vpop.f32.mrb[0].mxu0
    %v2191 = vadd.f32 %v1934, %v2190
    %2192 = vmatprep.mubr.f32.mxu0 %v442
    %2193 = vmatmul.mubr.f32.gmra.mrb[0].mxu0 %v441
    %v2194 = vpop.f32.mrb[0].mxu0
    %v2195 = vadd.f32 %v1938, %v2194
    %v2196 = vpop.f32.mrb[0].mxu0
    %v2197 = vadd.f32 %v1940, %v2196
    %2198 = vmatprep.mubr.f32.mxu0 %v446
    %2199 = vmatmul.mubr.f32.gmra.mrb[0].mxu0 %v445
    %v2200 = vpop.f32.mrb[0].mxu0
    %v2201 = vadd.f32 %v1944, %v2200
    %v2202 = vpop.f32.mrb[0].mxu0
    %v2203 = vadd.f32 %v1946, %v2202
    %2204 = vmatprep.mubr.f32.mxu0 %v450
    %2205 = vmatmul.mubr.f32.gmra.mrb[0].mxu0 %v449
    %v2206 = vpop.f32.mrb[0].mxu0
    %v2207 = vadd.f32 %v1950, %v2206
    %v2208 = vpop.f32.mrb[0].mxu0
    %v2209 = vadd.f32 %v1952, %v2208
    %2210 = vmatprep.mubr.f32.mxu0 %v454
    %2211 = vmatmul.mubr.f32.gmra.mrb[0].mxu0 %v453
    %v2212 = vpop.f32.mrb[0].mxu0
    %v2213 = vadd.f32 %v1956, %v2212
    %v2214 = vpop.f32.mrb[0].mxu0
    %v2215 = vadd.f32 %v1958, %v2214
    %2216 = vmatprep.mubr.f32.mxu0 %v458
    %2217 = vmatmul.mubr.f32.gmra.mrb[0].mxu0 %v457
    %v2218 = vpop.f32.mrb[0].mxu0
    %v2219 = vadd.f32 %v1962, %v2218
    %v2220 = vpop.f32.mrb[0].mxu0
    %v2221 = vadd.f32 %v1964, %v2220
    %2222 = vmatprep.mubr.f32.mxu0 %v462
    %2223 = vmatmul.mubr.f32.gmra.mrb[0].mxu0 %v461
    %v2224 = vpop.f32.mrb[0].mxu0
    %v2225 = vadd.f32 %v1968, %v2224
    %v2226 = vpop.f32.mrb[0].mxu0
    %v2227 = vadd.f32 %v1970, %v2226
    %2228 = vmatprep.mubr.f32.mxu0 %v466
    %2229 = vmatmul.mubr.f32.gmra.mrb[0].mxu0 %v465
    %v2230 = vpop.f32.mrb[0].mxu0
    %v2231 = vadd.f32 %v1974, %v2230
    %v2232 = vpop.f32.mrb[0].mxu0
    %v2233 = vadd.f32 %v1976, %v2232
    %2234 = vmatprep.mubr.f32.mxu0 %v470
    %2235 = vmatmul.mubr.f32.gmra.mrb[0].mxu0 %v469
    %v2236 = vpop.f32.mrb[0].mxu0
    %v2237 = vadd.f32 %v1980, %v2236
    %v2238 = vpop.f32.mrb[0].mxu0
    %v2239 = vadd.f32 %v1982, %v2238
    %2240 = vdwg.mxu0
    %v2241 = vadd.f32 %v2051, %v2057
    %v2242 = vadd.f32 %v2241, %v2063
    %v2243 = vadd.f32 %v2242, %v2069
    %v2244 = vadd.f32 %v2243, %v2075
    %v2245 = vadd.f32 %v2244, %v2081
    %v2246 = vadd.f32 %v2245, %v2087
    %v2247 = vadd.f32 %v2246, %v2093
    %v2248 = vadd.f32 %v2247, %v2099
    %v2249 = vadd.f32 %v2248, %v2105
    %v2250 = vadd.f32 %v2249, %v2111
    %v2251 = vadd.f32 %v2250, %v2117
    %v2252 = vadd.f32 %v2251, %v2123
    %v2253 = vadd.f32 %v2252, %v2129
    %v2254 = vadd.f32 %v2253, %v2135
    %v2255 = vadd.f32 %v2254, %v2141
    %v2256 = vadd.f32 %v2255, %v2147
    %v2257 = vadd.f32 %v2256, %v2153
    %v2258 = vadd.f32 %v2257, %v2159
    %v2259 = vadd.f32 %v2258, %v2165
    %v2260 = vadd.f32 %v2259, %v2171
    %v2261 = vadd.f32 %v2260, %v2177
    %v2262 = vadd.f32 %v2261, %v2183
    %v2263 = vadd.f32 %v2262, %v2189
    %v2264 = vadd.f32 %v2263, %v2195
    %v2265 = vadd.f32 %v2264, %v2201
    %v2266 = vadd.f32 %v2265, %v2207
    %v2267 = vadd.f32 %v2266, %v2213
    %v2268 = vadd.f32 %v2267, %v2219
    %v2269 = vadd.f32 %v2268, %v2225
    %v2270 = vadd.f32 %v2269, %v2231
    %v2271 = vadd.f32 %v2270, %v2237
    %v2272 = vrot.slane %v2271, 4
    %v2273 = vadd.f32 %v2271, %v2272
    %v2274 = vrot.slane %v2273, 2
    %v2275 = vadd.f32 %v2273, %v2274
    %v2276 = vrot.slane %v2275, 1
    %v2277 = vadd.f32 %v2275, %v2276
    %v2278 = vadd.f32 %v2053, %v2059
    %v2279 = vadd.f32 %v2278, %v2065
    %v2280 = vadd.f32 %v2279, %v2071
    %v2281 = vadd.f32 %v2280, %v2077
    %v2282 = vadd.f32 %v2281, %v2083
    %v2283 = vadd.f32 %v2282, %v2089
    %v2284 = vadd.f32 %v2283, %v2095
    %v2285 = vadd.f32 %v2284, %v2101
    %v2286 = vadd.f32 %v2285, %v2107
    %v2287 = vadd.f32 %v2286, %v2113
    %v2288 = vadd.f32 %v2287, %v2119
    %v2289 = vadd.f32 %v2288, %v2125
    %v2290 = vadd.f32 %v2289, %v2131
    %v2291 = vadd.f32 %v2290, %v2137
    %v2292 = vadd.f32 %v2291, %v2143
    %v2293 = vadd.f32 %v2292, %v2149
    %v2294 = vadd.f32 %v2293, %v2155
    %v2295 = vadd.f32 %v2294, %v2161
    %v2296 = vadd.f32 %v2295, %v2167
    %v2297 = vadd.f32 %v2296, %v2173
    %v2298 = vadd.f32 %v2297, %v2179
    %v2299 = vadd.f32 %v2298, %v2185
    %v2300 = vadd.f32 %v2299, %v2191
    %v2301 = vadd.f32 %v2300, %v2197
    %v2302 = vadd.f32 %v2301, %v2203
    %v2303 = vadd.f32 %v2302, %v2209
    %v2304 = vadd.f32 %v2303, %v2215
    %v2305 = vadd.f32 %v2304, %v2221
    %v2306 = vadd.f32 %v2305, %v2227
    %v2307 = vadd.f32 %v2306, %v2233
    %v2308 = vadd.f32 %v2307, %v2239
    %v2309 = vrot.slane %v2308, 4
    %v2310 = vadd.f32 %v2308, %v2309
    %v2311 = vrot.slane %v2310, 2
    %v2312 = vadd.f32 %v2310, %v2311
    %v2313 = vrot.slane %v2312, 1
    %v2314 = vadd.f32 %v2312, %v2313
    %vm2315 = vcmp.gt.f32.partialorder %v2277, 0.0
    %vm2316 = vcmp.gt.f32.partialorder %v2314, 0.0
    %v2317 = vrsqrt.pop %v2277
    %v2318 = vrsqrt.pop %v2314
    %v2319 = vsel %vm2315, %v2317, 0.0
    %v2320 = vsel %vm2316, %v2318, 0.0
    %s2321 = sld [smem:[#allocation2]]
    %v2322 = vld [vmem:[%s1] ss:$4 sm:$0x3]
    %v2323 = vstv %s2321
    %v2324 = vmul.f32 %v2323, %v2322
    %s2325 = sld [smem:[#allocation2 + $0x1]]
    %s2326 = scalar_lea.vmem %s1, 1
    %v2327 = vld [vmem:[%s2326] ss:$4 sm:$0x3]
    %v2328 = vstv %s2325
    %v2329 = vmul.f32 %v2328, %v2327
    %v2330 = vadd.f32 %v2324, %v2329
    %s2331 = sld [smem:[#allocation2 + $0x2]]
    %s2332 = scalar_lea.vmem %s1, 2
    %v2333 = vld [vmem:[%s2332] ss:$4 sm:$0x3]
    %v2334 = vstv %s2331
    %v2335 = vmul.f32 %v2334, %v2333
    %v2336 = vadd.f32 %v2330, %v2335
    %s2337 = sld [smem:[#allocation2 + $0x3]]
    %s2338 = scalar_lea.vmem %s1, 3
    %v2339 = vld [vmem:[%s2338] ss:$4 sm:$0x3]
    %v2340 = vstv %s2337
    %v2341 = vmul.f32 %v2340, %v2339
    %v2342 = vadd.f32 %v2336, %v2341
    %v2345 = vcombine.low %v2319, %v2320
    %v2347 = vunpack.c.l.s4 1966171168
    %v2348 = vunpack.c.0.s8 %v2347
    %v2349 = vlaneseq
    %v2350 = vshrl.u32 %v2349, 7
    %v2351 = vsub.s32 %v2348, %v2350
    %v2352 = vrot.slane %v2345, %v2351
    %v2354 = vunpack.c.l.s4 1966171168
    %v2355 = vunpack.c.0.s8 %v2354
    %v2356 = vlaneseq
    %v2357 = vshrl.u32 %v2356, 7
    %v2358 = vsub.s32 %v2355, %v2357
    %v2359 = vrot.slane %v2352, %v2358
    %v2361 = vmul.f32 %v2342, %v2359
    %v2363 = vlaneseq
    %v2364 = vshrl.u32 %v2363, 7
    %v2365 = vsub.s32 0, %v2364
    %v2366 = vrot.slane %v2361, %v2365
    %v2367 = vlaneseq
    %v2368 = vshrl.u32 %v2367, 7
    %v2369 = vsub.s32 1, %v2368
    %v2370 = vrot.slane %v2361, %v2369
    %2373 = vmatprep.subr.mxu0 %v2053
    %2374 = vmatpush1.msra.mxu0 %v2051
    %2375 = vmatprep.subr.mxu0 %v2059
    %2376 = vmatpush1.msra.mxu0 %v2057
    %2377 = vmatprep.subr.mxu0 %v2065
    %2378 = vmatpush1.msra.mxu0 %v2063
    %2379 = vmatprep.subr.mxu0 %v2071
    %2380 = vmatpush1.msra.mxu0 %v2069
    %2381 = vmatprep.subr.mxu0 %v2077
    %2382 = vmatpush1.msra.mxu0 %v2075
    %2383 = vmatprep.subr.mxu0 %v2083
    %2384 = vmatpush1.msra.mxu0 %v2081
    %2385 = vmatprep.subr.mxu0 %v2089
    %2386 = vmatpush1.msra.mxu0 %v2087
    %2387 = vmatprep.subr.mxu0 %v2095
    %2388 = vmatpush1.msra.mxu0 %v2093
    %2389 = vmatprep.subr.mxu0 %v2101
    %2390 = vmatpush1.msra.mxu0 %v2099
    %2391 = vmatprep.subr.mxu0 %v2107
    %2392 = vmatpush1.msra.mxu0 %v2105
    %2393 = vmatprep.subr.mxu0 %v2113
    %2394 = vmatpush1.msra.mxu0 %v2111
    %2395 = vmatprep.subr.mxu0 %v2119
    %2396 = vmatpush1.msra.mxu0 %v2117
    %2397 = vmatprep.subr.mxu0 %v2125
    %2398 = vmatpush1.msra.mxu0 %v2123
    %2399 = vmatprep.subr.mxu0 %v2131
    %2400 = vmatpush1.msra.mxu0 %v2129
    %2401 = vmatprep.subr.mxu0 %v2137
    %2402 = vmatpush1.msra.mxu0 %v2135
    %2403 = vmatprep.subr.mxu0 %v2143
    %2404 = vmatpush1.msra.mxu0 %v2141
    %2405 = vmatprep.subr.mxu0 %v2149
    %2406 = vmatpush1.msra.mxu0 %v2147
    %2407 = vmatprep.subr.mxu0 %v2155
    %2408 = vmatpush1.msra.mxu0 %v2153
    %2409 = vmatprep.subr.mxu0 %v2161
    %2410 = vmatpush1.msra.mxu0 %v2159
    %2411 = vmatprep.subr.mxu0 %v2167
    %2412 = vmatpush1.msra.mxu0 %v2165
    %2413 = vmatprep.subr.mxu0 %v2173
    %2414 = vmatpush1.msra.mxu0 %v2171
    %2415 = vmatprep.subr.mxu0 %v2179
    %2416 = vmatpush1.msra.mxu0 %v2177
    %2417 = vmatprep.subr.mxu0 %v2185
    %2418 = vmatpush1.msra.mxu0 %v2183
    %2419 = vmatprep.subr.mxu0 %v2191
    %2420 = vmatpush1.msra.mxu0 %v2189
    %2421 = vmatprep.subr.mxu0 %v2197
    %2422 = vmatpush1.msra.mxu0 %v2195
    %2423 = vmatprep.subr.mxu0 %v2203
    %2424 = vmatpush1.msra.mxu0 %v2201
    %2425 = vmatprep.subr.mxu0 %v2209
    %2426 = vmatpush1.msra.mxu0 %v2207
    %2427 = vmatprep.subr.mxu0 %v2215
    %2428 = vmatpush1.msra.mxu0 %v2213
    %2429 = vmatprep.subr.mxu0 %v2221
    %2430 = vmatpush1.msra.mxu0 %v2219
    %2431 = vmatprep.subr.mxu0 %v2227
    %2432 = vmatpush1.msra.mxu0 %v2225
    %2433 = vmatprep.subr.mxu0 %v2233
    %2434 = vmatpush1.msra.mxu0 %v2231
    %2435 = vmatprep.subr.mxu0 %v2239
    %2436 = vmatpush1.msra.mxu0 %v2237
    %2437 = vmatprep.mubr.f32.mxu0 %v2370
    %2438 = vmatmul.mubr.f32.gmra.mrb[0].mxu0 %v2366
    %v2439 = vpop.f32.mrb[0].mxu0
    %v2440 = vadd.f32 0.0, %v2439
    %v2441 = vpop.f32.mrb[0].mxu0
    %v2442 = vadd.f32 0.0, %v2441
    %2443 = vdwg.mxu0
    %v2444 = vmul.f32 %v2440, %v2319
    %v2445 = vmul.f32 %v2442, %v2320
    %s2446 = sld [smem:[#allocation2 + $0x8]]
    %v2447 = vstv %s2446
    %v2448 = vadd.f32 %v2444, %v2447
    %v2449 = vadd.f32 %v2445, %v2447
    %s2450 = sld [smem:[#allocation2 + $0x4]]
    %v2451 = vstv %s2450
    %v2452 = vmul.f32 %v2448, %v2451
    %v2453 = vmul.f32 %v2449, %v2451
    %v2454 = vmul.f32 %v2452, %v2319
    %v2455 = vmul.f32 %v2453, %v2320
    %2456 = vmatprep.subr.mxu0 %v2053
    %2457 = vmatpush1.msra.mxu0 %v2051
    %2458 = vmatprep.subr.mxu0 %v2059
    %2459 = vmatpush1.msra.mxu0 %v2057
    %2460 = vmatprep.subr.mxu0 %v2065
    %2461 = vmatpush1.msra.mxu0 %v2063
    %2462 = vmatprep.subr.mxu0 %v2071
    %2463 = vmatpush1.msra.mxu0 %v2069
    %2464 = vmatprep.subr.mxu0 %v2077
    %2465 = vmatpush1.msra.mxu0 %v2075
    %2466 = vmatprep.subr.mxu0 %v2083
    %2467 = vmatpush1.msra.mxu0 %v2081
    %2468 = vmatprep.subr.mxu0 %v2089
    %2469 = vmatpush1.msra.mxu0 %v2087
    %2470 = vmatprep.subr.mxu0 %v2095
    %2471 = vmatpush1.msra.mxu0 %v2093
    %2472 = vmatprep.subr.mxu0 %v2101
    %2473 = vmatpush1.msra.mxu0 %v2099
    %2474 = vmatprep.subr.mxu0 %v2107
    %2475 = vmatpush1.msra.mxu0 %v2105
    %2476 = vmatprep.subr.mxu0 %v2113
    %2477 = vmatpush1.msra.mxu0 %v2111
    %2478 = vmatprep.subr.mxu0 %v2119
    %2479 = vmatpush1.msra.mxu0 %v2117
    %2480 = vmatprep.subr.mxu0 %v2125
    %2481 = vmatpush1.msra.mxu0 %v2123
    %2482 = vmatprep.subr.mxu0 %v2131
    %2483 = vmatpush1.msra.mxu0 %v2129
    %2484 = vmatprep.subr.mxu0 %v2137
    %2485 = vmatpush1.msra.mxu0 %v2135
    %2486 = vmatprep.subr.mxu0 %v2143
    %2487 = vmatpush1.msra.mxu0 %v2141
    %2488 = vmatprep.subr.mxu0 %v2149
    %2489 = vmatpush1.msra.mxu0 %v2147
    %2490 = vmatprep.subr.mxu0 %v2155
    %2491 = vmatpush1.msra.mxu0 %v2153
    %2492 = vmatprep.subr.mxu0 %v2161
    %2493 = vmatpush1.msra.mxu0 %v2159
    %2494 = vmatprep.subr.mxu0 %v2167
    %2495 = vmatpush1.msra.mxu0 %v2165
    %2496 = vmatprep.subr.mxu0 %v2173
    %2497 = vmatpush1.msra.mxu0 %v2171
    %2498 = vmatprep.subr.mxu0 %v2179
    %2499 = vmatpush1.msra.mxu0 %v2177
    %2500 = vmatprep.subr.mxu0 %v2185
    %2501 = vmatpush1.msra.mxu0 %v2183
    %2502 = vmatprep.subr.mxu0 %v2191
    %2503 = vmatpush1.msra.mxu0 %v2189
    %2504 = vmatprep.subr.mxu0 %v2197
    %2505 = vmatpush1.msra.mxu0 %v2195
    %2506 = vmatprep.subr.mxu0 %v2203
    %2507 = vmatpush1.msra.mxu0 %v2201
    %2508 = vmatprep.subr.mxu0 %v2209
    %2509 = vmatpush1.msra.mxu0 %v2207
    %2510 = vmatprep.subr.mxu0 %v2215
    %2511 = vmatpush1.msra.mxu0 %v2213
    %2512 = vmatprep.subr.mxu0 %v2221
    %2513 = vmatpush1.msra.mxu0 %v2219
    %2514 = vmatprep.subr.mxu0 %v2227
    %2515 = vmatpush1.msra.mxu0 %v2225
    %2516 = vmatprep.subr.mxu0 %v2233
    %2517 = vmatpush1.msra.mxu0 %v2231
    %2518 = vmatprep.subr.mxu0 %v2239
    %2519 = vmatpush1.msra.mxu0 %v2237
    %2520 = vmatprep.mubr.f32.mxu0 %v2455
    %2521 = vmatmul.mubr.f32.gmra.mrb[0].mxu0 %v2454
    %v2522 = vpop.f32.mrb[0].mxu0
    %v2523 = vadd.f32 0.0, %v2522
    %v2524 = vpop.f32.mrb[0].mxu0
    %v2525 = vadd.f32 0.0, %v2524
    %2526 = vdwg.mxu0
    %v2527 = vmul.f32 %v2523, %v2319
    %v2528 = vmul.f32 %v2525, %v2320
    %s2529 = sld [smem:[#allocation2 + $0x9]]
    %v2530 = vstv %s2529
    %v2531 = vadd.f32 %v2527, %v2530
    %v2532 = vadd.f32 %v2528, %v2530
    %s2533 = sld [smem:[#allocation2 + $0x5]]
    %v2534 = vstv %s2533
    %v2535 = vmul.f32 %v2531, %v2534
    %v2536 = vmul.f32 %v2532, %v2534
    %v2537 = vmul.f32 %v2535, %v2319
    %v2538 = vmul.f32 %v2536, %v2320
    %2539 = vmatprep.subr.mxu0 %v2053
    %2540 = vmatpush1.msra.mxu0 %v2051
    %2541 = vmatprep.subr.mxu0 %v2059
    %2542 = vmatpush1.msra.mxu0 %v2057
    %2543 = vmatprep.subr.mxu0 %v2065
    %2544 = vmatpush1.msra.mxu0 %v2063
    %2545 = vmatprep.subr.mxu0 %v2071
    %2546 = vmatpush1.msra.mxu0 %v2069
    %2547 = vmatprep.subr.mxu0 %v2077
    %2548 = vmatpush1.msra.mxu0 %v2075
    %2549 = vmatprep.subr.mxu0 %v2083
    %2550 = vmatpush1.msra.mxu0 %v2081
    %2551 = vmatprep.subr.mxu0 %v2089
    %2552 = vmatpush1.msra.mxu0 %v2087
    %2553 = vmatprep.subr.mxu0 %v2095
    %2554 = vmatpush1.msra.mxu0 %v2093
    %2555 = vmatprep.subr.mxu0 %v2101
    %2556 = vmatpush1.msra.mxu0 %v2099
    %2557 = vmatprep.subr.mxu0 %v2107
    %2558 = vmatpush1.msra.mxu0 %v2105
    %2559 = vmatprep.subr.mxu0 %v2113
    %2560 = vmatpush1.msra.mxu0 %v2111
    %2561 = vmatprep.subr.mxu0 %v2119
    %2562 = vmatpush1.msra.mxu0 %v2117
    %2563 = vmatprep.subr.mxu0 %v2125
    %2564 = vmatpush1.msra.mxu0 %v2123
    %2565 = vmatprep.subr.mxu0 %v2131
    %2566 = vmatpush1.msra.mxu0 %v2129
    %2567 = vmatprep.subr.mxu0 %v2137
    %2568 = vmatpush1.msra.mxu0 %v2135
    %2569 = vmatprep.subr.mxu0 %v2143
    %2570 = vmatpush1.msra.mxu0 %v2141
    %2571 = vmatprep.subr.mxu0 %v2149
    %2572 = vmatpush1.msra.mxu0 %v2147
    %2573 = vmatprep.subr.mxu0 %v2155
    %2574 = vmatpush1.msra.mxu0 %v2153
    %2575 = vmatprep.subr.mxu0 %v2161
    %2576 = vmatpush1.msra.mxu0 %v2159
    %2577 = vmatprep.subr.mxu0 %v2167
    %2578 = vmatpush1.msra.mxu0 %v2165
    %2579 = vmatprep.subr.mxu0 %v2173
    %2580 = vmatpush1.msra.mxu0 %v2171
    %2581 = vmatprep.subr.mxu0 %v2179
    %2582 = vmatpush1.msra.mxu0 %v2177
    %2583 = vmatprep.subr.mxu0 %v2185
    %2584 = vmatpush1.msra.mxu0 %v2183
    %2585 = vmatprep.subr.mxu0 %v2191
    %2586 = vmatpush1.msra.mxu0 %v2189
    %2587 = vmatprep.subr.mxu0 %v2197
    %2588 = vmatpush1.msra.mxu0 %v2195
    %2589 = vmatprep.subr.mxu0 %v2203
    %2590 = vmatpush1.msra.mxu0 %v2201
    %2591 = vmatprep.subr.mxu0 %v2209
    %2592 = vmatpush1.msra.mxu0 %v2207
    %2593 = vmatprep.subr.mxu0 %v2215
    %2594 = vmatpush1.msra.mxu0 %v2213
    %2595 = vmatprep.subr.mxu0 %v2221
    %2596 = vmatpush1.msra.mxu0 %v2219
    %2597 = vmatprep.subr.mxu0 %v2227
    %2598 = vmatpush1.msra.mxu0 %v2225
    %2599 = vmatprep.subr.mxu0 %v2233
    %2600 = vmatpush1.msra.mxu0 %v2231
    %2601 = vmatprep.subr.mxu0 %v2239
    %2602 = vmatpush1.msra.mxu0 %v2237
    %2603 = vmatprep.mubr.f32.mxu0 %v2538
    %2604 = vmatmul.mubr.f32.gmra.mrb[0].mxu0 %v2537
    %v2605 = vpop.f32.mrb[0].mxu0
    %v2606 = vadd.f32 0.0, %v2605
    %v2607 = vpop.f32.mrb[0].mxu0
    %v2608 = vadd.f32 0.0, %v2607
    %2609 = vdwg.mxu0
    %v2610 = vmul.f32 %v2606, %v2319
    %v2611 = vmul.f32 %v2608, %v2320
    %s2612 = sld [smem:[#allocation2 + $0xa]]
    %v2613 = vstv %s2612
    %v2614 = vadd.f32 %v2610, %v2613
    %v2615 = vadd.f32 %v2611, %v2613
    %s2616 = sld [smem:[#allocation2 + $0x6]]
    %v2617 = vstv %s2616
    %v2618 = vmul.f32 %v2614, %v2617
    %v2619 = vmul.f32 %v2615, %v2617
    %v2620 = vmul.f32 %v2618, %v2319
    %v2621 = vmul.f32 %v2619, %v2320
    %2622 = vmatprep.subr.mxu0 %v2053
    %2623 = vmatpush1.msra.mxu0 %v2051
    %2624 = vmatprep.subr.mxu0 %v2059
    %2625 = vmatpush1.msra.mxu0 %v2057
    %2626 = vmatprep.subr.mxu0 %v2065
    %2627 = vmatpush1.msra.mxu0 %v2063
    %2628 = vmatprep.subr.mxu0 %v2071
    %2629 = vmatpush1.msra.mxu0 %v2069
    %2630 = vmatprep.subr.mxu0 %v2077
    %2631 = vmatpush1.msra.mxu0 %v2075
    %2632 = vmatprep.subr.mxu0 %v2083
    %2633 = vmatpush1.msra.mxu0 %v2081
    %2634 = vmatprep.subr.mxu0 %v2089
    %2635 = vmatpush1.msra.mxu0 %v2087
    %2636 = vmatprep.subr.mxu0 %v2095
    %2637 = vmatpush1.msra.mxu0 %v2093
    %2638 = vmatprep.subr.mxu0 %v2101
    %2639 = vmatpush1.msra.mxu0 %v2099
    %2640 = vmatprep.subr.mxu0 %v2107
    %2641 = vmatpush1.msra.mxu0 %v2105
    %2642 = vmatprep.subr.mxu0 %v2113
    %2643 = vmatpush1.msra.mxu0 %v2111
    %2644 = vmatprep.subr.mxu0 %v2119
    %2645 = vmatpush1.msra.mxu0 %v2117
    %2646 = vmatprep.subr.mxu0 %v2125
    %2647 = vmatpush1.msra.mxu0 %v2123
    %2648 = vmatprep.subr.mxu0 %v2131
    %2649 = vmatpush1.msra.mxu0 %v2129
    %2650 = vmatprep.subr.mxu0 %v2137
    %2651 = vmatpush1.msra.mxu0 %v2135
    %2652 = vmatprep.subr.mxu0 %v2143
    %2653 = vmatpush1.msra.mxu0 %v2141
    %2654 = vmatprep.subr.mxu0 %v2149
    %2655 = vmatpush1.msra.mxu0 %v2147
    %2656 = vmatprep.subr.mxu0 %v2155
    %2657 = vmatpush1.msra.mxu0 %v2153
    %2658 = vmatprep.subr.mxu0 %v2161
    %2659 = vmatpush1.msra.mxu0 %v2159
    %2660 = vmatprep.subr.mxu0 %v2167
    %2661 = vmatpush1.msra.mxu0 %v2165
    %2662 = vmatprep.subr.mxu0 %v2173
    %2663 = vmatpush1.msra.mxu0 %v2171
    %2664 = vmatprep.subr.mxu0 %v2179
    %2665 = vmatpush1.msra.mxu0 %v2177
    %2666 = vmatprep.subr.mxu0 %v2185
    %2667 = vmatpush1.msra.mxu0 %v2183
    %2668 = vmatprep.subr.mxu0 %v2191
    %2669 = vmatpush1.msra.mxu0 %v2189
    %2670 = vmatprep.subr.mxu0 %v2197
    %2671 = vmatpush1.msra.mxu0 %v2195
    %2672 = vmatprep.subr.mxu0 %v2203
    %2673 = vmatpush1.msra.mxu0 %v2201
    %2674 = vmatprep.subr.mxu0 %v2209
    %2675 = vmatpush1.msra.mxu0 %v2207
    %2676 = vmatprep.subr.mxu0 %v2215
    %2677 = vmatpush1.msra.mxu0 %v2213
    %2678 = vmatprep.subr.mxu0 %v2221
    %2679 = vmatpush1.msra.mxu0 %v2219
    %2680 = vmatprep.subr.mxu0 %v2227
    %2681 = vmatpush1.msra.mxu0 %v2225
    %2682 = vmatprep.subr.mxu0 %v2233
    %2683 = vmatpush1.msra.mxu0 %v2231
    %2684 = vmatprep.subr.mxu0 %v2239
    %2685 = vmatpush1.msra.mxu0 %v2237
    %2686 = vmatprep.mubr.f32.mxu0 %v2621
    %2687 = vmatmul.mubr.f32.gmra.mrb[0].mxu0 %v2620
    %v2688 = vpop.f32.mrb[0].mxu0
    %v2689 = vadd.f32 0.0, %v2688
    %v2690 = vpop.f32.mrb[0].mxu0
    %v2691 = vadd.f32 0.0, %v2690
    %2692 = vdwg.mxu0
    %v2693 = vmul.f32 %v2689, %v2319
    %v2694 = vmul.f32 %v2691, %v2320
    %s2695 = sld [smem:[#allocation2 + $0xb]]
    %v2696 = vstv %s2695
    %v2697 = vadd.f32 %v2693, %v2696
    %v2698 = vadd.f32 %v2694, %v2696
    %s2699 = sld [smem:[#allocation2 + $0x7]]
    %v2700 = vstv %s2699
    %v2701 = vmul.f32 %v2697, %v2700
    %v2702 = vmul.f32 %v2698, %v2700
    %v2703 = vmul.f32 %v2701, %v2319
    %v2704 = vmul.f32 %v2702, %v2320
    %2705 = vmatprep.subr.mxu0 %v2053
    %2706 = vmatpush1.msra.mxu0 %v2051
    %2707 = vmatprep.subr.mxu0 %v2059
    %2708 = vmatpush1.msra.mxu0 %v2057
    %2709 = vmatprep.subr.mxu0 %v2065
    %2710 = vmatpush1.msra.mxu0 %v2063
    %2711 = vmatprep.subr.mxu0 %v2071
    %2712 = vmatpush1.msra.mxu0 %v2069
    %2713 = vmatprep.subr.mxu0 %v2077
    %2714 = vmatpush1.msra.mxu0 %v2075
    %2715 = vmatprep.subr.mxu0 %v2083
    %2716 = vmatpush1.msra.mxu0 %v2081
    %2717 = vmatprep.subr.mxu0 %v2089
    %2718 = vmatpush1.msra.mxu0 %v2087
    %2719 = vmatprep.subr.mxu0 %v2095
    %2720 = vmatpush1.msra.mxu0 %v2093
    %2721 = vmatprep.subr.mxu0 %v2101
    %2722 = vmatpush1.msra.mxu0 %v2099
    %2723 = vmatprep.subr.mxu0 %v2107
    %2724 = vmatpush1.msra.mxu0 %v2105
    %2725 = vmatprep.subr.mxu0 %v2113
    %2726 = vmatpush1.msra.mxu0 %v2111
    %2727 = vmatprep.subr.mxu0 %v2119
    %2728 = vmatpush1.msra.mxu0 %v2117
    %2729 = vmatprep.subr.mxu0 %v2125
    %2730 = vmatpush1.msra.mxu0 %v2123
    %2731 = vmatprep.subr.mxu0 %v2131
    %2732 = vmatpush1.msra.mxu0 %v2129
    %2733 = vmatprep.subr.mxu0 %v2137
    %2734 = vmatpush1.msra.mxu0 %v2135
    %2735 = vmatprep.subr.mxu0 %v2143
    %2736 = vmatpush1.msra.mxu0 %v2141
    %2737 = vmatprep.subr.mxu0 %v2149
    %2738 = vmatpush1.msra.mxu0 %v2147
    %2739 = vmatprep.subr.mxu0 %v2155
    %2740 = vmatpush1.msra.mxu0 %v2153
    %2741 = vmatprep.subr.mxu0 %v2161
    %2742 = vmatpush1.msra.mxu0 %v2159
    %2743 = vmatprep.subr.mxu0 %v2167
    %2744 = vmatpush1.msra.mxu0 %v2165
    %2745 = vmatprep.subr.mxu0 %v2173
    %2746 = vmatpush1.msra.mxu0 %v2171
    %2747 = vmatprep.subr.mxu0 %v2179
    %2748 = vmatpush1.msra.mxu0 %v2177
    %2749 = vmatprep.subr.mxu0 %v2185
    %2750 = vmatpush1.msra.mxu0 %v2183
    %2751 = vmatprep.subr.mxu0 %v2191
    %2752 = vmatpush1.msra.mxu0 %v2189
    %2753 = vmatprep.subr.mxu0 %v2197
    %2754 = vmatpush1.msra.mxu0 %v2195
    %2755 = vmatprep.subr.mxu0 %v2203
    %2756 = vmatpush1.msra.mxu0 %v2201
    %2757 = vmatprep.subr.mxu0 %v2209
    %2758 = vmatpush1.msra.mxu0 %v2207
    %2759 = vmatprep.subr.mxu0 %v2215
    %2760 = vmatpush1.msra.mxu0 %v2213
    %2761 = vmatprep.subr.mxu0 %v2221
    %2762 = vmatpush1.msra.mxu0 %v2219
    %2763 = vmatprep.subr.mxu0 %v2227
    %2764 = vmatpush1.msra.mxu0 %v2225
    %2765 = vmatprep.subr.mxu0 %v2233
    %2766 = vmatpush1.msra.mxu0 %v2231
    %2767 = vmatprep.subr.mxu0 %v2239
    %2768 = vmatpush1.msra.mxu0 %v2237
    %2769 = vmatprep.mubr.f32.mxu0 %v2704
    %2770 = vmatmul.mubr.f32.gmra.mrb[0].mxu0 %v2703
    %v2771 = vpop.f32.mrb[0].mxu0
    %v2772 = vadd.f32 0.0, %v2771
    %v2773 = vpop.f32.mrb[0].mxu0
    %v2774 = vadd.f32 0.0, %v2773
    %2775 = vdwg.mxu0
    %v2776 = vmul.f32 %v2772, %v2319
    %v2777 = vmul.f32 %v2774, %v2320
    %s2778 = sld [smem:[#allocation2 + $0xc]]
    %v2779 = vstv %s2778
    %v2780 = vadd.f32 %v2776, %v2779
    %v2781 = vadd.f32 %v2777, %v2779
    %v2782 = vsel %vm1276, %v2780, -1e+30
    %v2783 = vsel %vm1277, %v2781, -1e+30
    %v2784 = vlaneseq
    %v2785 = vshrl.u32 %v2784, 7
    %v2786 = vsub.s32 0, %v2785
    %v2787 = vrot.slane %v2782, %v2786
    %v2788 = vlaneseq
    %v2789 = vshrl.u32 %v2788, 7
    %v2790 = vsub.s32 0, %v2789
    %v2791 = vrot.slane %v2783, %v2790
    %v2792 = vmul.f32 %v2787, %v1050
    %v2793 = vmul.f32 %v2791, %v1051
    %v2794 = vmul.f32 %v2787, %v1052
    %v2795 = vmul.f32 %v2791, %v1053
    %v2796 = vmul.f32 %v2787, %v1054
    %v2797 = vmul.f32 %v2791, %v1055
    %v2798 = vmul.f32 %v2787, %v1056
    %v2799 = vmul.f32 %v2791, %v1057
    %v2800 = vmul.f32 %v2787, %v1058
    %v2801 = vmul.f32 %v2791, %v1059
    %v2802 = vmul.f32 %v2787, %v1060
    %v2803 = vmul.f32 %v2791, %v1061
    %v2804 = vmul.f32 %v2787, %v1062
    %v2805 = vmul.f32 %v2791, %v1063
    %v2806 = vmul.f32 %v2787, %v1064
    %v2807 = vmul.f32 %v2791, %v1065
    %v2808 = vmul.f32 %v2787, %v1066
    %v2809 = vmul.f32 %v2791, %v1067
    %v2810 = vmul.f32 %v2787, %v1068
    %v2811 = vmul.f32 %v2791, %v1069
    %v2812 = vmul.f32 %v2787, %v1070
    %v2813 = vmul.f32 %v2791, %v1071
    %v2814 = vmul.f32 %v2787, %v1072
    %v2815 = vmul.f32 %v2791, %v1073
    %v2816 = vmul.f32 %v2787, %v1074
    %v2817 = vmul.f32 %v2791, %v1075
    %v2818 = vmul.f32 %v2787, %v1076
    %v2819 = vmul.f32 %v2791, %v1077
    %v2820 = vmul.f32 %v2787, %v1078
    %v2821 = vmul.f32 %v2791, %v1079
    %v2822 = vmul.f32 %v2787, %v1080
    %v2823 = vmul.f32 %v2791, %v1081
    %v2824 = vmul.f32 %v2787, %v1082
    %v2825 = vmul.f32 %v2791, %v1083
    %v2826 = vmul.f32 %v2787, %v1084
    %v2827 = vmul.f32 %v2791, %v1085
    %v2828 = vmul.f32 %v2787, %v1086
    %v2829 = vmul.f32 %v2791, %v1087
    %v2830 = vmul.f32 %v2787, %v1088
    %v2831 = vmul.f32 %v2791, %v1089
    %v2832 = vmul.f32 %v2787, %v1090
    %v2833 = vmul.f32 %v2791, %v1091
    %v2834 = vmul.f32 %v2787, %v1092
    %v2835 = vmul.f32 %v2791, %v1093
    %v2836 = vmul.f32 %v2787, %v1094
    %v2837 = vmul.f32 %v2791, %v1095
    %v2838 = vmul.f32 %v2787, %v1096
    %v2839 = vmul.f32 %v2791, %v1097
    %v2840 = vmul.f32 %v2787, %v1098
    %v2841 = vmul.f32 %v2791, %v1099
    %v2842 = vmul.f32 %v2787, %v1100
    %v2843 = vmul.f32 %v2791, %v1101
    %v2844 = vmul.f32 %v2787, %v1102
    %v2845 = vmul.f32 %v2791, %v1103
    %v2846 = vmul.f32 %v2787, %v1104
    %v2847 = vmul.f32 %v2791, %v1105
    %v2848 = vmul.f32 %v2787, %v1106
    %v2849 = vmul.f32 %v2791, %v1107
    %v2850 = vmul.f32 %v2787, %v1108
    %v2851 = vmul.f32 %v2791, %v1109
    %v2852 = vmul.f32 %v2787, %v1110
    %v2853 = vmul.f32 %v2791, %v1111
    %v2854 = vmul.f32 %v2787, %v1112
    %v2855 = vmul.f32 %v2791, %v1113
    %v2856 = vadd.f32 %v2792, %v2793
    %2857 = vadd.xlane.f32.xlu0 %v2856
    %v2858 = vpop.xlane.xlu0 %2857
    %v2859 = vadd.f32 %v2794, %v2795
    %2860 = vadd.xlane.f32.xlu0 %v2859
    %v2861 = vpop.xlane.xlu0 %2860
    %v2862 = vadd.f32 %v2796, %v2797
    %2863 = vadd.xlane.f32.xlu0 %v2862
    %v2864 = vpop.xlane.xlu0 %2863
    %v2865 = vadd.f32 %v2798, %v2799
    %2866 = vadd.xlane.f32.xlu0 %v2865
    %v2867 = vpop.xlane.xlu0 %2866
    %v2868 = vadd.f32 %v2800, %v2801
    %2869 = vadd.xlane.f32.xlu0 %v2868
    %v2870 = vpop.xlane.xlu0 %2869
    %v2871 = vadd.f32 %v2802, %v2803
    %2872 = vadd.xlane.f32.xlu0 %v2871
    %v2873 = vpop.xlane.xlu0 %2872
    %v2874 = vadd.f32 %v2804, %v2805
    %2875 = vadd.xlane.f32.xlu0 %v2874
    %v2876 = vpop.xlane.xlu0 %2875
    %v2877 = vadd.f32 %v2806, %v2807
    %2878 = vadd.xlane.f32.xlu0 %v2877
    %v2879 = vpop.xlane.xlu0 %2878
    %v2880 = vadd.f32 %v2808, %v2809
    %2881 = vadd.xlane.f32.xlu0 %v2880
    %v2882 = vpop.xlane.xlu0 %2881
    %v2883 = vadd.f32 %v2810, %v2811
    %2884 = vadd.xlane.f32.xlu0 %v2883
    %v2885 = vpop.xlane.xlu0 %2884
    %v2886 = vadd.f32 %v2812, %v2813
    %2887 = vadd.xlane.f32.xlu0 %v2886
    %v2888 = vpop.xlane.xlu0 %2887
    %v2889 = vadd.f32 %v2814, %v2815
    %2890 = vadd.xlane.f32.xlu0 %v2889
    %v2891 = vpop.xlane.xlu0 %2890
    %v2892 = vadd.f32 %v2816, %v2817
    %2893 = vadd.xlane.f32.xlu0 %v2892
    %v2894 = vpop.xlane.xlu0 %2893
    %v2895 = vadd.f32 %v2818, %v2819
    %2896 = vadd.xlane.f32.xlu0 %v2895
    %v2897 = vpop.xlane.xlu0 %2896
    %v2898 = vadd.f32 %v2820, %v2821
    %2899 = vadd.xlane.f32.xlu0 %v2898
    %v2900 = vpop.xlane.xlu0 %2899
    %v2901 = vadd.f32 %v2822, %v2823
    %2902 = vadd.xlane.f32.xlu0 %v2901
    %v2903 = vpop.xlane.xlu0 %2902
    %v2904 = vadd.f32 %v2824, %v2825
    %2905 = vadd.xlane.f32.xlu0 %v2904
    %v2906 = vpop.xlane.xlu0 %2905
    %v2907 = vadd.f32 %v2826, %v2827
    %2908 = vadd.xlane.f32.xlu0 %v2907
    %v2909 = vpop.xlane.xlu0 %2908
    %v2910 = vadd.f32 %v2828, %v2829
    %2911 = vadd.xlane.f32.xlu0 %v2910
    %v2912 = vpop.xlane.xlu0 %2911
    %v2913 = vadd.f32 %v2830, %v2831
    %2914 = vadd.xlane.f32.xlu0 %v2913
    %v2915 = vpop.xlane.xlu0 %2914
    %v2916 = vadd.f32 %v2832, %v2833
    %2917 = vadd.xlane.f32.xlu0 %v2916
    %v2918 = vpop.xlane.xlu0 %2917
    %v2919 = vadd.f32 %v2834, %v2835
    %2920 = vadd.xlane.f32.xlu0 %v2919
    %v2921 = vpop.xlane.xlu0 %2920
    %v2922 = vadd.f32 %v2836, %v2837
    %2923 = vadd.xlane.f32.xlu0 %v2922
    %v2924 = vpop.xlane.xlu0 %2923
    %v2925 = vadd.f32 %v2838, %v2839
    %2926 = vadd.xlane.f32.xlu0 %v2925
    %v2927 = vpop.xlane.xlu0 %2926
    %v2928 = vadd.f32 %v2840, %v2841
    %2929 = vadd.xlane.f32.xlu0 %v2928
    %v2930 = vpop.xlane.xlu0 %2929
    %v2931 = vadd.f32 %v2842, %v2843
    %2932 = vadd.xlane.f32.xlu0 %v2931
    %v2933 = vpop.xlane.xlu0 %2932
    %v2934 = vadd.f32 %v2844, %v2845
    %2935 = vadd.xlane.f32.xlu0 %v2934
    %v2936 = vpop.xlane.xlu0 %2935
    %v2937 = vadd.f32 %v2846, %v2847
    %2938 = vadd.xlane.f32.xlu0 %v2937
    %v2939 = vpop.xlane.xlu0 %2938
    %v2940 = vadd.f32 %v2848, %v2849
    %2941 = vadd.xlane.f32.xlu0 %v2940
    %v2942 = vpop.xlane.xlu0 %2941
    %v2943 = vadd.f32 %v2850, %v2851
    %2944 = vadd.xlane.f32.xlu0 %v2943
    %v2945 = vpop.xlane.xlu0 %2944
    %v2946 = vadd.f32 %v2852, %v2853
    %2947 = vadd.xlane.f32.xlu0 %v2946
    %v2948 = vpop.xlane.xlu0 %2947
    %v2949 = vadd.f32 %v2854, %v2855
    %2950 = vadd.xlane.f32.xlu0 %v2949
    %v2951 = vpop.xlane.xlu0 %2950
    %vm2952 = vcmp.gt.f32.partialorder %v2787, %v2858
    %vm2953 = vcmp.gt.f32.partialorder %v2791, %v2858
    %vm2954 = vcmp.gt.f32.partialorder %v2787, %v2861
    %vm2955 = vcmp.gt.f32.partialorder %v2791, %v2861
    %vm2956 = vcmp.gt.f32.partialorder %v2787, %v2864
    %vm2957 = vcmp.gt.f32.partialorder %v2791, %v2864
    %vm2958 = vcmp.gt.f32.partialorder %v2787, %v2867
    %vm2959 = vcmp.gt.f32.partialorder %v2791, %v2867
    %vm2960 = vcmp.gt.f32.partialorder %v2787, %v2870
    %vm2961 = vcmp.gt.f32.partialorder %v2791, %v2870
    %vm2962 = vcmp.gt.f32.partialorder %v2787, %v2873
    %vm2963 = vcmp.gt.f32.partialorder %v2791, %v2873
    %vm2964 = vcmp.gt.f32.partialorder %v2787, %v2876
    %vm2965 = vcmp.gt.f32.partialorder %v2791, %v2876
    %vm2966 = vcmp.gt.f32.partialorder %v2787, %v2879
    %vm2967 = vcmp.gt.f32.partialorder %v2791, %v2879
    %vm2968 = vcmp.gt.f32.partialorder %v2787, %v2882
    %vm2969 = vcmp.gt.f32.partialorder %v2791, %v2882
    %vm2970 = vcmp.gt.f32.partialorder %v2787, %v2885
    %vm2971 = vcmp.gt.f32.partialorder %v2791, %v2885
    %vm2972 = vcmp.gt.f32.partialorder %v2787, %v2888
    %vm2973 = vcmp.gt.f32.partialorder %v2791, %v2888
    %vm2974 = vcmp.gt.f32.partialorder %v2787, %v2891
    %vm2975 = vcmp.gt.f32.partialorder %v2791, %v2891
    %vm2976 = vcmp.gt.f32.partialorder %v2787, %v2894
    %vm2977 = vcmp.gt.f32.partialorder %v2791, %v2894
    %vm2978 = vcmp.gt.f32.partialorder %v2787, %v2897
    %vm2979 = vcmp.gt.f32.partialorder %v2791, %v2897
    %vm2980 = vcmp.gt.f32.partialorder %v2787, %v2900
    %vm2981 = vcmp.gt.f32.partialorder %v2791, %v2900
    %vm2982 = vcmp.gt.f32.partialorder %v2787, %v2903
    %vm2983 = vcmp.gt.f32.partialorder %v2791, %v2903
    %vm2984 = vcmp.gt.f32.partialorder %v2787, %v2906
    %vm2985 = vcmp.gt.f32.partialorder %v2791, %v2906
    %vm2986 = vcmp.gt.f32.partialorder %v2787, %v2909
    %vm2987 = vcmp.gt.f32.partialorder %v2791, %v2909
    %vm2988 = vcmp.gt.f32.partialorder %v2787, %v2912
    %vm2989 = vcmp.gt.f32.partialorder %v2791, %v2912
    %vm2990 = vcmp.gt.f32.partialorder %v2787, %v2915
    %vm2991 = vcmp.gt.f32.partialorder %v2791, %v2915
    %vm2992 = vcmp.gt.f32.partialorder %v2787, %v2918
    %vm2993 = vcmp.gt.f32.partialorder %v2791, %v2918
    %vm2994 = vcmp.gt.f32.partialorder %v2787, %v2921
    %vm2995 = vcmp.gt.f32.partialorder %v2791, %v2921
    %vm2996 = vcmp.gt.f32.partialorder %v2787, %v2924
    %vm2997 = vcmp.gt.f32.partialorder %v2791, %v2924
    %vm2998 = vcmp.gt.f32.partialorder %v2787, %v2927
    %vm2999 = vcmp.gt.f32.partialorder %v2791, %v2927
    %vm3000 = vcmp.gt.f32.partialorder %v2787, %v2930
    %vm3001 = vcmp.gt.f32.partialorder %v2791, %v2930
    %vm3002 = vcmp.gt.f32.partialorder %v2787, %v2933
    %vm3003 = vcmp.gt.f32.partialorder %v2791, %v2933
    %vm3004 = vcmp.gt.f32.partialorder %v2787, %v2936
    %vm3005 = vcmp.gt.f32.partialorder %v2791, %v2936
    %vm3006 = vcmp.gt.f32.partialorder %v2787, %v2939
    %vm3007 = vcmp.gt.f32.partialorder %v2791, %v2939
    %vm3008 = vcmp.gt.f32.partialorder %v2787, %v2942
    %vm3009 = vcmp.gt.f32.partialorder %v2791, %v2942
    %vm3010 = vcmp.gt.f32.partialorder %v2787, %v2945
    %vm3011 = vcmp.gt.f32.partialorder %v2791, %v2945
    %vm3012 = vcmp.gt.f32.partialorder %v2787, %v2948
    %vm3013 = vcmp.gt.f32.partialorder %v2791, %v2948
    %vm3014 = vcmp.gt.f32.partialorder %v2787, %v2951
    %vm3015 = vcmp.gt.f32.partialorder %v2791, %v2951
    %vm3016 = vcmp.eq.f32.partialorder %v2787, %v2858
    %vm3017 = vcmp.eq.f32.partialorder %v2791, %v2858
    %vm3018 = vcmp.eq.f32.partialorder %v2787, %v2861
    %vm3019 = vcmp.eq.f32.partialorder %v2791, %v2861
    %vm3020 = vcmp.eq.f32.partialorder %v2787, %v2864
    %vm3021 = vcmp.eq.f32.partialorder %v2791, %v2864
    %vm3022 = vcmp.eq.f32.partialorder %v2787, %v2867
    %vm3023 = vcmp.eq.f32.partialorder %v2791, %v2867
    %vm3024 = vcmp.eq.f32.partialorder %v2787, %v2870
    %vm3025 = vcmp.eq.f32.partialorder %v2791, %v2870
    %vm3026 = vcmp.eq.f32.partialorder %v2787, %v2873
    %vm3027 = vcmp.eq.f32.partialorder %v2791, %v2873
    %vm3028 = vcmp.eq.f32.partialorder %v2787, %v2876
    %vm3029 = vcmp.eq.f32.partialorder %v2791, %v2876
    %vm3030 = vcmp.eq.f32.partialorder %v2787, %v2879
    %vm3031 = vcmp.eq.f32.partialorder %v2791, %v2879
    %vm3032 = vcmp.eq.f32.partialorder %v2787, %v2882
    %vm3033 = vcmp.eq.f32.partialorder %v2791, %v2882
    %vm3034 = vcmp.eq.f32.partialorder %v2787, %v2885
    %vm3035 = vcmp.eq.f32.partialorder %v2791, %v2885
    %vm3036 = vcmp.eq.f32.partialorder %v2787, %v2888
    %vm3037 = vcmp.eq.f32.partialorder %v2791, %v2888
    %vm3038 = vcmp.eq.f32.partialorder %v2787, %v2891
    %vm3039 = vcmp.eq.f32.partialorder %v2791, %v2891
    %vm3040 = vcmp.eq.f32.partialorder %v2787, %v2894
    %vm3041 = vcmp.eq.f32.partialorder %v2791, %v2894
    %vm3042 = vcmp.eq.f32.partialorder %v2787, %v2897
    %vm3043 = vcmp.eq.f32.partialorder %v2791, %v2897
    %vm3044 = vcmp.eq.f32.partialorder %v2787, %v2900
    %vm3045 = vcmp.eq.f32.partialorder %v2791, %v2900
    %vm3046 = vcmp.eq.f32.partialorder %v2787, %v2903
    %vm3047 = vcmp.eq.f32.partialorder %v2791, %v2903
    %vm3048 = vcmp.eq.f32.partialorder %v2787, %v2906
    %vm3049 = vcmp.eq.f32.partialorder %v2791, %v2906
    %vm3050 = vcmp.eq.f32.partialorder %v2787, %v2909
    %vm3051 = vcmp.eq.f32.partialorder %v2791, %v2909
    %vm3052 = vcmp.eq.f32.partialorder %v2787, %v2912
    %vm3053 = vcmp.eq.f32.partialorder %v2791, %v2912
    %vm3054 = vcmp.eq.f32.partialorder %v2787, %v2915
    %vm3055 = vcmp.eq.f32.partialorder %v2791, %v2915
    %vm3056 = vcmp.eq.f32.partialorder %v2787, %v2918
    %vm3057 = vcmp.eq.f32.partialorder %v2791, %v2918
    %vm3058 = vcmp.eq.f32.partialorder %v2787, %v2921
    %vm3059 = vcmp.eq.f32.partialorder %v2791, %v2921
    %vm3060 = vcmp.eq.f32.partialorder %v2787, %v2924
    %vm3061 = vcmp.eq.f32.partialorder %v2791, %v2924
    %vm3062 = vcmp.eq.f32.partialorder %v2787, %v2927
    %vm3063 = vcmp.eq.f32.partialorder %v2791, %v2927
    %vm3064 = vcmp.eq.f32.partialorder %v2787, %v2930
    %vm3065 = vcmp.eq.f32.partialorder %v2791, %v2930
    %vm3066 = vcmp.eq.f32.partialorder %v2787, %v2933
    %vm3067 = vcmp.eq.f32.partialorder %v2791, %v2933
    %vm3068 = vcmp.eq.f32.partialorder %v2787, %v2936
    %vm3069 = vcmp.eq.f32.partialorder %v2791, %v2936
    %vm3070 = vcmp.eq.f32.partialorder %v2787, %v2939
    %vm3071 = vcmp.eq.f32.partialorder %v2791, %v2939
    %vm3072 = vcmp.eq.f32.partialorder %v2787, %v2942
    %vm3073 = vcmp.eq.f32.partialorder %v2791, %v2942
    %vm3074 = vcmp.eq.f32.partialorder %v2787, %v2945
    %vm3075 = vcmp.eq.f32.partialorder %v2791, %v2945
    %vm3076 = vcmp.eq.f32.partialorder %v2787, %v2948
    %vm3077 = vcmp.eq.f32.partialorder %v2791, %v2948
    %vm3078 = vcmp.eq.f32.partialorder %v2787, %v2951
    %vm3079 = vcmp.eq.f32.partialorder %v2791, %v2951
    %vm3080 = vcmp.lt.s32.totalorder %v472, %v38
    %vm3081 = vcmp.lt.s32.totalorder %v473, %v38
    %vm3082 = vcmp.lt.s32.totalorder %v472, %v39
    %vm3083 = vcmp.lt.s32.totalorder %v473, %v39
    %vm3084 = vcmp.lt.s32.totalorder %v472, %v40
    %vm3085 = vcmp.lt.s32.totalorder %v473, %v40
    %vm3086 = vcmp.lt.s32.totalorder %v472, %v41
    %vm3087 = vcmp.lt.s32.totalorder %v473, %v41
    %vm3088 = vcmp.lt.s32.totalorder %v472, %v42
    %vm3089 = vcmp.lt.s32.totalorder %v473, %v42
    %vm3090 = vcmp.lt.s32.totalorder %v472, %v43
    %vm3091 = vcmp.lt.s32.totalorder %v473, %v43
    %vm3092 = vcmp.lt.s32.totalorder %v472, %v44
    %vm3093 = vcmp.lt.s32.totalorder %v473, %v44
    %vm3094 = vcmp.lt.s32.totalorder %v472, %v45
    %vm3095 = vcmp.lt.s32.totalorder %v473, %v45
    %vm3096 = vcmp.lt.s32.totalorder %v472, %v46
    %vm3097 = vcmp.lt.s32.totalorder %v473, %v46
    %vm3098 = vcmp.lt.s32.totalorder %v472, %v47
    %vm3099 = vcmp.lt.s32.totalorder %v473, %v47
    %vm3100 = vcmp.lt.s32.totalorder %v472, %v48
    %vm3101 = vcmp.lt.s32.totalorder %v473, %v48
    %vm3102 = vcmp.lt.s32.totalorder %v472, %v49
    %vm3103 = vcmp.lt.s32.totalorder %v473, %v49
    %vm3104 = vcmp.lt.s32.totalorder %v472, %v50
    %vm3105 = vcmp.lt.s32.totalorder %v473, %v50
    %vm3106 = vcmp.lt.s32.totalorder %v472, %v51
    %vm3107 = vcmp.lt.s32.totalorder %v473, %v51
    %vm3108 = vcmp.lt.s32.totalorder %v472, %v52
    %vm3109 = vcmp.lt.s32.totalorder %v473, %v52
    %vm3110 = vcmp.lt.s32.totalorder %v472, %v53
    %vm3111 = vcmp.lt.s32.totalorder %v473, %v53
    %vm3112 = vcmp.lt.s32.totalorder %v472, %v54
    %vm3113 = vcmp.lt.s32.totalorder %v473, %v54
    %vm3114 = vcmp.lt.s32.totalorder %v472, %v55
    %vm3115 = vcmp.lt.s32.totalorder %v473, %v55
    %vm3116 = vcmp.lt.s32.totalorder %v472, %v56
    %vm3117 = vcmp.lt.s32.totalorder %v473, %v56
    %vm3118 = vcmp.lt.s32.totalorder %v472, %v57
    %vm3119 = vcmp.lt.s32.totalorder %v473, %v57
    %vm3120 = vcmp.lt.s32.totalorder %v472, %v58
    %vm3121 = vcmp.lt.s32.totalorder %v473, %v58
    %vm3122 = vcmp.lt.s32.totalorder %v472, %v59
    %vm3123 = vcmp.lt.s32.totalorder %v473, %v59
    %vm3124 = vcmp.lt.s32.totalorder %v472, %v60
    %vm3125 = vcmp.lt.s32.totalorder %v473, %v60
    %vm3126 = vcmp.lt.s32.totalorder %v472, %v61
    %vm3127 = vcmp.lt.s32.totalorder %v473, %v61
    %vm3128 = vcmp.lt.s32.totalorder %v472, %v62
    %vm3129 = vcmp.lt.s32.totalorder %v473, %v62
    %vm3130 = vcmp.lt.s32.totalorder %v472, %v63
    %vm3131 = vcmp.lt.s32.totalorder %v473, %v63
    %vm3132 = vcmp.lt.s32.totalorder %v472, %v64
    %vm3133 = vcmp.lt.s32.totalorder %v473, %v64
    %vm3134 = vcmp.lt.s32.totalorder %v472, %v65
    %vm3135 = vcmp.lt.s32.totalorder %v473, %v65
    %vm3136 = vcmp.lt.s32.totalorder %v472, %v66
    %vm3137 = vcmp.lt.s32.totalorder %v473, %v66
    %vm3138 = vcmp.lt.s32.totalorder %v472, %v67
    %vm3139 = vcmp.lt.s32.totalorder %v473, %v67
    %vm3140 = vcmp.lt.s32.totalorder %v472, %v68
    %vm3141 = vcmp.lt.s32.totalorder %v473, %v68
    %vm3142 = vcmp.lt.s32.totalorder %v472, %v69
    %vm3143 = vcmp.lt.s32.totalorder %v473, %v69
    %vm3144 = vmand %vm3016, %vm3080
    %vm3145 = vmand %vm3017, %vm3081
    %vm3146 = vmand %vm3018, %vm3082
    %vm3147 = vmand %vm3019, %vm3083
    %vm3148 = vmand %vm3020, %vm3084
    %vm3149 = vmand %vm3021, %vm3085
    %vm3150 = vmand %vm3022, %vm3086
    %vm3151 = vmand %vm3023, %vm3087
    %vm3152 = vmand %vm3024, %vm3088
    %vm3153 = vmand %vm3025, %vm3089
    %vm3154 = vmand %vm3026, %vm3090
    %vm3155 = vmand %vm3027, %vm3091
    %vm3156 = vmand %vm3028, %vm3092
    %vm3157 = vmand %vm3029, %vm3093
    %vm3158 = vmand %vm3030, %vm3094
    %vm3159 = vmand %vm3031, %vm3095
    %vm3160 = vmand %vm3032, %vm3096
    %vm3161 = vmand %vm3033, %vm3097
    %vm3162 = vmand %vm3034, %vm3098
    %vm3163 = vmand %vm3035, %vm3099
    %vm3164 = vmand %vm3036, %vm3100
    %vm3165 = vmand %vm3037, %vm3101
    %vm3166 = vmand %vm3038, %vm3102
    %vm3167 = vmand %vm3039, %vm3103
    %vm3168 = vmand %vm3040, %vm3104
    %vm3169 = vmand %vm3041, %vm3105
    %vm3170 = vmand %vm3042, %vm3106
    %vm3171 = vmand %vm3043, %vm3107
    %vm3172 = vmand %vm3044, %vm3108
    %vm3173 = vmand %vm3045, %vm3109
    %vm3174 = vmand %vm3046, %vm3110
    %vm3175 = vmand %vm3047, %vm3111
    %vm3176 = vmand %vm3048, %vm3112
    %vm3177 = vmand %vm3049, %vm3113
    %vm3178 = vmand %vm3050, %vm3114
    %vm3179 = vmand %vm3051, %vm3115
    %vm3180 = vmand %vm3052, %vm3116
    %vm3181 = vmand %vm3053, %vm3117
    %vm3182 = vmand %vm3054, %vm3118
    %vm3183 = vmand %vm3055, %vm3119
    %vm3184 = vmand %vm3056, %vm3120
    %vm3185 = vmand %vm3057, %vm3121
    %vm3186 = vmand %vm3058, %vm3122
    %vm3187 = vmand %vm3059, %vm3123
    %vm3188 = vmand %vm3060, %vm3124
    %vm3189 = vmand %vm3061, %vm3125
    %vm3190 = vmand %vm3062, %vm3126
    %vm3191 = vmand %vm3063, %vm3127
    %vm3192 = vmand %vm3064, %vm3128
    %vm3193 = vmand %vm3065, %vm3129
    %vm3194 = vmand %vm3066, %vm3130
    %vm3195 = vmand %vm3067, %vm3131
    %vm3196 = vmand %vm3068, %vm3132
    %vm3197 = vmand %vm3069, %vm3133
    %vm3198 = vmand %vm3070, %vm3134
    %vm3199 = vmand %vm3071, %vm3135
    %vm3200 = vmand %vm3072, %vm3136
    %vm3201 = vmand %vm3073, %vm3137
    %vm3202 = vmand %vm3074, %vm3138
    %vm3203 = vmand %vm3075, %vm3139
    %vm3204 = vmand %vm3076, %vm3140
    %vm3205 = vmand %vm3077, %vm3141
    %vm3206 = vmand %vm3078, %vm3142
    %vm3207 = vmand %vm3079, %vm3143
    %vm3208 = vmor %vm2952, %vm3144
    %vm3209 = vmor %vm2953, %vm3145
    %vm3210 = vmor %vm2954, %vm3146
    %vm3211 = vmor %vm2955, %vm3147
    %vm3212 = vmor %vm2956, %vm3148
    %vm3213 = vmor %vm2957, %vm3149
    %vm3214 = vmor %vm2958, %vm3150
    %vm3215 = vmor %vm2959, %vm3151
    %vm3216 = vmor %vm2960, %vm3152
    %vm3217 = vmor %vm2961, %vm3153
    %vm3218 = vmor %vm2962, %vm3154
    %vm3219 = vmor %vm2963, %vm3155
    %vm3220 = vmor %vm2964, %vm3156
    %vm3221 = vmor %vm2965, %vm3157
    %vm3222 = vmor %vm2966, %vm3158
    %vm3223 = vmor %vm2967, %vm3159
    %vm3224 = vmor %vm2968, %vm3160
    %vm3225 = vmor %vm2969, %vm3161
    %vm3226 = vmor %vm2970, %vm3162
    %vm3227 = vmor %vm2971, %vm3163
    %vm3228 = vmor %vm2972, %vm3164
    %vm3229 = vmor %vm2973, %vm3165
    %vm3230 = vmor %vm2974, %vm3166
    %vm3231 = vmor %vm2975, %vm3167
    %vm3232 = vmor %vm2976, %vm3168
    %vm3233 = vmor %vm2977, %vm3169
    %vm3234 = vmor %vm2978, %vm3170
    %vm3235 = vmor %vm2979, %vm3171
    %vm3236 = vmor %vm2980, %vm3172
    %vm3237 = vmor %vm2981, %vm3173
    %vm3238 = vmor %vm2982, %vm3174
    %vm3239 = vmor %vm2983, %vm3175
    %vm3240 = vmor %vm2984, %vm3176
    %vm3241 = vmor %vm2985, %vm3177
    %vm3242 = vmor %vm2986, %vm3178
    %vm3243 = vmor %vm2987, %vm3179
    %vm3244 = vmor %vm2988, %vm3180
    %vm3245 = vmor %vm2989, %vm3181
    %vm3246 = vmor %vm2990, %vm3182
    %vm3247 = vmor %vm2991, %vm3183
    %vm3248 = vmor %vm2992, %vm3184
    %vm3249 = vmor %vm2993, %vm3185
    %vm3250 = vmor %vm2994, %vm3186
    %vm3251 = vmor %vm2995, %vm3187
    %vm3252 = vmor %vm2996, %vm3188
    %vm3253 = vmor %vm2997, %vm3189
    %vm3254 = vmor %vm2998, %vm3190
    %vm3255 = vmor %vm2999, %vm3191
    %vm3256 = vmor %vm3000, %vm3192
    %vm3257 = vmor %vm3001, %vm3193
    %vm3258 = vmor %vm3002, %vm3194
    %vm3259 = vmor %vm3003, %vm3195
    %vm3260 = vmor %vm3004, %vm3196
    %vm3261 = vmor %vm3005, %vm3197
    %vm3262 = vmor %vm3006, %vm3198
    %vm3263 = vmor %vm3007, %vm3199
    %vm3264 = vmor %vm3008, %vm3200
    %vm3265 = vmor %vm3009, %vm3201
    %vm3266 = vmor %vm3010, %vm3202
    %vm3267 = vmor %vm3011, %vm3203
    %vm3268 = vmor %vm3012, %vm3204
    %vm3269 = vmor %vm3013, %vm3205
    %vm3270 = vmor %vm3014, %vm3206
    %vm3271 = vmor %vm3015, %vm3207
    %v3272 = vsel %vm3208, 1, 0
    %v3273 = vsel %vm3209, 1, 0
    %v3274 = vsel %vm3210, 1, 0
    %v3275 = vsel %vm3211, 1, 0
    %v3276 = vsel %vm3212, 1, 0
    %v3277 = vsel %vm3213, 1, 0
    %v3278 = vsel %vm3214, 1, 0
    %v3279 = vsel %vm3215, 1, 0
    %v3280 = vsel %vm3216, 1, 0
    %v3281 = vsel %vm3217, 1, 0
    %v3282 = vsel %vm3218, 1, 0
    %v3283 = vsel %vm3219, 1, 0
    %v3284 = vsel %vm3220, 1, 0
    %v3285 = vsel %vm3221, 1, 0
    %v3286 = vsel %vm3222, 1, 0
    %v3287 = vsel %vm3223, 1, 0
    %v3288 = vsel %vm3224, 1, 0
    %v3289 = vsel %vm3225, 1, 0
    %v3290 = vsel %vm3226, 1, 0
    %v3291 = vsel %vm3227, 1, 0
    %v3292 = vsel %vm3228, 1, 0
    %v3293 = vsel %vm3229, 1, 0
    %v3294 = vsel %vm3230, 1, 0
    %v3295 = vsel %vm3231, 1, 0
    %v3296 = vsel %vm3232, 1, 0
    %v3297 = vsel %vm3233, 1, 0
    %v3298 = vsel %vm3234, 1, 0
    %v3299 = vsel %vm3235, 1, 0
    %v3300 = vsel %vm3236, 1, 0
    %v3301 = vsel %vm3237, 1, 0
    %v3302 = vsel %vm3238, 1, 0
    %v3303 = vsel %vm3239, 1, 0
    %v3304 = vsel %vm3240, 1, 0
    %v3305 = vsel %vm3241, 1, 0
    %v3306 = vsel %vm3242, 1, 0
    %v3307 = vsel %vm3243, 1, 0
    %v3308 = vsel %vm3244, 1, 0
    %v3309 = vsel %vm3245, 1, 0
    %v3310 = vsel %vm3246, 1, 0
    %v3311 = vsel %vm3247, 1, 0
    %v3312 = vsel %vm3248, 1, 0
    %v3313 = vsel %vm3249, 1, 0
    %v3314 = vsel %vm3250, 1, 0
    %v3315 = vsel %vm3251, 1, 0
    %v3316 = vsel %vm3252, 1, 0
    %v3317 = vsel %vm3253, 1, 0
    %v3318 = vsel %vm3254, 1, 0
    %v3319 = vsel %vm3255, 1, 0
    %v3320 = vsel %vm3256, 1, 0
    %v3321 = vsel %vm3257, 1, 0
    %v3322 = vsel %vm3258, 1, 0
    %v3323 = vsel %vm3259, 1, 0
    %v3324 = vsel %vm3260, 1, 0
    %v3325 = vsel %vm3261, 1, 0
    %v3326 = vsel %vm3262, 1, 0
    %v3327 = vsel %vm3263, 1, 0
    %v3328 = vsel %vm3264, 1, 0
    %v3329 = vsel %vm3265, 1, 0
    %v3330 = vsel %vm3266, 1, 0
    %v3331 = vsel %vm3267, 1, 0
    %v3332 = vsel %vm3268, 1, 0
    %v3333 = vsel %vm3269, 1, 0
    %v3334 = vsel %vm3270, 1, 0
    %v3335 = vsel %vm3271, 1, 0
    %v3336 = vcvt.s32.f32 %v3272
    %v3337 = vcvt.s32.f32 %v3273
    %v3338 = vcvt.s32.f32 %v3274
    %v3339 = vcvt.s32.f32 %v3275
    %v3340 = vcvt.s32.f32 %v3276
    %v3341 = vcvt.s32.f32 %v3277
    %v3342 = vcvt.s32.f32 %v3278
    %v3343 = vcvt.s32.f32 %v3279
    %v3344 = vcvt.s32.f32 %v3280
    %v3345 = vcvt.s32.f32 %v3281
    %v3346 = vcvt.s32.f32 %v3282
    %v3347 = vcvt.s32.f32 %v3283
    %v3348 = vcvt.s32.f32 %v3284
    %v3349 = vcvt.s32.f32 %v3285
    %v3350 = vcvt.s32.f32 %v3286
    %v3351 = vcvt.s32.f32 %v3287
    %v3352 = vcvt.s32.f32 %v3288
    %v3353 = vcvt.s32.f32 %v3289
    %v3354 = vcvt.s32.f32 %v3290
    %v3355 = vcvt.s32.f32 %v3291
    %v3356 = vcvt.s32.f32 %v3292
    %v3357 = vcvt.s32.f32 %v3293
    %v3358 = vcvt.s32.f32 %v3294
    %v3359 = vcvt.s32.f32 %v3295
    %v3360 = vcvt.s32.f32 %v3296
    %v3361 = vcvt.s32.f32 %v3297
    %v3362 = vcvt.s32.f32 %v3298
    %v3363 = vcvt.s32.f32 %v3299
    %v3364 = vcvt.s32.f32 %v3300
    %v3365 = vcvt.s32.f32 %v3301
    %v3366 = vcvt.s32.f32 %v3302
    %v3367 = vcvt.s32.f32 %v3303
    %v3368 = vcvt.s32.f32 %v3304
    %v3369 = vcvt.s32.f32 %v3305
    %v3370 = vcvt.s32.f32 %v3306
    %v3371 = vcvt.s32.f32 %v3307
    %v3372 = vcvt.s32.f32 %v3308
    %v3373 = vcvt.s32.f32 %v3309
    %v3374 = vcvt.s32.f32 %v3310
    %v3375 = vcvt.s32.f32 %v3311
    %v3376 = vcvt.s32.f32 %v3312
    %v3377 = vcvt.s32.f32 %v3313
    %v3378 = vcvt.s32.f32 %v3314
    %v3379 = vcvt.s32.f32 %v3315
    %v3380 = vcvt.s32.f32 %v3316
    %v3381 = vcvt.s32.f32 %v3317
    %v3382 = vcvt.s32.f32 %v3318
    %v3383 = vcvt.s32.f32 %v3319
    %v3384 = vcvt.s32.f32 %v3320
    %v3385 = vcvt.s32.f32 %v3321
    %v3386 = vcvt.s32.f32 %v3322
    %v3387 = vcvt.s32.f32 %v3323
    %v3388 = vcvt.s32.f32 %v3324
    %v3389 = vcvt.s32.f32 %v3325
    %v3390 = vcvt.s32.f32 %v3326
    %v3391 = vcvt.s32.f32 %v3327
    %v3392 = vcvt.s32.f32 %v3328
    %v3393 = vcvt.s32.f32 %v3329
    %v3394 = vcvt.s32.f32 %v3330
    %v3395 = vcvt.s32.f32 %v3331
    %v3396 = vcvt.s32.f32 %v3332
    %v3397 = vcvt.s32.f32 %v3333
    %v3398 = vcvt.s32.f32 %v3334
    %v3399 = vcvt.s32.f32 %v3335
    %v3400 = vadd.f32 %v3336, %v3337
    %3401 = vadd.xlane.f32.xlu0 %v3400
    %v3402 = vpop.xlane.xlu0 %3401
    %v3403 = vadd.f32 %v3338, %v3339
    %3404 = vadd.xlane.f32.xlu0 %v3403
    %v3405 = vpop.xlane.xlu0 %3404
    %v3406 = vadd.f32 %v3340, %v3341
    %3407 = vadd.xlane.f32.xlu0 %v3406
    %v3408 = vpop.xlane.xlu0 %3407
    %v3409 = vadd.f32 %v3342, %v3343
    %3410 = vadd.xlane.f32.xlu0 %v3409
    %v3411 = vpop.xlane.xlu0 %3410
    %v3412 = vadd.f32 %v3344, %v3345
    %3413 = vadd.xlane.f32.xlu0 %v3412
    %v3414 = vpop.xlane.xlu0 %3413
    %v3415 = vadd.f32 %v3346, %v3347
    %3416 = vadd.xlane.f32.xlu0 %v3415
    %v3417 = vpop.xlane.xlu0 %3416
    %v3418 = vadd.f32 %v3348, %v3349
    %3419 = vadd.xlane.f32.xlu0 %v3418
    %v3420 = vpop.xlane.xlu0 %3419
    %v3421 = vadd.f32 %v3350, %v3351
    %3422 = vadd.xlane.f32.xlu0 %v3421
    %v3423 = vpop.xlane.xlu0 %3422
    %v3424 = vadd.f32 %v3352, %v3353
    %3425 = vadd.xlane.f32.xlu0 %v3424
    %v3426 = vpop.xlane.xlu0 %3425
    %v3427 = vadd.f32 %v3354, %v3355
    %3428 = vadd.xlane.f32.xlu0 %v3427
    %v3429 = vpop.xlane.xlu0 %3428
    %v3430 = vadd.f32 %v3356, %v3357
    %3431 = vadd.xlane.f32.xlu0 %v3430
    %v3432 = vpop.xlane.xlu0 %3431
    %v3433 = vadd.f32 %v3358, %v3359
    %3434 = vadd.xlane.f32.xlu0 %v3433
    %v3435 = vpop.xlane.xlu0 %3434
    %v3436 = vadd.f32 %v3360, %v3361
    %3437 = vadd.xlane.f32.xlu0 %v3436
    %v3438 = vpop.xlane.xlu0 %3437
    %v3439 = vadd.f32 %v3362, %v3363
    %3440 = vadd.xlane.f32.xlu0 %v3439
    %v3441 = vpop.xlane.xlu0 %3440
    %v3442 = vadd.f32 %v3364, %v3365
    %3443 = vadd.xlane.f32.xlu0 %v3442
    %v3444 = vpop.xlane.xlu0 %3443
    %v3445 = vadd.f32 %v3366, %v3367
    %3446 = vadd.xlane.f32.xlu0 %v3445
    %v3447 = vpop.xlane.xlu0 %3446
    %v3448 = vadd.f32 %v3368, %v3369
    %3449 = vadd.xlane.f32.xlu0 %v3448
    %v3450 = vpop.xlane.xlu0 %3449
    %v3451 = vadd.f32 %v3370, %v3371
    %3452 = vadd.xlane.f32.xlu0 %v3451
    %v3453 = vpop.xlane.xlu0 %3452
    %v3454 = vadd.f32 %v3372, %v3373
    %3455 = vadd.xlane.f32.xlu0 %v3454
    %v3456 = vpop.xlane.xlu0 %3455
    %v3457 = vadd.f32 %v3374, %v3375
    %3458 = vadd.xlane.f32.xlu0 %v3457
    %v3459 = vpop.xlane.xlu0 %3458
    %v3460 = vadd.f32 %v3376, %v3377
    %3461 = vadd.xlane.f32.xlu0 %v3460
    %v3462 = vpop.xlane.xlu0 %3461
    %v3463 = vadd.f32 %v3378, %v3379
    %3464 = vadd.xlane.f32.xlu0 %v3463
    %v3465 = vpop.xlane.xlu0 %3464
    %v3466 = vadd.f32 %v3380, %v3381
    %3467 = vadd.xlane.f32.xlu0 %v3466
    %v3468 = vpop.xlane.xlu0 %3467
    %v3469 = vadd.f32 %v3382, %v3383
    %3470 = vadd.xlane.f32.xlu0 %v3469
    %v3471 = vpop.xlane.xlu0 %3470
    %v3472 = vadd.f32 %v3384, %v3385
    %3473 = vadd.xlane.f32.xlu0 %v3472
    %v3474 = vpop.xlane.xlu0 %3473
    %v3475 = vadd.f32 %v3386, %v3387
    %3476 = vadd.xlane.f32.xlu0 %v3475
    %v3477 = vpop.xlane.xlu0 %3476
    %v3478 = vadd.f32 %v3388, %v3389
    %3479 = vadd.xlane.f32.xlu0 %v3478
    %v3480 = vpop.xlane.xlu0 %3479
    %v3481 = vadd.f32 %v3390, %v3391
    %3482 = vadd.xlane.f32.xlu0 %v3481
    %v3483 = vpop.xlane.xlu0 %3482
    %v3484 = vadd.f32 %v3392, %v3393
    %3485 = vadd.xlane.f32.xlu0 %v3484
    %v3486 = vpop.xlane.xlu0 %3485
    %v3487 = vadd.f32 %v3394, %v3395
    %3488 = vadd.xlane.f32.xlu0 %v3487
    %v3489 = vpop.xlane.xlu0 %3488
    %v3490 = vadd.f32 %v3396, %v3397
    %3491 = vadd.xlane.f32.xlu0 %v3490
    %v3492 = vpop.xlane.xlu0 %3491
    %v3493 = vadd.f32 %v3398, %v3399
    %3494 = vadd.xlane.f32.xlu0 %v3493
    %v3495 = vpop.xlane.xlu0 %3494
    %vm3496 = vcmp.eq.f32.partialorder %v3402, %v1274
    %vm3497 = vcmp.eq.f32.partialorder %v3402, %v1275
    %vm3498 = vcmp.eq.f32.partialorder %v3405, %v1274
    %vm3499 = vcmp.eq.f32.partialorder %v3405, %v1275
    %vm3500 = vcmp.eq.f32.partialorder %v3408, %v1274
    %vm3501 = vcmp.eq.f32.partialorder %v3408, %v1275
    %vm3502 = vcmp.eq.f32.partialorder %v3411, %v1274
    %vm3503 = vcmp.eq.f32.partialorder %v3411, %v1275
    %vm3504 = vcmp.eq.f32.partialorder %v3414, %v1274
    %vm3505 = vcmp.eq.f32.partialorder %v3414, %v1275
    %vm3506 = vcmp.eq.f32.partialorder %v3417, %v1274
    %vm3507 = vcmp.eq.f32.partialorder %v3417, %v1275
    %vm3508 = vcmp.eq.f32.partialorder %v3420, %v1274
    %vm3509 = vcmp.eq.f32.partialorder %v3420, %v1275
    %vm3510 = vcmp.eq.f32.partialorder %v3423, %v1274
    %vm3511 = vcmp.eq.f32.partialorder %v3423, %v1275
    %vm3512 = vcmp.eq.f32.partialorder %v3426, %v1274
    %vm3513 = vcmp.eq.f32.partialorder %v3426, %v1275
    %vm3514 = vcmp.eq.f32.partialorder %v3429, %v1274
    %vm3515 = vcmp.eq.f32.partialorder %v3429, %v1275
    %vm3516 = vcmp.eq.f32.partialorder %v3432, %v1274
    %vm3517 = vcmp.eq.f32.partialorder %v3432, %v1275
    %vm3518 = vcmp.eq.f32.partialorder %v3435, %v1274
    %vm3519 = vcmp.eq.f32.partialorder %v3435, %v1275
    %vm3520 = vcmp.eq.f32.partialorder %v3438, %v1274
    %vm3521 = vcmp.eq.f32.partialorder %v3438, %v1275
    %vm3522 = vcmp.eq.f32.partialorder %v3441, %v1274
    %vm3523 = vcmp.eq.f32.partialorder %v3441, %v1275
    %vm3524 = vcmp.eq.f32.partialorder %v3444, %v1274
    %vm3525 = vcmp.eq.f32.partialorder %v3444, %v1275
    %vm3526 = vcmp.eq.f32.partialorder %v3447, %v1274
    %vm3527 = vcmp.eq.f32.partialorder %v3447, %v1275
    %vm3528 = vcmp.eq.f32.partialorder %v3450, %v1274
    %vm3529 = vcmp.eq.f32.partialorder %v3450, %v1275
    %vm3530 = vcmp.eq.f32.partialorder %v3453, %v1274
    %vm3531 = vcmp.eq.f32.partialorder %v3453, %v1275
    %vm3532 = vcmp.eq.f32.partialorder %v3456, %v1274
    %vm3533 = vcmp.eq.f32.partialorder %v3456, %v1275
    %vm3534 = vcmp.eq.f32.partialorder %v3459, %v1274
    %vm3535 = vcmp.eq.f32.partialorder %v3459, %v1275
    %vm3536 = vcmp.eq.f32.partialorder %v3462, %v1274
    %vm3537 = vcmp.eq.f32.partialorder %v3462, %v1275
    %vm3538 = vcmp.eq.f32.partialorder %v3465, %v1274
    %vm3539 = vcmp.eq.f32.partialorder %v3465, %v1275
    %vm3540 = vcmp.eq.f32.partialorder %v3468, %v1274
    %vm3541 = vcmp.eq.f32.partialorder %v3468, %v1275
    %vm3542 = vcmp.eq.f32.partialorder %v3471, %v1274
    %vm3543 = vcmp.eq.f32.partialorder %v3471, %v1275
    %vm3544 = vcmp.eq.f32.partialorder %v3474, %v1274
    %vm3545 = vcmp.eq.f32.partialorder %v3474, %v1275
    %vm3546 = vcmp.eq.f32.partialorder %v3477, %v1274
    %vm3547 = vcmp.eq.f32.partialorder %v3477, %v1275
    %vm3548 = vcmp.eq.f32.partialorder %v3480, %v1274
    %vm3549 = vcmp.eq.f32.partialorder %v3480, %v1275
    %vm3550 = vcmp.eq.f32.partialorder %v3483, %v1274
    %vm3551 = vcmp.eq.f32.partialorder %v3483, %v1275
    %vm3552 = vcmp.eq.f32.partialorder %v3486, %v1274
    %vm3553 = vcmp.eq.f32.partialorder %v3486, %v1275
    %vm3554 = vcmp.eq.f32.partialorder %v3489, %v1274
    %vm3555 = vcmp.eq.f32.partialorder %v3489, %v1275
    %vm3556 = vcmp.eq.f32.partialorder %v3492, %v1274
    %vm3557 = vcmp.eq.f32.partialorder %v3492, %v1275
    %vm3558 = vcmp.eq.f32.partialorder %v3495, %v1274
    %vm3559 = vcmp.eq.f32.partialorder %v3495, %v1275
    %v3560 = vsel %vm3496, 1, 0
    %v3561 = vsel %vm3497, 1, 0
    %v3562 = vsel %vm3498, 1, 0
    %v3563 = vsel %vm3499, 1, 0
    %v3564 = vsel %vm3500, 1, 0
    %v3565 = vsel %vm3501, 1, 0
    %v3566 = vsel %vm3502, 1, 0
    %v3567 = vsel %vm3503, 1, 0
    %v3568 = vsel %vm3504, 1, 0
    %v3569 = vsel %vm3505, 1, 0
    %v3570 = vsel %vm3506, 1, 0
    %v3571 = vsel %vm3507, 1, 0
    %v3572 = vsel %vm3508, 1, 0
    %v3573 = vsel %vm3509, 1, 0
    %v3574 = vsel %vm3510, 1, 0
    %v3575 = vsel %vm3511, 1, 0
    %v3576 = vsel %vm3512, 1, 0
    %v3577 = vsel %vm3513, 1, 0
    %v3578 = vsel %vm3514, 1, 0
    %v3579 = vsel %vm3515, 1, 0
    %v3580 = vsel %vm3516, 1, 0
    %v3581 = vsel %vm3517, 1, 0
    %v3582 = vsel %vm3518, 1, 0
    %v3583 = vsel %vm3519, 1, 0
    %v3584 = vsel %vm3520, 1, 0
    %v3585 = vsel %vm3521, 1, 0
    %v3586 = vsel %vm3522, 1, 0
    %v3587 = vsel %vm3523, 1, 0
    %v3588 = vsel %vm3524, 1, 0
    %v3589 = vsel %vm3525, 1, 0
    %v3590 = vsel %vm3526, 1, 0
    %v3591 = vsel %vm3527, 1, 0
    %v3592 = vsel %vm3528, 1, 0
    %v3593 = vsel %vm3529, 1, 0
    %v3594 = vsel %vm3530, 1, 0
    %v3595 = vsel %vm3531, 1, 0
    %v3596 = vsel %vm3532, 1, 0
    %v3597 = vsel %vm3533, 1, 0
    %v3598 = vsel %vm3534, 1, 0
    %v3599 = vsel %vm3535, 1, 0
    %v3600 = vsel %vm3536, 1, 0
    %v3601 = vsel %vm3537, 1, 0
    %v3602 = vsel %vm3538, 1, 0
    %v3603 = vsel %vm3539, 1, 0
    %v3604 = vsel %vm3540, 1, 0
    %v3605 = vsel %vm3541, 1, 0
    %v3606 = vsel %vm3542, 1, 0
    %v3607 = vsel %vm3543, 1, 0
    %v3608 = vsel %vm3544, 1, 0
    %v3609 = vsel %vm3545, 1, 0
    %v3610 = vsel %vm3546, 1, 0
    %v3611 = vsel %vm3547, 1, 0
    %v3612 = vsel %vm3548, 1, 0
    %v3613 = vsel %vm3549, 1, 0
    %v3614 = vsel %vm3550, 1, 0
    %v3615 = vsel %vm3551, 1, 0
    %v3616 = vsel %vm3552, 1, 0
    %v3617 = vsel %vm3553, 1, 0
    %v3618 = vsel %vm3554, 1, 0
    %v3619 = vsel %vm3555, 1, 0
    %v3620 = vsel %vm3556, 1, 0
    %v3621 = vsel %vm3557, 1, 0
    %v3622 = vsel %vm3558, 1, 0
    %v3623 = vsel %vm3559, 1, 0
    %v3624 = vcvt.s32.f32 %v3560
    %v3625 = vcvt.s32.f32 %v3561
    %v3626 = vcvt.s32.f32 %v3562
    %v3627 = vcvt.s32.f32 %v3563
    %v3628 = vcvt.s32.f32 %v3564
    %v3629 = vcvt.s32.f32 %v3565
    %v3630 = vcvt.s32.f32 %v3566
    %v3631 = vcvt.s32.f32 %v3567
    %v3632 = vcvt.s32.f32 %v3568
    %v3633 = vcvt.s32.f32 %v3569
    %v3634 = vcvt.s32.f32 %v3570
    %v3635 = vcvt.s32.f32 %v3571
    %v3636 = vcvt.s32.f32 %v3572
    %v3637 = vcvt.s32.f32 %v3573
    %v3638 = vcvt.s32.f32 %v3574
    %v3639 = vcvt.s32.f32 %v3575
    %v3640 = vcvt.s32.f32 %v3576
    %v3641 = vcvt.s32.f32 %v3577
    %v3642 = vcvt.s32.f32 %v3578
    %v3643 = vcvt.s32.f32 %v3579
    %v3644 = vcvt.s32.f32 %v3580
    %v3645 = vcvt.s32.f32 %v3581
    %v3646 = vcvt.s32.f32 %v3582
    %v3647 = vcvt.s32.f32 %v3583
    %v3648 = vcvt.s32.f32 %v3584
    %v3649 = vcvt.s32.f32 %v3585
    %v3650 = vcvt.s32.f32 %v3586
    %v3651 = vcvt.s32.f32 %v3587
    %v3652 = vcvt.s32.f32 %v3588
    %v3653 = vcvt.s32.f32 %v3589
    %v3654 = vcvt.s32.f32 %v3590
    %v3655 = vcvt.s32.f32 %v3591
    %v3656 = vcvt.s32.f32 %v3592
    %v3657 = vcvt.s32.f32 %v3593
    %v3658 = vcvt.s32.f32 %v3594
    %v3659 = vcvt.s32.f32 %v3595
    %v3660 = vcvt.s32.f32 %v3596
    %v3661 = vcvt.s32.f32 %v3597
    %v3662 = vcvt.s32.f32 %v3598
    %v3663 = vcvt.s32.f32 %v3599
    %v3664 = vcvt.s32.f32 %v3600
    %v3665 = vcvt.s32.f32 %v3601
    %v3666 = vcvt.s32.f32 %v3602
    %v3667 = vcvt.s32.f32 %v3603
    %v3668 = vcvt.s32.f32 %v3604
    %v3669 = vcvt.s32.f32 %v3605
    %v3670 = vcvt.s32.f32 %v3606
    %v3671 = vcvt.s32.f32 %v3607
    %v3672 = vcvt.s32.f32 %v3608
    %v3673 = vcvt.s32.f32 %v3609
    %v3674 = vcvt.s32.f32 %v3610
    %v3675 = vcvt.s32.f32 %v3611
    %v3676 = vcvt.s32.f32 %v3612
    %v3677 = vcvt.s32.f32 %v3613
    %v3678 = vcvt.s32.f32 %v3614
    %v3679 = vcvt.s32.f32 %v3615
    %v3680 = vcvt.s32.f32 %v3616
    %v3681 = vcvt.s32.f32 %v3617
    %v3682 = vcvt.s32.f32 %v3618
    %v3683 = vcvt.s32.f32 %v3619
    %v3684 = vcvt.s32.f32 %v3620
    %v3685 = vcvt.s32.f32 %v3621
    %v3686 = vcvt.s32.f32 %v3622
    %v3687 = vcvt.s32.f32 %v3623
    %3688 = vmatprep.subr.mxu0 %v3625
    %3689 = vmatpush1.msra.mxu0 %v3624
    %3690 = vmatprep.subr.mxu0 %v3627
    %3691 = vmatpush1.msra.mxu0 %v3626
    %3692 = vmatprep.subr.mxu0 %v3629
    %3693 = vmatpush1.msra.mxu0 %v3628
    %3694 = vmatprep.subr.mxu0 %v3631
    %3695 = vmatpush1.msra.mxu0 %v3630
    %3696 = vmatprep.subr.mxu0 %v3633
    %3697 = vmatpush1.msra.mxu0 %v3632
    %3698 = vmatprep.subr.mxu0 %v3635
    %3699 = vmatpush1.msra.mxu0 %v3634
    %3700 = vmatprep.subr.mxu0 %v3637
    %3701 = vmatpush1.msra.mxu0 %v3636
    %3702 = vmatprep.subr.mxu0 %v3639
    %3703 = vmatpush1.msra.mxu0 %v3638
    %3704 = vmatprep.subr.mxu0 %v3641
    %3705 = vmatpush1.msra.mxu0 %v3640
    %3706 = vmatprep.subr.mxu0 %v3643
    %3707 = vmatpush1.msra.mxu0 %v3642
    %3708 = vmatprep.subr.mxu0 %v3645
    %3709 = vmatpush1.msra.mxu0 %v3644
    %3710 = vmatprep.subr.mxu0 %v3647
    %3711 = vmatpush1.msra.mxu0 %v3646
    %3712 = vmatprep.subr.mxu0 %v3649
    %3713 = vmatpush1.msra.mxu0 %v3648
    %3714 = vmatprep.subr.mxu0 %v3651
    %3715 = vmatpush1.msra.mxu0 %v3650
    %3716 = vmatprep.subr.mxu0 %v3653
    %3717 = vmatpush1.msra.mxu0 %v3652
    %3718 = vmatprep.subr.mxu0 %v3655
    %3719 = vmatpush1.msra.mxu0 %v3654
    %3720 = vmatprep.subr.mxu0 %v3657
    %3721 = vmatpush1.msra.mxu0 %v3656
    %3722 = vmatprep.subr.mxu0 %v3659
    %3723 = vmatpush1.msra.mxu0 %v3658
    %3724 = vmatprep.subr.mxu0 %v3661
    %3725 = vmatpush1.msra.mxu0 %v3660
    %3726 = vmatprep.subr.mxu0 %v3663
    %3727 = vmatpush1.msra.mxu0 %v3662
    %3728 = vmatprep.subr.mxu0 %v3665
    %3729 = vmatpush1.msra.mxu0 %v3664
    %3730 = vmatprep.subr.mxu0 %v3667
    %3731 = vmatpush1.msra.mxu0 %v3666
    %3732 = vmatprep.subr.mxu0 %v3669
    %3733 = vmatpush1.msra.mxu0 %v3668
    %3734 = vmatprep.subr.mxu0 %v3671
    %3735 = vmatpush1.msra.mxu0 %v3670
    %3736 = vmatprep.subr.mxu0 %v3673
    %3737 = vmatpush1.msra.mxu0 %v3672
    %3738 = vmatprep.subr.mxu0 %v3675
    %3739 = vmatpush1.msra.mxu0 %v3674
    %3740 = vmatprep.subr.mxu0 %v3677
    %3741 = vmatpush1.msra.mxu0 %v3676
    %3742 = vmatprep.subr.mxu0 %v3679
    %3743 = vmatpush1.msra.mxu0 %v3678
    %3744 = vmatprep.subr.mxu0 %v3681
    %3745 = vmatpush1.msra.mxu0 %v3680
    %3746 = vmatprep.subr.mxu0 %v3683
    %3747 = vmatpush1.msra.mxu0 %v3682
    %3748 = vmatprep.subr.mxu0 %v3685
    %3749 = vmatpush1.msra.mxu0 %v3684
    %3750 = vmatprep.subr.mxu0 %v3687
    %3751 = vmatpush1.msra.mxu0 %v3686
    %3752 = vmatprep.mubr.f32.mxu0 %v2449
    %3753 = vmatmul.mubr.f32.gmra.mrb[0].mxu0 %v2448
    %v3754 = vpop.f32.mrb[0].mxu0
    %v3755 = vadd.f32 0.0, %v3754
    %v3756 = vpop.f32.mrb[0].mxu0
    %v3757 = vadd.f32 0.0, %v3756
    %3758 = vdwg.mxu0
    %3759 = vmatprep.subr.mxu0 %v3625
    %3760 = vmatpush1.msra.mxu0 %v3624
    %3761 = vmatprep.subr.mxu0 %v3627
    %3762 = vmatpush1.msra.mxu0 %v3626
    %3763 = vmatprep.subr.mxu0 %v3629
    %3764 = vmatpush1.msra.mxu0 %v3628
    %3765 = vmatprep.subr.mxu0 %v3631
    %3766 = vmatpush1.msra.mxu0 %v3630
    %3767 = vmatprep.subr.mxu0 %v3633
    %3768 = vmatpush1.msra.mxu0 %v3632
    %3769 = vmatprep.subr.mxu0 %v3635
    %3770 = vmatpush1.msra.mxu0 %v3634
    %3771 = vmatprep.subr.mxu0 %v3637
    %3772 = vmatpush1.msra.mxu0 %v3636
    %3773 = vmatprep.subr.mxu0 %v3639
    %3774 = vmatpush1.msra.mxu0 %v3638
    %3775 = vmatprep.subr.mxu0 %v3641
    %3776 = vmatpush1.msra.mxu0 %v3640
    %3777 = vmatprep.subr.mxu0 %v3643
    %3778 = vmatpush1.msra.mxu0 %v3642
    %3779 = vmatprep.subr.mxu0 %v3645
    %3780 = vmatpush1.msra.mxu0 %v3644
    %3781 = vmatprep.subr.mxu0 %v3647
    %3782 = vmatpush1.msra.mxu0 %v3646
    %3783 = vmatprep.subr.mxu0 %v3649
    %3784 = vmatpush1.msra.mxu0 %v3648
    %3785 = vmatprep.subr.mxu0 %v3651
    %3786 = vmatpush1.msra.mxu0 %v3650
    %3787 = vmatprep.subr.mxu0 %v3653
    %3788 = vmatpush1.msra.mxu0 %v3652
    %3789 = vmatprep.subr.mxu0 %v3655
    %3790 = vmatpush1.msra.mxu0 %v3654
    %3791 = vmatprep.subr.mxu0 %v3657
    %3792 = vmatpush1.msra.mxu0 %v3656
    %3793 = vmatprep.subr.mxu0 %v3659
    %3794 = vmatpush1.msra.mxu0 %v3658
    %3795 = vmatprep.subr.mxu0 %v3661
    %3796 = vmatpush1.msra.mxu0 %v3660
    %3797 = vmatprep.subr.mxu0 %v3663
    %3798 = vmatpush1.msra.mxu0 %v3662
    %3799 = vmatprep.subr.mxu0 %v3665
    %3800 = vmatpush1.msra.mxu0 %v3664
    %3801 = vmatprep.subr.mxu0 %v3667
    %3802 = vmatpush1.msra.mxu0 %v3666
    %3803 = vmatprep.subr.mxu0 %v3669
    %3804 = vmatpush1.msra.mxu0 %v3668
    %3805 = vmatprep.subr.mxu0 %v3671
    %3806 = vmatpush1.msra.mxu0 %v3670
    %3807 = vmatprep.subr.mxu0 %v3673
    %3808 = vmatpush1.msra.mxu0 %v3672
    %3809 = vmatprep.subr.mxu0 %v3675
    %3810 = vmatpush1.msra.mxu0 %v3674
    %3811 = vmatprep.subr.mxu0 %v3677
    %3812 = vmatpush1.msra.mxu0 %v3676
    %3813 = vmatprep.subr.mxu0 %v3679
    %3814 = vmatpush1.msra.mxu0 %v3678
    %3815 = vmatprep.subr.mxu0 %v3681
    %3816 = vmatpush1.msra.mxu0 %v3680
    %3817 = vmatprep.subr.mxu0 %v3683
    %3818 = vmatpush1.msra.mxu0 %v3682
    %3819 = vmatprep.subr.mxu0 %v3685
    %3820 = vmatpush1.msra.mxu0 %v3684
    %3821 = vmatprep.subr.mxu0 %v3687
    %3822 = vmatpush1.msra.mxu0 %v3686
    %3823 = vmatprep.mubr.f32.mxu0 %v2532
    %3824 = vmatmul.mubr.f32.gmra.mrb[0].mxu0 %v2531
    %v3825 = vpop.f32.mrb[0].mxu0
    %v3826 = vadd.f32 0.0, %v3825
    %v3827 = vpop.f32.mrb[0].mxu0
    %v3828 = vadd.f32 0.0, %v3827
    %3829 = vdwg.mxu0
    %3830 = vmatprep.subr.mxu0 %v3625
    %3831 = vmatpush1.msra.mxu0 %v3624
    %3832 = vmatprep.subr.mxu0 %v3627
    %3833 = vmatpush1.msra.mxu0 %v3626
    %3834 = vmatprep.subr.mxu0 %v3629
    %3835 = vmatpush1.msra.mxu0 %v3628
    %3836 = vmatprep.subr.mxu0 %v3631
    %3837 = vmatpush1.msra.mxu0 %v3630
    %3838 = vmatprep.subr.mxu0 %v3633
    %3839 = vmatpush1.msra.mxu0 %v3632
    %3840 = vmatprep.subr.mxu0 %v3635
    %3841 = vmatpush1.msra.mxu0 %v3634
    %3842 = vmatprep.subr.mxu0 %v3637
    %3843 = vmatpush1.msra.mxu0 %v3636
    %3844 = vmatprep.subr.mxu0 %v3639
    %3845 = vmatpush1.msra.mxu0 %v3638
    %3846 = vmatprep.subr.mxu0 %v3641
    %3847 = vmatpush1.msra.mxu0 %v3640
    %3848 = vmatprep.subr.mxu0 %v3643
    %3849 = vmatpush1.msra.mxu0 %v3642
    %3850 = vmatprep.subr.mxu0 %v3645
    %3851 = vmatpush1.msra.mxu0 %v3644
    %3852 = vmatprep.subr.mxu0 %v3647
    %3853 = vmatpush1.msra.mxu0 %v3646
    %3854 = vmatprep.subr.mxu0 %v3649
    %3855 = vmatpush1.msra.mxu0 %v3648
    %3856 = vmatprep.subr.mxu0 %v3651
    %3857 = vmatpush1.msra.mxu0 %v3650
    %3858 = vmatprep.subr.mxu0 %v3653
    %3859 = vmatpush1.msra.mxu0 %v3652
    %3860 = vmatprep.subr.mxu0 %v3655
    %3861 = vmatpush1.msra.mxu0 %v3654
    %3862 = vmatprep.subr.mxu0 %v3657
    %3863 = vmatpush1.msra.mxu0 %v3656
    %3864 = vmatprep.subr.mxu0 %v3659
    %3865 = vmatpush1.msra.mxu0 %v3658
    %3866 = vmatprep.subr.mxu0 %v3661
    %3867 = vmatpush1.msra.mxu0 %v3660
    %3868 = vmatprep.subr.mxu0 %v3663
    %3869 = vmatpush1.msra.mxu0 %v3662
    %3870 = vmatprep.subr.mxu0 %v3665
    %3871 = vmatpush1.msra.mxu0 %v3664
    %3872 = vmatprep.subr.mxu0 %v3667
    %3873 = vmatpush1.msra.mxu0 %v3666
    %3874 = vmatprep.subr.mxu0 %v3669
    %3875 = vmatpush1.msra.mxu0 %v3668
    %3876 = vmatprep.subr.mxu0 %v3671
    %3877 = vmatpush1.msra.mxu0 %v3670
    %3878 = vmatprep.subr.mxu0 %v3673
    %3879 = vmatpush1.msra.mxu0 %v3672
    %3880 = vmatprep.subr.mxu0 %v3675
    %3881 = vmatpush1.msra.mxu0 %v3674
    %3882 = vmatprep.subr.mxu0 %v3677
    %3883 = vmatpush1.msra.mxu0 %v3676
    %3884 = vmatprep.subr.mxu0 %v3679
    %3885 = vmatpush1.msra.mxu0 %v3678
    %3886 = vmatprep.subr.mxu0 %v3681
    %3887 = vmatpush1.msra.mxu0 %v3680
    %3888 = vmatprep.subr.mxu0 %v3683
    %3889 = vmatpush1.msra.mxu0 %v3682
    %3890 = vmatprep.subr.mxu0 %v3685
    %3891 = vmatpush1.msra.mxu0 %v3684
    %3892 = vmatprep.subr.mxu0 %v3687
    %3893 = vmatpush1.msra.mxu0 %v3686
    %3894 = vmatprep.mubr.f32.mxu0 %v2615
    %3895 = vmatmul.mubr.f32.gmra.mrb[0].mxu0 %v2614
    %v3896 = vpop.f32.mrb[0].mxu0
    %v3897 = vadd.f32 0.0, %v3896
    %v3898 = vpop.f32.mrb[0].mxu0
    %v3899 = vadd.f32 0.0, %v3898
    %3900 = vdwg.mxu0
    %3901 = vmatprep.subr.mxu0 %v3625
    %3902 = vmatpush1.msra.mxu0 %v3624
    %3903 = vmatprep.subr.mxu0 %v3627
    %3904 = vmatpush1.msra.mxu0 %v3626
    %3905 = vmatprep.subr.mxu0 %v3629
    %3906 = vmatpush1.msra.mxu0 %v3628
    %3907 = vmatprep.subr.mxu0 %v3631
    %3908 = vmatpush1.msra.mxu0 %v3630
    %3909 = vmatprep.subr.mxu0 %v3633
    %3910 = vmatpush1.msra.mxu0 %v3632
    %3911 = vmatprep.subr.mxu0 %v3635
    %3912 = vmatpush1.msra.mxu0 %v3634
    %3913 = vmatprep.subr.mxu0 %v3637
    %3914 = vmatpush1.msra.mxu0 %v3636
    %3915 = vmatprep.subr.mxu0 %v3639
    %3916 = vmatpush1.msra.mxu0 %v3638
    %3917 = vmatprep.subr.mxu0 %v3641
    %3918 = vmatpush1.msra.mxu0 %v3640
    %3919 = vmatprep.subr.mxu0 %v3643
    %3920 = vmatpush1.msra.mxu0 %v3642
    %3921 = vmatprep.subr.mxu0 %v3645
    %3922 = vmatpush1.msra.mxu0 %v3644
    %3923 = vmatprep.subr.mxu0 %v3647
    %3924 = vmatpush1.msra.mxu0 %v3646
    %3925 = vmatprep.subr.mxu0 %v3649
    %3926 = vmatpush1.msra.mxu0 %v3648
    %3927 = vmatprep.subr.mxu0 %v3651
    %3928 = vmatpush1.msra.mxu0 %v3650
    %3929 = vmatprep.subr.mxu0 %v3653
    %3930 = vmatpush1.msra.mxu0 %v3652
    %3931 = vmatprep.subr.mxu0 %v3655
    %3932 = vmatpush1.msra.mxu0 %v3654
    %3933 = vmatprep.subr.mxu0 %v3657
    %3934 = vmatpush1.msra.mxu0 %v3656
    %3935 = vmatprep.subr.mxu0 %v3659
    %3936 = vmatpush1.msra.mxu0 %v3658
    %3937 = vmatprep.subr.mxu0 %v3661
    %3938 = vmatpush1.msra.mxu0 %v3660
    %3939 = vmatprep.subr.mxu0 %v3663
    %3940 = vmatpush1.msra.mxu0 %v3662
    %3941 = vmatprep.subr.mxu0 %v3665
    %3942 = vmatpush1.msra.mxu0 %v3664
    %3943 = vmatprep.subr.mxu0 %v3667
    %3944 = vmatpush1.msra.mxu0 %v3666
    %3945 = vmatprep.subr.mxu0 %v3669
    %3946 = vmatpush1.msra.mxu0 %v3668
    %3947 = vmatprep.subr.mxu0 %v3671
    %3948 = vmatpush1.msra.mxu0 %v3670
    %3949 = vmatprep.subr.mxu0 %v3673
    %3950 = vmatpush1.msra.mxu0 %v3672
    %3951 = vmatprep.subr.mxu0 %v3675
    %3952 = vmatpush1.msra.mxu0 %v3674
    %3953 = vmatprep.subr.mxu0 %v3677
    %3954 = vmatpush1.msra.mxu0 %v3676
    %3955 = vmatprep.subr.mxu0 %v3679
    %3956 = vmatpush1.msra.mxu0 %v3678
    %3957 = vmatprep.subr.mxu0 %v3681
    %3958 = vmatpush1.msra.mxu0 %v3680
    %3959 = vmatprep.subr.mxu0 %v3683
    %3960 = vmatpush1.msra.mxu0 %v3682
    %3961 = vmatprep.subr.mxu0 %v3685
    %3962 = vmatpush1.msra.mxu0 %v3684
    %3963 = vmatprep.subr.mxu0 %v3687
    %3964 = vmatpush1.msra.mxu0 %v3686
    %3965 = vmatprep.mubr.f32.mxu0 %v2698
    %3966 = vmatmul.mubr.f32.gmra.mrb[0].mxu0 %v2697
    %v3967 = vpop.f32.mrb[0].mxu0
    %v3968 = vadd.f32 0.0, %v3967
    %v3969 = vpop.f32.mrb[0].mxu0
    %v3970 = vadd.f32 0.0, %v3969
    %3971 = vdwg.mxu0
    %3972 = vmatprep.subr.mxu0 %v3625
    %3973 = vmatpush1.msra.mxu0 %v3624
    %3974 = vmatprep.subr.mxu0 %v3627
    %3975 = vmatpush1.msra.mxu0 %v3626
    %3976 = vmatprep.subr.mxu0 %v3629
    %3977 = vmatpush1.msra.mxu0 %v3628
    %3978 = vmatprep.subr.mxu0 %v3631
    %3979 = vmatpush1.msra.mxu0 %v3630
    %3980 = vmatprep.subr.mxu0 %v3633
    %3981 = vmatpush1.msra.mxu0 %v3632
    %3982 = vmatprep.subr.mxu0 %v3635
    %3983 = vmatpush1.msra.mxu0 %v3634
    %3984 = vmatprep.subr.mxu0 %v3637
    %3985 = vmatpush1.msra.mxu0 %v3636
    %3986 = vmatprep.subr.mxu0 %v3639
    %3987 = vmatpush1.msra.mxu0 %v3638
    %3988 = vmatprep.subr.mxu0 %v3641
    %3989 = vmatpush1.msra.mxu0 %v3640
    %3990 = vmatprep.subr.mxu0 %v3643
    %3991 = vmatpush1.msra.mxu0 %v3642
    %3992 = vmatprep.subr.mxu0 %v3645
    %3993 = vmatpush1.msra.mxu0 %v3644
    %3994 = vmatprep.subr.mxu0 %v3647
    %3995 = vmatpush1.msra.mxu0 %v3646
    %3996 = vmatprep.subr.mxu0 %v3649
    %3997 = vmatpush1.msra.mxu0 %v3648
    %3998 = vmatprep.subr.mxu0 %v3651
    %3999 = vmatpush1.msra.mxu0 %v3650
    %4000 = vmatprep.subr.mxu0 %v3653
    %4001 = vmatpush1.msra.mxu0 %v3652
    %4002 = vmatprep.subr.mxu0 %v3655
    %4003 = vmatpush1.msra.mxu0 %v3654
    %4004 = vmatprep.subr.mxu0 %v3657
    %4005 = vmatpush1.msra.mxu0 %v3656
    %4006 = vmatprep.subr.mxu0 %v3659
    %4007 = vmatpush1.msra.mxu0 %v3658
    %4008 = vmatprep.subr.mxu0 %v3661
    %4009 = vmatpush1.msra.mxu0 %v3660
    %4010 = vmatprep.subr.mxu0 %v3663
    %4011 = vmatpush1.msra.mxu0 %v3662
    %4012 = vmatprep.subr.mxu0 %v3665
    %4013 = vmatpush1.msra.mxu0 %v3664
    %4014 = vmatprep.subr.mxu0 %v3667
    %4015 = vmatpush1.msra.mxu0 %v3666
    %4016 = vmatprep.subr.mxu0 %v3669
    %4017 = vmatpush1.msra.mxu0 %v3668
    %4018 = vmatprep.subr.mxu0 %v3671
    %4019 = vmatpush1.msra.mxu0 %v3670
    %4020 = vmatprep.subr.mxu0 %v3673
    %4021 = vmatpush1.msra.mxu0 %v3672
    %4022 = vmatprep.subr.mxu0 %v3675
    %4023 = vmatpush1.msra.mxu0 %v3674
    %4024 = vmatprep.subr.mxu0 %v3677
    %4025 = vmatpush1.msra.mxu0 %v3676
    %4026 = vmatprep.subr.mxu0 %v3679
    %4027 = vmatpush1.msra.mxu0 %v3678
    %4028 = vmatprep.subr.mxu0 %v3681
    %4029 = vmatpush1.msra.mxu0 %v3680
    %4030 = vmatprep.subr.mxu0 %v3683
    %4031 = vmatpush1.msra.mxu0 %v3682
    %4032 = vmatprep.subr.mxu0 %v3685
    %4033 = vmatpush1.msra.mxu0 %v3684
    %4034 = vmatprep.subr.mxu0 %v3687
    %4035 = vmatpush1.msra.mxu0 %v3686
    %4036 = vmatprep.mubr.f32.mxu0 %v2781
    %4037 = vmatmul.mubr.f32.gmra.mrb[0].mxu0 %v2780
    %v4038 = vpop.f32.mrb[0].mxu0
    %v4039 = vadd.f32 0.0, %v4038
    %v4040 = vpop.f32.mrb[0].mxu0
    %v4041 = vadd.f32 0.0, %v4040
    %4042 = vdwg.mxu0
    %4043 = vrot.lane.b32.xlu0 %v3755, 127
    %v4044 = vpop.permute.xlu0 %4043
    %4045 = vrot.lane.b32.xlu0 %v3757, 127
    %v4046 = vpop.permute.xlu0 %4045
    %vm4047 = vcmp.lt.s32.totalorder %v472, 127
    %v4048 = vsel %vm4047, %v4044, %v4046
    %v4049 = vsel %vm4047, %v4046, %v4044
    %4050 = vrot.lane.b32.xlu0 %v3755, 126
    %v4051 = vpop.permute.xlu0 %4050
    %4052 = vrot.lane.b32.xlu0 %v3757, 126
    %v4053 = vpop.permute.xlu0 %4052
    %vm4054 = vcmp.lt.s32.totalorder %v472, 126
    %v4055 = vsel %vm4054, %v4051, %v4053
    %v4056 = vsel %vm4054, %v4053, %v4051
    %4057 = vrot.lane.b32.xlu0 %v3826, 127
    %v4058 = vpop.permute.xlu0 %4057
    %4059 = vrot.lane.b32.xlu0 %v3828, 127
    %v4060 = vpop.permute.xlu0 %4059
    %v4061 = vsel %vm4047, %v4058, %v4060
    %v4062 = vsel %vm4047, %v4060, %v4058
    %4063 = vrot.lane.b32.xlu0 %v3826, 126
    %v4064 = vpop.permute.xlu0 %4063
    %4065 = vrot.lane.b32.xlu0 %v3828, 126
    %v4066 = vpop.permute.xlu0 %4065
    %v4067 = vsel %vm4054, %v4064, %v4066
    %v4068 = vsel %vm4054, %v4066, %v4064
    %4069 = vrot.lane.b32.xlu0 %v3897, 127
    %v4070 = vpop.permute.xlu0 %4069
    %4071 = vrot.lane.b32.xlu0 %v3899, 127
    %v4072 = vpop.permute.xlu0 %4071
    %v4073 = vsel %vm4047, %v4070, %v4072
    %v4074 = vsel %vm4047, %v4072, %v4070
    %4075 = vrot.lane.b32.xlu0 %v3897, 126
    %v4076 = vpop.permute.xlu0 %4075
    %4077 = vrot.lane.b32.xlu0 %v3899, 126
    %v4078 = vpop.permute.xlu0 %4077
    %v4079 = vsel %vm4054, %v4076, %v4078
    %v4080 = vsel %vm4054, %v4078, %v4076
    %4081 = vrot.lane.b32.xlu0 %v3968, 127
    %v4082 = vpop.permute.xlu0 %4081
    %4083 = vrot.lane.b32.xlu0 %v3970, 127
    %v4084 = vpop.permute.xlu0 %4083
    %v4085 = vsel %vm4047, %v4082, %v4084
    %v4086 = vsel %vm4047, %v4084, %v4082
    %4087 = vrot.lane.b32.xlu0 %v3968, 126
    %v4088 = vpop.permute.xlu0 %4087
    %4089 = vrot.lane.b32.xlu0 %v3970, 126
    %v4090 = vpop.permute.xlu0 %4089
    %v4091 = vsel %vm4054, %v4088, %v4090
    %v4092 = vsel %vm4054, %v4090, %v4088
    %4093 = vrot.lane.b32.xlu0 %v4039, 127
    %v4094 = vpop.permute.xlu0 %4093
    %4095 = vrot.lane.b32.xlu0 %v4041, 127
    %v4096 = vpop.permute.xlu0 %4095
    %v4097 = vsel %vm4047, %v4094, %v4096
    %v4098 = vsel %vm4047, %v4096, %v4094
    %4099 = vrot.lane.b32.xlu0 %v4039, 126
    %v4100 = vpop.permute.xlu0 %4099
    %4101 = vrot.lane.b32.xlu0 %v4041, 126
    %v4102 = vpop.permute.xlu0 %4101
    %v4103 = vsel %vm4054, %v4100, %v4102
    %v4104 = vsel %vm4054, %v4102, %v4100
    %s4105 = sld [smem:[#allocation2 + $0xd]]
    %v4106 = vstv %s4105
    %v4107 = vmul.f32 %v4106, %v3755
    %v4108 = vmul.f32 %v4106, %v3757
    %s4109 = sld [smem:[#allocation2 + $0xe]]
    %v4110 = vstv %s4109
    %v4111 = vmul.f32 %v4110, %v4048
    %v4112 = vmul.f32 %v4110, %v4049
    %v4113 = vadd.f32 %v4107, %v4111
    %v4114 = vadd.f32 %v4108, %v4112
    %s4115 = sld [smem:[#allocation2 + $0xf]]
    %v4116 = vstv %s4115
    %v4117 = vmul.f32 %v4116, %v4055
    %v4118 = vmul.f32 %v4116, %v4056
    %v4119 = vadd.f32 %v4113, %v4117
    %v4120 = vadd.f32 %v4114, %v4118
    %s4121 = sld [smem:[#allocation2 + $0x10]]
    %v4122 = vstv %s4121
    %v4123 = vmul.f32 %v4122, %v3826
    %v4124 = vmul.f32 %v4122, %v3828
    %v4125 = vadd.f32 %v4119, %v4123
    %v4126 = vadd.f32 %v4120, %v4124
    %s4127 = sld [smem:[#allocation2 + $0x11]]
    %v4128 = vstv %s4127
    %v4129 = vmul.f32 %v4128, %v4061
    %v4130 = vmul.f32 %v4128, %v4062
    %v4131 = vadd.f32 %v4125, %v4129
    %v4132 = vadd.f32 %v4126, %v4130
    %s4133 = sld [smem:[#allocation2 + $0x12]]
    %v4134 = vstv %s4133
    %v4135 = vmul.f32 %v4134, %v4067
    %v4136 = vmul.f32 %v4134, %v4068
    %v4137 = vadd.f32 %v4131, %v4135
    %v4138 = vadd.f32 %v4132, %v4136
    %s4139 = sld [smem:[#allocation2 + $0x13]]
    %v4140 = vstv %s4139
    %v4141 = vmul.f32 %v4140, %v3897
    %v4142 = vmul.f32 %v4140, %v3899
    %v4143 = vadd.f32 %v4137, %v4141
    %v4144 = vadd.f32 %v4138, %v4142
    %s4145 = sld [smem:[#allocation2 + $0x14]]
    %v4146 = vstv %s4145
    %v4147 = vmul.f32 %v4146, %v4073
    %v4148 = vmul.f32 %v4146, %v4074
    %v4149 = vadd.f32 %v4143, %v4147
    %v4150 = vadd.f32 %v4144, %v4148
    %s4151 = sld [smem:[#allocation2 + $0x15]]
    %v4152 = vstv %s4151
    %v4153 = vmul.f32 %v4152, %v4079
    %v4154 = vmul.f32 %v4152, %v4080
    %v4155 = vadd.f32 %v4149, %v4153
    %v4156 = vadd.f32 %v4150, %v4154
    %s4157 = sld [smem:[#allocation2 + $0x16]]
    %v4158 = vstv %s4157
    %v4159 = vmul.f32 %v4158, %v3968
    %v4160 = vmul.f32 %v4158, %v3970
    %v4161 = vadd.f32 %v4155, %v4159
    %v4162 = vadd.f32 %v4156, %v4160
    %s4163 = sld [smem:[#allocation2 + $0x17]]
    %v4164 = vstv %s4163
    %v4165 = vmul.f32 %v4164, %v4085
    %v4166 = vmul.f32 %v4164, %v4086
    %v4167 = vadd.f32 %v4161, %v4165
    %v4168 = vadd.f32 %v4162, %v4166
    %s4169 = sld [smem:[#allocation2 + $0x18]]
    %v4170 = vstv %s4169
    %v4171 = vmul.f32 %v4170, %v4091
    %v4172 = vmul.f32 %v4170, %v4092
    %v4173 = vadd.f32 %v4167, %v4171
    %v4174 = vadd.f32 %v4168, %v4172
    %s4175 = sld [smem:[#allocation2 + $0x19]]
    %v4176 = vstv %s4175
    %v4177 = vmul.f32 %v4176, %v4039
    %v4178 = vmul.f32 %v4176, %v4041
    %v4179 = vadd.f32 %v4173, %v4177
    %v4180 = vadd.f32 %v4174, %v4178
    %s4181 = sld [smem:[#allocation2 + $0x1a]]
    %v4182 = vstv %s4181
    %v4183 = vmul.f32 %v4182, %v4097
    %v4184 = vmul.f32 %v4182, %v4098
    %v4185 = vadd.f32 %v4179, %v4183
    %v4186 = vadd.f32 %v4180, %v4184
    %s4187 = sld [smem:[#allocation2 + $0x1b]]
    %v4188 = vstv %s4187
    %v4189 = vmul.f32 %v4188, %v4103
    %v4190 = vmul.f32 %v4188, %v4104
    %v4191 = vadd.f32 %v4185, %v4189
    %v4192 = vadd.f32 %v4186, %v4190
    %s4193 = sld [smem:[#allocation2 + $0x3a]]
    %v4194 = vstv %s4193
    %v4195 = vadd.f32 %v4191, %v4194
    %v4196 = vadd.f32 %v4192, %v4194
    %4197 = vrot.lane.b32.xlu0 %v4195, 127
    %v4198 = vpop.permute.xlu0 %4197
    %4199 = vrot.lane.b32.xlu0 %v4196, 127
    %v4200 = vpop.permute.xlu0 %4199
    %v4201 = vsel %vm4047, %v4198, %v4200
    %v4202 = vsel %vm4047, %v4200, %v4198
    %v4203 = vmax.f32 %v4195, %v4201
    %v4204 = vmax.f32 %v4196, %v4202
    %4205 = vrot.lane.b32.xlu0 %v4195, 126
    %v4206 = vpop.permute.xlu0 %4205
    %4207 = vrot.lane.b32.xlu0 %v4196, 126
    %v4208 = vpop.permute.xlu0 %4207
    %v4209 = vsel %vm4054, %v4206, %v4208
    %v4210 = vsel %vm4054, %v4208, %v4206
    %v4211 = vmax.f32 %v4203, %v4209
    %v4212 = vmax.f32 %v4204, %v4210
    %s4213 = sld [smem:[#allocation2 + $0x1c]]
    %v4214 = vstv %s4213
    %v4215 = vmul.f32 %v4214, %v3755
    %v4216 = vmul.f32 %v4214, %v3757
    %s4217 = sld [smem:[#allocation2 + $0x1d]]
    %v4218 = vstv %s4217
    %v4219 = vmul.f32 %v4218, %v4048
    %v4220 = vmul.f32 %v4218, %v4049
    %v4221 = vadd.f32 %v4215, %v4219
    %v4222 = vadd.f32 %v4216, %v4220
    %s4223 = sld [smem:[#allocation2 + $0x1e]]
    %v4224 = vstv %s4223
    %v4225 = vmul.f32 %v4224, %v4055
    %v4226 = vmul.f32 %v4224, %v4056
    %v4227 = vadd.f32 %v4221, %v4225
    %v4228 = vadd.f32 %v4222, %v4226
    %s4229 = sld [smem:[#allocation2 + $0x1f]]
    %v4230 = vstv %s4229
    %v4231 = vmul.f32 %v4230, %v3826
    %v4232 = vmul.f32 %v4230, %v3828
    %v4233 = vadd.f32 %v4227, %v4231
    %v4234 = vadd.f32 %v4228, %v4232
    %s4235 = sld [smem:[#allocation2 + $0x20]]
    %v4236 = vstv %s4235
    %v4237 = vmul.f32 %v4236, %v4061
    %v4238 = vmul.f32 %v4236, %v4062
    %v4239 = vadd.f32 %v4233, %v4237
    %v4240 = vadd.f32 %v4234, %v4238
    %s4241 = sld [smem:[#allocation2 + $0x21]]
    %v4242 = vstv %s4241
    %v4243 = vmul.f32 %v4242, %v4067
    %v4244 = vmul.f32 %v4242, %v4068
    %v4245 = vadd.f32 %v4239, %v4243
    %v4246 = vadd.f32 %v4240, %v4244
    %s4247 = sld [smem:[#allocation2 + $0x22]]
    %v4248 = vstv %s4247
    %v4249 = vmul.f32 %v4248, %v3897
    %v4250 = vmul.f32 %v4248, %v3899
    %v4251 = vadd.f32 %v4245, %v4249
    %v4252 = vadd.f32 %v4246, %v4250
    %s4253 = sld [smem:[#allocation2 + $0x23]]
    %v4254 = vstv %s4253
    %v4255 = vmul.f32 %v4254, %v4073
    %v4256 = vmul.f32 %v4254, %v4074
    %v4257 = vadd.f32 %v4251, %v4255
    %v4258 = vadd.f32 %v4252, %v4256
    %s4259 = sld [smem:[#allocation2 + $0x24]]
    %v4260 = vstv %s4259
    %v4261 = vmul.f32 %v4260, %v4079
    %v4262 = vmul.f32 %v4260, %v4080
    %v4263 = vadd.f32 %v4257, %v4261
    %v4264 = vadd.f32 %v4258, %v4262
    %s4265 = sld [smem:[#allocation2 + $0x25]]
    %v4266 = vstv %s4265
    %v4267 = vmul.f32 %v4266, %v3968
    %v4268 = vmul.f32 %v4266, %v3970
    %v4269 = vadd.f32 %v4263, %v4267
    %v4270 = vadd.f32 %v4264, %v4268
    %s4271 = sld [smem:[#allocation2 + $0x26]]
    %v4272 = vstv %s4271
    %v4273 = vmul.f32 %v4272, %v4085
    %v4274 = vmul.f32 %v4272, %v4086
    %v4275 = vadd.f32 %v4269, %v4273
    %v4276 = vadd.f32 %v4270, %v4274
    %s4277 = sld [smem:[#allocation2 + $0x27]]
    %v4278 = vstv %s4277
    %v4279 = vmul.f32 %v4278, %v4091
    %v4280 = vmul.f32 %v4278, %v4092
    %v4281 = vadd.f32 %v4275, %v4279
    %v4282 = vadd.f32 %v4276, %v4280
    %s4283 = sld [smem:[#allocation2 + $0x28]]
    %v4284 = vstv %s4283
    %v4285 = vmul.f32 %v4284, %v4039
    %v4286 = vmul.f32 %v4284, %v4041
    %v4287 = vadd.f32 %v4281, %v4285
    %v4288 = vadd.f32 %v4282, %v4286
    %s4289 = sld [smem:[#allocation2 + $0x29]]
    %v4290 = vstv %s4289
    %v4291 = vmul.f32 %v4290, %v4097
    %v4292 = vmul.f32 %v4290, %v4098
    %v4293 = vadd.f32 %v4287, %v4291
    %v4294 = vadd.f32 %v4288, %v4292
    %s4295 = sld [smem:[#allocation2 + $0x2a]]
    %v4296 = vstv %s4295
    %v4297 = vmul.f32 %v4296, %v4103
    %v4298 = vmul.f32 %v4296, %v4104
    %v4299 = vadd.f32 %v4293, %v4297
    %v4300 = vadd.f32 %v4294, %v4298
    %s4301 = sld [smem:[#allocation2 + $0x3b]]
    %v4302 = vstv %s4301
    %v4303 = vadd.f32 %v4299, %v4302
    %v4304 = vadd.f32 %v4300, %v4302
    %4305 = vrot.lane.b32.xlu0 %v4303, 127
    %v4306 = vpop.permute.xlu0 %4305
    %4307 = vrot.lane.b32.xlu0 %v4304, 127
    %v4308 = vpop.permute.xlu0 %4307
    %v4309 = vsel %vm4047, %v4306, %v4308
    %v4310 = vsel %vm4047, %v4308, %v4306
    %v4311 = vmax.f32 %v4303, %v4309
    %v4312 = vmax.f32 %v4304, %v4310
    %4313 = vrot.lane.b32.xlu0 %v4303, 126
    %v4314 = vpop.permute.xlu0 %4313
    %4315 = vrot.lane.b32.xlu0 %v4304, 126
    %v4316 = vpop.permute.xlu0 %4315
    %v4317 = vsel %vm4054, %v4314, %v4316
    %v4318 = vsel %vm4054, %v4316, %v4314
    %v4319 = vmax.f32 %v4311, %v4317
    %v4320 = vmax.f32 %v4312, %v4318
    %s4321 = sld [smem:[#allocation2 + $0x2b]]
    %v4322 = vstv %s4321
    %v4323 = vmul.f32 %v4322, %v3755
    %v4324 = vmul.f32 %v4322, %v3757
    %s4325 = sld [smem:[#allocation2 + $0x2c]]
    %v4326 = vstv %s4325
    %v4327 = vmul.f32 %v4326, %v4048
    %v4328 = vmul.f32 %v4326, %v4049
    %v4329 = vadd.f32 %v4323, %v4327
    %v4330 = vadd.f32 %v4324, %v4328
    %s4331 = sld [smem:[#allocation2 + $0x2d]]
    %v4332 = vstv %s4331
    %v4333 = vmul.f32 %v4332, %v4055
    %v4334 = vmul.f32 %v4332, %v4056
    %v4335 = vadd.f32 %v4329, %v4333
    %v4336 = vadd.f32 %v4330, %v4334
    %s4337 = sld [smem:[#allocation2 + $0x2e]]
    %v4338 = vstv %s4337
    %v4339 = vmul.f32 %v4338, %v3826
    %v4340 = vmul.f32 %v4338, %v3828
    %v4341 = vadd.f32 %v4335, %v4339
    %v4342 = vadd.f32 %v4336, %v4340
    %s4343 = sld [smem:[#allocation2 + $0x2f]]
    %v4344 = vstv %s4343
    %v4345 = vmul.f32 %v4344, %v4061
    %v4346 = vmul.f32 %v4344, %v4062
    %v4347 = vadd.f32 %v4341, %v4345
    %v4348 = vadd.f32 %v4342, %v4346
    %s4349 = sld [smem:[#allocation2 + $0x30]]
    %v4350 = vstv %s4349
    %v4351 = vmul.f32 %v4350, %v4067
    %v4352 = vmul.f32 %v4350, %v4068
    %v4353 = vadd.f32 %v4347, %v4351
    %v4354 = vadd.f32 %v4348, %v4352
    %s4355 = sld [smem:[#allocation2 + $0x31]]
    %v4356 = vstv %s4355
    %v4357 = vmul.f32 %v4356, %v3897
    %v4358 = vmul.f32 %v4356, %v3899
    %v4359 = vadd.f32 %v4353, %v4357
    %v4360 = vadd.f32 %v4354, %v4358
    %s4361 = sld [smem:[#allocation2 + $0x32]]
    %v4362 = vstv %s4361
    %v4363 = vmul.f32 %v4362, %v4073
    %v4364 = vmul.f32 %v4362, %v4074
    %v4365 = vadd.f32 %v4359, %v4363
    %v4366 = vadd.f32 %v4360, %v4364
    %s4367 = sld [smem:[#allocation2 + $0x33]]
    %v4368 = vstv %s4367
    %v4369 = vmul.f32 %v4368, %v4079
    %v4370 = vmul.f32 %v4368, %v4080
    %v4371 = vadd.f32 %v4365, %v4369
    %v4372 = vadd.f32 %v4366, %v4370
    %s4373 = sld [smem:[#allocation2 + $0x34]]
    %v4374 = vstv %s4373
    %v4375 = vmul.f32 %v4374, %v3968
    %v4376 = vmul.f32 %v4374, %v3970
    %v4377 = vadd.f32 %v4371, %v4375
    %v4378 = vadd.f32 %v4372, %v4376
    %s4379 = sld [smem:[#allocation2 + $0x35]]
    %v4380 = vstv %s4379
    %v4381 = vmul.f32 %v4380, %v4085
    %v4382 = vmul.f32 %v4380, %v4086
    %v4383 = vadd.f32 %v4377, %v4381
    %v4384 = vadd.f32 %v4378, %v4382
    %s4385 = sld [smem:[#allocation2 + $0x36]]
    %v4386 = vstv %s4385
    %v4387 = vmul.f32 %v4386, %v4091
    %v4388 = vmul.f32 %v4386, %v4092
    %v4389 = vadd.f32 %v4383, %v4387
    %v4390 = vadd.f32 %v4384, %v4388
    %s4391 = sld [smem:[#allocation2 + $0x37]]
    %v4392 = vstv %s4391
    %v4393 = vmul.f32 %v4392, %v4039
    %v4394 = vmul.f32 %v4392, %v4041
    %v4395 = vadd.f32 %v4389, %v4393
    %v4396 = vadd.f32 %v4390, %v4394
    %s4397 = sld [smem:[#allocation2 + $0x38]]
    %v4398 = vstv %s4397
    %v4399 = vmul.f32 %v4398, %v4097
    %v4400 = vmul.f32 %v4398, %v4098
    %v4401 = vadd.f32 %v4395, %v4399
    %v4402 = vadd.f32 %v4396, %v4400
    %s4403 = sld [smem:[#allocation2 + $0x39]]
    %v4404 = vstv %s4403
    %v4405 = vmul.f32 %v4404, %v4103
    %v4406 = vmul.f32 %v4404, %v4104
    %v4407 = vadd.f32 %v4401, %v4405
    %v4408 = vadd.f32 %v4402, %v4406
    %s4409 = sld [smem:[#allocation2 + $0x3c]]
    %v4410 = vstv %s4409
    %v4411 = vadd.f32 %v4407, %v4410
    %v4412 = vadd.f32 %v4408, %v4410
    %4413 = vrot.lane.b32.xlu0 %v4411, 127
    %v4414 = vpop.permute.xlu0 %4413
    %4415 = vrot.lane.b32.xlu0 %v4412, 127
    %v4416 = vpop.permute.xlu0 %4415
    %v4417 = vsel %vm4047, %v4414, %v4416
    %v4418 = vsel %vm4047, %v4416, %v4414
    %v4419 = vmax.f32 %v4411, %v4417
    %v4420 = vmax.f32 %v4412, %v4418
    %4421 = vrot.lane.b32.xlu0 %v4411, 126
    %v4422 = vpop.permute.xlu0 %4421
    %4423 = vrot.lane.b32.xlu0 %v4412, 126
    %v4424 = vpop.permute.xlu0 %4423
    %v4425 = vsel %vm4054, %v4422, %v4424
    %v4426 = vsel %vm4054, %v4424, %v4422
    %v4427 = vmax.f32 %v4419, %v4425
    %v4428 = vmax.f32 %v4420, %v4426
    %4429 = vrot.lane.b32.xlu0 %v4211, 127
    %v4430 = vpop.permute.xlu0 %4429
    %4431 = vrot.lane.b32.xlu0 %v4212, 127
    %v4432 = vpop.permute.xlu0 %4431
    %v4433 = vsel %vm4047, %v4430, %v4432
    %v4434 = vsel %vm4047, %v4432, %v4430
    %4435 = vrot.lane.b32.xlu0 %v4211, 126
    %v4436 = vpop.permute.xlu0 %4435
    %4437 = vrot.lane.b32.xlu0 %v4212, 126
    %v4438 = vpop.permute.xlu0 %4437
    %v4439 = vsel %vm4054, %v4436, %v4438
    %v4440 = vsel %vm4054, %v4438, %v4436
    %4441 = vrot.lane.b32.xlu0 %v4319, 127
    %v4442 = vpop.permute.xlu0 %4441
    %4443 = vrot.lane.b32.xlu0 %v4320, 127
    %v4444 = vpop.permute.xlu0 %4443
    %v4445 = vsel %vm4047, %v4442, %v4444
    %v4446 = vsel %vm4047, %v4444, %v4442
    %4447 = vrot.lane.b32.xlu0 %v4319, 126
    %v4448 = vpop.permute.xlu0 %4447
    %4449 = vrot.lane.b32.xlu0 %v4320, 126
    %v4450 = vpop.permute.xlu0 %4449
    %v4451 = vsel %vm4054, %v4448, %v4450
    %v4452 = vsel %vm4054, %v4450, %v4448
    %4453 = vrot.lane.b32.xlu0 %v4427, 127
    %v4454 = vpop.permute.xlu0 %4453
    %4455 = vrot.lane.b32.xlu0 %v4428, 127
    %v4456 = vpop.permute.xlu0 %4455
    %v4457 = vsel %vm4047, %v4454, %v4456
    %v4458 = vsel %vm4047, %v4456, %v4454
    %4459 = vrot.lane.b32.xlu0 %v4427, 126
    %v4460 = vpop.permute.xlu0 %4459
    %4461 = vrot.lane.b32.xlu0 %v4428, 126
    %v4462 = vpop.permute.xlu0 %4461
    %v4463 = vsel %vm4054, %v4460, %v4462
    %v4464 = vsel %vm4054, %v4462, %v4460
    %s4465 = sld [smem:[#allocation2 + $0x3d]]
    %v4466 = vstv %s4465
    %v4467 = vmul.f32 %v4466, %v4211
    %v4468 = vmul.f32 %v4466, %v4212
    %s4469 = sld [smem:[#allocation2 + $0x3e]]
    %v4470 = vstv %s4469
    %v4471 = vmul.f32 %v4470, %v4433
    %v4472 = vmul.f32 %v4470, %v4434
    %v4473 = vadd.f32 %v4467, %v4471
    %v4474 = vadd.f32 %v4468, %v4472
    %s4475 = sld [smem:[#allocation2 + $0x3f]]
    %v4476 = vstv %s4475
    %v4477 = vmul.f32 %v4476, %v4439
    %v4478 = vmul.f32 %v4476, %v4440
    %v4479 = vadd.f32 %v4473, %v4477
    %v4480 = vadd.f32 %v4474, %v4478
    %s4481 = sld [smem:[#allocation2 + $0x40]]
    %v4482 = vstv %s4481
    %v4483 = vmul.f32 %v4482, %v4319
    %v4484 = vmul.f32 %v4482, %v4320
    %v4485 = vadd.f32 %v4479, %v4483
    %v4486 = vadd.f32 %v4480, %v4484
    %s4487 = sld [smem:[#allocation2 + $0x41]]
    %v4488 = vstv %s4487
    %v4489 = vmul.f32 %v4488, %v4445
    %v4490 = vmul.f32 %v4488, %v4446
    %v4491 = vadd.f32 %v4485, %v4489
    %v4492 = vadd.f32 %v4486, %v4490
    %s4493 = sld [smem:[#allocation2 + $0x42]]
    %v4494 = vstv %s4493
    %v4495 = vmul.f32 %v4494, %v4451
    %v4496 = vmul.f32 %v4494, %v4452
    %v4497 = vadd.f32 %v4491, %v4495
    %v4498 = vadd.f32 %v4492, %v4496
    %s4499 = sld [smem:[#allocation2 + $0x43]]
    %v4500 = vstv %s4499
    %v4501 = vmul.f32 %v4500, %v4427
    %v4502 = vmul.f32 %v4500, %v4428
    %v4503 = vadd.f32 %v4497, %v4501
    %v4504 = vadd.f32 %v4498, %v4502
    %s4505 = sld [smem:[#allocation2 + $0x44]]
    %v4506 = vstv %s4505
    %v4507 = vmul.f32 %v4506, %v4457
    %v4508 = vmul.f32 %v4506, %v4458
    %v4509 = vadd.f32 %v4503, %v4507
    %v4510 = vadd.f32 %v4504, %v4508
    %s4511 = sld [smem:[#allocation2 + $0x45]]
    %v4512 = vstv %s4511
    %v4513 = vmul.f32 %v4512, %v4463
    %v4514 = vmul.f32 %v4512, %v4464
    %v4515 = vadd.f32 %v4509, %v4513
    %v4516 = vadd.f32 %v4510, %v4514
    %s4517 = sld [smem:[#allocation2 + $0x46]]
    %v4518 = vstv %s4517
    %v4519 = vadd.f32 %v4515, %v4518
    %v4520 = vadd.f32 %v4516, %v4518
    %4521 = vrot.lane.b32.xlu0 %v4519, 127
    %v4522 = vpop.permute.xlu0 %4521
    %4523 = vrot.lane.b32.xlu0 %v4520, 127
    %v4524 = vpop.permute.xlu0 %4523
    %v4525 = vsel %vm4047, %v4522, %v4524
    %v4526 = vsel %vm4047, %v4524, %v4522
    %v4527 = vmax.f32 %v4519, %v4525
    %v4528 = vmax.f32 %v4520, %v4526
    %4529 = vrot.lane.b32.xlu0 %v4519, 126
    %v4530 = vpop.permute.xlu0 %4529
    %4531 = vrot.lane.b32.xlu0 %v4520, 126
    %v4532 = vpop.permute.xlu0 %4531
    %v4533 = vsel %vm4054, %v4530, %v4532
    %v4534 = vsel %vm4054, %v4532, %v4530
    %v4535 = vmax.f32 %v4527, %v4533
    %v4536 = vmax.f32 %v4528, %v4534
    %v4537 = vld [vmem:[%s4] sm:$0xff]
    %v4538 = vld [vmem:[%s4 + $0x8] sm:$0xff]
    %v4539 = vld [vmem:[%s4 + $0x10] sm:$0xff]
    %v4540 = vld [vmem:[%s4 + $0x18] sm:$0xff]
    %v4541 = vld [vmem:[%s4 + $0x20] sm:$0xff]
    %v4542 = vld [vmem:[%s4 + $0x28] sm:$0xff]
    %v4543 = vld [vmem:[%s4 + $0x30] sm:$0xff]
    %v4544 = vld [vmem:[%s4 + $0x38] sm:$0xff]
    %v4545 = vld [vmem:[%s4 + $0x40] sm:$0xff]
    %v4546 = vld [vmem:[%s4 + $0x48] sm:$0xff]
    %v4547 = vld [vmem:[%s4 + $0x50] sm:$0xff]
    %v4548 = vld [vmem:[%s4 + $0x58] sm:$0xff]
    %v4549 = vld [vmem:[%s4 + $0x60] sm:$0xff]
    %v4550 = vld [vmem:[%s4 + $0x68] sm:$0xff]
    %v4551 = vld [vmem:[%s4 + $0x70] sm:$0xff]
    %v4552 = vld [vmem:[%s4 + $0x78] sm:$0xff]
    %v4553 = vld [vmem:[%s4 + $0x80] sm:$0xff]
    %v4554 = vld [vmem:[%s4 + $0x88] sm:$0xff]
    %v4555 = vld [vmem:[%s4 + $0x90] sm:$0xff]
    %v4556 = vld [vmem:[%s4 + $0x98] sm:$0xff]
    %v4557 = vld [vmem:[%s4 + $0xa0] sm:$0xff]
    %v4558 = vld [vmem:[%s4 + $0xa8] sm:$0xff]
    %v4559 = vld [vmem:[%s4 + $0xb0] sm:$0xff]
    %v4560 = vld [vmem:[%s4 + $0xb8] sm:$0xff]
    %v4561 = vld [vmem:[%s4 + $0xc0] sm:$0xff]
    %v4562 = vld [vmem:[%s4 + $0xc8] sm:$0xff]
    %v4563 = vld [vmem:[%s4 + $0xd0] sm:$0xff]
    %v4564 = vld [vmem:[%s4 + $0xd8] sm:$0xff]
    %v4565 = vld [vmem:[%s4 + $0xe0] sm:$0xff]
    %v4566 = vld [vmem:[%s4 + $0xe8] sm:$0xff]
    %v4567 = vld [vmem:[%s4 + $0xf0] sm:$0xff]
    %v4568 = vld [vmem:[%s4 + $0xf8] sm:$0xff]
    %4569 = vmatprep.subr.mxu0 0.0
    %4570 = vmatpush1.msra.mxu0 %v4537
    %4571 = vmatprep.subr.mxu0 0.0
    %4572 = vmatpush1.msra.mxu0 %v4538
    %4573 = vmatprep.subr.mxu0 0.0
    %4574 = vmatpush1.msra.mxu0 %v4539
    %4575 = vmatprep.subr.mxu0 0.0
    %4576 = vmatpush1.msra.mxu0 %v4540
    %4577 = vmatprep.subr.mxu0 0.0
    %4578 = vmatpush1.msra.mxu0 %v4541
    %4579 = vmatprep.subr.mxu0 0.0
    %4580 = vmatpush1.msra.mxu0 %v4542
    %4581 = vmatprep.subr.mxu0 0.0
    %4582 = vmatpush1.msra.mxu0 %v4543
    %4583 = vmatprep.subr.mxu0 0.0
    %4584 = vmatpush1.msra.mxu0 %v4544
    %4585 = vmatprep.subr.mxu0 0.0
    %4586 = vmatpush1.msra.mxu0 %v4545
    %4587 = vmatprep.subr.mxu0 0.0
    %4588 = vmatpush1.msra.mxu0 %v4546
    %4589 = vmatprep.subr.mxu0 0.0
    %4590 = vmatpush1.msra.mxu0 %v4547
    %4591 = vmatprep.subr.mxu0 0.0
    %4592 = vmatpush1.msra.mxu0 %v4548
    %4593 = vmatprep.subr.mxu0 0.0
    %4594 = vmatpush1.msra.mxu0 %v4549
    %4595 = vmatprep.subr.mxu0 0.0
    %4596 = vmatpush1.msra.mxu0 %v4550
    %4597 = vmatprep.subr.mxu0 0.0
    %4598 = vmatpush1.msra.mxu0 %v4551
    %4599 = vmatprep.subr.mxu0 0.0
    %4600 = vmatpush1.msra.mxu0 %v4552
    %4601 = vmatprep.subr.mxu0 0.0
    %4602 = vmatpush1.msra.mxu0 %v4553
    %4603 = vmatprep.subr.mxu0 0.0
    %4604 = vmatpush1.msra.mxu0 %v4554
    %4605 = vmatprep.subr.mxu0 0.0
    %4606 = vmatpush1.msra.mxu0 %v4555
    %4607 = vmatprep.subr.mxu0 0.0
    %4608 = vmatpush1.msra.mxu0 %v4556
    %4609 = vmatprep.subr.mxu0 0.0
    %4610 = vmatpush1.msra.mxu0 %v4557
    %4611 = vmatprep.subr.mxu0 0.0
    %4612 = vmatpush1.msra.mxu0 %v4558
    %4613 = vmatprep.subr.mxu0 0.0
    %4614 = vmatpush1.msra.mxu0 %v4559
    %4615 = vmatprep.subr.mxu0 0.0
    %4616 = vmatpush1.msra.mxu0 %v4560
    %4617 = vmatprep.subr.mxu0 0.0
    %4618 = vmatpush1.msra.mxu0 %v4561
    %4619 = vmatprep.subr.mxu0 0.0
    %4620 = vmatpush1.msra.mxu0 %v4562
    %4621 = vmatprep.subr.mxu0 0.0
    %4622 = vmatpush1.msra.mxu0 %v4563
    %4623 = vmatprep.subr.mxu0 0.0
    %4624 = vmatpush1.msra.mxu0 %v4564
    %4625 = vmatprep.subr.mxu0 0.0
    %4626 = vmatpush1.msra.mxu0 %v4565
    %4627 = vmatprep.subr.mxu0 0.0
    %4628 = vmatpush1.msra.mxu0 %v4566
    %4629 = vmatprep.subr.mxu0 0.0
    %4630 = vmatpush1.msra.mxu0 %v4567
    %4631 = vmatprep.subr.mxu0 0.0
    %4632 = vmatpush1.msra.mxu0 %v4568
    %4633 = vmatprep.mubr.f32.mxu0 %v4536
    %4634 = vmatmul.mubr.f32.gmra.mrb[0].mxu0 %v4535
    %v4635 = vpop.f32.mrb[0].mxu0
    %v4636 = vadd.f32 0.0, %v4635
    %v4637 = vpop.f32.mrb[0].mxu0
    %4638 = vdwg.mxu0
    %v4639 = vadd.f32 %v1278, %v4636
    %v4640 = vld [vmem:[%s3] sm:$0xff]
    %v4641 = vld [vmem:[%s3 + $0x8] sm:$0xff]
    %v4642 = vld [vmem:[%s3 + $0x10] sm:$0xff]
    %v4643 = vld [vmem:[%s3 + $0x18] sm:$0xff]
    %v4644 = vld [vmem:[%s3 + $0x20] sm:$0xff]
    %v4645 = vld [vmem:[%s3 + $0x28] sm:$0xff]
    %v4646 = vld [vmem:[%s3 + $0x30] sm:$0xff]
    %v4647 = vld [vmem:[%s3 + $0x38] sm:$0xff]
    %v4648 = vld [vmem:[%s3 + $0x40] sm:$0xff]
    %v4649 = vld [vmem:[%s3 + $0x48] sm:$0xff]
    %v4650 = vld [vmem:[%s3 + $0x50] sm:$0xff]
    %v4651 = vld [vmem:[%s3 + $0x58] sm:$0xff]
    %v4652 = vld [vmem:[%s3 + $0x60] sm:$0xff]
    %v4653 = vld [vmem:[%s3 + $0x68] sm:$0xff]
    %v4654 = vld [vmem:[%s3 + $0x70] sm:$0xff]
    %v4655 = vld [vmem:[%s3 + $0x78] sm:$0xff]
    %v4656 = vld [vmem:[%s3 + $0x80] sm:$0xff]
    %v4657 = vld [vmem:[%s3 + $0x88] sm:$0xff]
    %v4658 = vld [vmem:[%s3 + $0x90] sm:$0xff]
    %v4659 = vld [vmem:[%s3 + $0x98] sm:$0xff]
    %v4660 = vld [vmem:[%s3 + $0xa0] sm:$0xff]
    %v4661 = vld [vmem:[%s3 + $0xa8] sm:$0xff]
    %v4662 = vld [vmem:[%s3 + $0xb0] sm:$0xff]
    %v4663 = vld [vmem:[%s3 + $0xb8] sm:$0xff]
    %v4664 = vld [vmem:[%s3 + $0xc0] sm:$0xff]
    %v4665 = vld [vmem:[%s3 + $0xc8] sm:$0xff]
    %v4666 = vld [vmem:[%s3 + $0xd0] sm:$0xff]
    %v4667 = vld [vmem:[%s3 + $0xd8] sm:$0xff]
    %v4668 = vld [vmem:[%s3 + $0xe0] sm:$0xff]
    %v4669 = vld [vmem:[%s3 + $0xe8] sm:$0xff]
    %v4670 = vld [vmem:[%s3 + $0xf0] sm:$0xff]
    %v4671 = vld [vmem:[%s3 + $0xf8] sm:$0xff]
    %v4672 = vld [vmem:[%s3 + $0x100] sm:$0xff]
    %v4673 = vld [vmem:[%s3 + $0x108] sm:$0xff]
    %v4674 = vld [vmem:[%s3 + $0x110] sm:$0xff]
    %v4675 = vld [vmem:[%s3 + $0x118] sm:$0xff]
    %v4676 = vld [vmem:[%s3 + $0x120] sm:$0xff]
    %v4677 = vld [vmem:[%s3 + $0x128] sm:$0xff]
    %v4678 = vld [vmem:[%s3 + $0x130] sm:$0xff]
    %v4679 = vld [vmem:[%s3 + $0x138] sm:$0xff]
    %v4680 = vld [vmem:[%s3 + $0x140] sm:$0xff]
    %v4681 = vld [vmem:[%s3 + $0x148] sm:$0xff]
    %v4682 = vld [vmem:[%s3 + $0x150] sm:$0xff]
    %v4683 = vld [vmem:[%s3 + $0x158] sm:$0xff]
    %v4684 = vld [vmem:[%s3 + $0x160] sm:$0xff]
    %v4685 = vld [vmem:[%s3 + $0x168] sm:$0xff]
    %v4686 = vld [vmem:[%s3 + $0x170] sm:$0xff]
    %v4687 = vld [vmem:[%s3 + $0x178] sm:$0xff]
    %v4688 = vld [vmem:[%s3 + $0x180] sm:$0xff]
    %v4689 = vld [vmem:[%s3 + $0x188] sm:$0xff]
    %v4690 = vld [vmem:[%s3 + $0x190] sm:$0xff]
    %v4691 = vld [vmem:[%s3 + $0x198] sm:$0xff]
    %v4692 = vld [vmem:[%s3 + $0x1a0] sm:$0xff]
    %v4693 = vld [vmem:[%s3 + $0x1a8] sm:$0xff]
    %v4694 = vld [vmem:[%s3 + $0x1b0] sm:$0xff]
    %v4695 = vld [vmem:[%s3 + $0x1b8] sm:$0xff]
    %v4696 = vld [vmem:[%s3 + $0x1c0] sm:$0xff]
    %v4697 = vld [vmem:[%s3 + $0x1c8] sm:$0xff]
    %v4698 = vld [vmem:[%s3 + $0x1d0] sm:$0xff]
    %v4699 = vld [vmem:[%s3 + $0x1d8] sm:$0xff]
    %v4700 = vld [vmem:[%s3 + $0x1e0] sm:$0xff]
    %v4701 = vld [vmem:[%s3 + $0x1e8] sm:$0xff]
    %v4702 = vld [vmem:[%s3 + $0x1f0] sm:$0xff]
    %v4703 = vld [vmem:[%s3 + $0x1f8] sm:$0xff]
    %4705 = vset.pattern.permute.xlu0 2
    %4706 = vperm.xlu0 %4705, %v4640
    %v4707 = vpop.permute.xlu0 %4706
    %4710 = vset.pattern.permute.xlu0 2
    %4711 = vperm.xlu0 %4710, %v4641
    %v4712 = vpop.permute.xlu0 %4711
    %4715 = vset.pattern.permute.xlu0 2
    %4716 = vperm.xlu0 %4715, %v4642
    %v4717 = vpop.permute.xlu0 %4716
    %4720 = vset.pattern.permute.xlu0 2
    %4721 = vperm.xlu0 %4720, %v4643
    %v4722 = vpop.permute.xlu0 %4721
    %4725 = vset.pattern.permute.xlu0 2
    %4726 = vperm.xlu0 %4725, %v4644
    %v4727 = vpop.permute.xlu0 %4726
    %4730 = vset.pattern.permute.xlu0 2
    %4731 = vperm.xlu0 %4730, %v4645
    %v4732 = vpop.permute.xlu0 %4731
    %4735 = vset.pattern.permute.xlu0 2
    %4736 = vperm.xlu0 %4735, %v4646
    %v4737 = vpop.permute.xlu0 %4736
    %4740 = vset.pattern.permute.xlu0 2
    %4741 = vperm.xlu0 %4740, %v4647
    %v4742 = vpop.permute.xlu0 %4741
    %4745 = vset.pattern.permute.xlu0 2
    %4746 = vperm.xlu0 %4745, %v4648
    %v4747 = vpop.permute.xlu0 %4746
    %4750 = vset.pattern.permute.xlu0 2
    %4751 = vperm.xlu0 %4750, %v4649
    %v4752 = vpop.permute.xlu0 %4751
    %4755 = vset.pattern.permute.xlu0 2
    %4756 = vperm.xlu0 %4755, %v4650
    %v4757 = vpop.permute.xlu0 %4756
    %4760 = vset.pattern.permute.xlu0 2
    %4761 = vperm.xlu0 %4760, %v4651
    %v4762 = vpop.permute.xlu0 %4761
    %4765 = vset.pattern.permute.xlu0 2
    %4766 = vperm.xlu0 %4765, %v4652
    %v4767 = vpop.permute.xlu0 %4766
    %4770 = vset.pattern.permute.xlu0 2
    %4771 = vperm.xlu0 %4770, %v4653
    %v4772 = vpop.permute.xlu0 %4771
    %4775 = vset.pattern.permute.xlu0 2
    %4776 = vperm.xlu0 %4775, %v4654
    %v4777 = vpop.permute.xlu0 %4776
    %4780 = vset.pattern.permute.xlu0 2
    %4781 = vperm.xlu0 %4780, %v4655
    %v4782 = vpop.permute.xlu0 %4781
    %4785 = vset.pattern.permute.xlu0 2
    %4786 = vperm.xlu0 %4785, %v4656
    %v4787 = vpop.permute.xlu0 %4786
    %4790 = vset.pattern.permute.xlu0 2
    %4791 = vperm.xlu0 %4790, %v4657
    %v4792 = vpop.permute.xlu0 %4791
    %4795 = vset.pattern.permute.xlu0 2
    %4796 = vperm.xlu0 %4795, %v4658
    %v4797 = vpop.permute.xlu0 %4796
    %4800 = vset.pattern.permute.xlu0 2
    %4801 = vperm.xlu0 %4800, %v4659
    %v4802 = vpop.permute.xlu0 %4801
    %4805 = vset.pattern.permute.xlu0 2
    %4806 = vperm.xlu0 %4805, %v4660
    %v4807 = vpop.permute.xlu0 %4806
    %4810 = vset.pattern.permute.xlu0 2
    %4811 = vperm.xlu0 %4810, %v4661
    %v4812 = vpop.permute.xlu0 %4811
    %4815 = vset.pattern.permute.xlu0 2
    %4816 = vperm.xlu0 %4815, %v4662
    %v4817 = vpop.permute.xlu0 %4816
    %4820 = vset.pattern.permute.xlu0 2
    %4821 = vperm.xlu0 %4820, %v4663
    %v4822 = vpop.permute.xlu0 %4821
    %4825 = vset.pattern.permute.xlu0 2
    %4826 = vperm.xlu0 %4825, %v4664
    %v4827 = vpop.permute.xlu0 %4826
    %4830 = vset.pattern.permute.xlu0 2
    %4831 = vperm.xlu0 %4830, %v4665
    %v4832 = vpop.permute.xlu0 %4831
    %4835 = vset.pattern.permute.xlu0 2
    %4836 = vperm.xlu0 %4835, %v4666
    %v4837 = vpop.permute.xlu0 %4836
    %4840 = vset.pattern.permute.xlu0 2
    %4841 = vperm.xlu0 %4840, %v4667
    %v4842 = vpop.permute.xlu0 %4841
    %4845 = vset.pattern.permute.xlu0 2
    %4846 = vperm.xlu0 %4845, %v4668
    %v4847 = vpop.permute.xlu0 %4846
    %4850 = vset.pattern.permute.xlu0 2
    %4851 = vperm.xlu0 %4850, %v4669
    %v4852 = vpop.permute.xlu0 %4851
    %4855 = vset.pattern.permute.xlu0 2
    %4856 = vperm.xlu0 %4855, %v4670
    %v4857 = vpop.permute.xlu0 %4856
    %4860 = vset.pattern.permute.xlu0 2
    %4861 = vperm.xlu0 %4860, %v4671
    %v4862 = vpop.permute.xlu0 %4861
    %4865 = vset.pattern.permute.xlu0 2
    %4866 = vperm.xlu0 %4865, %v4672
    %v4867 = vpop.permute.xlu0 %4866
    %4870 = vset.pattern.permute.xlu0 2
    %4871 = vperm.xlu0 %4870, %v4673
    %v4872 = vpop.permute.xlu0 %4871
    %4875 = vset.pattern.permute.xlu0 2
    %4876 = vperm.xlu0 %4875, %v4674
    %v4877 = vpop.permute.xlu0 %4876
    %4880 = vset.pattern.permute.xlu0 2
    %4881 = vperm.xlu0 %4880, %v4675
    %v4882 = vpop.permute.xlu0 %4881
    %4885 = vset.pattern.permute.xlu0 2
    %4886 = vperm.xlu0 %4885, %v4676
    %v4887 = vpop.permute.xlu0 %4886
    %4890 = vset.pattern.permute.xlu0 2
    %4891 = vperm.xlu0 %4890, %v4677
    %v4892 = vpop.permute.xlu0 %4891
    %4895 = vset.pattern.permute.xlu0 2
    %4896 = vperm.xlu0 %4895, %v4678
    %v4897 = vpop.permute.xlu0 %4896
    %4900 = vset.pattern.permute.xlu0 2
    %4901 = vperm.xlu0 %4900, %v4679
    %v4902 = vpop.permute.xlu0 %4901
    %4905 = vset.pattern.permute.xlu0 2
    %4906 = vperm.xlu0 %4905, %v4680
    %v4907 = vpop.permute.xlu0 %4906
    %4910 = vset.pattern.permute.xlu0 2
    %4911 = vperm.xlu0 %4910, %v4681
    %v4912 = vpop.permute.xlu0 %4911
    %4915 = vset.pattern.permute.xlu0 2
    %4916 = vperm.xlu0 %4915, %v4682
    %v4917 = vpop.permute.xlu0 %4916
    %4920 = vset.pattern.permute.xlu0 2
    %4921 = vperm.xlu0 %4920, %v4683
    %v4922 = vpop.permute.xlu0 %4921
    %4925 = vset.pattern.permute.xlu0 2
    %4926 = vperm.xlu0 %4925, %v4684
    %v4927 = vpop.permute.xlu0 %4926
    %4930 = vset.pattern.permute.xlu0 2
    %4931 = vperm.xlu0 %4930, %v4685
    %v4932 = vpop.permute.xlu0 %4931
    %4935 = vset.pattern.permute.xlu0 2
    %4936 = vperm.xlu0 %4935, %v4686
    %v4937 = vpop.permute.xlu0 %4936
    %4940 = vset.pattern.permute.xlu0 2
    %4941 = vperm.xlu0 %4940, %v4687
    %v4942 = vpop.permute.xlu0 %4941
    %4945 = vset.pattern.permute.xlu0 2
    %4946 = vperm.xlu0 %4945, %v4688
    %v4947 = vpop.permute.xlu0 %4946
    %4950 = vset.pattern.permute.xlu0 2
    %4951 = vperm.xlu0 %4950, %v4689
    %v4952 = vpop.permute.xlu0 %4951
    %4955 = vset.pattern.permute.xlu0 2
    %4956 = vperm.xlu0 %4955, %v4690
    %v4957 = vpop.permute.xlu0 %4956
    %4960 = vset.pattern.permute.xlu0 2
    %4961 = vperm.xlu0 %4960, %v4691
    %v4962 = vpop.permute.xlu0 %4961
    %4965 = vset.pattern.permute.xlu0 2
    %4966 = vperm.xlu0 %4965, %v4692
    %v4967 = vpop.permute.xlu0 %4966
    %4970 = vset.pattern.permute.xlu0 2
    %4971 = vperm.xlu0 %4970, %v4693
    %v4972 = vpop.permute.xlu0 %4971
    %4975 = vset.pattern.permute.xlu0 2
    %4976 = vperm.xlu0 %4975, %v4694
    %v4977 = vpop.permute.xlu0 %4976
    %4980 = vset.pattern.permute.xlu0 2
    %4981 = vperm.xlu0 %4980, %v4695
    %v4982 = vpop.permute.xlu0 %4981
    %4985 = vset.pattern.permute.xlu0 2
    %4986 = vperm.xlu0 %4985, %v4696
    %v4987 = vpop.permute.xlu0 %4986
    %4990 = vset.pattern.permute.xlu0 2
    %4991 = vperm.xlu0 %4990, %v4697
    %v4992 = vpop.permute.xlu0 %4991
    %4995 = vset.pattern.permute.xlu0 2
    %4996 = vperm.xlu0 %4995, %v4698
    %v4997 = vpop.permute.xlu0 %4996
    %5000 = vset.pattern.permute.xlu0 2
    %5001 = vperm.xlu0 %5000, %v4699
    %v5002 = vpop.permute.xlu0 %5001
    %5005 = vset.pattern.permute.xlu0 2
    %5006 = vperm.xlu0 %5005, %v4700
    %v5007 = vpop.permute.xlu0 %5006
    %5010 = vset.pattern.permute.xlu0 2
    %5011 = vperm.xlu0 %5010, %v4701
    %v5012 = vpop.permute.xlu0 %5011
    %5015 = vset.pattern.permute.xlu0 2
    %5016 = vperm.xlu0 %5015, %v4702
    %v5017 = vpop.permute.xlu0 %5016
    %5020 = vset.pattern.permute.xlu0 2
    %5021 = vperm.xlu0 %5020, %v4703
    %v5022 = vpop.permute.xlu0 %5021
    %v5024 = vsel %vm794, %v4707, 0.0
    %v5025 = vsel %vm795, %v4707, 0.0
    %v5026 = vsel %vm796, %v4712, 0.0
    %v5027 = vsel %vm797, %v4712, 0.0
    %v5028 = vsel %vm798, %v4717, 0.0
    %v5029 = vsel %vm799, %v4717, 0.0
    %v5030 = vsel %vm800, %v4722, 0.0
    %v5031 = vsel %vm801, %v4722, 0.0
    %v5032 = vsel %vm802, %v4727, 0.0
    %v5033 = vsel %vm803, %v4727, 0.0
    %v5034 = vsel %vm804, %v4732, 0.0
    %v5035 = vsel %vm805, %v4732, 0.0
    %v5036 = vsel %vm806, %v4737, 0.0
    %v5037 = vsel %vm807, %v4737, 0.0
    %v5038 = vsel %vm808, %v4742, 0.0
    %v5039 = vsel %vm809, %v4742, 0.0
    %v5040 = vsel %vm810, %v4747, 0.0
    %v5041 = vsel %vm811, %v4747, 0.0
    %v5042 = vsel %vm812, %v4752, 0.0
    %v5043 = vsel %vm813, %v4752, 0.0
    %v5044 = vsel %vm814, %v4757, 0.0
    %v5045 = vsel %vm815, %v4757, 0.0
    %v5046 = vsel %vm816, %v4762, 0.0
    %v5047 = vsel %vm817, %v4762, 0.0
    %v5048 = vsel %vm818, %v4767, 0.0
    %v5049 = vsel %vm819, %v4767, 0.0
    %v5050 = vsel %vm820, %v4772, 0.0
    %v5051 = vsel %vm821, %v4772, 0.0
    %v5052 = vsel %vm822, %v4777, 0.0
    %v5053 = vsel %vm823, %v4777, 0.0
    %v5054 = vsel %vm824, %v4782, 0.0
    %v5055 = vsel %vm825, %v4782, 0.0
    %v5056 = vsel %vm826, %v4787, 0.0
    %v5057 = vsel %vm827, %v4787, 0.0
    %v5058 = vsel %vm828, %v4792, 0.0
    %v5059 = vsel %vm829, %v4792, 0.0
    %v5060 = vsel %vm830, %v4797, 0.0
    %v5061 = vsel %vm831, %v4797, 0.0
    %v5062 = vsel %vm832, %v4802, 0.0
    %v5063 = vsel %vm833, %v4802, 0.0
    %v5064 = vsel %vm834, %v4807, 0.0
    %v5065 = vsel %vm835, %v4807, 0.0
    %v5066 = vsel %vm836, %v4812, 0.0
    %v5067 = vsel %vm837, %v4812, 0.0
    %v5068 = vsel %vm838, %v4817, 0.0
    %v5069 = vsel %vm839, %v4817, 0.0
    %v5070 = vsel %vm840, %v4822, 0.0
    %v5071 = vsel %vm841, %v4822, 0.0
    %v5072 = vsel %vm842, %v4827, 0.0
    %v5073 = vsel %vm843, %v4827, 0.0
    %v5074 = vsel %vm844, %v4832, 0.0
    %v5075 = vsel %vm845, %v4832, 0.0
    %v5076 = vsel %vm846, %v4837, 0.0
    %v5077 = vsel %vm847, %v4837, 0.0
    %v5078 = vsel %vm848, %v4842, 0.0
    %v5079 = vsel %vm849, %v4842, 0.0
    %v5080 = vsel %vm850, %v4847, 0.0
    %v5081 = vsel %vm851, %v4847, 0.0
    %v5082 = vsel %vm852, %v4852, 0.0
    %v5083 = vsel %vm853, %v4852, 0.0
    %v5084 = vsel %vm854, %v4857, 0.0
    %v5085 = vsel %vm855, %v4857, 0.0
    %v5086 = vsel %vm856, %v4862, 0.0
    %v5087 = vsel %vm857, %v4862, 0.0
    %v5088 = vsel %vm858, %v4867, 0.0
    %v5089 = vsel %vm859, %v4867, 0.0
    %v5090 = vsel %vm860, %v4872, 0.0
    %v5091 = vsel %vm861, %v4872, 0.0
    %v5092 = vsel %vm862, %v4877, 0.0
    %v5093 = vsel %vm863, %v4877, 0.0
    %v5094 = vsel %vm864, %v4882, 0.0
    %v5095 = vsel %vm865, %v4882, 0.0
    %v5096 = vsel %vm866, %v4887, 0.0
    %v5097 = vsel %vm867, %v4887, 0.0
    %v5098 = vsel %vm868, %v4892, 0.0
    %v5099 = vsel %vm869, %v4892, 0.0
    %v5100 = vsel %vm870, %v4897, 0.0
    %v5101 = vsel %vm871, %v4897, 0.0
    %v5102 = vsel %vm872, %v4902, 0.0
    %v5103 = vsel %vm873, %v4902, 0.0
    %v5104 = vsel %vm874, %v4907, 0.0
    %v5105 = vsel %vm875, %v4907, 0.0
    %v5106 = vsel %vm876, %v4912, 0.0
    %v5107 = vsel %vm877, %v4912, 0.0
    %v5108 = vsel %vm878, %v4917, 0.0
    %v5109 = vsel %vm879, %v4917, 0.0
    %v5110 = vsel %vm880, %v4922, 0.0
    %v5111 = vsel %vm881, %v4922, 0.0
    %v5112 = vsel %vm882, %v4927, 0.0
    %v5113 = vsel %vm883, %v4927, 0.0
    %v5114 = vsel %vm884, %v4932, 0.0
    %v5115 = vsel %vm885, %v4932, 0.0
    %v5116 = vsel %vm886, %v4937, 0.0
    %v5117 = vsel %vm887, %v4937, 0.0
    %v5118 = vsel %vm888, %v4942, 0.0
    %v5119 = vsel %vm889, %v4942, 0.0
    %v5120 = vsel %vm890, %v4947, 0.0
    %v5121 = vsel %vm891, %v4947, 0.0
    %v5122 = vsel %vm892, %v4952, 0.0
    %v5123 = vsel %vm893, %v4952, 0.0
    %v5124 = vsel %vm894, %v4957, 0.0
    %v5125 = vsel %vm895, %v4957, 0.0
    %v5126 = vsel %vm896, %v4962, 0.0
    %v5127 = vsel %vm897, %v4962, 0.0
    %v5128 = vsel %vm898, %v4967, 0.0
    %v5129 = vsel %vm899, %v4967, 0.0
    %v5130 = vsel %vm900, %v4972, 0.0
    %v5131 = vsel %vm901, %v4972, 0.0
    %v5132 = vsel %vm902, %v4977, 0.0
    %v5133 = vsel %vm903, %v4977, 0.0
    %v5134 = vsel %vm904, %v4982, 0.0
    %v5135 = vsel %vm905, %v4982, 0.0
    %v5136 = vsel %vm906, %v4987, 0.0
    %v5137 = vsel %vm907, %v4987, 0.0
    %v5138 = vsel %vm908, %v4992, 0.0
    %v5139 = vsel %vm909, %v4992, 0.0
    %v5140 = vsel %vm910, %v4997, 0.0
    %v5141 = vsel %vm911, %v4997, 0.0
    %v5142 = vsel %vm912, %v5002, 0.0
    %v5143 = vsel %vm913, %v5002, 0.0
    %v5144 = vsel %vm914, %v5007, 0.0
    %v5145 = vsel %vm915, %v5007, 0.0
    %v5146 = vsel %vm916, %v5012, 0.0
    %v5147 = vsel %vm917, %v5012, 0.0
    %v5148 = vsel %vm918, %v5017, 0.0
    %v5149 = vsel %vm919, %v5017, 0.0
    %v5150 = vsel %vm920, %v5022, 0.0
    %v5151 = vsel %vm921, %v5022, 0.0
    %5152 = vmatprep.subr.mxu0 %v5025
    %5153 = vmatpush1.msra.mxu0 %v5024
    %5154 = vmatprep.subr.mxu0 %v5027
    %5155 = vmatpush1.msra.mxu0 %v5026
    %5156 = vmatprep.subr.mxu0 %v5029
    %5157 = vmatpush1.msra.mxu0 %v5028
    %5158 = vmatprep.subr.mxu0 %v5031
    %5159 = vmatpush1.msra.mxu0 %v5030
    %5160 = vmatprep.subr.mxu0 %v5033
    %5161 = vmatpush1.msra.mxu0 %v5032
    %5162 = vmatprep.subr.mxu0 %v5035
    %5163 = vmatpush1.msra.mxu0 %v5034
    %5164 = vmatprep.subr.mxu0 %v5037
    %5165 = vmatpush1.msra.mxu0 %v5036
    %5166 = vmatprep.subr.mxu0 %v5039
    %5167 = vmatpush1.msra.mxu0 %v5038
    %5168 = vmatprep.subr.mxu0 %v5041
    %5169 = vmatpush1.msra.mxu0 %v5040
    %5170 = vmatprep.subr.mxu0 %v5043
    %5171 = vmatpush1.msra.mxu0 %v5042
    %5172 = vmatprep.subr.mxu0 %v5045
    %5173 = vmatpush1.msra.mxu0 %v5044
    %5174 = vmatprep.subr.mxu0 %v5047
    %5175 = vmatpush1.msra.mxu0 %v5046
    %5176 = vmatprep.subr.mxu0 %v5049
    %5177 = vmatpush1.msra.mxu0 %v5048
    %5178 = vmatprep.subr.mxu0 %v5051
    %5179 = vmatpush1.msra.mxu0 %v5050
    %5180 = vmatprep.subr.mxu0 %v5053
    %5181 = vmatpush1.msra.mxu0 %v5052
    %5182 = vmatprep.subr.mxu0 %v5055
    %5183 = vmatpush1.msra.mxu0 %v5054
    %5184 = vmatprep.subr.mxu0 %v5057
    %5185 = vmatpush1.msra.mxu0 %v5056
    %5186 = vmatprep.subr.mxu0 %v5059
    %5187 = vmatpush1.msra.mxu0 %v5058
    %5188 = vmatprep.subr.mxu0 %v5061
    %5189 = vmatpush1.msra.mxu0 %v5060
    %5190 = vmatprep.subr.mxu0 %v5063
    %5191 = vmatpush1.msra.mxu0 %v5062
    %5192 = vmatprep.subr.mxu0 %v5065
    %5193 = vmatpush1.msra.mxu0 %v5064
    %5194 = vmatprep.subr.mxu0 %v5067
    %5195 = vmatpush1.msra.mxu0 %v5066
    %5196 = vmatprep.subr.mxu0 %v5069
    %5197 = vmatpush1.msra.mxu0 %v5068
    %5198 = vmatprep.subr.mxu0 %v5071
    %5199 = vmatpush1.msra.mxu0 %v5070
    %5200 = vmatprep.subr.mxu0 %v5073
    %5201 = vmatpush1.msra.mxu0 %v5072
    %5202 = vmatprep.subr.mxu0 %v5075
    %5203 = vmatpush1.msra.mxu0 %v5074
    %5204 = vmatprep.subr.mxu0 %v5077
    %5205 = vmatpush1.msra.mxu0 %v5076
    %5206 = vmatprep.subr.mxu0 %v5079
    %5207 = vmatpush1.msra.mxu0 %v5078
    %5208 = vmatprep.subr.mxu0 %v5081
    %5209 = vmatpush1.msra.mxu0 %v5080
    %5210 = vmatprep.subr.mxu0 %v5083
    %5211 = vmatpush1.msra.mxu0 %v5082
    %5212 = vmatprep.subr.mxu0 %v5085
    %5213 = vmatpush1.msra.mxu0 %v5084
    %5214 = vmatprep.subr.mxu0 %v5087
    %5215 = vmatpush1.msra.mxu0 %v5086
    %5216 = vmatprep.mubr.f32.mxu0 %v344
    %5217 = vmatmul.mubr.f32.gmra.mrb[0].mxu0 %v343
    %v5218 = vpop.f32.mrb[0].mxu0
    %v5219 = vadd.f32 %v1210, %v5218
    %v5220 = vpop.f32.mrb[0].mxu0
    %v5221 = vadd.f32 %v1211, %v5220
    %5222 = vmatprep.mubr.f32.mxu0 %v348
    %5223 = vmatmul.mubr.f32.gmra.mrb[0].mxu0 %v347
    %v5224 = vpop.f32.mrb[0].mxu0
    %v5225 = vadd.f32 %v1212, %v5224
    %v5226 = vpop.f32.mrb[0].mxu0
    %v5227 = vadd.f32 %v1213, %v5226
    %5228 = vmatprep.mubr.f32.mxu0 %v352
    %5229 = vmatmul.mubr.f32.gmra.mrb[0].mxu0 %v351
    %v5230 = vpop.f32.mrb[0].mxu0
    %v5231 = vadd.f32 %v1214, %v5230
    %v5232 = vpop.f32.mrb[0].mxu0
    %v5233 = vadd.f32 %v1215, %v5232
    %5234 = vmatprep.mubr.f32.mxu0 %v356
    %5235 = vmatmul.mubr.f32.gmra.mrb[0].mxu0 %v355
    %v5236 = vpop.f32.mrb[0].mxu0
    %v5237 = vadd.f32 %v1216, %v5236
    %v5238 = vpop.f32.mrb[0].mxu0
    %v5239 = vadd.f32 %v1217, %v5238
    %5240 = vmatprep.mubr.f32.mxu0 %v360
    %5241 = vmatmul.mubr.f32.gmra.mrb[0].mxu0 %v359
    %v5242 = vpop.f32.mrb[0].mxu0
    %v5243 = vadd.f32 %v1218, %v5242
    %v5244 = vpop.f32.mrb[0].mxu0
    %v5245 = vadd.f32 %v1219, %v5244
    %5246 = vmatprep.mubr.f32.mxu0 %v364
    %5247 = vmatmul.mubr.f32.gmra.mrb[0].mxu0 %v363
    %v5248 = vpop.f32.mrb[0].mxu0
    %v5249 = vadd.f32 %v1220, %v5248
    %v5250 = vpop.f32.mrb[0].mxu0
    %v5251 = vadd.f32 %v1221, %v5250
    %5252 = vmatprep.mubr.f32.mxu0 %v368
    %5253 = vmatmul.mubr.f32.gmra.mrb[0].mxu0 %v367
    %v5254 = vpop.f32.mrb[0].mxu0
    %v5255 = vadd.f32 %v1222, %v5254
    %v5256 = vpop.f32.mrb[0].mxu0
    %v5257 = vadd.f32 %v1223, %v5256
    %5258 = vmatprep.mubr.f32.mxu0 %v372
    %5259 = vmatmul.mubr.f32.gmra.mrb[0].mxu0 %v371
    %v5260 = vpop.f32.mrb[0].mxu0
    %v5261 = vadd.f32 %v1224, %v5260
    %v5262 = vpop.f32.mrb[0].mxu0
    %v5263 = vadd.f32 %v1225, %v5262
    %5264 = vmatprep.mubr.f32.mxu0 %v376
    %5265 = vmatmul.mubr.f32.gmra.mrb[0].mxu0 %v375
    %v5266 = vpop.f32.mrb[0].mxu0
    %v5267 = vadd.f32 %v1226, %v5266
    %v5268 = vpop.f32.mrb[0].mxu0
    %v5269 = vadd.f32 %v1227, %v5268
    %5270 = vmatprep.mubr.f32.mxu0 %v380
    %5271 = vmatmul.mubr.f32.gmra.mrb[0].mxu0 %v379
    %v5272 = vpop.f32.mrb[0].mxu0
    %v5273 = vadd.f32 %v1228, %v5272
    %v5274 = vpop.f32.mrb[0].mxu0
    %v5275 = vadd.f32 %v1229, %v5274
    %5276 = vmatprep.mubr.f32.mxu0 %v384
    %5277 = vmatmul.mubr.f32.gmra.mrb[0].mxu0 %v383
    %v5278 = vpop.f32.mrb[0].mxu0
    %v5279 = vadd.f32 %v1230, %v5278
    %v5280 = vpop.f32.mrb[0].mxu0
    %v5281 = vadd.f32 %v1231, %v5280
    %5282 = vmatprep.mubr.f32.mxu0 %v388
    %5283 = vmatmul.mubr.f32.gmra.mrb[0].mxu0 %v387
    %v5284 = vpop.f32.mrb[0].mxu0
    %v5285 = vadd.f32 %v1232, %v5284
    %v5286 = vpop.f32.mrb[0].mxu0
    %v5287 = vadd.f32 %v1233, %v5286
    %5288 = vmatprep.mubr.f32.mxu0 %v392
    %5289 = vmatmul.mubr.f32.gmra.mrb[0].mxu0 %v391
    %v5290 = vpop.f32.mrb[0].mxu0
    %v5291 = vadd.f32 %v1234, %v5290
    %v5292 = vpop.f32.mrb[0].mxu0
    %v5293 = vadd.f32 %v1235, %v5292
    %5294 = vmatprep.mubr.f32.mxu0 %v396
    %5295 = vmatmul.mubr.f32.gmra.mrb[0].mxu0 %v395
    %v5296 = vpop.f32.mrb[0].mxu0
    %v5297 = vadd.f32 %v1236, %v5296
    %v5298 = vpop.f32.mrb[0].mxu0
    %v5299 = vadd.f32 %v1237, %v5298
    %5300 = vmatprep.mubr.f32.mxu0 %v400
    %5301 = vmatmul.mubr.f32.gmra.mrb[0].mxu0 %v399
    %v5302 = vpop.f32.mrb[0].mxu0
    %v5303 = vadd.f32 %v1238, %v5302
    %v5304 = vpop.f32.mrb[0].mxu0
    %v5305 = vadd.f32 %v1239, %v5304
    %5306 = vmatprep.mubr.f32.mxu0 %v404
    %5307 = vmatmul.mubr.f32.gmra.mrb[0].mxu0 %v403
    %v5308 = vpop.f32.mrb[0].mxu0
    %v5309 = vadd.f32 %v1240, %v5308
    %v5310 = vpop.f32.mrb[0].mxu0
    %v5311 = vadd.f32 %v1241, %v5310
    %5312 = vmatprep.mubr.f32.mxu0 %v408
    %5313 = vmatmul.mubr.f32.gmra.mrb[0].mxu0 %v407
    %v5314 = vpop.f32.mrb[0].mxu0
    %v5315 = vadd.f32 %v1242, %v5314
    %v5316 = vpop.f32.mrb[0].mxu0
    %v5317 = vadd.f32 %v1243, %v5316
    %5318 = vmatprep.mubr.f32.mxu0 %v412
    %5319 = vmatmul.mubr.f32.gmra.mrb[0].mxu0 %v411
    %v5320 = vpop.f32.mrb[0].mxu0
    %v5321 = vadd.f32 %v1244, %v5320
    %v5322 = vpop.f32.mrb[0].mxu0
    %v5323 = vadd.f32 %v1245, %v5322
    %5324 = vmatprep.mubr.f32.mxu0 %v416
    %5325 = vmatmul.mubr.f32.gmra.mrb[0].mxu0 %v415
    %v5326 = vpop.f32.mrb[0].mxu0
    %v5327 = vadd.f32 %v1246, %v5326
    %v5328 = vpop.f32.mrb[0].mxu0
    %v5329 = vadd.f32 %v1247, %v5328
    %5330 = vmatprep.mubr.f32.mxu0 %v420
    %5331 = vmatmul.mubr.f32.gmra.mrb[0].mxu0 %v419
    %v5332 = vpop.f32.mrb[0].mxu0
    %v5333 = vadd.f32 %v1248, %v5332
    %v5334 = vpop.f32.mrb[0].mxu0
    %v5335 = vadd.f32 %v1249, %v5334
    %5336 = vmatprep.mubr.f32.mxu0 %v424
    %5337 = vmatmul.mubr.f32.gmra.mrb[0].mxu0 %v423
    %v5338 = vpop.f32.mrb[0].mxu0
    %v5339 = vadd.f32 %v1250, %v5338
    %v5340 = vpop.f32.mrb[0].mxu0
    %v5341 = vadd.f32 %v1251, %v5340
    %5342 = vmatprep.mubr.f32.mxu0 %v428
    %5343 = vmatmul.mubr.f32.gmra.mrb[0].mxu0 %v427
    %v5344 = vpop.f32.mrb[0].mxu0
    %v5345 = vadd.f32 %v1252, %v5344
    %v5346 = vpop.f32.mrb[0].mxu0
    %v5347 = vadd.f32 %v1253, %v5346
    %5348 = vmatprep.mubr.f32.mxu0 %v432
    %5349 = vmatmul.mubr.f32.gmra.mrb[0].mxu0 %v431
    %v5350 = vpop.f32.mrb[0].mxu0
    %v5351 = vadd.f32 %v1254, %v5350
    %v5352 = vpop.f32.mrb[0].mxu0
    %v5353 = vadd.f32 %v1255, %v5352
    %5354 = vmatprep.mubr.f32.mxu0 %v436
    %5355 = vmatmul.mubr.f32.gmra.mrb[0].mxu0 %v435
    %v5356 = vpop.f32.mrb[0].mxu0
    %v5357 = vadd.f32 %v1256, %v5356
    %v5358 = vpop.f32.mrb[0].mxu0
    %v5359 = vadd.f32 %v1257, %v5358
    %5360 = vmatprep.mubr.f32.mxu0 %v440
    %5361 = vmatmul.mubr.f32.gmra.mrb[0].mxu0 %v439
    %v5362 = vpop.f32.mrb[0].mxu0
    %v5363 = vadd.f32 %v1258, %v5362
    %v5364 = vpop.f32.mrb[0].mxu0
    %v5365 = vadd.f32 %v1259, %v5364
    %5366 = vmatprep.mubr.f32.mxu0 %v444
    %5367 = vmatmul.mubr.f32.gmra.mrb[0].mxu0 %v443
    %v5368 = vpop.f32.mrb[0].mxu0
    %v5369 = vadd.f32 %v1260, %v5368
    %v5370 = vpop.f32.mrb[0].mxu0
    %v5371 = vadd.f32 %v1261, %v5370
    %5372 = vmatprep.mubr.f32.mxu0 %v448
    %5373 = vmatmul.mubr.f32.gmra.mrb[0].mxu0 %v447
    %v5374 = vpop.f32.mrb[0].mxu0
    %v5375 = vadd.f32 %v1262, %v5374
    %v5376 = vpop.f32.mrb[0].mxu0
    %v5377 = vadd.f32 %v1263, %v5376
    %5378 = vmatprep.mubr.f32.mxu0 %v452
    %5379 = vmatmul.mubr.f32.gmra.mrb[0].mxu0 %v451
    %v5380 = vpop.f32.mrb[0].mxu0
    %v5381 = vadd.f32 %v1264, %v5380
    %v5382 = vpop.f32.mrb[0].mxu0
    %v5383 = vadd.f32 %v1265, %v5382
    %5384 = vmatprep.mubr.f32.mxu0 %v456
    %5385 = vmatmul.mubr.f32.gmra.mrb[0].mxu0 %v455
    %v5386 = vpop.f32.mrb[0].mxu0
    %v5387 = vadd.f32 %v1266, %v5386
    %v5388 = vpop.f32.mrb[0].mxu0
    %v5389 = vadd.f32 %v1267, %v5388
    %5390 = vmatprep.mubr.f32.mxu0 %v460
    %5391 = vmatmul.mubr.f32.gmra.mrb[0].mxu0 %v459
    %v5392 = vpop.f32.mrb[0].mxu0
    %v5393 = vadd.f32 %v1268, %v5392
    %v5394 = vpop.f32.mrb[0].mxu0
    %v5395 = vadd.f32 %v1269, %v5394
    %5396 = vmatprep.mubr.f32.mxu0 %v464
    %5397 = vmatmul.mubr.f32.gmra.mrb[0].mxu0 %v463
    %v5398 = vpop.f32.mrb[0].mxu0
    %v5399 = vadd.f32 %v1270, %v5398
    %v5400 = vpop.f32.mrb[0].mxu0
    %v5401 = vadd.f32 %v1271, %v5400
    %5402 = vmatprep.mubr.f32.mxu0 %v468
    %5403 = vmatmul.mubr.f32.gmra.mrb[0].mxu0 %v467
    %v5404 = vpop.f32.mrb[0].mxu0
    %v5405 = vadd.f32 %v1272, %v5404
    %v5406 = vpop.f32.mrb[0].mxu0
    %v5407 = vadd.f32 %v1273, %v5406
    %5408 = vdwg.mxu0
    %5409 = vmatprep.subr.mxu0 %v5089
    %5410 = vmatpush1.msra.mxu0 %v5088
    %5411 = vmatprep.subr.mxu0 %v5091
    %5412 = vmatpush1.msra.mxu0 %v5090
    %5413 = vmatprep.subr.mxu0 %v5093
    %5414 = vmatpush1.msra.mxu0 %v5092
    %5415 = vmatprep.subr.mxu0 %v5095
    %5416 = vmatpush1.msra.mxu0 %v5094
    %5417 = vmatprep.subr.mxu0 %v5097
    %5418 = vmatpush1.msra.mxu0 %v5096
    %5419 = vmatprep.subr.mxu0 %v5099
    %5420 = vmatpush1.msra.mxu0 %v5098
    %5421 = vmatprep.subr.mxu0 %v5101
    %5422 = vmatpush1.msra.mxu0 %v5100
    %5423 = vmatprep.subr.mxu0 %v5103
    %5424 = vmatpush1.msra.mxu0 %v5102
    %5425 = vmatprep.subr.mxu0 %v5105
    %5426 = vmatpush1.msra.mxu0 %v5104
    %5427 = vmatprep.subr.mxu0 %v5107
    %5428 = vmatpush1.msra.mxu0 %v5106
    %5429 = vmatprep.subr.mxu0 %v5109
    %5430 = vmatpush1.msra.mxu0 %v5108
    %5431 = vmatprep.subr.mxu0 %v5111
    %5432 = vmatpush1.msra.mxu0 %v5110
    %5433 = vmatprep.subr.mxu0 %v5113
    %5434 = vmatpush1.msra.mxu0 %v5112
    %5435 = vmatprep.subr.mxu0 %v5115
    %5436 = vmatpush1.msra.mxu0 %v5114
    %5437 = vmatprep.subr.mxu0 %v5117
    %5438 = vmatpush1.msra.mxu0 %v5116
    %5439 = vmatprep.subr.mxu0 %v5119
    %5440 = vmatpush1.msra.mxu0 %v5118
    %5441 = vmatprep.subr.mxu0 %v5121
    %5442 = vmatpush1.msra.mxu0 %v5120
    %5443 = vmatprep.subr.mxu0 %v5123
    %5444 = vmatpush1.msra.mxu0 %v5122
    %5445 = vmatprep.subr.mxu0 %v5125
    %5446 = vmatpush1.msra.mxu0 %v5124
    %5447 = vmatprep.subr.mxu0 %v5127
    %5448 = vmatpush1.msra.mxu0 %v5126
    %5449 = vmatprep.subr.mxu0 %v5129
    %5450 = vmatpush1.msra.mxu0 %v5128
    %5451 = vmatprep.subr.mxu0 %v5131
    %5452 = vmatpush1.msra.mxu0 %v5130
    %5453 = vmatprep.subr.mxu0 %v5133
    %5454 = vmatpush1.msra.mxu0 %v5132
    %5455 = vmatprep.subr.mxu0 %v5135
    %5456 = vmatpush1.msra.mxu0 %v5134
    %5457 = vmatprep.subr.mxu0 %v5137
    %5458 = vmatpush1.msra.mxu0 %v5136
    %5459 = vmatprep.subr.mxu0 %v5139
    %5460 = vmatpush1.msra.mxu0 %v5138
    %5461 = vmatprep.subr.mxu0 %v5141
    %5462 = vmatpush1.msra.mxu0 %v5140
    %5463 = vmatprep.subr.mxu0 %v5143
    %5464 = vmatpush1.msra.mxu0 %v5142
    %5465 = vmatprep.subr.mxu0 %v5145
    %5466 = vmatpush1.msra.mxu0 %v5144
    %5467 = vmatprep.subr.mxu0 %v5147
    %5468 = vmatpush1.msra.mxu0 %v5146
    %5469 = vmatprep.subr.mxu0 %v5149
    %5470 = vmatpush1.msra.mxu0 %v5148
    %5471 = vmatprep.subr.mxu0 %v5151
    %5472 = vmatpush1.msra.mxu0 %v5150
    %5473 = vmatprep.mubr.f32.mxu0 %v346
    %5474 = vmatmul.mubr.f32.gmra.mrb[0].mxu0 %v345
    %v5475 = vpop.f32.mrb[0].mxu0
    %v5476 = vadd.f32 %v5219, %v5475
    %v5477 = vpop.f32.mrb[0].mxu0
    %v5478 = vadd.f32 %v5221, %v5477
    %5479 = vmatprep.mubr.f32.mxu0 %v350
    %5480 = vmatmul.mubr.f32.gmra.mrb[0].mxu0 %v349
    %v5481 = vpop.f32.mrb[0].mxu0
    %v5482 = vadd.f32 %v5225, %v5481
    %v5483 = vpop.f32.mrb[0].mxu0
    %v5484 = vadd.f32 %v5227, %v5483
    %5485 = vmatprep.mubr.f32.mxu0 %v354
    %5486 = vmatmul.mubr.f32.gmra.mrb[0].mxu0 %v353
    %v5487 = vpop.f32.mrb[0].mxu0
    %v5488 = vadd.f32 %v5231, %v5487
    %v5489 = vpop.f32.mrb[0].mxu0
    %v5490 = vadd.f32 %v5233, %v5489
    %5491 = vmatprep.mubr.f32.mxu0 %v358
    %5492 = vmatmul.mubr.f32.gmra.mrb[0].mxu0 %v357
    %v5493 = vpop.f32.mrb[0].mxu0
    %v5494 = vadd.f32 %v5237, %v5493
    %v5495 = vpop.f32.mrb[0].mxu0
    %v5496 = vadd.f32 %v5239, %v5495
    %5497 = vmatprep.mubr.f32.mxu0 %v362
    %5498 = vmatmul.mubr.f32.gmra.mrb[0].mxu0 %v361
    %v5499 = vpop.f32.mrb[0].mxu0
    %v5500 = vadd.f32 %v5243, %v5499
    %v5501 = vpop.f32.mrb[0].mxu0
    %v5502 = vadd.f32 %v5245, %v5501
    %5503 = vmatprep.mubr.f32.mxu0 %v366
    %5504 = vmatmul.mubr.f32.gmra.mrb[0].mxu0 %v365
    %v5505 = vpop.f32.mrb[0].mxu0
    %v5506 = vadd.f32 %v5249, %v5505
    %v5507 = vpop.f32.mrb[0].mxu0
    %v5508 = vadd.f32 %v5251, %v5507
    %5509 = vmatprep.mubr.f32.mxu0 %v370
    %5510 = vmatmul.mubr.f32.gmra.mrb[0].mxu0 %v369
    %v5511 = vpop.f32.mrb[0].mxu0
    %v5512 = vadd.f32 %v5255, %v5511
    %v5513 = vpop.f32.mrb[0].mxu0
    %v5514 = vadd.f32 %v5257, %v5513
    %5515 = vmatprep.mubr.f32.mxu0 %v374
    %5516 = vmatmul.mubr.f32.gmra.mrb[0].mxu0 %v373
    %v5517 = vpop.f32.mrb[0].mxu0
    %v5518 = vadd.f32 %v5261, %v5517
    %v5519 = vpop.f32.mrb[0].mxu0
    %v5520 = vadd.f32 %v5263, %v5519
    %5521 = vmatprep.mubr.f32.mxu0 %v378
    %5522 = vmatmul.mubr.f32.gmra.mrb[0].mxu0 %v377
    %v5523 = vpop.f32.mrb[0].mxu0
    %v5524 = vadd.f32 %v5267, %v5523
    %v5525 = vpop.f32.mrb[0].mxu0
    %v5526 = vadd.f32 %v5269, %v5525
    %5527 = vmatprep.mubr.f32.mxu0 %v382
    %5528 = vmatmul.mubr.f32.gmra.mrb[0].mxu0 %v381
    %v5529 = vpop.f32.mrb[0].mxu0
    %v5530 = vadd.f32 %v5273, %v5529
    %v5531 = vpop.f32.mrb[0].mxu0
    %v5532 = vadd.f32 %v5275, %v5531
    %5533 = vmatprep.mubr.f32.mxu0 %v386
    %5534 = vmatmul.mubr.f32.gmra.mrb[0].mxu0 %v385
    %v5535 = vpop.f32.mrb[0].mxu0
    %v5536 = vadd.f32 %v5279, %v5535
    %v5537 = vpop.f32.mrb[0].mxu0
    %v5538 = vadd.f32 %v5281, %v5537
    %5539 = vmatprep.mubr.f32.mxu0 %v390
    %5540 = vmatmul.mubr.f32.gmra.mrb[0].mxu0 %v389
    %v5541 = vpop.f32.mrb[0].mxu0
    %v5542 = vadd.f32 %v5285, %v5541
    %v5543 = vpop.f32.mrb[0].mxu0
    %v5544 = vadd.f32 %v5287, %v5543
    %5545 = vmatprep.mubr.f32.mxu0 %v394
    %5546 = vmatmul.mubr.f32.gmra.mrb[0].mxu0 %v393
    %v5547 = vpop.f32.mrb[0].mxu0
    %v5548 = vadd.f32 %v5291, %v5547
    %v5549 = vpop.f32.mrb[0].mxu0
    %v5550 = vadd.f32 %v5293, %v5549
    %5551 = vmatprep.mubr.f32.mxu0 %v398
    %5552 = vmatmul.mubr.f32.gmra.mrb[0].mxu0 %v397
    %v5553 = vpop.f32.mrb[0].mxu0
    %v5554 = vadd.f32 %v5297, %v5553
    %v5555 = vpop.f32.mrb[0].mxu0
    %v5556 = vadd.f32 %v5299, %v5555
    %5557 = vmatprep.mubr.f32.mxu0 %v402
    %5558 = vmatmul.mubr.f32.gmra.mrb[0].mxu0 %v401
    %v5559 = vpop.f32.mrb[0].mxu0
    %v5560 = vadd.f32 %v5303, %v5559
    %v5561 = vpop.f32.mrb[0].mxu0
    %v5562 = vadd.f32 %v5305, %v5561
    %5563 = vmatprep.mubr.f32.mxu0 %v406
    %5564 = vmatmul.mubr.f32.gmra.mrb[0].mxu0 %v405
    %v5565 = vpop.f32.mrb[0].mxu0
    %v5566 = vadd.f32 %v5309, %v5565
    %v5567 = vpop.f32.mrb[0].mxu0
    %v5568 = vadd.f32 %v5311, %v5567
    %5569 = vmatprep.mubr.f32.mxu0 %v410
    %5570 = vmatmul.mubr.f32.gmra.mrb[0].mxu0 %v409
    %v5571 = vpop.f32.mrb[0].mxu0
    %v5572 = vadd.f32 %v5315, %v5571
    %v5573 = vpop.f32.mrb[0].mxu0
    %v5574 = vadd.f32 %v5317, %v5573
    %5575 = vmatprep.mubr.f32.mxu0 %v414
    %5576 = vmatmul.mubr.f32.gmra.mrb[0].mxu0 %v413
    %v5577 = vpop.f32.mrb[0].mxu0
    %v5578 = vadd.f32 %v5321, %v5577
    %v5579 = vpop.f32.mrb[0].mxu0
    %v5580 = vadd.f32 %v5323, %v5579
    %5581 = vmatprep.mubr.f32.mxu0 %v418
    %5582 = vmatmul.mubr.f32.gmra.mrb[0].mxu0 %v417
    %v5583 = vpop.f32.mrb[0].mxu0
    %v5584 = vadd.f32 %v5327, %v5583
    %v5585 = vpop.f32.mrb[0].mxu0
    %v5586 = vadd.f32 %v5329, %v5585
    %5587 = vmatprep.mubr.f32.mxu0 %v422
    %5588 = vmatmul.mubr.f32.gmra.mrb[0].mxu0 %v421
    %v5589 = vpop.f32.mrb[0].mxu0
    %v5590 = vadd.f32 %v5333, %v5589
    %v5591 = vpop.f32.mrb[0].mxu0
    %v5592 = vadd.f32 %v5335, %v5591
    %5593 = vmatprep.mubr.f32.mxu0 %v426
    %5594 = vmatmul.mubr.f32.gmra.mrb[0].mxu0 %v425
    %v5595 = vpop.f32.mrb[0].mxu0
    %v5596 = vadd.f32 %v5339, %v5595
    %v5597 = vpop.f32.mrb[0].mxu0
    %v5598 = vadd.f32 %v5341, %v5597
    %5599 = vmatprep.mubr.f32.mxu0 %v430
    %5600 = vmatmul.mubr.f32.gmra.mrb[0].mxu0 %v429
    %v5601 = vpop.f32.mrb[0].mxu0
    %v5602 = vadd.f32 %v5345, %v5601
    %v5603 = vpop.f32.mrb[0].mxu0
    %v5604 = vadd.f32 %v5347, %v5603
    %5605 = vmatprep.mubr.f32.mxu0 %v434
    %5606 = vmatmul.mubr.f32.gmra.mrb[0].mxu0 %v433
    %v5607 = vpop.f32.mrb[0].mxu0
    %v5608 = vadd.f32 %v5351, %v5607
    %v5609 = vpop.f32.mrb[0].mxu0
    %v5610 = vadd.f32 %v5353, %v5609
    %5611 = vmatprep.mubr.f32.mxu0 %v438
    %5612 = vmatmul.mubr.f32.gmra.mrb[0].mxu0 %v437
    %v5613 = vpop.f32.mrb[0].mxu0
    %v5614 = vadd.f32 %v5357, %v5613
    %v5615 = vpop.f32.mrb[0].mxu0
    %v5616 = vadd.f32 %v5359, %v5615
    %5617 = vmatprep.mubr.f32.mxu0 %v442
    %5618 = vmatmul.mubr.f32.gmra.mrb[0].mxu0 %v441
    %v5619 = vpop.f32.mrb[0].mxu0
    %v5620 = vadd.f32 %v5363, %v5619
    %v5621 = vpop.f32.mrb[0].mxu0
    %v5622 = vadd.f32 %v5365, %v5621
    %5623 = vmatprep.mubr.f32.mxu0 %v446
    %5624 = vmatmul.mubr.f32.gmra.mrb[0].mxu0 %v445
    %v5625 = vpop.f32.mrb[0].mxu0
    %v5626 = vadd.f32 %v5369, %v5625
    %v5627 = vpop.f32.mrb[0].mxu0
    %v5628 = vadd.f32 %v5371, %v5627
    %5629 = vmatprep.mubr.f32.mxu0 %v450
    %5630 = vmatmul.mubr.f32.gmra.mrb[0].mxu0 %v449
    %v5631 = vpop.f32.mrb[0].mxu0
    %v5632 = vadd.f32 %v5375, %v5631
    %v5633 = vpop.f32.mrb[0].mxu0
    %v5634 = vadd.f32 %v5377, %v5633
    %5635 = vmatprep.mubr.f32.mxu0 %v454
    %5636 = vmatmul.mubr.f32.gmra.mrb[0].mxu0 %v453
    %v5637 = vpop.f32.mrb[0].mxu0
    %v5638 = vadd.f32 %v5381, %v5637
    %v5639 = vpop.f32.mrb[0].mxu0
    %v5640 = vadd.f32 %v5383, %v5639
    %5641 = vmatprep.mubr.f32.mxu0 %v458
    %5642 = vmatmul.mubr.f32.gmra.mrb[0].mxu0 %v457
    %v5643 = vpop.f32.mrb[0].mxu0
    %v5644 = vadd.f32 %v5387, %v5643
    %v5645 = vpop.f32.mrb[0].mxu0
    %v5646 = vadd.f32 %v5389, %v5645
    %5647 = vmatprep.mubr.f32.mxu0 %v462
    %5648 = vmatmul.mubr.f32.gmra.mrb[0].mxu0 %v461
    %v5649 = vpop.f32.mrb[0].mxu0
    %v5650 = vadd.f32 %v5393, %v5649
    %v5651 = vpop.f32.mrb[0].mxu0
    %v5652 = vadd.f32 %v5395, %v5651
    %5653 = vmatprep.mubr.f32.mxu0 %v466
    %5654 = vmatmul.mubr.f32.gmra.mrb[0].mxu0 %v465
    %v5655 = vpop.f32.mrb[0].mxu0
    %v5656 = vadd.f32 %v5399, %v5655
    %v5657 = vpop.f32.mrb[0].mxu0
    %v5658 = vadd.f32 %v5401, %v5657
    %5659 = vmatprep.mubr.f32.mxu0 %v470
    %5660 = vmatmul.mubr.f32.gmra.mrb[0].mxu0 %v469
    %v5661 = vpop.f32.mrb[0].mxu0
    %v5662 = vadd.f32 %v5405, %v5661
    %v5663 = vpop.f32.mrb[0].mxu0
    %v5664 = vadd.f32 %v5407, %v5663
    %5665 = vdwg.mxu0
    %v5666 = vadd.f32 %v5476, %v5482
    %v5667 = vadd.f32 %v5666, %v5488
    %v5668 = vadd.f32 %v5667, %v5494
    %v5669 = vadd.f32 %v5668, %v5500
    %v5670 = vadd.f32 %v5669, %v5506
    %v5671 = vadd.f32 %v5670, %v5512
    %v5672 = vadd.f32 %v5671, %v5518
    %v5673 = vadd.f32 %v5672, %v5524
    %v5674 = vadd.f32 %v5673, %v5530
    %v5675 = vadd.f32 %v5674, %v5536
    %v5676 = vadd.f32 %v5675, %v5542
    %v5677 = vadd.f32 %v5676, %v5548
    %v5678 = vadd.f32 %v5677, %v5554
    %v5679 = vadd.f32 %v5678, %v5560
    %v5680 = vadd.f32 %v5679, %v5566
    %v5681 = vadd.f32 %v5680, %v5572
    %v5682 = vadd.f32 %v5681, %v5578
    %v5683 = vadd.f32 %v5682, %v5584
    %v5684 = vadd.f32 %v5683, %v5590
    %v5685 = vadd.f32 %v5684, %v5596
    %v5686 = vadd.f32 %v5685, %v5602
    %v5687 = vadd.f32 %v5686, %v5608
    %v5688 = vadd.f32 %v5687, %v5614
    %v5689 = vadd.f32 %v5688, %v5620
    %v5690 = vadd.f32 %v5689, %v5626
    %v5691 = vadd.f32 %v5690, %v5632
    %v5692 = vadd.f32 %v5691, %v5638
    %v5693 = vadd.f32 %v5692, %v5644
    %v5694 = vadd.f32 %v5693, %v5650
    %v5695 = vadd.f32 %v5694, %v5656
    %v5696 = vadd.f32 %v5695, %v5662
    %v5697 = vrot.slane %v5696, 4
    %v5698 = vadd.f32 %v5696, %v5697
    %v5699 = vrot.slane %v5698, 2
    %v5700 = vadd.f32 %v5698, %v5699
    %v5701 = vrot.slane %v5700, 1
    %v5702 = vadd.f32 %v5700, %v5701
    %v5703 = vadd.f32 %v5478, %v5484
    %v5704 = vadd.f32 %v5703, %v5490
    %v5705 = vadd.f32 %v5704, %v5496
    %v5706 = vadd.f32 %v5705, %v5502
    %v5707 = vadd.f32 %v5706, %v5508
    %v5708 = vadd.f32 %v5707, %v5514
    %v5709 = vadd.f32 %v5708, %v5520
    %v5710 = vadd.f32 %v5709, %v5526
    %v5711 = vadd.f32 %v5710, %v5532
    %v5712 = vadd.f32 %v5711, %v5538
    %v5713 = vadd.f32 %v5712, %v5544
    %v5714 = vadd.f32 %v5713, %v5550
    %v5715 = vadd.f32 %v5714, %v5556
    %v5716 = vadd.f32 %v5715, %v5562
    %v5717 = vadd.f32 %v5716, %v5568
    %v5718 = vadd.f32 %v5717, %v5574
    %v5719 = vadd.f32 %v5718, %v5580
    %v5720 = vadd.f32 %v5719, %v5586
    %v5721 = vadd.f32 %v5720, %v5592
    %v5722 = vadd.f32 %v5721, %v5598
    %v5723 = vadd.f32 %v5722, %v5604
    %v5724 = vadd.f32 %v5723, %v5610
    %v5725 = vadd.f32 %v5724, %v5616
    %v5726 = vadd.f32 %v5725, %v5622
    %v5727 = vadd.f32 %v5726, %v5628
    %v5728 = vadd.f32 %v5727, %v5634
    %v5729 = vadd.f32 %v5728, %v5640
    %v5730 = vadd.f32 %v5729, %v5646
    %v5731 = vadd.f32 %v5730, %v5652
    %v5732 = vadd.f32 %v5731, %v5658
    %v5733 = vadd.f32 %v5732, %v5664
    %v5734 = vrot.slane %v5733, 4
    %v5735 = vadd.f32 %v5733, %v5734
    %v5736 = vrot.slane %v5735, 2
    %v5737 = vadd.f32 %v5735, %v5736
    %v5738 = vrot.slane %v5737, 1
    %v5739 = vadd.f32 %v5737, %v5738
    %vm5740 = vcmp.gt.f32.partialorder %v5702, 0.0
    %vm5741 = vcmp.gt.f32.partialorder %v5739, 0.0
    %v5742 = vrsqrt.pop %v5702
    %v5743 = vrsqrt.pop %v5739
    %v5744 = vsel %vm5740, %v5742, 0.0
    %v5745 = vsel %vm5741, %v5743, 0.0
    %s5746 = sld [smem:[#allocation2 + $0x80]]
    %v5747 = vstv %s5746
    %v5748 = vmul.f32 %v5747, %v2322
    %s5749 = sld [smem:[#allocation2 + $0x81]]
    %v5750 = vstv %s5749
    %v5751 = vmul.f32 %v5750, %v2327
    %v5752 = vadd.f32 %v5748, %v5751
    %s5753 = sld [smem:[#allocation2 + $0x82]]
    %v5754 = vstv %s5753
    %v5755 = vmul.f32 %v5754, %v2333
    %v5756 = vadd.f32 %v5752, %v5755
    %s5757 = sld [smem:[#allocation2 + $0x83]]
    %v5758 = vstv %s5757
    %v5759 = vmul.f32 %v5758, %v2339
    %v5760 = vadd.f32 %v5756, %v5759
    %v5763 = vcombine.low %v5744, %v5745
    %v5765 = vunpack.c.l.s4 1966171168
    %v5766 = vunpack.c.0.s8 %v5765
    %v5767 = vlaneseq
    %v5768 = vshrl.u32 %v5767, 7
    %v5769 = vsub.s32 %v5766, %v5768
    %v5770 = vrot.slane %v5763, %v5769
    %v5772 = vunpack.c.l.s4 1966171168
    %v5773 = vunpack.c.0.s8 %v5772
    %v5774 = vlaneseq
    %v5775 = vshrl.u32 %v5774, 7
    %v5776 = vsub.s32 %v5773, %v5775
    %v5777 = vrot.slane %v5770, %v5776
    %v5779 = vmul.f32 %v5760, %v5777
    %v5781 = vlaneseq
    %v5782 = vshrl.u32 %v5781, 7
    %v5783 = vsub.s32 0, %v5782
    %v5784 = vrot.slane %v5779, %v5783
    %v5785 = vlaneseq
    %v5786 = vshrl.u32 %v5785, 7
    %v5787 = vsub.s32 1, %v5786
    %v5788 = vrot.slane %v5779, %v5787
    %5791 = vmatprep.subr.mxu0 %v5478
    %5792 = vmatpush1.msra.mxu0 %v5476
    %5793 = vmatprep.subr.mxu0 %v5484
    %5794 = vmatpush1.msra.mxu0 %v5482
    %5795 = vmatprep.subr.mxu0 %v5490
    %5796 = vmatpush1.msra.mxu0 %v5488
    %5797 = vmatprep.subr.mxu0 %v5496
    %5798 = vmatpush1.msra.mxu0 %v5494
    %5799 = vmatprep.subr.mxu0 %v5502
    %5800 = vmatpush1.msra.mxu0 %v5500
    %5801 = vmatprep.subr.mxu0 %v5508
    %5802 = vmatpush1.msra.mxu0 %v5506
    %5803 = vmatprep.subr.mxu0 %v5514
    %5804 = vmatpush1.msra.mxu0 %v5512
    %5805 = vmatprep.subr.mxu0 %v5520
    %5806 = vmatpush1.msra.mxu0 %v5518
    %5807 = vmatprep.subr.mxu0 %v5526
    %5808 = vmatpush1.msra.mxu0 %v5524
    %5809 = vmatprep.subr.mxu0 %v5532
    %5810 = vmatpush1.msra.mxu0 %v5530
    %5811 = vmatprep.subr.mxu0 %v5538
    %5812 = vmatpush1.msra.mxu0 %v5536
    %5813 = vmatprep.subr.mxu0 %v5544
    %5814 = vmatpush1.msra.mxu0 %v5542
    %5815 = vmatprep.subr.mxu0 %v5550
    %5816 = vmatpush1.msra.mxu0 %v5548
    %5817 = vmatprep.subr.mxu0 %v5556
    %5818 = vmatpush1.msra.mxu0 %v5554
    %5819 = vmatprep.subr.mxu0 %v5562
    %5820 = vmatpush1.msra.mxu0 %v5560
    %5821 = vmatprep.subr.mxu0 %v5568
    %5822 = vmatpush1.msra.mxu0 %v5566
    %5823 = vmatprep.subr.mxu0 %v5574
    %5824 = vmatpush1.msra.mxu0 %v5572
    %5825 = vmatprep.subr.mxu0 %v5580
    %5826 = vmatpush1.msra.mxu0 %v5578
    %5827 = vmatprep.subr.mxu0 %v5586
    %5828 = vmatpush1.msra.mxu0 %v5584
    %5829 = vmatprep.subr.mxu0 %v5592
    %5830 = vmatpush1.msra.mxu0 %v5590
    %5831 = vmatprep.subr.mxu0 %v5598
    %5832 = vmatpush1.msra.mxu0 %v5596
    %5833 = vmatprep.subr.mxu0 %v5604
    %5834 = vmatpush1.msra.mxu0 %v5602
    %5835 = vmatprep.subr.mxu0 %v5610
    %5836 = vmatpush1.msra.mxu0 %v5608
    %5837 = vmatprep.subr.mxu0 %v5616
    %5838 = vmatpush1.msra.mxu0 %v5614
    %5839 = vmatprep.subr.mxu0 %v5622
    %5840 = vmatpush1.msra.mxu0 %v5620
    %5841 = vmatprep.subr.mxu0 %v5628
    %5842 = vmatpush1.msra.mxu0 %v5626
    %5843 = vmatprep.subr.mxu0 %v5634
    %5844 = vmatpush1.msra.mxu0 %v5632
    %5845 = vmatprep.subr.mxu0 %v5640
    %5846 = vmatpush1.msra.mxu0 %v5638
    %5847 = vmatprep.subr.mxu0 %v5646
    %5848 = vmatpush1.msra.mxu0 %v5644
    %5849 = vmatprep.subr.mxu0 %v5652
    %5850 = vmatpush1.msra.mxu0 %v5650
    %5851 = vmatprep.subr.mxu0 %v5658
    %5852 = vmatpush1.msra.mxu0 %v5656
    %5853 = vmatprep.subr.mxu0 %v5664
    %5854 = vmatpush1.msra.mxu0 %v5662
    %5855 = vmatprep.mubr.f32.mxu0 %v5788
    %5856 = vmatmul.mubr.f32.gmra.mrb[0].mxu0 %v5784
    %v5857 = vpop.f32.mrb[0].mxu0
    %v5858 = vadd.f32 0.0, %v5857
    %v5859 = vpop.f32.mrb[0].mxu0
    %v5860 = vadd.f32 0.0, %v5859
    %5861 = vdwg.mxu0
    %v5862 = vmul.f32 %v5858, %v5744
    %v5863 = vmul.f32 %v5860, %v5745
    %s5864 = sld [smem:[#allocation2 + $0x88]]
    %v5865 = vstv %s5864
    %v5866 = vadd.f32 %v5862, %v5865
    %v5867 = vadd.f32 %v5863, %v5865
    %s5868 = sld [smem:[#allocation2 + $0x84]]
    %v5869 = vstv %s5868
    %v5870 = vmul.f32 %v5866, %v5869
    %v5871 = vmul.f32 %v5867, %v5869
    %v5872 = vmul.f32 %v5870, %v5744
    %v5873 = vmul.f32 %v5871, %v5745
    %5874 = vmatprep.subr.mxu0 %v5478
    %5875 = vmatpush1.msra.mxu0 %v5476
    %5876 = vmatprep.subr.mxu0 %v5484
    %5877 = vmatpush1.msra.mxu0 %v5482
    %5878 = vmatprep.subr.mxu0 %v5490
    %5879 = vmatpush1.msra.mxu0 %v5488
    %5880 = vmatprep.subr.mxu0 %v5496
    %5881 = vmatpush1.msra.mxu0 %v5494
    %5882 = vmatprep.subr.mxu0 %v5502
    %5883 = vmatpush1.msra.mxu0 %v5500
    %5884 = vmatprep.subr.mxu0 %v5508
    %5885 = vmatpush1.msra.mxu0 %v5506
    %5886 = vmatprep.subr.mxu0 %v5514
    %5887 = vmatpush1.msra.mxu0 %v5512
    %5888 = vmatprep.subr.mxu0 %v5520
    %5889 = vmatpush1.msra.mxu0 %v5518
    %5890 = vmatprep.subr.mxu0 %v5526
    %5891 = vmatpush1.msra.mxu0 %v5524
    %5892 = vmatprep.subr.mxu0 %v5532
    %5893 = vmatpush1.msra.mxu0 %v5530
    %5894 = vmatprep.subr.mxu0 %v5538
    %5895 = vmatpush1.msra.mxu0 %v5536
    %5896 = vmatprep.subr.mxu0 %v5544
    %5897 = vmatpush1.msra.mxu0 %v5542
    %5898 = vmatprep.subr.mxu0 %v5550
    %5899 = vmatpush1.msra.mxu0 %v5548
    %5900 = vmatprep.subr.mxu0 %v5556
    %5901 = vmatpush1.msra.mxu0 %v5554
    %5902 = vmatprep.subr.mxu0 %v5562
    %5903 = vmatpush1.msra.mxu0 %v5560
    %5904 = vmatprep.subr.mxu0 %v5568
    %5905 = vmatpush1.msra.mxu0 %v5566
    %5906 = vmatprep.subr.mxu0 %v5574
    %5907 = vmatpush1.msra.mxu0 %v5572
    %5908 = vmatprep.subr.mxu0 %v5580
    %5909 = vmatpush1.msra.mxu0 %v5578
    %5910 = vmatprep.subr.mxu0 %v5586
    %5911 = vmatpush1.msra.mxu0 %v5584
    %5912 = vmatprep.subr.mxu0 %v5592
    %5913 = vmatpush1.msra.mxu0 %v5590
    %5914 = vmatprep.subr.mxu0 %v5598
    %5915 = vmatpush1.msra.mxu0 %v5596
    %5916 = vmatprep.subr.mxu0 %v5604
    %5917 = vmatpush1.msra.mxu0 %v5602
    %5918 = vmatprep.subr.mxu0 %v5610
    %5919 = vmatpush1.msra.mxu0 %v5608
    %5920 = vmatprep.subr.mxu0 %v5616
    %5921 = vmatpush1.msra.mxu0 %v5614
    %5922 = vmatprep.subr.mxu0 %v5622
    %5923 = vmatpush1.msra.mxu0 %v5620
    %5924 = vmatprep.subr.mxu0 %v5628
    %5925 = vmatpush1.msra.mxu0 %v5626
    %5926 = vmatprep.subr.mxu0 %v5634
    %5927 = vmatpush1.msra.mxu0 %v5632
    %5928 = vmatprep.subr.mxu0 %v5640
    %5929 = vmatpush1.msra.mxu0 %v5638
    %5930 = vmatprep.subr.mxu0 %v5646
    %5931 = vmatpush1.msra.mxu0 %v5644
    %5932 = vmatprep.subr.mxu0 %v5652
    %5933 = vmatpush1.msra.mxu0 %v5650
    %5934 = vmatprep.subr.mxu0 %v5658
    %5935 = vmatpush1.msra.mxu0 %v5656
    %5936 = vmatprep.subr.mxu0 %v5664
    %5937 = vmatpush1.msra.mxu0 %v5662
    %5938 = vmatprep.mubr.f32.mxu0 %v5873
    %5939 = vmatmul.mubr.f32.gmra.mrb[0].mxu0 %v5872
    %v5940 = vpop.f32.mrb[0].mxu0
    %v5941 = vadd.f32 0.0, %v5940
    %v5942 = vpop.f32.mrb[0].mxu0
    %v5943 = vadd.f32 0.0, %v5942
    %5944 = vdwg.mxu0
    %v5945 = vmul.f32 %v5941, %v5744
    %v5946 = vmul.f32 %v5943, %v5745
    %s5947 = sld [smem:[#allocation2 + $0x89]]
    %v5948 = vstv %s5947
    %v5949 = vadd.f32 %v5945, %v5948
    %v5950 = vadd.f32 %v5946, %v5948
    %s5951 = sld [smem:[#allocation2 + $0x85]]
    %v5952 = vstv %s5951
    %v5953 = vmul.f32 %v5949, %v5952
    %v5954 = vmul.f32 %v5950, %v5952
    %v5955 = vmul.f32 %v5953, %v5744
    %v5956 = vmul.f32 %v5954, %v5745
    %5957 = vmatprep.subr.mxu0 %v5478
    %5958 = vmatpush1.msra.mxu0 %v5476
    %5959 = vmatprep.subr.mxu0 %v5484
    %5960 = vmatpush1.msra.mxu0 %v5482
    %5961 = vmatprep.subr.mxu0 %v5490
    %5962 = vmatpush1.msra.mxu0 %v5488
    %5963 = vmatprep.subr.mxu0 %v5496
    %5964 = vmatpush1.msra.mxu0 %v5494
    %5965 = vmatprep.subr.mxu0 %v5502
    %5966 = vmatpush1.msra.mxu0 %v5500
    %5967 = vmatprep.subr.mxu0 %v5508
    %5968 = vmatpush1.msra.mxu0 %v5506
    %5969 = vmatprep.subr.mxu0 %v5514
    %5970 = vmatpush1.msra.mxu0 %v5512
    %5971 = vmatprep.subr.mxu0 %v5520
    %5972 = vmatpush1.msra.mxu0 %v5518
    %5973 = vmatprep.subr.mxu0 %v5526
    %5974 = vmatpush1.msra.mxu0 %v5524
    %5975 = vmatprep.subr.mxu0 %v5532
    %5976 = vmatpush1.msra.mxu0 %v5530
    %5977 = vmatprep.subr.mxu0 %v5538
    %5978 = vmatpush1.msra.mxu0 %v5536
    %5979 = vmatprep.subr.mxu0 %v5544
    %5980 = vmatpush1.msra.mxu0 %v5542
    %5981 = vmatprep.subr.mxu0 %v5550
    %5982 = vmatpush1.msra.mxu0 %v5548
    %5983 = vmatprep.subr.mxu0 %v5556
    %5984 = vmatpush1.msra.mxu0 %v5554
    %5985 = vmatprep.subr.mxu0 %v5562
    %5986 = vmatpush1.msra.mxu0 %v5560
    %5987 = vmatprep.subr.mxu0 %v5568
    %5988 = vmatpush1.msra.mxu0 %v5566
    %5989 = vmatprep.subr.mxu0 %v5574
    %5990 = vmatpush1.msra.mxu0 %v5572
    %5991 = vmatprep.subr.mxu0 %v5580
    %5992 = vmatpush1.msra.mxu0 %v5578
    %5993 = vmatprep.subr.mxu0 %v5586
    %5994 = vmatpush1.msra.mxu0 %v5584
    %5995 = vmatprep.subr.mxu0 %v5592
    %5996 = vmatpush1.msra.mxu0 %v5590
    %5997 = vmatprep.subr.mxu0 %v5598
    %5998 = vmatpush1.msra.mxu0 %v5596
    %5999 = vmatprep.subr.mxu0 %v5604
    %6000 = vmatpush1.msra.mxu0 %v5602
    %6001 = vmatprep.subr.mxu0 %v5610
    %6002 = vmatpush1.msra.mxu0 %v5608
    %6003 = vmatprep.subr.mxu0 %v5616
    %6004 = vmatpush1.msra.mxu0 %v5614
    %6005 = vmatprep.subr.mxu0 %v5622
    %6006 = vmatpush1.msra.mxu0 %v5620
    %6007 = vmatprep.subr.mxu0 %v5628
    %6008 = vmatpush1.msra.mxu0 %v5626
    %6009 = vmatprep.subr.mxu0 %v5634
    %6010 = vmatpush1.msra.mxu0 %v5632
    %6011 = vmatprep.subr.mxu0 %v5640
    %6012 = vmatpush1.msra.mxu0 %v5638
    %6013 = vmatprep.subr.mxu0 %v5646
    %6014 = vmatpush1.msra.mxu0 %v5644
    %6015 = vmatprep.subr.mxu0 %v5652
    %6016 = vmatpush1.msra.mxu0 %v5650
    %6017 = vmatprep.subr.mxu0 %v5658
    %6018 = vmatpush1.msra.mxu0 %v5656
    %6019 = vmatprep.subr.mxu0 %v5664
    %6020 = vmatpush1.msra.mxu0 %v5662
    %6021 = vmatprep.mubr.f32.mxu0 %v5956
    %6022 = vmatmul.mubr.f32.gmra.mrb[0].mxu0 %v5955
    %v6023 = vpop.f32.mrb[0].mxu0
    %v6024 = vadd.f32 0.0, %v6023
    %v6025 = vpop.f32.mrb[0].mxu0
    %v6026 = vadd.f32 0.0, %v6025
    %6027 = vdwg.mxu0
    %v6028 = vmul.f32 %v6024, %v5744
    %v6029 = vmul.f32 %v6026, %v5745
    %s6030 = sld [smem:[#allocation2 + $0x8a]]
    %v6031 = vstv %s6030
    %v6032 = vadd.f32 %v6028, %v6031
    %v6033 = vadd.f32 %v6029, %v6031
    %s6034 = sld [smem:[#allocation2 + $0x86]]
    %v6035 = vstv %s6034
    %v6036 = vmul.f32 %v6032, %v6035
    %v6037 = vmul.f32 %v6033, %v6035
    %v6038 = vmul.f32 %v6036, %v5744
    %v6039 = vmul.f32 %v6037, %v5745
    %6040 = vmatprep.subr.mxu0 %v5478
    %6041 = vmatpush1.msra.mxu0 %v5476
    %6042 = vmatprep.subr.mxu0 %v5484
    %6043 = vmatpush1.msra.mxu0 %v5482
    %6044 = vmatprep.subr.mxu0 %v5490
    %6045 = vmatpush1.msra.mxu0 %v5488
    %6046 = vmatprep.subr.mxu0 %v5496
    %6047 = vmatpush1.msra.mxu0 %v5494
    %6048 = vmatprep.subr.mxu0 %v5502
    %6049 = vmatpush1.msra.mxu0 %v5500
    %6050 = vmatprep.subr.mxu0 %v5508
    %6051 = vmatpush1.msra.mxu0 %v5506
    %6052 = vmatprep.subr.mxu0 %v5514
    %6053 = vmatpush1.msra.mxu0 %v5512
    %6054 = vmatprep.subr.mxu0 %v5520
    %6055 = vmatpush1.msra.mxu0 %v5518
    %6056 = vmatprep.subr.mxu0 %v5526
    %6057 = vmatpush1.msra.mxu0 %v5524
    %6058 = vmatprep.subr.mxu0 %v5532
    %6059 = vmatpush1.msra.mxu0 %v5530
    %6060 = vmatprep.subr.mxu0 %v5538
    %6061 = vmatpush1.msra.mxu0 %v5536
    %6062 = vmatprep.subr.mxu0 %v5544
    %6063 = vmatpush1.msra.mxu0 %v5542
    %6064 = vmatprep.subr.mxu0 %v5550
    %6065 = vmatpush1.msra.mxu0 %v5548
    %6066 = vmatprep.subr.mxu0 %v5556
    %6067 = vmatpush1.msra.mxu0 %v5554
    %6068 = vmatprep.subr.mxu0 %v5562
    %6069 = vmatpush1.msra.mxu0 %v5560
    %6070 = vmatprep.subr.mxu0 %v5568
    %6071 = vmatpush1.msra.mxu0 %v5566
    %6072 = vmatprep.subr.mxu0 %v5574
    %6073 = vmatpush1.msra.mxu0 %v5572
    %6074 = vmatprep.subr.mxu0 %v5580
    %6075 = vmatpush1.msra.mxu0 %v5578
    %6076 = vmatprep.subr.mxu0 %v5586
    %6077 = vmatpush1.msra.mxu0 %v5584
    %6078 = vmatprep.subr.mxu0 %v5592
    %6079 = vmatpush1.msra.mxu0 %v5590
    %6080 = vmatprep.subr.mxu0 %v5598
    %6081 = vmatpush1.msra.mxu0 %v5596
    %6082 = vmatprep.subr.mxu0 %v5604
    %6083 = vmatpush1.msra.mxu0 %v5602
    %6084 = vmatprep.subr.mxu0 %v5610
    %6085 = vmatpush1.msra.mxu0 %v5608
    %6086 = vmatprep.subr.mxu0 %v5616
    %6087 = vmatpush1.msra.mxu0 %v5614
    %6088 = vmatprep.subr.mxu0 %v5622
    %6089 = vmatpush1.msra.mxu0 %v5620
    %6090 = vmatprep.subr.mxu0 %v5628
    %6091 = vmatpush1.msra.mxu0 %v5626
    %6092 = vmatprep.subr.mxu0 %v5634
    %6093 = vmatpush1.msra.mxu0 %v5632
    %6094 = vmatprep.subr.mxu0 %v5640
    %6095 = vmatpush1.msra.mxu0 %v5638
    %6096 = vmatprep.subr.mxu0 %v5646
    %6097 = vmatpush1.msra.mxu0 %v5644
    %6098 = vmatprep.subr.mxu0 %v5652
    %6099 = vmatpush1.msra.mxu0 %v5650
    %6100 = vmatprep.subr.mxu0 %v5658
    %6101 = vmatpush1.msra.mxu0 %v5656
    %6102 = vmatprep.subr.mxu0 %v5664
    %6103 = vmatpush1.msra.mxu0 %v5662
    %6104 = vmatprep.mubr.f32.mxu0 %v6039
    %6105 = vmatmul.mubr.f32.gmra.mrb[0].mxu0 %v6038
    %v6106 = vpop.f32.mrb[0].mxu0
    %v6107 = vadd.f32 0.0, %v6106
    %v6108 = vpop.f32.mrb[0].mxu0
    %v6109 = vadd.f32 0.0, %v6108
    %6110 = vdwg.mxu0
    %v6111 = vmul.f32 %v6107, %v5744
    %v6112 = vmul.f32 %v6109, %v5745
    %s6113 = sld [smem:[#allocation2 + $0x8b]]
    %v6114 = vstv %s6113
    %v6115 = vadd.f32 %v6111, %v6114
    %v6116 = vadd.f32 %v6112, %v6114
    %s6117 = sld [smem:[#allocation2 + $0x87]]
    %v6118 = vstv %s6117
    %v6119 = vmul.f32 %v6115, %v6118
    %v6120 = vmul.f32 %v6116, %v6118
    %v6121 = vmul.f32 %v6119, %v5744
    %v6122 = vmul.f32 %v6120, %v5745
    %6123 = vmatprep.subr.mxu0 %v5478
    %6124 = vmatpush1.msra.mxu0 %v5476
    %6125 = vmatprep.subr.mxu0 %v5484
    %6126 = vmatpush1.msra.mxu0 %v5482
    %6127 = vmatprep.subr.mxu0 %v5490
    %6128 = vmatpush1.msra.mxu0 %v5488
    %6129 = vmatprep.subr.mxu0 %v5496
    %6130 = vmatpush1.msra.mxu0 %v5494
    %6131 = vmatprep.subr.mxu0 %v5502
    %6132 = vmatpush1.msra.mxu0 %v5500
    %6133 = vmatprep.subr.mxu0 %v5508
    %6134 = vmatpush1.msra.mxu0 %v5506
    %6135 = vmatprep.subr.mxu0 %v5514
    %6136 = vmatpush1.msra.mxu0 %v5512
    %6137 = vmatprep.subr.mxu0 %v5520
    %6138 = vmatpush1.msra.mxu0 %v5518
    %6139 = vmatprep.subr.mxu0 %v5526
    %6140 = vmatpush1.msra.mxu0 %v5524
    %6141 = vmatprep.subr.mxu0 %v5532
    %6142 = vmatpush1.msra.mxu0 %v5530
    %6143 = vmatprep.subr.mxu0 %v5538
    %6144 = vmatpush1.msra.mxu0 %v5536
    %6145 = vmatprep.subr.mxu0 %v5544
    %6146 = vmatpush1.msra.mxu0 %v5542
    %6147 = vmatprep.subr.mxu0 %v5550
    %6148 = vmatpush1.msra.mxu0 %v5548
    %6149 = vmatprep.subr.mxu0 %v5556
    %6150 = vmatpush1.msra.mxu0 %v5554
    %6151 = vmatprep.subr.mxu0 %v5562
    %6152 = vmatpush1.msra.mxu0 %v5560
    %6153 = vmatprep.subr.mxu0 %v5568
    %6154 = vmatpush1.msra.mxu0 %v5566
    %6155 = vmatprep.subr.mxu0 %v5574
    %6156 = vmatpush1.msra.mxu0 %v5572
    %6157 = vmatprep.subr.mxu0 %v5580
    %6158 = vmatpush1.msra.mxu0 %v5578
    %6159 = vmatprep.subr.mxu0 %v5586
    %6160 = vmatpush1.msra.mxu0 %v5584
    %6161 = vmatprep.subr.mxu0 %v5592
    %6162 = vmatpush1.msra.mxu0 %v5590
    %6163 = vmatprep.subr.mxu0 %v5598
    %6164 = vmatpush1.msra.mxu0 %v5596
    %6165 = vmatprep.subr.mxu0 %v5604
    %6166 = vmatpush1.msra.mxu0 %v5602
    %6167 = vmatprep.subr.mxu0 %v5610
    %6168 = vmatpush1.msra.mxu0 %v5608
    %6169 = vmatprep.subr.mxu0 %v5616
    %6170 = vmatpush1.msra.mxu0 %v5614
    %6171 = vmatprep.subr.mxu0 %v5622
    %6172 = vmatpush1.msra.mxu0 %v5620
    %6173 = vmatprep.subr.mxu0 %v5628
    %6174 = vmatpush1.msra.mxu0 %v5626
    %6175 = vmatprep.subr.mxu0 %v5634
    %6176 = vmatpush1.msra.mxu0 %v5632
    %6177 = vmatprep.subr.mxu0 %v5640
    %6178 = vmatpush1.msra.mxu0 %v5638
    %6179 = vmatprep.subr.mxu0 %v5646
    %6180 = vmatpush1.msra.mxu0 %v5644
    %6181 = vmatprep.subr.mxu0 %v5652
    %6182 = vmatpush1.msra.mxu0 %v5650
    %6183 = vmatprep.subr.mxu0 %v5658
    %6184 = vmatpush1.msra.mxu0 %v5656
    %6185 = vmatprep.subr.mxu0 %v5664
    %6186 = vmatpush1.msra.mxu0 %v5662
    %6187 = vmatprep.mubr.f32.mxu0 %v6122
    %6188 = vmatmul.mubr.f32.gmra.mrb[0].mxu0 %v6121
    %v6189 = vpop.f32.mrb[0].mxu0
    %v6190 = vadd.f32 0.0, %v6189
    %v6191 = vpop.f32.mrb[0].mxu0
    %v6192 = vadd.f32 0.0, %v6191
    %6193 = vdwg.mxu0
    %v6194 = vmul.f32 %v6190, %v5744
    %v6195 = vmul.f32 %v6192, %v5745
    %s6196 = sld [smem:[#allocation2 + $0x8c]]
    %v6197 = vstv %s6196
    %v6198 = vadd.f32 %v6194, %v6197
    %v6199 = vadd.f32 %v6195, %v6197
    %v6200 = vsel %vm1276, %v6198, -1e+30
    %v6201 = vsel %vm1277, %v6199, -1e+30
    %v6202 = vlaneseq
    %v6203 = vshrl.u32 %v6202, 7
    %v6204 = vsub.s32 0, %v6203
    %v6205 = vrot.slane %v6200, %v6204
    %v6206 = vlaneseq
    %v6207 = vshrl.u32 %v6206, 7
    %v6208 = vsub.s32 0, %v6207
    %v6209 = vrot.slane %v6201, %v6208
    %v6210 = vmul.f32 %v6205, %v1050
    %v6211 = vmul.f32 %v6209, %v1051
    %v6212 = vmul.f32 %v6205, %v1052
    %v6213 = vmul.f32 %v6209, %v1053
    %v6214 = vmul.f32 %v6205, %v1054
    %v6215 = vmul.f32 %v6209, %v1055
    %v6216 = vmul.f32 %v6205, %v1056
    %v6217 = vmul.f32 %v6209, %v1057
    %v6218 = vmul.f32 %v6205, %v1058
    %v6219 = vmul.f32 %v6209, %v1059
    %v6220 = vmul.f32 %v6205, %v1060
    %v6221 = vmul.f32 %v6209, %v1061
    %v6222 = vmul.f32 %v6205, %v1062
    %v6223 = vmul.f32 %v6209, %v1063
    %v6224 = vmul.f32 %v6205, %v1064
    %v6225 = vmul.f32 %v6209, %v1065
    %v6226 = vmul.f32 %v6205, %v1066
    %v6227 = vmul.f32 %v6209, %v1067
    %v6228 = vmul.f32 %v6205, %v1068
    %v6229 = vmul.f32 %v6209, %v1069
    %v6230 = vmul.f32 %v6205, %v1070
    %v6231 = vmul.f32 %v6209, %v1071
    %v6232 = vmul.f32 %v6205, %v1072
    %v6233 = vmul.f32 %v6209, %v1073
    %v6234 = vmul.f32 %v6205, %v1074
    %v6235 = vmul.f32 %v6209, %v1075
    %v6236 = vmul.f32 %v6205, %v1076
    %v6237 = vmul.f32 %v6209, %v1077
    %v6238 = vmul.f32 %v6205, %v1078
    %v6239 = vmul.f32 %v6209, %v1079
    %v6240 = vmul.f32 %v6205, %v1080
    %v6241 = vmul.f32 %v6209, %v1081
    %v6242 = vmul.f32 %v6205, %v1082
    %v6243 = vmul.f32 %v6209, %v1083
    %v6244 = vmul.f32 %v6205, %v1084
    %v6245 = vmul.f32 %v6209, %v1085
    %v6246 = vmul.f32 %v6205, %v1086
    %v6247 = vmul.f32 %v6209, %v1087
    %v6248 = vmul.f32 %v6205, %v1088
    %v6249 = vmul.f32 %v6209, %v1089
    %v6250 = vmul.f32 %v6205, %v1090
    %v6251 = vmul.f32 %v6209, %v1091
    %v6252 = vmul.f32 %v6205, %v1092
    %v6253 = vmul.f32 %v6209, %v1093
    %v6254 = vmul.f32 %v6205, %v1094
    %v6255 = vmul.f32 %v6209, %v1095
    %v6256 = vmul.f32 %v6205, %v1096
    %v6257 = vmul.f32 %v6209, %v1097
    %v6258 = vmul.f32 %v6205, %v1098
    %v6259 = vmul.f32 %v6209, %v1099
    %v6260 = vmul.f32 %v6205, %v1100
    %v6261 = vmul.f32 %v6209, %v1101
    %v6262 = vmul.f32 %v6205, %v1102
    %v6263 = vmul.f32 %v6209, %v1103
    %v6264 = vmul.f32 %v6205, %v1104
    %v6265 = vmul.f32 %v6209, %v1105
    %v6266 = vmul.f32 %v6205, %v1106
    %v6267 = vmul.f32 %v6209, %v1107
    %v6268 = vmul.f32 %v6205, %v1108
    %v6269 = vmul.f32 %v6209, %v1109
    %v6270 = vmul.f32 %v6205, %v1110
    %v6271 = vmul.f32 %v6209, %v1111
    %v6272 = vmul.f32 %v6205, %v1112
    %v6273 = vmul.f32 %v6209, %v1113
    %v6274 = vadd.f32 %v6210, %v6211
    %6275 = vadd.xlane.f32.xlu0 %v6274
    %v6276 = vpop.xlane.xlu0 %6275
    %v6277 = vadd.f32 %v6212, %v6213
    %6278 = vadd.xlane.f32.xlu0 %v6277
    %v6279 = vpop.xlane.xlu0 %6278
    %v6280 = vadd.f32 %v6214, %v6215
    %6281 = vadd.xlane.f32.xlu0 %v6280
    %v6282 = vpop.xlane.xlu0 %6281
    %v6283 = vadd.f32 %v6216, %v6217
    %6284 = vadd.xlane.f32.xlu0 %v6283
    %v6285 = vpop.xlane.xlu0 %6284
    %v6286 = vadd.f32 %v6218, %v6219
    %6287 = vadd.xlane.f32.xlu0 %v6286
    %v6288 = vpop.xlane.xlu0 %6287
    %v6289 = vadd.f32 %v6220, %v6221
    %6290 = vadd.xlane.f32.xlu0 %v6289
    %v6291 = vpop.xlane.xlu0 %6290
    %v6292 = vadd.f32 %v6222, %v6223
    %6293 = vadd.xlane.f32.xlu0 %v6292
    %v6294 = vpop.xlane.xlu0 %6293
    %v6295 = vadd.f32 %v6224, %v6225
    %6296 = vadd.xlane.f32.xlu0 %v6295
    %v6297 = vpop.xlane.xlu0 %6296
    %v6298 = vadd.f32 %v6226, %v6227
    %6299 = vadd.xlane.f32.xlu0 %v6298
    %v6300 = vpop.xlane.xlu0 %6299
    %v6301 = vadd.f32 %v6228, %v6229
    %6302 = vadd.xlane.f32.xlu0 %v6301
    %v6303 = vpop.xlane.xlu0 %6302
    %v6304 = vadd.f32 %v6230, %v6231
    %6305 = vadd.xlane.f32.xlu0 %v6304
    %v6306 = vpop.xlane.xlu0 %6305
    %v6307 = vadd.f32 %v6232, %v6233
    %6308 = vadd.xlane.f32.xlu0 %v6307
    %v6309 = vpop.xlane.xlu0 %6308
    %v6310 = vadd.f32 %v6234, %v6235
    %6311 = vadd.xlane.f32.xlu0 %v6310
    %v6312 = vpop.xlane.xlu0 %6311
    %v6313 = vadd.f32 %v6236, %v6237
    %6314 = vadd.xlane.f32.xlu0 %v6313
    %v6315 = vpop.xlane.xlu0 %6314
    %v6316 = vadd.f32 %v6238, %v6239
    %6317 = vadd.xlane.f32.xlu0 %v6316
    %v6318 = vpop.xlane.xlu0 %6317
    %v6319 = vadd.f32 %v6240, %v6241
    %6320 = vadd.xlane.f32.xlu0 %v6319
    %v6321 = vpop.xlane.xlu0 %6320
    %v6322 = vadd.f32 %v6242, %v6243
    %6323 = vadd.xlane.f32.xlu0 %v6322
    %v6324 = vpop.xlane.xlu0 %6323
    %v6325 = vadd.f32 %v6244, %v6245
    %6326 = vadd.xlane.f32.xlu0 %v6325
    %v6327 = vpop.xlane.xlu0 %6326
    %v6328 = vadd.f32 %v6246, %v6247
    %6329 = vadd.xlane.f32.xlu0 %v6328
    %v6330 = vpop.xlane.xlu0 %6329
    %v6331 = vadd.f32 %v6248, %v6249
    %6332 = vadd.xlane.f32.xlu0 %v6331
    %v6333 = vpop.xlane.xlu0 %6332
    %v6334 = vadd.f32 %v6250, %v6251
    %6335 = vadd.xlane.f32.xlu0 %v6334
    %v6336 = vpop.xlane.xlu0 %6335
    %v6337 = vadd.f32 %v6252, %v6253
    %6338 = vadd.xlane.f32.xlu0 %v6337
    %v6339 = vpop.xlane.xlu0 %6338
    %v6340 = vadd.f32 %v6254, %v6255
    %6341 = vadd.xlane.f32.xlu0 %v6340
    %v6342 = vpop.xlane.xlu0 %6341
    %v6343 = vadd.f32 %v6256, %v6257
    %6344 = vadd.xlane.f32.xlu0 %v6343
    %v6345 = vpop.xlane.xlu0 %6344
    %v6346 = vadd.f32 %v6258, %v6259
    %6347 = vadd.xlane.f32.xlu0 %v6346
    %v6348 = vpop.xlane.xlu0 %6347
    %v6349 = vadd.f32 %v6260, %v6261
    %6350 = vadd.xlane.f32.xlu0 %v6349
    %v6351 = vpop.xlane.xlu0 %6350
    %v6352 = vadd.f32 %v6262, %v6263
    %6353 = vadd.xlane.f32.xlu0 %v6352
    %v6354 = vpop.xlane.xlu0 %6353
    %v6355 = vadd.f32 %v6264, %v6265
    %6356 = vadd.xlane.f32.xlu0 %v6355
    %v6357 = vpop.xlane.xlu0 %6356
    %v6358 = vadd.f32 %v6266, %v6267
    %6359 = vadd.xlane.f32.xlu0 %v6358
    %v6360 = vpop.xlane.xlu0 %6359
    %v6361 = vadd.f32 %v6268, %v6269
    %6362 = vadd.xlane.f32.xlu0 %v6361
    %v6363 = vpop.xlane.xlu0 %6362
    %v6364 = vadd.f32 %v6270, %v6271
    %6365 = vadd.xlane.f32.xlu0 %v6364
    %v6366 = vpop.xlane.xlu0 %6365
    %v6367 = vadd.f32 %v6272, %v6273
    %6368 = vadd.xlane.f32.xlu0 %v6367
    %v6369 = vpop.xlane.xlu0 %6368
    %vm6370 = vcmp.gt.f32.partialorder %v6205, %v6276
    %vm6371 = vcmp.gt.f32.partialorder %v6209, %v6276
    %vm6372 = vcmp.gt.f32.partialorder %v6205, %v6279
    %vm6373 = vcmp.gt.f32.partialorder %v6209, %v6279
    %vm6374 = vcmp.gt.f32.partialorder %v6205, %v6282
    %vm6375 = vcmp.gt.f32.partialorder %v6209, %v6282
    %vm6376 = vcmp.gt.f32.partialorder %v6205, %v6285
    %vm6377 = vcmp.gt.f32.partialorder %v6209, %v6285
    %vm6378 = vcmp.gt.f32.partialorder %v6205, %v6288
    %vm6379 = vcmp.gt.f32.partialorder %v6209, %v6288
    %vm6380 = vcmp.gt.f32.partialorder %v6205, %v6291
    %vm6381 = vcmp.gt.f32.partialorder %v6209, %v6291
    %vm6382 = vcmp.gt.f32.partialorder %v6205, %v6294
    %vm6383 = vcmp.gt.f32.partialorder %v6209, %v6294
    %vm6384 = vcmp.gt.f32.partialorder %v6205, %v6297
    %vm6385 = vcmp.gt.f32.partialorder %v6209, %v6297
    %vm6386 = vcmp.gt.f32.partialorder %v6205, %v6300
    %vm6387 = vcmp.gt.f32.partialorder %v6209, %v6300
    %vm6388 = vcmp.gt.f32.partialorder %v6205, %v6303
    %vm6389 = vcmp.gt.f32.partialorder %v6209, %v6303
    %vm6390 = vcmp.gt.f32.partialorder %v6205, %v6306
    %vm6391 = vcmp.gt.f32.partialorder %v6209, %v6306
    %vm6392 = vcmp.gt.f32.partialorder %v6205, %v6309
    %vm6393 = vcmp.gt.f32.partialorder %v6209, %v6309
    %vm6394 = vcmp.gt.f32.partialorder %v6205, %v6312
    %vm6395 = vcmp.gt.f32.partialorder %v6209, %v6312
    %vm6396 = vcmp.gt.f32.partialorder %v6205, %v6315
    %vm6397 = vcmp.gt.f32.partialorder %v6209, %v6315
    %vm6398 = vcmp.gt.f32.partialorder %v6205, %v6318
    %vm6399 = vcmp.gt.f32.partialorder %v6209, %v6318
    %vm6400 = vcmp.gt.f32.partialorder %v6205, %v6321
    %vm6401 = vcmp.gt.f32.partialorder %v6209, %v6321
    %vm6402 = vcmp.gt.f32.partialorder %v6205, %v6324
    %vm6403 = vcmp.gt.f32.partialorder %v6209, %v6324
    %vm6404 = vcmp.gt.f32.partialorder %v6205, %v6327
    %vm6405 = vcmp.gt.f32.partialorder %v6209, %v6327
    %vm6406 = vcmp.gt.f32.partialorder %v6205, %v6330
    %vm6407 = vcmp.gt.f32.partialorder %v6209, %v6330
    %vm6408 = vcmp.gt.f32.partialorder %v6205, %v6333
    %vm6409 = vcmp.gt.f32.partialorder %v6209, %v6333
    %vm6410 = vcmp.gt.f32.partialorder %v6205, %v6336
    %vm6411 = vcmp.gt.f32.partialorder %v6209, %v6336
    %vm6412 = vcmp.gt.f32.partialorder %v6205, %v6339
    %vm6413 = vcmp.gt.f32.partialorder %v6209, %v6339
    %vm6414 = vcmp.gt.f32.partialorder %v6205, %v6342
    %vm6415 = vcmp.gt.f32.partialorder %v6209, %v6342
    %vm6416 = vcmp.gt.f32.partialorder %v6205, %v6345
    %vm6417 = vcmp.gt.f32.partialorder %v6209, %v6345
    %vm6418 = vcmp.gt.f32.partialorder %v6205, %v6348
    %vm6419 = vcmp.gt.f32.partialorder %v6209, %v6348
    %vm6420 = vcmp.gt.f32.partialorder %v6205, %v6351
    %vm6421 = vcmp.gt.f32.partialorder %v6209, %v6351
    %vm6422 = vcmp.gt.f32.partialorder %v6205, %v6354
    %vm6423 = vcmp.gt.f32.partialorder %v6209, %v6354
    %vm6424 = vcmp.gt.f32.partialorder %v6205, %v6357
    %vm6425 = vcmp.gt.f32.partialorder %v6209, %v6357
    %vm6426 = vcmp.gt.f32.partialorder %v6205, %v6360
    %vm6427 = vcmp.gt.f32.partialorder %v6209, %v6360
    %vm6428 = vcmp.gt.f32.partialorder %v6205, %v6363
    %vm6429 = vcmp.gt.f32.partialorder %v6209, %v6363
    %vm6430 = vcmp.gt.f32.partialorder %v6205, %v6366
    %vm6431 = vcmp.gt.f32.partialorder %v6209, %v6366
    %vm6432 = vcmp.gt.f32.partialorder %v6205, %v6369
    %vm6433 = vcmp.gt.f32.partialorder %v6209, %v6369
    %vm6434 = vcmp.eq.f32.partialorder %v6205, %v6276
    %vm6435 = vcmp.eq.f32.partialorder %v6209, %v6276
    %vm6436 = vcmp.eq.f32.partialorder %v6205, %v6279
    %vm6437 = vcmp.eq.f32.partialorder %v6209, %v6279
    %vm6438 = vcmp.eq.f32.partialorder %v6205, %v6282
    %vm6439 = vcmp.eq.f32.partialorder %v6209, %v6282
    %vm6440 = vcmp.eq.f32.partialorder %v6205, %v6285
    %vm6441 = vcmp.eq.f32.partialorder %v6209, %v6285
    %vm6442 = vcmp.eq.f32.partialorder %v6205, %v6288
    %vm6443 = vcmp.eq.f32.partialorder %v6209, %v6288
    %vm6444 = vcmp.eq.f32.partialorder %v6205, %v6291
    %vm6445 = vcmp.eq.f32.partialorder %v6209, %v6291
    %vm6446 = vcmp.eq.f32.partialorder %v6205, %v6294
    %vm6447 = vcmp.eq.f32.partialorder %v6209, %v6294
    %vm6448 = vcmp.eq.f32.partialorder %v6205, %v6297
    %vm6449 = vcmp.eq.f32.partialorder %v6209, %v6297
    %vm6450 = vcmp.eq.f32.partialorder %v6205, %v6300
    %vm6451 = vcmp.eq.f32.partialorder %v6209, %v6300
    %vm6452 = vcmp.eq.f32.partialorder %v6205, %v6303
    %vm6453 = vcmp.eq.f32.partialorder %v6209, %v6303
    %vm6454 = vcmp.eq.f32.partialorder %v6205, %v6306
    %vm6455 = vcmp.eq.f32.partialorder %v6209, %v6306
    %vm6456 = vcmp.eq.f32.partialorder %v6205, %v6309
    %vm6457 = vcmp.eq.f32.partialorder %v6209, %v6309
    %vm6458 = vcmp.eq.f32.partialorder %v6205, %v6312
    %vm6459 = vcmp.eq.f32.partialorder %v6209, %v6312
    %vm6460 = vcmp.eq.f32.partialorder %v6205, %v6315
    %vm6461 = vcmp.eq.f32.partialorder %v6209, %v6315
    %vm6462 = vcmp.eq.f32.partialorder %v6205, %v6318
    %vm6463 = vcmp.eq.f32.partialorder %v6209, %v6318
    %vm6464 = vcmp.eq.f32.partialorder %v6205, %v6321
    %vm6465 = vcmp.eq.f32.partialorder %v6209, %v6321
    %vm6466 = vcmp.eq.f32.partialorder %v6205, %v6324
    %vm6467 = vcmp.eq.f32.partialorder %v6209, %v6324
    %vm6468 = vcmp.eq.f32.partialorder %v6205, %v6327
    %vm6469 = vcmp.eq.f32.partialorder %v6209, %v6327
    %vm6470 = vcmp.eq.f32.partialorder %v6205, %v6330
    %vm6471 = vcmp.eq.f32.partialorder %v6209, %v6330
    %vm6472 = vcmp.eq.f32.partialorder %v6205, %v6333
    %vm6473 = vcmp.eq.f32.partialorder %v6209, %v6333
    %vm6474 = vcmp.eq.f32.partialorder %v6205, %v6336
    %vm6475 = vcmp.eq.f32.partialorder %v6209, %v6336
    %vm6476 = vcmp.eq.f32.partialorder %v6205, %v6339
    %vm6477 = vcmp.eq.f32.partialorder %v6209, %v6339
    %vm6478 = vcmp.eq.f32.partialorder %v6205, %v6342
    %vm6479 = vcmp.eq.f32.partialorder %v6209, %v6342
    %vm6480 = vcmp.eq.f32.partialorder %v6205, %v6345
    %vm6481 = vcmp.eq.f32.partialorder %v6209, %v6345
    %vm6482 = vcmp.eq.f32.partialorder %v6205, %v6348
    %vm6483 = vcmp.eq.f32.partialorder %v6209, %v6348
    %vm6484 = vcmp.eq.f32.partialorder %v6205, %v6351
    %vm6485 = vcmp.eq.f32.partialorder %v6209, %v6351
    %vm6486 = vcmp.eq.f32.partialorder %v6205, %v6354
    %vm6487 = vcmp.eq.f32.partialorder %v6209, %v6354
    %vm6488 = vcmp.eq.f32.partialorder %v6205, %v6357
    %vm6489 = vcmp.eq.f32.partialorder %v6209, %v6357
    %vm6490 = vcmp.eq.f32.partialorder %v6205, %v6360
    %vm6491 = vcmp.eq.f32.partialorder %v6209, %v6360
    %vm6492 = vcmp.eq.f32.partialorder %v6205, %v6363
    %vm6493 = vcmp.eq.f32.partialorder %v6209, %v6363
    %vm6494 = vcmp.eq.f32.partialorder %v6205, %v6366
    %vm6495 = vcmp.eq.f32.partialorder %v6209, %v6366
    %vm6496 = vcmp.eq.f32.partialorder %v6205, %v6369
    %vm6497 = vcmp.eq.f32.partialorder %v6209, %v6369
    %vm6498 = vmand %vm6434, %vm3080
    %vm6499 = vmand %vm6435, %vm3081
    %vm6500 = vmand %vm6436, %vm3082
    %vm6501 = vmand %vm6437, %vm3083
    %vm6502 = vmand %vm6438, %vm3084
    %vm6503 = vmand %vm6439, %vm3085
    %vm6504 = vmand %vm6440, %vm3086
    %vm6505 = vmand %vm6441, %vm3087
    %vm6506 = vmand %vm6442, %vm3088
    %vm6507 = vmand %vm6443, %vm3089
    %vm6508 = vmand %vm6444, %vm3090
    %vm6509 = vmand %vm6445, %vm3091
    %vm6510 = vmand %vm6446, %vm3092
    %vm6511 = vmand %vm6447, %vm3093
    %vm6512 = vmand %vm6448, %vm3094
    %vm6513 = vmand %vm6449, %vm3095
    %vm6514 = vmand %vm6450, %vm3096
    %vm6515 = vmand %vm6451, %vm3097
    %vm6516 = vmand %vm6452, %vm3098
    %vm6517 = vmand %vm6453, %vm3099
    %vm6518 = vmand %vm6454, %vm3100
    %vm6519 = vmand %vm6455, %vm3101
    %vm6520 = vmand %vm6456, %vm3102
    %vm6521 = vmand %vm6457, %vm3103
    %vm6522 = vmand %vm6458, %vm3104
    %vm6523 = vmand %vm6459, %vm3105
    %vm6524 = vmand %vm6460, %vm3106
    %vm6525 = vmand %vm6461, %vm3107
    %vm6526 = vmand %vm6462, %vm3108
    %vm6527 = vmand %vm6463, %vm3109
    %vm6528 = vmand %vm6464, %vm3110
    %vm6529 = vmand %vm6465, %vm3111
    %vm6530 = vmand %vm6466, %vm3112
    %vm6531 = vmand %vm6467, %vm3113
    %vm6532 = vmand %vm6468, %vm3114
    %vm6533 = vmand %vm6469, %vm3115
    %vm6534 = vmand %vm6470, %vm3116
    %vm6535 = vmand %vm6471, %vm3117
    %vm6536 = vmand %vm6472, %vm3118
    %vm6537 = vmand %vm6473, %vm3119
    %vm6538 = vmand %vm6474, %vm3120
    %vm6539 = vmand %vm6475, %vm3121
    %vm6540 = vmand %vm6476, %vm3122
    %vm6541 = vmand %vm6477, %vm3123
    %vm6542 = vmand %vm6478, %vm3124
    %vm6543 = vmand %vm6479, %vm3125
    %vm6544 = vmand %vm6480, %vm3126
    %vm6545 = vmand %vm6481, %vm3127
    %vm6546 = vmand %vm6482, %vm3128
    %vm6547 = vmand %vm6483, %vm3129
    %vm6548 = vmand %vm6484, %vm3130
    %vm6549 = vmand %vm6485, %vm3131
    %vm6550 = vmand %vm6486, %vm3132
    %vm6551 = vmand %vm6487, %vm3133
    %vm6552 = vmand %vm6488, %vm3134
    %vm6553 = vmand %vm6489, %vm3135
    %vm6554 = vmand %vm6490, %vm3136
    %vm6555 = vmand %vm6491, %vm3137
    %vm6556 = vmand %vm6492, %vm3138
    %vm6557 = vmand %vm6493, %vm3139
    %vm6558 = vmand %vm6494, %vm3140
    %vm6559 = vmand %vm6495, %vm3141
    %vm6560 = vmand %vm6496, %vm3142
    %vm6561 = vmand %vm6497, %vm3143
    %vm6562 = vmor %vm6370, %vm6498
    %vm6563 = vmor %vm6371, %vm6499
    %vm6564 = vmor %vm6372, %vm6500
    %vm6565 = vmor %vm6373, %vm6501
    %vm6566 = vmor %vm6374, %vm6502
    %vm6567 = vmor %vm6375, %vm6503
    %vm6568 = vmor %vm6376, %vm6504
    %vm6569 = vmor %vm6377, %vm6505
    %vm6570 = vmor %vm6378, %vm6506
    %vm6571 = vmor %vm6379, %vm6507
    %vm6572 = vmor %vm6380, %vm6508
    %vm6573 = vmor %vm6381, %vm6509
    %vm6574 = vmor %vm6382, %vm6510
    %vm6575 = vmor %vm6383, %vm6511
    %vm6576 = vmor %vm6384, %vm6512
    %vm6577 = vmor %vm6385, %vm6513
    %vm6578 = vmor %vm6386, %vm6514
    %vm6579 = vmor %vm6387, %vm6515
    %vm6580 = vmor %vm6388, %vm6516
    %vm6581 = vmor %vm6389, %vm6517
    %vm6582 = vmor %vm6390, %vm6518
    %vm6583 = vmor %vm6391, %vm6519
    %vm6584 = vmor %vm6392, %vm6520
    %vm6585 = vmor %vm6393, %vm6521
    %vm6586 = vmor %vm6394, %vm6522
    %vm6587 = vmor %vm6395, %vm6523
    %vm6588 = vmor %vm6396, %vm6524
    %vm6589 = vmor %vm6397, %vm6525
    %vm6590 = vmor %vm6398, %vm6526
    %vm6591 = vmor %vm6399, %vm6527
    %vm6592 = vmor %vm6400, %vm6528
    %vm6593 = vmor %vm6401, %vm6529
    %vm6594 = vmor %vm6402, %vm6530
    %vm6595 = vmor %vm6403, %vm6531
    %vm6596 = vmor %vm6404, %vm6532
    %vm6597 = vmor %vm6405, %vm6533
    %vm6598 = vmor %vm6406, %vm6534
    %vm6599 = vmor %vm6407, %vm6535
    %vm6600 = vmor %vm6408, %vm6536
    %vm6601 = vmor %vm6409, %vm6537
    %vm6602 = vmor %vm6410, %vm6538
    %vm6603 = vmor %vm6411, %vm6539
    %vm6604 = vmor %vm6412, %vm6540
    %vm6605 = vmor %vm6413, %vm6541
    %vm6606 = vmor %vm6414, %vm6542
    %vm6607 = vmor %vm6415, %vm6543
    %vm6608 = vmor %vm6416, %vm6544
    %vm6609 = vmor %vm6417, %vm6545
    %vm6610 = vmor %vm6418, %vm6546
    %vm6611 = vmor %vm6419, %vm6547
    %vm6612 = vmor %vm6420, %vm6548
    %vm6613 = vmor %vm6421, %vm6549
    %vm6614 = vmor %vm6422, %vm6550
    %vm6615 = vmor %vm6423, %vm6551
    %vm6616 = vmor %vm6424, %vm6552
    %vm6617 = vmor %vm6425, %vm6553
    %vm6618 = vmor %vm6426, %vm6554
    %vm6619 = vmor %vm6427, %vm6555
    %vm6620 = vmor %vm6428, %vm6556
    %vm6621 = vmor %vm6429, %vm6557
    %vm6622 = vmor %vm6430, %vm6558
    %vm6623 = vmor %vm6431, %vm6559
    %vm6624 = vmor %vm6432, %vm6560
    %vm6625 = vmor %vm6433, %vm6561
    %v6626 = vsel %vm6562, 1, 0
    %v6627 = vsel %vm6563, 1, 0
    %v6628 = vsel %vm6564, 1, 0
    %v6629 = vsel %vm6565, 1, 0
    %v6630 = vsel %vm6566, 1, 0
    %v6631 = vsel %vm6567, 1, 0
    %v6632 = vsel %vm6568, 1, 0
    %v6633 = vsel %vm6569, 1, 0
    %v6634 = vsel %vm6570, 1, 0
    %v6635 = vsel %vm6571, 1, 0
    %v6636 = vsel %vm6572, 1, 0
    %v6637 = vsel %vm6573, 1, 0
    %v6638 = vsel %vm6574, 1, 0
    %v6639 = vsel %vm6575, 1, 0
    %v6640 = vsel %vm6576, 1, 0
    %v6641 = vsel %vm6577, 1, 0
    %v6642 = vsel %vm6578, 1, 0
    %v6643 = vsel %vm6579, 1, 0
    %v6644 = vsel %vm6580, 1, 0
    %v6645 = vsel %vm6581, 1, 0
    %v6646 = vsel %vm6582, 1, 0
    %v6647 = vsel %vm6583, 1, 0
    %v6648 = vsel %vm6584, 1, 0
    %v6649 = vsel %vm6585, 1, 0
    %v6650 = vsel %vm6586, 1, 0
    %v6651 = vsel %vm6587, 1, 0
    %v6652 = vsel %vm6588, 1, 0
    %v6653 = vsel %vm6589, 1, 0
    %v6654 = vsel %vm6590, 1, 0
    %v6655 = vsel %vm6591, 1, 0
    %v6656 = vsel %vm6592, 1, 0
    %v6657 = vsel %vm6593, 1, 0
    %v6658 = vsel %vm6594, 1, 0
    %v6659 = vsel %vm6595, 1, 0
    %v6660 = vsel %vm6596, 1, 0
    %v6661 = vsel %vm6597, 1, 0
    %v6662 = vsel %vm6598, 1, 0
    %v6663 = vsel %vm6599, 1, 0
    %v6664 = vsel %vm6600, 1, 0
    %v6665 = vsel %vm6601, 1, 0
    %v6666 = vsel %vm6602, 1, 0
    %v6667 = vsel %vm6603, 1, 0
    %v6668 = vsel %vm6604, 1, 0
    %v6669 = vsel %vm6605, 1, 0
    %v6670 = vsel %vm6606, 1, 0
    %v6671 = vsel %vm6607, 1, 0
    %v6672 = vsel %vm6608, 1, 0
    %v6673 = vsel %vm6609, 1, 0
    %v6674 = vsel %vm6610, 1, 0
    %v6675 = vsel %vm6611, 1, 0
    %v6676 = vsel %vm6612, 1, 0
    %v6677 = vsel %vm6613, 1, 0
    %v6678 = vsel %vm6614, 1, 0
    %v6679 = vsel %vm6615, 1, 0
    %v6680 = vsel %vm6616, 1, 0
    %v6681 = vsel %vm6617, 1, 0
    %v6682 = vsel %vm6618, 1, 0
    %v6683 = vsel %vm6619, 1, 0
    %v6684 = vsel %vm6620, 1, 0
    %v6685 = vsel %vm6621, 1, 0
    %v6686 = vsel %vm6622, 1, 0
    %v6687 = vsel %vm6623, 1, 0
    %v6688 = vsel %vm6624, 1, 0
    %v6689 = vsel %vm6625, 1, 0
    %v6690 = vcvt.s32.f32 %v6626
    %v6691 = vcvt.s32.f32 %v6627
    %v6692 = vcvt.s32.f32 %v6628
    %v6693 = vcvt.s32.f32 %v6629
    %v6694 = vcvt.s32.f32 %v6630
    %v6695 = vcvt.s32.f32 %v6631
    %v6696 = vcvt.s32.f32 %v6632
    %v6697 = vcvt.s32.f32 %v6633
    %v6698 = vcvt.s32.f32 %v6634
    %v6699 = vcvt.s32.f32 %v6635
    %v6700 = vcvt.s32.f32 %v6636
    %v6701 = vcvt.s32.f32 %v6637
    %v6702 = vcvt.s32.f32 %v6638
    %v6703 = vcvt.s32.f32 %v6639
    %v6704 = vcvt.s32.f32 %v6640
    %v6705 = vcvt.s32.f32 %v6641
    %v6706 = vcvt.s32.f32 %v6642
    %v6707 = vcvt.s32.f32 %v6643
    %v6708 = vcvt.s32.f32 %v6644
    %v6709 = vcvt.s32.f32 %v6645
    %v6710 = vcvt.s32.f32 %v6646
    %v6711 = vcvt.s32.f32 %v6647
    %v6712 = vcvt.s32.f32 %v6648
    %v6713 = vcvt.s32.f32 %v6649
    %v6714 = vcvt.s32.f32 %v6650
    %v6715 = vcvt.s32.f32 %v6651
    %v6716 = vcvt.s32.f32 %v6652
    %v6717 = vcvt.s32.f32 %v6653
    %v6718 = vcvt.s32.f32 %v6654
    %v6719 = vcvt.s32.f32 %v6655
    %v6720 = vcvt.s32.f32 %v6656
    %v6721 = vcvt.s32.f32 %v6657
    %v6722 = vcvt.s32.f32 %v6658
    %v6723 = vcvt.s32.f32 %v6659
    %v6724 = vcvt.s32.f32 %v6660
    %v6725 = vcvt.s32.f32 %v6661
    %v6726 = vcvt.s32.f32 %v6662
    %v6727 = vcvt.s32.f32 %v6663
    %v6728 = vcvt.s32.f32 %v6664
    %v6729 = vcvt.s32.f32 %v6665
    %v6730 = vcvt.s32.f32 %v6666
    %v6731 = vcvt.s32.f32 %v6667
    %v6732 = vcvt.s32.f32 %v6668
    %v6733 = vcvt.s32.f32 %v6669
    %v6734 = vcvt.s32.f32 %v6670
    %v6735 = vcvt.s32.f32 %v6671
    %v6736 = vcvt.s32.f32 %v6672
    %v6737 = vcvt.s32.f32 %v6673
    %v6738 = vcvt.s32.f32 %v6674
    %v6739 = vcvt.s32.f32 %v6675
    %v6740 = vcvt.s32.f32 %v6676
    %v6741 = vcvt.s32.f32 %v6677
    %v6742 = vcvt.s32.f32 %v6678
    %v6743 = vcvt.s32.f32 %v6679
    %v6744 = vcvt.s32.f32 %v6680
    %v6745 = vcvt.s32.f32 %v6681
    %v6746 = vcvt.s32.f32 %v6682
    %v6747 = vcvt.s32.f32 %v6683
    %v6748 = vcvt.s32.f32 %v6684
    %v6749 = vcvt.s32.f32 %v6685
    %v6750 = vcvt.s32.f32 %v6686
    %v6751 = vcvt.s32.f32 %v6687
    %v6752 = vcvt.s32.f32 %v6688
    %v6753 = vcvt.s32.f32 %v6689
    %v6754 = vadd.f32 %v6690, %v6691
    %6755 = vadd.xlane.f32.xlu0 %v6754
    %v6756 = vpop.xlane.xlu0 %6755
    %v6757 = vadd.f32 %v6692, %v6693
    %6758 = vadd.xlane.f32.xlu0 %v6757
    %v6759 = vpop.xlane.xlu0 %6758
    %v6760 = vadd.f32 %v6694, %v6695
    %6761 = vadd.xlane.f32.xlu0 %v6760
    %v6762 = vpop.xlane.xlu0 %6761
    %v6763 = vadd.f32 %v6696, %v6697
    %6764 = vadd.xlane.f32.xlu0 %v6763
    %v6765 = vpop.xlane.xlu0 %6764
    %v6766 = vadd.f32 %v6698, %v6699
    %6767 = vadd.xlane.f32.xlu0 %v6766
    %v6768 = vpop.xlane.xlu0 %6767
    %v6769 = vadd.f32 %v6700, %v6701
    %6770 = vadd.xlane.f32.xlu0 %v6769
    %v6771 = vpop.xlane.xlu0 %6770
    %v6772 = vadd.f32 %v6702, %v6703
    %6773 = vadd.xlane.f32.xlu0 %v6772
    %v6774 = vpop.xlane.xlu0 %6773
    %v6775 = vadd.f32 %v6704, %v6705
    %6776 = vadd.xlane.f32.xlu0 %v6775
    %v6777 = vpop.xlane.xlu0 %6776
    %v6778 = vadd.f32 %v6706, %v6707
    %6779 = vadd.xlane.f32.xlu0 %v6778
    %v6780 = vpop.xlane.xlu0 %6779
    %v6781 = vadd.f32 %v6708, %v6709
    %6782 = vadd.xlane.f32.xlu0 %v6781
    %v6783 = vpop.xlane.xlu0 %6782
    %v6784 = vadd.f32 %v6710, %v6711
    %6785 = vadd.xlane.f32.xlu0 %v6784
    %v6786 = vpop.xlane.xlu0 %6785
    %v6787 = vadd.f32 %v6712, %v6713
    %6788 = vadd.xlane.f32.xlu0 %v6787
    %v6789 = vpop.xlane.xlu0 %6788
    %v6790 = vadd.f32 %v6714, %v6715
    %6791 = vadd.xlane.f32.xlu0 %v6790
    %v6792 = vpop.xlane.xlu0 %6791
    %v6793 = vadd.f32 %v6716, %v6717
    %6794 = vadd.xlane.f32.xlu0 %v6793
    %v6795 = vpop.xlane.xlu0 %6794
    %v6796 = vadd.f32 %v6718, %v6719
    %6797 = vadd.xlane.f32.xlu0 %v6796
    %v6798 = vpop.xlane.xlu0 %6797
    %v6799 = vadd.f32 %v6720, %v6721
    %6800 = vadd.xlane.f32.xlu0 %v6799
    %v6801 = vpop.xlane.xlu0 %6800
    %v6802 = vadd.f32 %v6722, %v6723
    %6803 = vadd.xlane.f32.xlu0 %v6802
    %v6804 = vpop.xlane.xlu0 %6803
    %v6805 = vadd.f32 %v6724, %v6725
    %6806 = vadd.xlane.f32.xlu0 %v6805
    %v6807 = vpop.xlane.xlu0 %6806
    %v6808 = vadd.f32 %v6726, %v6727
    %6809 = vadd.xlane.f32.xlu0 %v6808
    %v6810 = vpop.xlane.xlu0 %6809
    %v6811 = vadd.f32 %v6728, %v6729
    %6812 = vadd.xlane.f32.xlu0 %v6811
    %v6813 = vpop.xlane.xlu0 %6812
    %v6814 = vadd.f32 %v6730, %v6731
    %6815 = vadd.xlane.f32.xlu0 %v6814
    %v6816 = vpop.xlane.xlu0 %6815
    %v6817 = vadd.f32 %v6732, %v6733
    %6818 = vadd.xlane.f32.xlu0 %v6817
    %v6819 = vpop.xlane.xlu0 %6818
    %v6820 = vadd.f32 %v6734, %v6735
    %6821 = vadd.xlane.f32.xlu0 %v6820
    %v6822 = vpop.xlane.xlu0 %6821
    %v6823 = vadd.f32 %v6736, %v6737
    %6824 = vadd.xlane.f32.xlu0 %v6823
    %v6825 = vpop.xlane.xlu0 %6824
    %v6826 = vadd.f32 %v6738, %v6739
    %6827 = vadd.xlane.f32.xlu0 %v6826
    %v6828 = vpop.xlane.xlu0 %6827
    %v6829 = vadd.f32 %v6740, %v6741
    %6830 = vadd.xlane.f32.xlu0 %v6829
    %v6831 = vpop.xlane.xlu0 %6830
    %v6832 = vadd.f32 %v6742, %v6743
    %6833 = vadd.xlane.f32.xlu0 %v6832
    %v6834 = vpop.xlane.xlu0 %6833
    %v6835 = vadd.f32 %v6744, %v6745
    %6836 = vadd.xlane.f32.xlu0 %v6835
    %v6837 = vpop.xlane.xlu0 %6836
    %v6838 = vadd.f32 %v6746, %v6747
    %6839 = vadd.xlane.f32.xlu0 %v6838
    %v6840 = vpop.xlane.xlu0 %6839
    %v6841 = vadd.f32 %v6748, %v6749
    %6842 = vadd.xlane.f32.xlu0 %v6841
    %v6843 = vpop.xlane.xlu0 %6842
    %v6844 = vadd.f32 %v6750, %v6751
    %6845 = vadd.xlane.f32.xlu0 %v6844
    %v6846 = vpop.xlane.xlu0 %6845
    %v6847 = vadd.f32 %v6752, %v6753
    %6848 = vadd.xlane.f32.xlu0 %v6847
    %v6849 = vpop.xlane.xlu0 %6848
    %vm6850 = vcmp.eq.f32.partialorder %v6756, %v1274
    %vm6851 = vcmp.eq.f32.partialorder %v6756, %v1275
    %vm6852 = vcmp.eq.f32.partialorder %v6759, %v1274
    %vm6853 = vcmp.eq.f32.partialorder %v6759, %v1275
    %vm6854 = vcmp.eq.f32.partialorder %v6762, %v1274
    %vm6855 = vcmp.eq.f32.partialorder %v6762, %v1275
    %vm6856 = vcmp.eq.f32.partialorder %v6765, %v1274
    %vm6857 = vcmp.eq.f32.partialorder %v6765, %v1275
    %vm6858 = vcmp.eq.f32.partialorder %v6768, %v1274
    %vm6859 = vcmp.eq.f32.partialorder %v6768, %v1275
    %vm6860 = vcmp.eq.f32.partialorder %v6771, %v1274
    %vm6861 = vcmp.eq.f32.partialorder %v6771, %v1275
    %vm6862 = vcmp.eq.f32.partialorder %v6774, %v1274
    %vm6863 = vcmp.eq.f32.partialorder %v6774, %v1275
    %vm6864 = vcmp.eq.f32.partialorder %v6777, %v1274
    %vm6865 = vcmp.eq.f32.partialorder %v6777, %v1275
    %vm6866 = vcmp.eq.f32.partialorder %v6780, %v1274
    %vm6867 = vcmp.eq.f32.partialorder %v6780, %v1275
    %vm6868 = vcmp.eq.f32.partialorder %v6783, %v1274
    %vm6869 = vcmp.eq.f32.partialorder %v6783, %v1275
    %vm6870 = vcmp.eq.f32.partialorder %v6786, %v1274
    %vm6871 = vcmp.eq.f32.partialorder %v6786, %v1275
    %vm6872 = vcmp.eq.f32.partialorder %v6789, %v1274
    %vm6873 = vcmp.eq.f32.partialorder %v6789, %v1275
    %vm6874 = vcmp.eq.f32.partialorder %v6792, %v1274
    %vm6875 = vcmp.eq.f32.partialorder %v6792, %v1275
    %vm6876 = vcmp.eq.f32.partialorder %v6795, %v1274
    %vm6877 = vcmp.eq.f32.partialorder %v6795, %v1275
    %vm6878 = vcmp.eq.f32.partialorder %v6798, %v1274
    %vm6879 = vcmp.eq.f32.partialorder %v6798, %v1275
    %vm6880 = vcmp.eq.f32.partialorder %v6801, %v1274
    %vm6881 = vcmp.eq.f32.partialorder %v6801, %v1275
    %vm6882 = vcmp.eq.f32.partialorder %v6804, %v1274
    %vm6883 = vcmp.eq.f32.partialorder %v6804, %v1275
    %vm6884 = vcmp.eq.f32.partialorder %v6807, %v1274
    %vm6885 = vcmp.eq.f32.partialorder %v6807, %v1275
    %vm6886 = vcmp.eq.f32.partialorder %v6810, %v1274
    %vm6887 = vcmp.eq.f32.partialorder %v6810, %v1275
    %vm6888 = vcmp.eq.f32.partialorder %v6813, %v1274
    %vm6889 = vcmp.eq.f32.partialorder %v6813, %v1275
    %vm6890 = vcmp.eq.f32.partialorder %v6816, %v1274
    %vm6891 = vcmp.eq.f32.partialorder %v6816, %v1275
    %vm6892 = vcmp.eq.f32.partialorder %v6819, %v1274
    %vm6893 = vcmp.eq.f32.partialorder %v6819, %v1275
    %vm6894 = vcmp.eq.f32.partialorder %v6822, %v1274
    %vm6895 = vcmp.eq.f32.partialorder %v6822, %v1275
    %vm6896 = vcmp.eq.f32.partialorder %v6825, %v1274
    %vm6897 = vcmp.eq.f32.partialorder %v6825, %v1275
    %vm6898 = vcmp.eq.f32.partialorder %v6828, %v1274
    %vm6899 = vcmp.eq.f32.partialorder %v6828, %v1275
    %vm6900 = vcmp.eq.f32.partialorder %v6831, %v1274
    %vm6901 = vcmp.eq.f32.partialorder %v6831, %v1275
    %vm6902 = vcmp.eq.f32.partialorder %v6834, %v1274
    %vm6903 = vcmp.eq.f32.partialorder %v6834, %v1275
    %vm6904 = vcmp.eq.f32.partialorder %v6837, %v1274
    %vm6905 = vcmp.eq.f32.partialorder %v6837, %v1275
    %vm6906 = vcmp.eq.f32.partialorder %v6840, %v1274
    %vm6907 = vcmp.eq.f32.partialorder %v6840, %v1275
    %vm6908 = vcmp.eq.f32.partialorder %v6843, %v1274
    %vm6909 = vcmp.eq.f32.partialorder %v6843, %v1275
    %vm6910 = vcmp.eq.f32.partialorder %v6846, %v1274
    %vm6911 = vcmp.eq.f32.partialorder %v6846, %v1275
    %vm6912 = vcmp.eq.f32.partialorder %v6849, %v1274
    %vm6913 = vcmp.eq.f32.partialorder %v6849, %v1275
    %v6914 = vsel %vm6850, 1, 0
    %v6915 = vsel %vm6851, 1, 0
    %v6916 = vsel %vm6852, 1, 0
    %v6917 = vsel %vm6853, 1, 0
    %v6918 = vsel %vm6854, 1, 0
    %v6919 = vsel %vm6855, 1, 0
    %v6920 = vsel %vm6856, 1, 0
    %v6921 = vsel %vm6857, 1, 0
    %v6922 = vsel %vm6858, 1, 0
    %v6923 = vsel %vm6859, 1, 0
    %v6924 = vsel %vm6860, 1, 0
    %v6925 = vsel %vm6861, 1, 0
    %v6926 = vsel %vm6862, 1, 0
    %v6927 = vsel %vm6863, 1, 0
    %v6928 = vsel %vm6864, 1, 0
    %v6929 = vsel %vm6865, 1, 0
    %v6930 = vsel %vm6866, 1, 0
    %v6931 = vsel %vm6867, 1, 0
    %v6932 = vsel %vm6868, 1, 0
    %v6933 = vsel %vm6869, 1, 0
    %v6934 = vsel %vm6870, 1, 0
    %v6935 = vsel %vm6871, 1, 0
    %v6936 = vsel %vm6872, 1, 0
    %v6937 = vsel %vm6873, 1, 0
    %v6938 = vsel %vm6874, 1, 0
    %v6939 = vsel %vm6875, 1, 0
    %v6940 = vsel %vm6876, 1, 0
    %v6941 = vsel %vm6877, 1, 0
    %v6942 = vsel %vm6878, 1, 0
    %v6943 = vsel %vm6879, 1, 0
    %v6944 = vsel %vm6880, 1, 0
    %v6945 = vsel %vm6881, 1, 0
    %v6946 = vsel %vm6882, 1, 0
    %v6947 = vsel %vm6883, 1, 0
    %v6948 = vsel %vm6884, 1, 0
    %v6949 = vsel %vm6885, 1, 0
    %v6950 = vsel %vm6886, 1, 0
    %v6951 = vsel %vm6887, 1, 0
    %v6952 = vsel %vm6888, 1, 0
    %v6953 = vsel %vm6889, 1, 0
    %v6954 = vsel %vm6890, 1, 0
    %v6955 = vsel %vm6891, 1, 0
    %v6956 = vsel %vm6892, 1, 0
    %v6957 = vsel %vm6893, 1, 0
    %v6958 = vsel %vm6894, 1, 0
    %v6959 = vsel %vm6895, 1, 0
    %v6960 = vsel %vm6896, 1, 0
    %v6961 = vsel %vm6897, 1, 0
    %v6962 = vsel %vm6898, 1, 0
    %v6963 = vsel %vm6899, 1, 0
    %v6964 = vsel %vm6900, 1, 0
    %v6965 = vsel %vm6901, 1, 0
    %v6966 = vsel %vm6902, 1, 0
    %v6967 = vsel %vm6903, 1, 0
    %v6968 = vsel %vm6904, 1, 0
    %v6969 = vsel %vm6905, 1, 0
    %v6970 = vsel %vm6906, 1, 0
    %v6971 = vsel %vm6907, 1, 0
    %v6972 = vsel %vm6908, 1, 0
    %v6973 = vsel %vm6909, 1, 0
    %v6974 = vsel %vm6910, 1, 0
    %v6975 = vsel %vm6911, 1, 0
    %v6976 = vsel %vm6912, 1, 0
    %v6977 = vsel %vm6913, 1, 0
    %v6978 = vcvt.s32.f32 %v6914
    %v6979 = vcvt.s32.f32 %v6915
    %v6980 = vcvt.s32.f32 %v6916
    %v6981 = vcvt.s32.f32 %v6917
    %v6982 = vcvt.s32.f32 %v6918
    %v6983 = vcvt.s32.f32 %v6919
    %v6984 = vcvt.s32.f32 %v6920
    %v6985 = vcvt.s32.f32 %v6921
    %v6986 = vcvt.s32.f32 %v6922
    %v6987 = vcvt.s32.f32 %v6923
    %v6988 = vcvt.s32.f32 %v6924
    %v6989 = vcvt.s32.f32 %v6925
    %v6990 = vcvt.s32.f32 %v6926
    %v6991 = vcvt.s32.f32 %v6927
    %v6992 = vcvt.s32.f32 %v6928
    %v6993 = vcvt.s32.f32 %v6929
    %v6994 = vcvt.s32.f32 %v6930
    %v6995 = vcvt.s32.f32 %v6931
    %v6996 = vcvt.s32.f32 %v6932
    %v6997 = vcvt.s32.f32 %v6933
    %v6998 = vcvt.s32.f32 %v6934
    %v6999 = vcvt.s32.f32 %v6935
    %v7000 = vcvt.s32.f32 %v6936
    %v7001 = vcvt.s32.f32 %v6937
    %v7002 = vcvt.s32.f32 %v6938
    %v7003 = vcvt.s32.f32 %v6939
    %v7004 = vcvt.s32.f32 %v6940
    %v7005 = vcvt.s32.f32 %v6941
    %v7006 = vcvt.s32.f32 %v6942
    %v7007 = vcvt.s32.f32 %v6943
    %v7008 = vcvt.s32.f32 %v6944
    %v7009 = vcvt.s32.f32 %v6945
    %v7010 = vcvt.s32.f32 %v6946
    %v7011 = vcvt.s32.f32 %v6947
    %v7012 = vcvt.s32.f32 %v6948
    %v7013 = vcvt.s32.f32 %v6949
    %v7014 = vcvt.s32.f32 %v6950
    %v7015 = vcvt.s32.f32 %v6951
    %v7016 = vcvt.s32.f32 %v6952
    %v7017 = vcvt.s32.f32 %v6953
    %v7018 = vcvt.s32.f32 %v6954
    %v7019 = vcvt.s32.f32 %v6955
    %v7020 = vcvt.s32.f32 %v6956
    %v7021 = vcvt.s32.f32 %v6957
    %v7022 = vcvt.s32.f32 %v6958
    %v7023 = vcvt.s32.f32 %v6959
    %v7024 = vcvt.s32.f32 %v6960
    %v7025 = vcvt.s32.f32 %v6961
    %v7026 = vcvt.s32.f32 %v6962
    %v7027 = vcvt.s32.f32 %v6963
    %v7028 = vcvt.s32.f32 %v6964
    %v7029 = vcvt.s32.f32 %v6965
    %v7030 = vcvt.s32.f32 %v6966
    %v7031 = vcvt.s32.f32 %v6967
    %v7032 = vcvt.s32.f32 %v6968
    %v7033 = vcvt.s32.f32 %v6969
    %v7034 = vcvt.s32.f32 %v6970
    %v7035 = vcvt.s32.f32 %v6971
    %v7036 = vcvt.s32.f32 %v6972
    %v7037 = vcvt.s32.f32 %v6973
    %v7038 = vcvt.s32.f32 %v6974
    %v7039 = vcvt.s32.f32 %v6975
    %v7040 = vcvt.s32.f32 %v6976
    %v7041 = vcvt.s32.f32 %v6977
    %7042 = vmatprep.subr.mxu0 %v6979
    %7043 = vmatpush1.msra.mxu0 %v6978
    %7044 = vmatprep.subr.mxu0 %v6981
    %7045 = vmatpush1.msra.mxu0 %v6980
    %7046 = vmatprep.subr.mxu0 %v6983
    %7047 = vmatpush1.msra.mxu0 %v6982
    %7048 = vmatprep.subr.mxu0 %v6985
    %7049 = vmatpush1.msra.mxu0 %v6984
    %7050 = vmatprep.subr.mxu0 %v6987
    %7051 = vmatpush1.msra.mxu0 %v6986
    %7052 = vmatprep.subr.mxu0 %v6989
    %7053 = vmatpush1.msra.mxu0 %v6988
    %7054 = vmatprep.subr.mxu0 %v6991
    %7055 = vmatpush1.msra.mxu0 %v6990
    %7056 = vmatprep.subr.mxu0 %v6993
    %7057 = vmatpush1.msra.mxu0 %v6992
    %7058 = vmatprep.subr.mxu0 %v6995
    %7059 = vmatpush1.msra.mxu0 %v6994
    %7060 = vmatprep.subr.mxu0 %v6997
    %7061 = vmatpush1.msra.mxu0 %v6996
    %7062 = vmatprep.subr.mxu0 %v6999
    %7063 = vmatpush1.msra.mxu0 %v6998
    %7064 = vmatprep.subr.mxu0 %v7001
    %7065 = vmatpush1.msra.mxu0 %v7000
    %7066 = vmatprep.subr.mxu0 %v7003
    %7067 = vmatpush1.msra.mxu0 %v7002
    %7068 = vmatprep.subr.mxu0 %v7005
    %7069 = vmatpush1.msra.mxu0 %v7004
    %7070 = vmatprep.subr.mxu0 %v7007
    %7071 = vmatpush1.msra.mxu0 %v7006
    %7072 = vmatprep.subr.mxu0 %v7009
    %7073 = vmatpush1.msra.mxu0 %v7008
    %7074 = vmatprep.subr.mxu0 %v7011
    %7075 = vmatpush1.msra.mxu0 %v7010
    %7076 = vmatprep.subr.mxu0 %v7013
    %7077 = vmatpush1.msra.mxu0 %v7012
    %7078 = vmatprep.subr.mxu0 %v7015
    %7079 = vmatpush1.msra.mxu0 %v7014
    %7080 = vmatprep.subr.mxu0 %v7017
    %7081 = vmatpush1.msra.mxu0 %v7016
    %7082 = vmatprep.subr.mxu0 %v7019
    %7083 = vmatpush1.msra.mxu0 %v7018
    %7084 = vmatprep.subr.mxu0 %v7021
    %7085 = vmatpush1.msra.mxu0 %v7020
    %7086 = vmatprep.subr.mxu0 %v7023
    %7087 = vmatpush1.msra.mxu0 %v7022
    %7088 = vmatprep.subr.mxu0 %v7025
    %7089 = vmatpush1.msra.mxu0 %v7024
    %7090 = vmatprep.subr.mxu0 %v7027
    %7091 = vmatpush1.msra.mxu0 %v7026
    %7092 = vmatprep.subr.mxu0 %v7029
    %7093 = vmatpush1.msra.mxu0 %v7028
    %7094 = vmatprep.subr.mxu0 %v7031
    %7095 = vmatpush1.msra.mxu0 %v7030
    %7096 = vmatprep.subr.mxu0 %v7033
    %7097 = vmatpush1.msra.mxu0 %v7032
    %7098 = vmatprep.subr.mxu0 %v7035
    %7099 = vmatpush1.msra.mxu0 %v7034
    %7100 = vmatprep.subr.mxu0 %v7037
    %7101 = vmatpush1.msra.mxu0 %v7036
    %7102 = vmatprep.subr.mxu0 %v7039
    %7103 = vmatpush1.msra.mxu0 %v7038
    %7104 = vmatprep.subr.mxu0 %v7041
    %7105 = vmatpush1.msra.mxu0 %v7040
    %7106 = vmatprep.mubr.f32.mxu0 %v5867
    %7107 = vmatmul.mubr.f32.gmra.mrb[0].mxu0 %v5866
    %v7108 = vpop.f32.mrb[0].mxu0
    %v7109 = vadd.f32 0.0, %v7108
    %v7110 = vpop.f32.mrb[0].mxu0
    %v7111 = vadd.f32 0.0, %v7110
    %7112 = vdwg.mxu0
    %7113 = vmatprep.subr.mxu0 %v6979
    %7114 = vmatpush1.msra.mxu0 %v6978
    %7115 = vmatprep.subr.mxu0 %v6981
    %7116 = vmatpush1.msra.mxu0 %v6980
    %7117 = vmatprep.subr.mxu0 %v6983
    %7118 = vmatpush1.msra.mxu0 %v6982
    %7119 = vmatprep.subr.mxu0 %v6985
    %7120 = vmatpush1.msra.mxu0 %v6984
    %7121 = vmatprep.subr.mxu0 %v6987
    %7122 = vmatpush1.msra.mxu0 %v6986
    %7123 = vmatprep.subr.mxu0 %v6989
    %7124 = vmatpush1.msra.mxu0 %v6988
    %7125 = vmatprep.subr.mxu0 %v6991
    %7126 = vmatpush1.msra.mxu0 %v6990
    %7127 = vmatprep.subr.mxu0 %v6993
    %7128 = vmatpush1.msra.mxu0 %v6992
    %7129 = vmatprep.subr.mxu0 %v6995
    %7130 = vmatpush1.msra.mxu0 %v6994
    %7131 = vmatprep.subr.mxu0 %v6997
    %7132 = vmatpush1.msra.mxu0 %v6996
    %7133 = vmatprep.subr.mxu0 %v6999
    %7134 = vmatpush1.msra.mxu0 %v6998
    %7135 = vmatprep.subr.mxu0 %v7001
    %7136 = vmatpush1.msra.mxu0 %v7000
    %7137 = vmatprep.subr.mxu0 %v7003
    %7138 = vmatpush1.msra.mxu0 %v7002
    %7139 = vmatprep.subr.mxu0 %v7005
    %7140 = vmatpush1.msra.mxu0 %v7004
    %7141 = vmatprep.subr.mxu0 %v7007
    %7142 = vmatpush1.msra.mxu0 %v7006
    %7143 = vmatprep.subr.mxu0 %v7009
    %7144 = vmatpush1.msra.mxu0 %v7008
    %7145 = vmatprep.subr.mxu0 %v7011
    %7146 = vmatpush1.msra.mxu0 %v7010
    %7147 = vmatprep.subr.mxu0 %v7013
    %7148 = vmatpush1.msra.mxu0 %v7012
    %7149 = vmatprep.subr.mxu0 %v7015
    %7150 = vmatpush1.msra.mxu0 %v7014
    %7151 = vmatprep.subr.mxu0 %v7017
    %7152 = vmatpush1.msra.mxu0 %v7016
    %7153 = vmatprep.subr.mxu0 %v7019
    %7154 = vmatpush1.msra.mxu0 %v7018
    %7155 = vmatprep.subr.mxu0 %v7021
    %7156 = vmatpush1.msra.mxu0 %v7020
    %7157 = vmatprep.subr.mxu0 %v7023
    %7158 = vmatpush1.msra.mxu0 %v7022
    %7159 = vmatprep.subr.mxu0 %v7025
    %7160 = vmatpush1.msra.mxu0 %v7024
    %7161 = vmatprep.subr.mxu0 %v7027
    %7162 = vmatpush1.msra.mxu0 %v7026
    %7163 = vmatprep.subr.mxu0 %v7029
    %7164 = vmatpush1.msra.mxu0 %v7028
    %7165 = vmatprep.subr.mxu0 %v7031
    %7166 = vmatpush1.msra.mxu0 %v7030
    %7167 = vmatprep.subr.mxu0 %v7033
    %7168 = vmatpush1.msra.mxu0 %v7032
    %7169 = vmatprep.subr.mxu0 %v7035
    %7170 = vmatpush1.msra.mxu0 %v7034
    %7171 = vmatprep.subr.mxu0 %v7037
    %7172 = vmatpush1.msra.mxu0 %v7036
    %7173 = vmatprep.subr.mxu0 %v7039
    %7174 = vmatpush1.msra.mxu0 %v7038
    %7175 = vmatprep.subr.mxu0 %v7041
    %7176 = vmatpush1.msra.mxu0 %v7040
    %7177 = vmatprep.mubr.f32.mxu0 %v5950
    %7178 = vmatmul.mubr.f32.gmra.mrb[0].mxu0 %v5949
    %v7179 = vpop.f32.mrb[0].mxu0
    %v7180 = vadd.f32 0.0, %v7179
    %v7181 = vpop.f32.mrb[0].mxu0
    %v7182 = vadd.f32 0.0, %v7181
    %7183 = vdwg.mxu0
    %7184 = vmatprep.subr.mxu0 %v6979
    %7185 = vmatpush1.msra.mxu0 %v6978
    %7186 = vmatprep.subr.mxu0 %v6981
    %7187 = vmatpush1.msra.mxu0 %v6980
    %7188 = vmatprep.subr.mxu0 %v6983
    %7189 = vmatpush1.msra.mxu0 %v6982
    %7190 = vmatprep.subr.mxu0 %v6985
    %7191 = vmatpush1.msra.mxu0 %v6984
    %7192 = vmatprep.subr.mxu0 %v6987
    %7193 = vmatpush1.msra.mxu0 %v6986
    %7194 = vmatprep.subr.mxu0 %v6989
    %7195 = vmatpush1.msra.mxu0 %v6988
    %7196 = vmatprep.subr.mxu0 %v6991
    %7197 = vmatpush1.msra.mxu0 %v6990
    %7198 = vmatprep.subr.mxu0 %v6993
    %7199 = vmatpush1.msra.mxu0 %v6992
    %7200 = vmatprep.subr.mxu0 %v6995
    %7201 = vmatpush1.msra.mxu0 %v6994
    %7202 = vmatprep.subr.mxu0 %v6997
    %7203 = vmatpush1.msra.mxu0 %v6996
    %7204 = vmatprep.subr.mxu0 %v6999
    %7205 = vmatpush1.msra.mxu0 %v6998
    %7206 = vmatprep.subr.mxu0 %v7001
    %7207 = vmatpush1.msra.mxu0 %v7000
    %7208 = vmatprep.subr.mxu0 %v7003
    %7209 = vmatpush1.msra.mxu0 %v7002
    %7210 = vmatprep.subr.mxu0 %v7005
    %7211 = vmatpush1.msra.mxu0 %v7004
    %7212 = vmatprep.subr.mxu0 %v7007
    %7213 = vmatpush1.msra.mxu0 %v7006
    %7214 = vmatprep.subr.mxu0 %v7009
    %7215 = vmatpush1.msra.mxu0 %v7008
    %7216 = vmatprep.subr.mxu0 %v7011
    %7217 = vmatpush1.msra.mxu0 %v7010
    %7218 = vmatprep.subr.mxu0 %v7013
    %7219 = vmatpush1.msra.mxu0 %v7012
    %7220 = vmatprep.subr.mxu0 %v7015
    %7221 = vmatpush1.msra.mxu0 %v7014
    %7222 = vmatprep.subr.mxu0 %v7017
    %7223 = vmatpush1.msra.mxu0 %v7016
    %7224 = vmatprep.subr.mxu0 %v7019
    %7225 = vmatpush1.msra.mxu0 %v7018
    %7226 = vmatprep.subr.mxu0 %v7021
    %7227 = vmatpush1.msra.mxu0 %v7020
    %7228 = vmatprep.subr.mxu0 %v7023
    %7229 = vmatpush1.msra.mxu0 %v7022
    %7230 = vmatprep.subr.mxu0 %v7025
    %7231 = vmatpush1.msra.mxu0 %v7024
    %7232 = vmatprep.subr.mxu0 %v7027
    %7233 = vmatpush1.msra.mxu0 %v7026
    %7234 = vmatprep.subr.mxu0 %v7029
    %7235 = vmatpush1.msra.mxu0 %v7028
    %7236 = vmatprep.subr.mxu0 %v7031
    %7237 = vmatpush1.msra.mxu0 %v7030
    %7238 = vmatprep.subr.mxu0 %v7033
    %7239 = vmatpush1.msra.mxu0 %v7032
    %7240 = vmatprep.subr.mxu0 %v7035
    %7241 = vmatpush1.msra.mxu0 %v7034
    %7242 = vmatprep.subr.mxu0 %v7037
    %7243 = vmatpush1.msra.mxu0 %v7036
    %7244 = vmatprep.subr.mxu0 %v7039
    %7245 = vmatpush1.msra.mxu0 %v7038
    %7246 = vmatprep.subr.mxu0 %v7041
    %7247 = vmatpush1.msra.mxu0 %v7040
    %7248 = vmatprep.mubr.f32.mxu0 %v6033
    %7249 = vmatmul.mubr.f32.gmra.mrb[0].mxu0 %v6032
    %v7250 = vpop.f32.mrb[0].mxu0
    %v7251 = vadd.f32 0.0, %v7250
    %v7252 = vpop.f32.mrb[0].mxu0
    %v7253 = vadd.f32 0.0, %v7252
    %7254 = vdwg.mxu0
    %7255 = vmatprep.subr.mxu0 %v6979
    %7256 = vmatpush1.msra.mxu0 %v6978
    %7257 = vmatprep.subr.mxu0 %v6981
    %7258 = vmatpush1.msra.mxu0 %v6980
    %7259 = vmatprep.subr.mxu0 %v6983
    %7260 = vmatpush1.msra.mxu0 %v6982
    %7261 = vmatprep.subr.mxu0 %v6985
    %7262 = vmatpush1.msra.mxu0 %v6984
    %7263 = vmatprep.subr.mxu0 %v6987
    %7264 = vmatpush1.msra.mxu0 %v6986
    %7265 = vmatprep.subr.mxu0 %v6989
    %7266 = vmatpush1.msra.mxu0 %v6988
    %7267 = vmatprep.subr.mxu0 %v6991
    %7268 = vmatpush1.msra.mxu0 %v6990
    %7269 = vmatprep.subr.mxu0 %v6993
    %7270 = vmatpush1.msra.mxu0 %v6992
    %7271 = vmatprep.subr.mxu0 %v6995
    %7272 = vmatpush1.msra.mxu0 %v6994
    %7273 = vmatprep.subr.mxu0 %v6997
    %7274 = vmatpush1.msra.mxu0 %v6996
    %7275 = vmatprep.subr.mxu0 %v6999
    %7276 = vmatpush1.msra.mxu0 %v6998
    %7277 = vmatprep.subr.mxu0 %v7001
    %7278 = vmatpush1.msra.mxu0 %v7000
    %7279 = vmatprep.subr.mxu0 %v7003
    %7280 = vmatpush1.msra.mxu0 %v7002
    %7281 = vmatprep.subr.mxu0 %v7005
    %7282 = vmatpush1.msra.mxu0 %v7004
    %7283 = vmatprep.subr.mxu0 %v7007
    %7284 = vmatpush1.msra.mxu0 %v7006
    %7285 = vmatprep.subr.mxu0 %v7009
    %7286 = vmatpush1.msra.mxu0 %v7008
    %7287 = vmatprep.subr.mxu0 %v7011
    %7288 = vmatpush1.msra.mxu0 %v7010
    %7289 = vmatprep.subr.mxu0 %v7013
    %7290 = vmatpush1.msra.mxu0 %v7012
    %7291 = vmatprep.subr.mxu0 %v7015
    %7292 = vmatpush1.msra.mxu0 %v7014
    %7293 = vmatprep.subr.mxu0 %v7017
    %7294 = vmatpush1.msra.mxu0 %v7016
    %7295 = vmatprep.subr.mxu0 %v7019
    %7296 = vmatpush1.msra.mxu0 %v7018
    %7297 = vmatprep.subr.mxu0 %v7021
    %7298 = vmatpush1.msra.mxu0 %v7020
    %7299 = vmatprep.subr.mxu0 %v7023
    %7300 = vmatpush1.msra.mxu0 %v7022
    %7301 = vmatprep.subr.mxu0 %v7025
    %7302 = vmatpush1.msra.mxu0 %v7024
    %7303 = vmatprep.subr.mxu0 %v7027
    %7304 = vmatpush1.msra.mxu0 %v7026
    %7305 = vmatprep.subr.mxu0 %v7029
    %7306 = vmatpush1.msra.mxu0 %v7028
    %7307 = vmatprep.subr.mxu0 %v7031
    %7308 = vmatpush1.msra.mxu0 %v7030
    %7309 = vmatprep.subr.mxu0 %v7033
    %7310 = vmatpush1.msra.mxu0 %v7032
    %7311 = vmatprep.subr.mxu0 %v7035
    %7312 = vmatpush1.msra.mxu0 %v7034
    %7313 = vmatprep.subr.mxu0 %v7037
    %7314 = vmatpush1.msra.mxu0 %v7036
    %7315 = vmatprep.subr.mxu0 %v7039
    %7316 = vmatpush1.msra.mxu0 %v7038
    %7317 = vmatprep.subr.mxu0 %v7041
    %7318 = vmatpush1.msra.mxu0 %v7040
    %7319 = vmatprep.mubr.f32.mxu0 %v6116
    %7320 = vmatmul.mubr.f32.gmra.mrb[0].mxu0 %v6115
    %v7321 = vpop.f32.mrb[0].mxu0
    %v7322 = vadd.f32 0.0, %v7321
    %v7323 = vpop.f32.mrb[0].mxu0
    %v7324 = vadd.f32 0.0, %v7323
    %7325 = vdwg.mxu0
    %7326 = vmatprep.subr.mxu0 %v6979
    %7327 = vmatpush1.msra.mxu0 %v6978
    %7328 = vmatprep.subr.mxu0 %v6981
    %7329 = vmatpush1.msra.mxu0 %v6980
    %7330 = vmatprep.subr.mxu0 %v6983
    %7331 = vmatpush1.msra.mxu0 %v6982
    %7332 = vmatprep.subr.mxu0 %v6985
    %7333 = vmatpush1.msra.mxu0 %v6984
    %7334 = vmatprep.subr.mxu0 %v6987
    %7335 = vmatpush1.msra.mxu0 %v6986
    %7336 = vmatprep.subr.mxu0 %v6989
    %7337 = vmatpush1.msra.mxu0 %v6988
    %7338 = vmatprep.subr.mxu0 %v6991
    %7339 = vmatpush1.msra.mxu0 %v6990
    %7340 = vmatprep.subr.mxu0 %v6993
    %7341 = vmatpush1.msra.mxu0 %v6992
    %7342 = vmatprep.subr.mxu0 %v6995
    %7343 = vmatpush1.msra.mxu0 %v6994
    %7344 = vmatprep.subr.mxu0 %v6997
    %7345 = vmatpush1.msra.mxu0 %v6996
    %7346 = vmatprep.subr.mxu0 %v6999
    %7347 = vmatpush1.msra.mxu0 %v6998
    %7348 = vmatprep.subr.mxu0 %v7001
    %7349 = vmatpush1.msra.mxu0 %v7000
    %7350 = vmatprep.subr.mxu0 %v7003
    %7351 = vmatpush1.msra.mxu0 %v7002
    %7352 = vmatprep.subr.mxu0 %v7005
    %7353 = vmatpush1.msra.mxu0 %v7004
    %7354 = vmatprep.subr.mxu0 %v7007
    %7355 = vmatpush1.msra.mxu0 %v7006
    %7356 = vmatprep.subr.mxu0 %v7009
    %7357 = vmatpush1.msra.mxu0 %v7008
    %7358 = vmatprep.subr.mxu0 %v7011
    %7359 = vmatpush1.msra.mxu0 %v7010
    %7360 = vmatprep.subr.mxu0 %v7013
    %7361 = vmatpush1.msra.mxu0 %v7012
    %7362 = vmatprep.subr.mxu0 %v7015
    %7363 = vmatpush1.msra.mxu0 %v7014
    %7364 = vmatprep.subr.mxu0 %v7017
    %7365 = vmatpush1.msra.mxu0 %v7016
    %7366 = vmatprep.subr.mxu0 %v7019
    %7367 = vmatpush1.msra.mxu0 %v7018
    %7368 = vmatprep.subr.mxu0 %v7021
    %7369 = vmatpush1.msra.mxu0 %v7020
    %7370 = vmatprep.subr.mxu0 %v7023
    %7371 = vmatpush1.msra.mxu0 %v7022
    %7372 = vmatprep.subr.mxu0 %v7025
    %7373 = vmatpush1.msra.mxu0 %v7024
    %7374 = vmatprep.subr.mxu0 %v7027
    %7375 = vmatpush1.msra.mxu0 %v7026
    %7376 = vmatprep.subr.mxu0 %v7029
    %7377 = vmatpush1.msra.mxu0 %v7028
    %7378 = vmatprep.subr.mxu0 %v7031
    %7379 = vmatpush1.msra.mxu0 %v7030
    %7380 = vmatprep.subr.mxu0 %v7033
    %7381 = vmatpush1.msra.mxu0 %v7032
    %7382 = vmatprep.subr.mxu0 %v7035
    %7383 = vmatpush1.msra.mxu0 %v7034
    %7384 = vmatprep.subr.mxu0 %v7037
    %7385 = vmatpush1.msra.mxu0 %v7036
    %7386 = vmatprep.subr.mxu0 %v7039
    %7387 = vmatpush1.msra.mxu0 %v7038
    %7388 = vmatprep.subr.mxu0 %v7041
    %7389 = vmatpush1.msra.mxu0 %v7040
    %7390 = vmatprep.mubr.f32.mxu0 %v6199
    %7391 = vmatmul.mubr.f32.gmra.mrb[0].mxu0 %v6198
    %v7392 = vpop.f32.mrb[0].mxu0
    %v7393 = vadd.f32 0.0, %v7392
    %v7394 = vpop.f32.mrb[0].mxu0
    %v7395 = vadd.f32 0.0, %v7394
    %7396 = vdwg.mxu0
    %7397 = vrot.lane.b32.xlu0 %v7109, 127
    %v7398 = vpop.permute.xlu0 %7397
    %7399 = vrot.lane.b32.xlu0 %v7111, 127
    %v7400 = vpop.permute.xlu0 %7399
    %v7401 = vsel %vm4047, %v7398, %v7400
    %v7402 = vsel %vm4047, %v7400, %v7398
    %7403 = vrot.lane.b32.xlu0 %v7109, 126
    %v7404 = vpop.permute.xlu0 %7403
    %7405 = vrot.lane.b32.xlu0 %v7111, 126
    %v7406 = vpop.permute.xlu0 %7405
    %v7407 = vsel %vm4054, %v7404, %v7406
    %v7408 = vsel %vm4054, %v7406, %v7404
    %7409 = vrot.lane.b32.xlu0 %v7180, 127
    %v7410 = vpop.permute.xlu0 %7409
    %7411 = vrot.lane.b32.xlu0 %v7182, 127
    %v7412 = vpop.permute.xlu0 %7411
    %v7413 = vsel %vm4047, %v7410, %v7412
    %v7414 = vsel %vm4047, %v7412, %v7410
    %7415 = vrot.lane.b32.xlu0 %v7180, 126
    %v7416 = vpop.permute.xlu0 %7415
    %7417 = vrot.lane.b32.xlu0 %v7182, 126
    %v7418 = vpop.permute.xlu0 %7417
    %v7419 = vsel %vm4054, %v7416, %v7418
    %v7420 = vsel %vm4054, %v7418, %v7416
    %7421 = vrot.lane.b32.xlu0 %v7251, 127
    %v7422 = vpop.permute.xlu0 %7421
    %7423 = vrot.lane.b32.xlu0 %v7253, 127
    %v7424 = vpop.permute.xlu0 %7423
    %v7425 = vsel %vm4047, %v7422, %v7424
    %v7426 = vsel %vm4047, %v7424, %v7422
    %7427 = vrot.lane.b32.xlu0 %v7251, 126
    %v7428 = vpop.permute.xlu0 %7427
    %7429 = vrot.lane.b32.xlu0 %v7253, 126
    %v7430 = vpop.permute.xlu0 %7429
    %v7431 = vsel %vm4054, %v7428, %v7430
    %v7432 = vsel %vm4054, %v7430, %v7428
    %7433 = vrot.lane.b32.xlu0 %v7322, 127
    %v7434 = vpop.permute.xlu0 %7433
    %7435 = vrot.lane.b32.xlu0 %v7324, 127
    %v7436 = vpop.permute.xlu0 %7435
    %v7437 = vsel %vm4047, %v7434, %v7436
    %v7438 = vsel %vm4047, %v7436, %v7434
    %7439 = vrot.lane.b32.xlu0 %v7322, 126
    %v7440 = vpop.permute.xlu0 %7439
    %7441 = vrot.lane.b32.xlu0 %v7324, 126
    %v7442 = vpop.permute.xlu0 %7441
    %v7443 = vsel %vm4054, %v7440, %v7442
    %v7444 = vsel %vm4054, %v7442, %v7440
    %7445 = vrot.lane.b32.xlu0 %v7393, 127
    %v7446 = vpop.permute.xlu0 %7445
    %7447 = vrot.lane.b32.xlu0 %v7395, 127
    %v7448 = vpop.permute.xlu0 %7447
    %v7449 = vsel %vm4047, %v7446, %v7448
    %v7450 = vsel %vm4047, %v7448, %v7446
    %7451 = vrot.lane.b32.xlu0 %v7393, 126
    %v7452 = vpop.permute.xlu0 %7451
    %7453 = vrot.lane.b32.xlu0 %v7395, 126
    %v7454 = vpop.permute.xlu0 %7453
    %v7455 = vsel %vm4054, %v7452, %v7454
    %v7456 = vsel %vm4054, %v7454, %v7452
    %s7457 = sld [smem:[#allocation2 + $0x8d]]
    %v7458 = vstv %s7457
    %v7459 = vmul.f32 %v7458, %v7109
    %v7460 = vmul.f32 %v7458, %v7111
    %s7461 = sld [smem:[#allocation2 + $0x8e]]
    %v7462 = vstv %s7461
    %v7463 = vmul.f32 %v7462, %v7401
    %v7464 = vmul.f32 %v7462, %v7402
    %v7465 = vadd.f32 %v7459, %v7463
    %v7466 = vadd.f32 %v7460, %v7464
    %s7467 = sld [smem:[#allocation2 + $0x8f]]
    %v7468 = vstv %s7467
    %v7469 = vmul.f32 %v7468, %v7407
    %v7470 = vmul.f32 %v7468, %v7408
    %v7471 = vadd.f32 %v7465, %v7469
    %v7472 = vadd.f32 %v7466, %v7470
    %s7473 = sld [smem:[#allocation2 + $0x90]]
    %v7474 = vstv %s7473
    %v7475 = vmul.f32 %v7474, %v7180
    %v7476 = vmul.f32 %v7474, %v7182
    %v7477 = vadd.f32 %v7471, %v7475
    %v7478 = vadd.f32 %v7472, %v7476
    %s7479 = sld [smem:[#allocation2 + $0x91]]
    %v7480 = vstv %s7479
    %v7481 = vmul.f32 %v7480, %v7413
    %v7482 = vmul.f32 %v7480, %v7414
    %v7483 = vadd.f32 %v7477, %v7481
    %v7484 = vadd.f32 %v7478, %v7482
    %s7485 = sld [smem:[#allocation2 + $0x92]]
    %v7486 = vstv %s7485
    %v7487 = vmul.f32 %v7486, %v7419
    %v7488 = vmul.f32 %v7486, %v7420
    %v7489 = vadd.f32 %v7483, %v7487
    %v7490 = vadd.f32 %v7484, %v7488
    %s7491 = sld [smem:[#allocation2 + $0x93]]
    %v7492 = vstv %s7491
    %v7493 = vmul.f32 %v7492, %v7251
    %v7494 = vmul.f32 %v7492, %v7253
    %v7495 = vadd.f32 %v7489, %v7493
    %v7496 = vadd.f32 %v7490, %v7494
    %s7497 = sld [smem:[#allocation2 + $0x94]]
    %v7498 = vstv %s7497
    %v7499 = vmul.f32 %v7498, %v7425
    %v7500 = vmul.f32 %v7498, %v7426
    %v7501 = vadd.f32 %v7495, %v7499
    %v7502 = vadd.f32 %v7496, %v7500
    %s7503 = sld [smem:[#allocation2 + $0x95]]
    %v7504 = vstv %s7503
    %v7505 = vmul.f32 %v7504, %v7431
    %v7506 = vmul.f32 %v7504, %v7432
    %v7507 = vadd.f32 %v7501, %v7505
    %v7508 = vadd.f32 %v7502, %v7506
    %s7509 = sld [smem:[#allocation2 + $0x96]]
    %v7510 = vstv %s7509
    %v7511 = vmul.f32 %v7510, %v7322
    %v7512 = vmul.f32 %v7510, %v7324
    %v7513 = vadd.f32 %v7507, %v7511
    %v7514 = vadd.f32 %v7508, %v7512
    %s7515 = sld [smem:[#allocation2 + $0x97]]
    %v7516 = vstv %s7515
    %v7517 = vmul.f32 %v7516, %v7437
    %v7518 = vmul.f32 %v7516, %v7438
    %v7519 = vadd.f32 %v7513, %v7517
    %v7520 = vadd.f32 %v7514, %v7518
    %s7521 = sld [smem:[#allocation2 + $0x98]]
    %v7522 = vstv %s7521
    %v7523 = vmul.f32 %v7522, %v7443
    %v7524 = vmul.f32 %v7522, %v7444
    %v7525 = vadd.f32 %v7519, %v7523
    %v7526 = vadd.f32 %v7520, %v7524
    %s7527 = sld [smem:[#allocation2 + $0x99]]
    %v7528 = vstv %s7527
    %v7529 = vmul.f32 %v7528, %v7393
    %v7530 = vmul.f32 %v7528, %v7395
    %v7531 = vadd.f32 %v7525, %v7529
    %v7532 = vadd.f32 %v7526, %v7530
    %s7533 = sld [smem:[#allocation2 + $0x9a]]
    %v7534 = vstv %s7533
    %v7535 = vmul.f32 %v7534, %v7449
    %v7536 = vmul.f32 %v7534, %v7450
    %v7537 = vadd.f32 %v7531, %v7535
    %v7538 = vadd.f32 %v7532, %v7536
    %s7539 = sld [smem:[#allocation2 + $0x9b]]
    %v7540 = vstv %s7539
    %v7541 = vmul.f32 %v7540, %v7455
    %v7542 = vmul.f32 %v7540, %v7456
    %v7543 = vadd.f32 %v7537, %v7541
    %v7544 = vadd.f32 %v7538, %v7542
    %s7545 = sld [smem:[#allocation2 + $0xba]]
    %v7546 = vstv %s7545
    %v7547 = vadd.f32 %v7543, %v7546
    %v7548 = vadd.f32 %v7544, %v7546
    %7549 = vrot.lane.b32.xlu0 %v7547, 127
    %v7550 = vpop.permute.xlu0 %7549
    %7551 = vrot.lane.b32.xlu0 %v7548, 127
    %v7552 = vpop.permute.xlu0 %7551
    %v7553 = vsel %vm4047, %v7550, %v7552
    %v7554 = vsel %vm4047, %v7552, %v7550
    %v7555 = vmax.f32 %v7547, %v7553
    %v7556 = vmax.f32 %v7548, %v7554
    %7557 = vrot.lane.b32.xlu0 %v7547, 126
    %v7558 = vpop.permute.xlu0 %7557
    %7559 = vrot.lane.b32.xlu0 %v7548, 126
    %v7560 = vpop.permute.xlu0 %7559
    %v7561 = vsel %vm4054, %v7558, %v7560
    %v7562 = vsel %vm4054, %v7560, %v7558
    %v7563 = vmax.f32 %v7555, %v7561
    %v7564 = vmax.f32 %v7556, %v7562
    %s7565 = sld [smem:[#allocation2 + $0x9c]]
    %v7566 = vstv %s7565
    %v7567 = vmul.f32 %v7566, %v7109
    %v7568 = vmul.f32 %v7566, %v7111
    %s7569 = sld [smem:[#allocation2 + $0x9d]]
    %v7570 = vstv %s7569
    %v7571 = vmul.f32 %v7570, %v7401
    %v7572 = vmul.f32 %v7570, %v7402
    %v7573 = vadd.f32 %v7567, %v7571
    %v7574 = vadd.f32 %v7568, %v7572
    %s7575 = sld [smem:[#allocation2 + $0x9e]]
    %v7576 = vstv %s7575
    %v7577 = vmul.f32 %v7576, %v7407
    %v7578 = vmul.f32 %v7576, %v7408
    %v7579 = vadd.f32 %v7573, %v7577
    %v7580 = vadd.f32 %v7574, %v7578
    %s7581 = sld [smem:[#allocation2 + $0x9f]]
    %v7582 = vstv %s7581
    %v7583 = vmul.f32 %v7582, %v7180
    %v7584 = vmul.f32 %v7582, %v7182
    %v7585 = vadd.f32 %v7579, %v7583
    %v7586 = vadd.f32 %v7580, %v7584
    %s7587 = sld [smem:[#allocation2 + $0xa0]]
    %v7588 = vstv %s7587
    %v7589 = vmul.f32 %v7588, %v7413
    %v7590 = vmul.f32 %v7588, %v7414
    %v7591 = vadd.f32 %v7585, %v7589
    %v7592 = vadd.f32 %v7586, %v7590
    %s7593 = sld [smem:[#allocation2 + $0xa1]]
    %v7594 = vstv %s7593
    %v7595 = vmul.f32 %v7594, %v7419
    %v7596 = vmul.f32 %v7594, %v7420
    %v7597 = vadd.f32 %v7591, %v7595
    %v7598 = vadd.f32 %v7592, %v7596
    %s7599 = sld [smem:[#allocation2 + $0xa2]]
    %v7600 = vstv %s7599
    %v7601 = vmul.f32 %v7600, %v7251
    %v7602 = vmul.f32 %v7600, %v7253
    %v7603 = vadd.f32 %v7597, %v7601
    %v7604 = vadd.f32 %v7598, %v7602
    %s7605 = sld [smem:[#allocation2 + $0xa3]]
    %v7606 = vstv %s7605
    %v7607 = vmul.f32 %v7606, %v7425
    %v7608 = vmul.f32 %v7606, %v7426
    %v7609 = vadd.f32 %v7603, %v7607
    %v7610 = vadd.f32 %v7604, %v7608
    %s7611 = sld [smem:[#allocation2 + $0xa4]]
    %v7612 = vstv %s7611
    %v7613 = vmul.f32 %v7612, %v7431
    %v7614 = vmul.f32 %v7612, %v7432
    %v7615 = vadd.f32 %v7609, %v7613
    %v7616 = vadd.f32 %v7610, %v7614
    %s7617 = sld [smem:[#allocation2 + $0xa5]]
    %v7618 = vstv %s7617
    %v7619 = vmul.f32 %v7618, %v7322
    %v7620 = vmul.f32 %v7618, %v7324
    %v7621 = vadd.f32 %v7615, %v7619
    %v7622 = vadd.f32 %v7616, %v7620
    %s7623 = sld [smem:[#allocation2 + $0xa6]]
    %v7624 = vstv %s7623
    %v7625 = vmul.f32 %v7624, %v7437
    %v7626 = vmul.f32 %v7624, %v7438
    %v7627 = vadd.f32 %v7621, %v7625
    %v7628 = vadd.f32 %v7622, %v7626
    %s7629 = sld [smem:[#allocation2 + $0xa7]]
    %v7630 = vstv %s7629
    %v7631 = vmul.f32 %v7630, %v7443
    %v7632 = vmul.f32 %v7630, %v7444
    %v7633 = vadd.f32 %v7627, %v7631
    %v7634 = vadd.f32 %v7628, %v7632
    %s7635 = sld [smem:[#allocation2 + $0xa8]]
    %v7636 = vstv %s7635
    %v7637 = vmul.f32 %v7636, %v7393
    %v7638 = vmul.f32 %v7636, %v7395
    %v7639 = vadd.f32 %v7633, %v7637
    %v7640 = vadd.f32 %v7634, %v7638
    %s7641 = sld [smem:[#allocation2 + $0xa9]]
    %v7642 = vstv %s7641
    %v7643 = vmul.f32 %v7642, %v7449
    %v7644 = vmul.f32 %v7642, %v7450
    %v7645 = vadd.f32 %v7639, %v7643
    %v7646 = vadd.f32 %v7640, %v7644
    %s7647 = sld [smem:[#allocation2 + $0xaa]]
    %v7648 = vstv %s7647
    %v7649 = vmul.f32 %v7648, %v7455
    %v7650 = vmul.f32 %v7648, %v7456
    %v7651 = vadd.f32 %v7645, %v7649
    %v7652 = vadd.f32 %v7646, %v7650
    %s7653 = sld [smem:[#allocation2 + $0xbb]]
    %v7654 = vstv %s7653
    %v7655 = vadd.f32 %v7651, %v7654
    %v7656 = vadd.f32 %v7652, %v7654
    %7657 = vrot.lane.b32.xlu0 %v7655, 127
    %v7658 = vpop.permute.xlu0 %7657
    %7659 = vrot.lane.b32.xlu0 %v7656, 127
    %v7660 = vpop.permute.xlu0 %7659
    %v7661 = vsel %vm4047, %v7658, %v7660
    %v7662 = vsel %vm4047, %v7660, %v7658
    %v7663 = vmax.f32 %v7655, %v7661
    %v7664 = vmax.f32 %v7656, %v7662
    %7665 = vrot.lane.b32.xlu0 %v7655, 126
    %v7666 = vpop.permute.xlu0 %7665
    %7667 = vrot.lane.b32.xlu0 %v7656, 126
    %v7668 = vpop.permute.xlu0 %7667
    %v7669 = vsel %vm4054, %v7666, %v7668
    %v7670 = vsel %vm4054, %v7668, %v7666
    %v7671 = vmax.f32 %v7663, %v7669
    %v7672 = vmax.f32 %v7664, %v7670
    %s7673 = sld [smem:[#allocation2 + $0xab]]
    %v7674 = vstv %s7673
    %v7675 = vmul.f32 %v7674, %v7109
    %v7676 = vmul.f32 %v7674, %v7111
    %s7677 = sld [smem:[#allocation2 + $0xac]]
    %v7678 = vstv %s7677
    %v7679 = vmul.f32 %v7678, %v7401
    %v7680 = vmul.f32 %v7678, %v7402
    %v7681 = vadd.f32 %v7675, %v7679
    %v7682 = vadd.f32 %v7676, %v7680
    %s7683 = sld [smem:[#allocation2 + $0xad]]
    %v7684 = vstv %s7683
    %v7685 = vmul.f32 %v7684, %v7407
    %v7686 = vmul.f32 %v7684, %v7408
    %v7687 = vadd.f32 %v7681, %v7685
    %v7688 = vadd.f32 %v7682, %v7686
    %s7689 = sld [smem:[#allocation2 + $0xae]]
    %v7690 = vstv %s7689
    %v7691 = vmul.f32 %v7690, %v7180
    %v7692 = vmul.f32 %v7690, %v7182
    %v7693 = vadd.f32 %v7687, %v7691
    %v7694 = vadd.f32 %v7688, %v7692
    %s7695 = sld [smem:[#allocation2 + $0xaf]]
    %v7696 = vstv %s7695
    %v7697 = vmul.f32 %v7696, %v7413
    %v7698 = vmul.f32 %v7696, %v7414
    %v7699 = vadd.f32 %v7693, %v7697
    %v7700 = vadd.f32 %v7694, %v7698
    %s7701 = sld [smem:[#allocation2 + $0xb0]]
    %v7702 = vstv %s7701
    %v7703 = vmul.f32 %v7702, %v7419
    %v7704 = vmul.f32 %v7702, %v7420
    %v7705 = vadd.f32 %v7699, %v7703
    %v7706 = vadd.f32 %v7700, %v7704
    %s7707 = sld [smem:[#allocation2 + $0xb1]]
    %v7708 = vstv %s7707
    %v7709 = vmul.f32 %v7708, %v7251
    %v7710 = vmul.f32 %v7708, %v7253
    %v7711 = vadd.f32 %v7705, %v7709
    %v7712 = vadd.f32 %v7706, %v7710
    %s7713 = sld [smem:[#allocation2 + $0xb2]]
    %v7714 = vstv %s7713
    %v7715 = vmul.f32 %v7714, %v7425
    %v7716 = vmul.f32 %v7714, %v7426
    %v7717 = vadd.f32 %v7711, %v7715
    %v7718 = vadd.f32 %v7712, %v7716
    %s7719 = sld [smem:[#allocation2 + $0xb3]]
    %v7720 = vstv %s7719
    %v7721 = vmul.f32 %v7720, %v7431
    %v7722 = vmul.f32 %v7720, %v7432
    %v7723 = vadd.f32 %v7717, %v7721
    %v7724 = vadd.f32 %v7718, %v7722
    %s7725 = sld [smem:[#allocation2 + $0xb4]]
    %v7726 = vstv %s7725
    %v7727 = vmul.f32 %v7726, %v7322
    %v7728 = vmul.f32 %v7726, %v7324
    %v7729 = vadd.f32 %v7723, %v7727
    %v7730 = vadd.f32 %v7724, %v7728
    %s7731 = sld [smem:[#allocation2 + $0xb5]]
    %v7732 = vstv %s7731
    %v7733 = vmul.f32 %v7732, %v7437
    %v7734 = vmul.f32 %v7732, %v7438
    %v7735 = vadd.f32 %v7729, %v7733
    %v7736 = vadd.f32 %v7730, %v7734
    %s7737 = sld [smem:[#allocation2 + $0xb6]]
    %v7738 = vstv %s7737
    %v7739 = vmul.f32 %v7738, %v7443
    %v7740 = vmul.f32 %v7738, %v7444
    %v7741 = vadd.f32 %v7735, %v7739
    %v7742 = vadd.f32 %v7736, %v7740
    %s7743 = sld [smem:[#allocation2 + $0xb7]]
    %v7744 = vstv %s7743
    %v7745 = vmul.f32 %v7744, %v7393
    %v7746 = vmul.f32 %v7744, %v7395
    %v7747 = vadd.f32 %v7741, %v7745
    %v7748 = vadd.f32 %v7742, %v7746
    %s7749 = sld [smem:[#allocation2 + $0xb8]]
    %v7750 = vstv %s7749
    %v7751 = vmul.f32 %v7750, %v7449
    %v7752 = vmul.f32 %v7750, %v7450
    %v7753 = vadd.f32 %v7747, %v7751
    %v7754 = vadd.f32 %v7748, %v7752
    %s7755 = sld [smem:[#allocation2 + $0xb9]]
    %v7756 = vstv %s7755
    %v7757 = vmul.f32 %v7756, %v7455
    %v7758 = vmul.f32 %v7756, %v7456
    %v7759 = vadd.f32 %v7753, %v7757
    %v7760 = vadd.f32 %v7754, %v7758
    %s7761 = sld [smem:[#allocation2 + $0xbc]]
    %v7762 = vstv %s7761
    %v7763 = vadd.f32 %v7759, %v7762
    %v7764 = vadd.f32 %v7760, %v7762
    %7765 = vrot.lane.b32.xlu0 %v7763, 127
    %v7766 = vpop.permute.xlu0 %7765
    %7767 = vrot.lane.b32.xlu0 %v7764, 127
    %v7768 = vpop.permute.xlu0 %7767
    %v7769 = vsel %vm4047, %v7766, %v7768
    %v7770 = vsel %vm4047, %v7768, %v7766
    %v7771 = vmax.f32 %v7763, %v7769
    %v7772 = vmax.f32 %v7764, %v7770
    %7773 = vrot.lane.b32.xlu0 %v7763, 126
    %v7774 = vpop.permute.xlu0 %7773
    %7775 = vrot.lane.b32.xlu0 %v7764, 126
    %v7776 = vpop.permute.xlu0 %7775
    %v7777 = vsel %vm4054, %v7774, %v7776
    %v7778 = vsel %vm4054, %v7776, %v7774
    %v7779 = vmax.f32 %v7771, %v7777
    %v7780 = vmax.f32 %v7772, %v7778
    %7781 = vrot.lane.b32.xlu0 %v7563, 127
    %v7782 = vpop.permute.xlu0 %7781
    %7783 = vrot.lane.b32.xlu0 %v7564, 127
    %v7784 = vpop.permute.xlu0 %7783
    %v7785 = vsel %vm4047, %v7782, %v7784
    %v7786 = vsel %vm4047, %v7784, %v7782
    %7787 = vrot.lane.b32.xlu0 %v7563, 126
    %v7788 = vpop.permute.xlu0 %7787
    %7789 = vrot.lane.b32.xlu0 %v7564, 126
    %v7790 = vpop.permute.xlu0 %7789
    %v7791 = vsel %vm4054, %v7788, %v7790
    %v7792 = vsel %vm4054, %v7790, %v7788
    %7793 = vrot.lane.b32.xlu0 %v7671, 127
    %v7794 = vpop.permute.xlu0 %7793
    %7795 = vrot.lane.b32.xlu0 %v7672, 127
    %v7796 = vpop.permute.xlu0 %7795
    %v7797 = vsel %vm4047, %v7794, %v7796
    %v7798 = vsel %vm4047, %v7796, %v7794
    %7799 = vrot.lane.b32.xlu0 %v7671, 126
    %v7800 = vpop.permute.xlu0 %7799
    %7801 = vrot.lane.b32.xlu0 %v7672, 126
    %v7802 = vpop.permute.xlu0 %7801
    %v7803 = vsel %vm4054, %v7800, %v7802
    %v7804 = vsel %vm4054, %v7802, %v7800
    %7805 = vrot.lane.b32.xlu0 %v7779, 127
    %v7806 = vpop.permute.xlu0 %7805
    %7807 = vrot.lane.b32.xlu0 %v7780, 127
    %v7808 = vpop.permute.xlu0 %7807
    %v7809 = vsel %vm4047, %v7806, %v7808
    %v7810 = vsel %vm4047, %v7808, %v7806
    %7811 = vrot.lane.b32.xlu0 %v7779, 126
    %v7812 = vpop.permute.xlu0 %7811
    %7813 = vrot.lane.b32.xlu0 %v7780, 126
    %v7814 = vpop.permute.xlu0 %7813
    %v7815 = vsel %vm4054, %v7812, %v7814
    %v7816 = vsel %vm4054, %v7814, %v7812
    %s7817 = sld [smem:[#allocation2 + $0xbd]]
    %v7818 = vstv %s7817
    %v7819 = vmul.f32 %v7818, %v7563
    %v7820 = vmul.f32 %v7818, %v7564
    %s7821 = sld [smem:[#allocation2 + $0xbe]]
    %v7822 = vstv %s7821
    %v7823 = vmul.f32 %v7822, %v7785
    %v7824 = vmul.f32 %v7822, %v7786
    %v7825 = vadd.f32 %v7819, %v7823
    %v7826 = vadd.f32 %v7820, %v7824
    %s7827 = sld [smem:[#allocation2 + $0xbf]]
    %v7828 = vstv %s7827
    %v7829 = vmul.f32 %v7828, %v7791
    %v7830 = vmul.f32 %v7828, %v7792
    %v7831 = vadd.f32 %v7825, %v7829
    %v7832 = vadd.f32 %v7826, %v7830
    %s7833 = sld [smem:[#allocation2 + $0xc0]]
    %v7834 = vstv %s7833
    %v7835 = vmul.f32 %v7834, %v7671
    %v7836 = vmul.f32 %v7834, %v7672
    %v7837 = vadd.f32 %v7831, %v7835
    %v7838 = vadd.f32 %v7832, %v7836
    %s7839 = sld [smem:[#allocation2 + $0xc1]]
    %v7840 = vstv %s7839
    %v7841 = vmul.f32 %v7840, %v7797
    %v7842 = vmul.f32 %v7840, %v7798
    %v7843 = vadd.f32 %v7837, %v7841
    %v7844 = vadd.f32 %v7838, %v7842
    %s7845 = sld [smem:[#allocation2 + $0xc2]]
    %v7846 = vstv %s7845
    %v7847 = vmul.f32 %v7846, %v7803
    %v7848 = vmul.f32 %v7846, %v7804
    %v7849 = vadd.f32 %v7843, %v7847
    %v7850 = vadd.f32 %v7844, %v7848
    %s7851 = sld [smem:[#allocation2 + $0xc3]]
    %v7852 = vstv %s7851
    %v7853 = vmul.f32 %v7852, %v7779
    %v7854 = vmul.f32 %v7852, %v7780
    %v7855 = vadd.f32 %v7849, %v7853
    %v7856 = vadd.f32 %v7850, %v7854
    %s7857 = sld [smem:[#allocation2 + $0xc4]]
    %v7858 = vstv %s7857
    %v7859 = vmul.f32 %v7858, %v7809
    %v7860 = vmul.f32 %v7858, %v7810
    %v7861 = vadd.f32 %v7855, %v7859
    %v7862 = vadd.f32 %v7856, %v7860
    %s7863 = sld [smem:[#allocation2 + $0xc5]]
    %v7864 = vstv %s7863
    %v7865 = vmul.f32 %v7864, %v7815
    %v7866 = vmul.f32 %v7864, %v7816
    %v7867 = vadd.f32 %v7861, %v7865
    %v7868 = vadd.f32 %v7862, %v7866
    %s7869 = sld [smem:[#allocation2 + $0xc6]]
    %v7870 = vstv %s7869
    %v7871 = vadd.f32 %v7867, %v7870
    %v7872 = vadd.f32 %v7868, %v7870
    %7873 = vrot.lane.b32.xlu0 %v7871, 127
    %v7874 = vpop.permute.xlu0 %7873
    %7875 = vrot.lane.b32.xlu0 %v7872, 127
    %v7876 = vpop.permute.xlu0 %7875
    %v7877 = vsel %vm4047, %v7874, %v7876
    %v7878 = vsel %vm4047, %v7876, %v7874
    %v7879 = vmax.f32 %v7871, %v7877
    %v7880 = vmax.f32 %v7872, %v7878
    %7881 = vrot.lane.b32.xlu0 %v7871, 126
    %v7882 = vpop.permute.xlu0 %7881
    %7883 = vrot.lane.b32.xlu0 %v7872, 126
    %v7884 = vpop.permute.xlu0 %7883
    %v7885 = vsel %vm4054, %v7882, %v7884
    %v7886 = vsel %vm4054, %v7884, %v7882
    %v7887 = vmax.f32 %v7879, %v7885
    %v7888 = vmax.f32 %v7880, %v7886
    %s7889 = scalar_lea.vmem %s4, 256
    %v7890 = vld [vmem:[%s7889] sm:$0xff]
    %v7891 = vld [vmem:[%s7889 + $0x8] sm:$0xff]
    %v7892 = vld [vmem:[%s7889 + $0x10] sm:$0xff]
    %v7893 = vld [vmem:[%s7889 + $0x18] sm:$0xff]
    %v7894 = vld [vmem:[%s7889 + $0x20] sm:$0xff]
    %v7895 = vld [vmem:[%s7889 + $0x28] sm:$0xff]
    %v7896 = vld [vmem:[%s7889 + $0x30] sm:$0xff]
    %v7897 = vld [vmem:[%s7889 + $0x38] sm:$0xff]
    %v7898 = vld [vmem:[%s7889 + $0x40] sm:$0xff]
    %v7899 = vld [vmem:[%s7889 + $0x48] sm:$0xff]
    %v7900 = vld [vmem:[%s7889 + $0x50] sm:$0xff]
    %v7901 = vld [vmem:[%s7889 + $0x58] sm:$0xff]
    %v7902 = vld [vmem:[%s7889 + $0x60] sm:$0xff]
    %v7903 = vld [vmem:[%s7889 + $0x68] sm:$0xff]
    %v7904 = vld [vmem:[%s7889 + $0x70] sm:$0xff]
    %v7905 = vld [vmem:[%s7889 + $0x78] sm:$0xff]
    %v7906 = vld [vmem:[%s7889 + $0x80] sm:$0xff]
    %v7907 = vld [vmem:[%s7889 + $0x88] sm:$0xff]
    %v7908 = vld [vmem:[%s7889 + $0x90] sm:$0xff]
    %v7909 = vld [vmem:[%s7889 + $0x98] sm:$0xff]
    %v7910 = vld [vmem:[%s7889 + $0xa0] sm:$0xff]
    %v7911 = vld [vmem:[%s7889 + $0xa8] sm:$0xff]
    %v7912 = vld [vmem:[%s7889 + $0xb0] sm:$0xff]
    %v7913 = vld [vmem:[%s7889 + $0xb8] sm:$0xff]
    %v7914 = vld [vmem:[%s7889 + $0xc0] sm:$0xff]
    %v7915 = vld [vmem:[%s7889 + $0xc8] sm:$0xff]
    %v7916 = vld [vmem:[%s7889 + $0xd0] sm:$0xff]
    %v7917 = vld [vmem:[%s7889 + $0xd8] sm:$0xff]
    %v7918 = vld [vmem:[%s7889 + $0xe0] sm:$0xff]
    %v7919 = vld [vmem:[%s7889 + $0xe8] sm:$0xff]
    %v7920 = vld [vmem:[%s7889 + $0xf0] sm:$0xff]
    %v7921 = vld [vmem:[%s7889 + $0xf8] sm:$0xff]
    %7922 = vmatprep.subr.mxu0 0.0
    %7923 = vmatpush1.msra.mxu0 %v7890
    %7924 = vmatprep.subr.mxu0 0.0
    %7925 = vmatpush1.msra.mxu0 %v7891
    %7926 = vmatprep.subr.mxu0 0.0
    %7927 = vmatpush1.msra.mxu0 %v7892
    %7928 = vmatprep.subr.mxu0 0.0
    %7929 = vmatpush1.msra.mxu0 %v7893
    %7930 = vmatprep.subr.mxu0 0.0
    %7931 = vmatpush1.msra.mxu0 %v7894
    %7932 = vmatprep.subr.mxu0 0.0
    %7933 = vmatpush1.msra.mxu0 %v7895
    %7934 = vmatprep.subr.mxu0 0.0
    %7935 = vmatpush1.msra.mxu0 %v7896
    %7936 = vmatprep.subr.mxu0 0.0
    %7937 = vmatpush1.msra.mxu0 %v7897
    %7938 = vmatprep.subr.mxu0 0.0
    %7939 = vmatpush1.msra.mxu0 %v7898
    %7940 = vmatprep.subr.mxu0 0.0
    %7941 = vmatpush1.msra.mxu0 %v7899
    %7942 = vmatprep.subr.mxu0 0.0
    %7943 = vmatpush1.msra.mxu0 %v7900
    %7944 = vmatprep.subr.mxu0 0.0
    %7945 = vmatpush1.msra.mxu0 %v7901
    %7946 = vmatprep.subr.mxu0 0.0
    %7947 = vmatpush1.msra.mxu0 %v7902
    %7948 = vmatprep.subr.mxu0 0.0
    %7949 = vmatpush1.msra.mxu0 %v7903
    %7950 = vmatprep.subr.mxu0 0.0
    %7951 = vmatpush1.msra.mxu0 %v7904
    %7952 = vmatprep.subr.mxu0 0.0
    %7953 = vmatpush1.msra.mxu0 %v7905
    %7954 = vmatprep.subr.mxu0 0.0
    %7955 = vmatpush1.msra.mxu0 %v7906
    %7956 = vmatprep.subr.mxu0 0.0
    %7957 = vmatpush1.msra.mxu0 %v7907
    %7958 = vmatprep.subr.mxu0 0.0
    %7959 = vmatpush1.msra.mxu0 %v7908
    %7960 = vmatprep.subr.mxu0 0.0
    %7961 = vmatpush1.msra.mxu0 %v7909
    %7962 = vmatprep.subr.mxu0 0.0
    %7963 = vmatpush1.msra.mxu0 %v7910
    %7964 = vmatprep.subr.mxu0 0.0
    %7965 = vmatpush1.msra.mxu0 %v7911
    %7966 = vmatprep.subr.mxu0 0.0
    %7967 = vmatpush1.msra.mxu0 %v7912
    %7968 = vmatprep.subr.mxu0 0.0
    %7969 = vmatpush1.msra.mxu0 %v7913
    %7970 = vmatprep.subr.mxu0 0.0
    %7971 = vmatpush1.msra.mxu0 %v7914
    %7972 = vmatprep.subr.mxu0 0.0
    %7973 = vmatpush1.msra.mxu0 %v7915
    %7974 = vmatprep.subr.mxu0 0.0
    %7975 = vmatpush1.msra.mxu0 %v7916
    %7976 = vmatprep.subr.mxu0 0.0
    %7977 = vmatpush1.msra.mxu0 %v7917
    %7978 = vmatprep.subr.mxu0 0.0
    %7979 = vmatpush1.msra.mxu0 %v7918
    %7980 = vmatprep.subr.mxu0 0.0
    %7981 = vmatpush1.msra.mxu0 %v7919
    %7982 = vmatprep.subr.mxu0 0.0
    %7983 = vmatpush1.msra.mxu0 %v7920
    %7984 = vmatprep.subr.mxu0 0.0
    %7985 = vmatpush1.msra.mxu0 %v7921
    %7986 = vmatprep.mubr.f32.mxu0 %v7888
    %7987 = vmatmul.mubr.f32.gmra.mrb[0].mxu0 %v7887
    %v7988 = vpop.f32.mrb[0].mxu0
    %v7989 = vadd.f32 0.0, %v7988
    %v7990 = vpop.f32.mrb[0].mxu0
    %7991 = vdwg.mxu0
    %v7992 = vadd.f32 %v4639, %v7989
    %vm7993 = vcmp.gt.f32.partialorder %v7992, 0.0
    %v7994 = vmin.f32 %v7992, 0.0
    %v7995 = vmul.f32 %v7994, 1.442695
    %v7996 = vpow.pop %v7995
    %v7997 = vsub.f32 %v7996, 1.0
    %v7998 = vsel %vm7993, %v7992, %v7997
    %v7999 = vld [vmem:[%s5 + $0x8] sm:$0xff]
    %v8000 = vld [vmem:[%s5 + $0x10] sm:$0xff]
    %v8001 = vld [vmem:[%s5 + $0x18] sm:$0xff]
    %v8002 = vld [vmem:[%s5 + $0x20] sm:$0xff]
    %v8003 = vld [vmem:[%s5 + $0x1] sm:$0x1]
    %vm8004 = vcmask 261120
    %v8006 = vsel %vm8004, %v7998, 0
    %8008 = vmatprep.subr.mxu0 0.0
    %8009 = vmatpush1.msra.mxu0 %v7999
    %8010 = vmatprep.subr.mxu0 0.0
    %8011 = vmatpush1.msra.mxu0 %v8000
    %8012 = vmatprep.subr.mxu0 0.0
    %8013 = vmatpush1.msra.mxu0 %v8001
    %8014 = vmatprep.subr.mxu0 0.0
    %8015 = vmatpush1.msra.mxu0 %v8002
    %8016 = vmatprep.subr.mxu0 0.0
    %8017 = vmatpush1.msra.mxu0 0.0
    %8018 = vmatprep.subr.mxu0 0.0
    %8019 = vmatpush1.msra.mxu0 0.0
    %8020 = vmatprep.subr.mxu0 0.0
    %8021 = vmatpush1.msra.mxu0 0.0
    %8022 = vmatprep.subr.mxu0 0.0
    %8023 = vmatpush1.msra.mxu0 0.0
    %8024 = vmatprep.subr.mxu0 0.0
    %8025 = vmatpush1.msra.mxu0 0.0
    %8026 = vmatprep.subr.mxu0 0.0
    %8027 = vmatpush1.msra.mxu0 0.0
    %8028 = vmatprep.subr.mxu0 0.0
    %8029 = vmatpush1.msra.mxu0 0.0
    %8030 = vmatprep.subr.mxu0 0.0
    %8031 = vmatpush1.msra.mxu0 0.0
    %8032 = vmatprep.subr.mxu0 0.0
    %8033 = vmatpush1.msra.mxu0 0.0
    %8034 = vmatprep.subr.mxu0 0.0
    %8035 = vmatpush1.msra.mxu0 0.0
    %8036 = vmatprep.subr.mxu0 0.0
    %8037 = vmatpush1.msra.mxu0 0.0
    %8038 = vmatprep.subr.mxu0 0.0
    %8039 = vmatpush1.msra.mxu0 0.0
    %8040 = vmatprep.subr.mxu0 0.0
    %8041 = vmatpush1.msra.mxu0 0.0
    %8042 = vmatprep.subr.mxu0 0.0
    %8043 = vmatpush1.msra.mxu0 0.0
    %8044 = vmatprep.subr.mxu0 0.0
    %8045 = vmatpush1.msra.mxu0 0.0
    %8046 = vmatprep.subr.mxu0 0.0
    %8047 = vmatpush1.msra.mxu0 0.0
    %8048 = vmatprep.subr.mxu0 0.0
    %8049 = vmatpush1.msra.mxu0 0.0
    %8050 = vmatprep.subr.mxu0 0.0
    %8051 = vmatpush1.msra.mxu0 0.0
    %8052 = vmatprep.subr.mxu0 0.0
    %8053 = vmatpush1.msra.mxu0 0.0
    %8054 = vmatprep.subr.mxu0 0.0
    %8055 = vmatpush1.msra.mxu0 0.0
    %8056 = vmatprep.subr.mxu0 0.0
    %8057 = vmatpush1.msra.mxu0 0.0
    %8058 = vmatprep.subr.mxu0 0.0
    %8059 = vmatpush1.msra.mxu0 0.0
    %8060 = vmatprep.subr.mxu0 0.0
    %8061 = vmatpush1.msra.mxu0 0.0
    %8062 = vmatprep.subr.mxu0 0.0
    %8063 = vmatpush1.msra.mxu0 0.0
    %8064 = vmatprep.subr.mxu0 0.0
    %8065 = vmatpush1.msra.mxu0 0.0
    %8066 = vmatprep.subr.mxu0 0.0
    %8067 = vmatpush1.msra.mxu0 0.0
    %8068 = vmatprep.subr.mxu0 0.0
    %8069 = vmatpush1.msra.mxu0 0.0
    %8070 = vmatprep.subr.mxu0 0.0
    %8071 = vmatpush1.msra.mxu0 0.0
    %8072 = vmatprep.mubr.f32.mxu0 0.0
    %8073 = vmatmul.mubr.f32.gmra.mrb[0].mxu0 %v8006
    %v8074 = vpop.f32.mrb[0].mxu0
    %v8075 = vadd.f32 %v8003, %v8074
    %v8076 = vpop.f32.mrb[0].mxu0
    %8077 = vdwg.mxu0
    %vm8078 = vcmp.gt.f32.partialorder %v8075, 0.0
    %v8079 = vmin.f32 %v8075, 0.0
    %v8080 = vmul.f32 %v8079, 1.442695
    %v8081 = vpow.pop %v8080
    %v8082 = vsub.f32 %v8081, 1.0
    %v8083 = vsel %vm8078, %v8075, %v8082
    %v8084 = vld [vmem:[%s5 + $0x28] sm:$0x3f]
    %v8085 = vld [vmem:[%s5 + $0x2] sm:$0x1]
    %vm8086 = vcmask 48128
    %v8088 = vsel %vm8086, %v8083, 0
    %vm8090 = vcmask 1045504
    %v8092 = vsel %vm8090, %v8084, 0
    %8094 = vmatprep.subr.mxu0 0.0
    %8095 = vmatpush1.msra.mxu0 %v8092
    %8096 = vmatprep.subr.mxu0 0.0
    %8097 = vmatpush1.msra.mxu0 0.0
    %8098 = vmatprep.subr.mxu0 0.0
    %8099 = vmatpush1.msra.mxu0 0.0
    %8100 = vmatprep.subr.mxu0 0.0
    %8101 = vmatpush1.msra.mxu0 0.0
    %8102 = vmatprep.subr.mxu0 0.0
    %8103 = vmatpush1.msra.mxu0 0.0
    %8104 = vmatprep.subr.mxu0 0.0
    %8105 = vmatpush1.msra.mxu0 0.0
    %8106 = vmatprep.subr.mxu0 0.0
    %8107 = vmatpush1.msra.mxu0 0.0
    %8108 = vmatprep.subr.mxu0 0.0
    %8109 = vmatpush1.msra.mxu0 0.0
    %8110 = vmatprep.subr.mxu0 0.0
    %8111 = vmatpush1.msra.mxu0 0.0
    %8112 = vmatprep.subr.mxu0 0.0
    %8113 = vmatpush1.msra.mxu0 0.0
    %8114 = vmatprep.subr.mxu0 0.0
    %8115 = vmatpush1.msra.mxu0 0.0
    %8116 = vmatprep.subr.mxu0 0.0
    %8117 = vmatpush1.msra.mxu0 0.0
    %8118 = vmatprep.subr.mxu0 0.0
    %8119 = vmatpush1.msra.mxu0 0.0
    %8120 = vmatprep.subr.mxu0 0.0
    %8121 = vmatpush1.msra.mxu0 0.0
    %8122 = vmatprep.subr.mxu0 0.0
    %8123 = vmatpush1.msra.mxu0 0.0
    %8124 = vmatprep.subr.mxu0 0.0
    %8125 = vmatpush1.msra.mxu0 0.0
    %8126 = vmatprep.subr.mxu0 0.0
    %8127 = vmatpush1.msra.mxu0 0.0
    %8128 = vmatprep.subr.mxu0 0.0
    %8129 = vmatpush1.msra.mxu0 0.0
    %8130 = vmatprep.subr.mxu0 0.0
    %8131 = vmatpush1.msra.mxu0 0.0
    %8132 = vmatprep.subr.mxu0 0.0
    %8133 = vmatpush1.msra.mxu0 0.0
    %8134 = vmatprep.subr.mxu0 0.0
    %8135 = vmatpush1.msra.mxu0 0.0
    %8136 = vmatprep.subr.mxu0 0.0
    %8137 = vmatpush1.msra.mxu0 0.0
    %8138 = vmatprep.subr.mxu0 0.0
    %8139 = vmatpush1.msra.mxu0 0.0
    %8140 = vmatprep.subr.mxu0 0.0
    %8141 = vmatpush1.msra.mxu0 0.0
    %8142 = vmatprep.subr.mxu0 0.0
    %8143 = vmatpush1.msra.mxu0 0.0
    %8144 = vmatprep.subr.mxu0 0.0
    %8145 = vmatpush1.msra.mxu0 0.0
    %8146 = vmatprep.subr.mxu0 0.0
    %8147 = vmatpush1.msra.mxu0 0.0
    %8148 = vmatprep.subr.mxu0 0.0
    %8149 = vmatpush1.msra.mxu0 0.0
    %8150 = vmatprep.subr.mxu0 0.0
    %8151 = vmatpush1.msra.mxu0 0.0
    %8152 = vmatprep.subr.mxu0 0.0
    %8153 = vmatpush1.msra.mxu0 0.0
    %8154 = vmatprep.subr.mxu0 0.0
    %8155 = vmatpush1.msra.mxu0 0.0
    %8156 = vmatprep.subr.mxu0 0.0
    %8157 = vmatpush1.msra.mxu0 0.0
    %8158 = vmatprep.mubr.f32.mxu0 0.0
    %8159 = vmatmul.mubr.f32.gmra.mrb[0].mxu0 %v8088
    %v8160 = vpop.f32.mrb[0].mxu0
    %v8161 = vadd.f32 %v8085, %v8160
    %v8162 = vpop.f32.mrb[0].mxu0
    %8163 = vdwg.mxu0
    %vm8164 = vcmask 8192
    %8165 = vst.msk [vmem:[#allocation5] sm:$0x1] %vm8164, %v8161
    // Predicated region
    $region30: #{forward.1} parent=1 // pred_check
      _
    $region31: #{forward.1} parent=1 // pred_check_branch
      %8167 = sbr.rel (0) target = $region33
    $region32: #{forward.1} parent=1 // pred_region
      %s8169 = ssub.s32 16, 16
      %8170 = vsyncadd [#allocation3], %s8169
      %s8172 = sshll.u32 [#allocation5], 4
      %s8173 = int_to_ptr.vmem [resolvable:$true] %s8172
      %8175 = dma.vmem_to_hbm [thread:$0]  %s8173, 16, %s6, [#allocation3]
    $region33: #{forward.1} parent=1 // pred_fallthru
      _
    // Predicated region
    $region34: #{forward.1} parent=1 // pred_check
      _
    $region35: #{forward.1} parent=1 // pred_check_branch
      %8177 = sbr.rel (0) target = $region37
    $region36: #{forward.1} parent=1 // pred_region
      %8178 = dma.done [#allocation3], 16
    $region37: #{forward.1} parent=1 // pred_fallthru
      _
    %8179 = vsyncpa [#allocation3], 1
    %8180 = vsyncpa [#allocation4], 1

</llo_original>
